<compile_context>
chip_gen: v5e
topology: v5e:2x2
jax: 0.10.0
libtpu: 0.0.40
codegen_flags: <defaults>
</compile_context>

<pallas_src>
import math

import numpy as np
import jax
import jax.numpy as jnp
from jax.experimental import pallas as pl
from jax.experimental.pallas import tpu as pltpu

# ----------------------------- hyper-parameters ------------------------------
B = 2
SEQ_LEN = 8            # encoder input length
LABEL_LEN = 4
PRED_LEN = 1           # out_len
DEC_LEN = LABEL_LEN + PRED_LEN      # 5
ENC_FEATS = 25         # raw feature width of x_enc / x_dec
D_MODEL = 32
N_HEADS = 4
DH = D_MODEL // N_HEADS             # 8
D_FF = 32
E_LAYERS = 2
D_LAYERS = 1           # single decoder layer
C_OUT = 1
DNN_HIDDEN = 1024
DNN_KMAX = 16          # zero-padded common input width of the 3 Dnn heads
INF_IN = 5             # features the Informer embeddings see after double slicing
NEG = -1e30            # finite "minus infinity"

assert E_LAYERS == 2   # constants below assume a single distilling ConvLayer

ENC_LENS = [SEQ_LEN]
for _ in range(E_LAYERS - 1):
    ENC_LENS.append((ENC_LENS[-1] - 1) // 2 + 1)   # MaxPool1d(k=3, s=2, p=1)
L_ENC_OUT = ENC_LENS[-1]            # 4

NE = B * SEQ_LEN                    # 16 stacked encoder rows
ND = B * DEC_LEN                    # 10 stacked decoder rows
NC = B * L_ENC_OUT                  # 8  stacked encoder-output rows

# channel selections (Informer_Dnn.forward + Informer.forward double slicing)
SEL_INFORMER = np.array([2, 3, 4, 18, 24])                      # raw 25 -> 5
DNN_COLS = (np.arange(20, 24), np.arange(5, 18), np.array([0]))  # img, poi, eui

# --------------------- packed-parameter registries ---------------------------
_VEC32_FIELDS = (
    ("enc_attn_b", E_LAYERS * 4), ("enc_ffn_b1", E_LAYERS), ("enc_ffn_b2", E_LAYERS),
    ("enc_ln_g", E_LAYERS * 2), ("enc_ln_b", E_LAYERS * 2),
    ("conv_b", E_LAYERS - 1), ("enc_norm_g", 1), ("enc_norm_b", 1),
    ("dec_sa_b", 3), ("dec_sa_ob", 1), ("dec_ca_b", 4),
    ("dec_ffn_b1", 1), ("dec_ffn_b2", 1), ("dec_ln_g", 4), ("dec_ln_b", 4),
    ("dec_proj_w", 1), ("head_mask", N_HEADS),
)
_MAT32_FIELDS = (
    ("enc_attn_w", E_LAYERS * 4), ("enc_ffn_w1", E_LAYERS), ("enc_ffn_w2", E_LAYERS),
    ("conv_w", (E_LAYERS - 1) * 3),
    ("dec_sa_w", 3), ("dec_ca_w", 4), ("dec_ffn_w1", 1), ("dec_ffn_w2", 1),
)
_TOK_FIELDS = (("enc_tok_w", 3), ("dec_tok_w", 3))


def _offsets(fields):
    off, table = 0, {}
    for name, k in fields:
        table[name] = off
        off += k
    return table, off


_VEC32_OFF, _VEC32_ROWS = _offsets(_VEC32_FIELDS)
_MAT32_OFF, _MAT32_ROWS = _offsets(_MAT32_FIELDS)
_TOK_OFF, _TOK_ROWS = _offsets(_TOK_FIELDS)


def _pack_fields(fields, parts, tail):
    total = sum(k for _, k in fields)
    out = np.zeros((total,) + tail, np.float32)
    off = 0
    for name, k in fields:
        out[off:off + k] = np.asarray(parts[name], np.float32).reshape((k,) + tail)
        off += k
    return jnp.asarray(out)


# kernel argument order (wrapper and kernel both index by this tuple)
_ARG_KEYS = (
    "dnn_w1",                       # (3, 16, 1024) -> pl.ANY, overlapped manual DMA
    "xe", "xd", "extra_enc", "extra_dec",
    "tok_w", "mat32", "vec32",
    "shift_enc", "shift_dec",
    "enc_bias0", "enc_bias1", "dec_self_bias", "cross_bias",
    "pool_sel", "pool_edge",
    "mix_place", "mix_sel", "head_extract", "dec_sa_ow",
    "enc_first_sel", "dec_last_sel",
    "dnn_in_sel", "dnn_b1", "dnn_w2", "dnn_b2",
    "proj_w", "proj_b", "dec_proj_b", "out_place",
)


# ---------------------------- in-kernel helpers -------------------------------
def _layer_norm(x, g, b, eps=1e-5):
    mu = jnp.mean(x, axis=-1, keepdims=True)
    xc = x - mu
    var = jnp.mean(xc * xc, axis=-1, keepdims=True)
    return xc * jax.lax.rsqrt(var + eps) * g + b


def _gelu(x):
    # tanh-approx GELU (single EUP tanh instead of the erf polynomial)
    return 0.5 * x * (1.0 + jnp.tanh(0.7978845608028654 * (x + 0.044715 * x * x * x)))


def _softmax_rows(s):
    m = jnp.max(s, axis=-1, keepdims=True)
    e = jnp.exp(s - m)
    return e * pl.reciprocal(jnp.sum(e, axis=-1, keepdims=True), approx=True)


# ================================ fused kernel ================================
def fused_kernel(*refs):
    n_in = len(_ARG_KEYS)
    r = dict(zip(_ARG_KEYS, refs[:n_in]))
    out_ref, w1_vmem, w1_sem = refs[n_in], refs[n_in + 1], refs[n_in + 2]

    # start the only non-trivial weight fetch (Dnn first layers, ~196 KiB) now;
    # it is waited on only right before the DNN matmuls at the very end.
    w1_copy = pltpu.make_async_copy(r["dnn_w1"], w1_vmem, w1_sem)
    w1_copy.start()

    def vec(name, i=0):
        return r["vec32"][_VEC32_OFF[name] + i]

    def mat(name, i=0):
        return r["mat32"][_MAT32_OFF[name] + i]

    def tok(name, i=0):
        return r["tok_w"][_TOK_OFF[name] + i]

    def mm(a, b):
        return jnp.dot(a, b, preferred_element_type=jnp.float32)

    scale = 1.0 / math.sqrt(DH)

    def mha_packed(xq, xkv, wq, wk, wv, wo, bq, bk, bv, bo, bias):
        # multi-head attention with heads kept packed in the d_model lanes;
        # `bias` is an additive {0, NEG} block/causal mask (built once at init).
        q = mm(xq, wq) + bq
        k = mm(xkv, wk) + bk
        v = mm(xkv, wv) + bv
        o = jnp.zeros((xq.shape[0], D_MODEL), jnp.float32)
        for h in range(N_HEADS):
            hmask = vec("head_mask", h)
            s = jax.lax.dot_general(q * hmask, k, (((1,), (1,)), ((), ())),
                                    preferred_element_type=jnp.float32) * scale + bias
            o = o + mm(_softmax_rows(s), v * hmask)
        return mm(o, wo) + bo

    def token_embed(xs, tname, shift, extra):
        # TokenEmbedding: Conv1d(k=3, circular, bias=False) as 3 tap matmuls.
        # The 25->5 channel selection is folded into the tap weights; the
        # per-batch circular shifts are constant block-diagonal matrices.
        p_prev = mm(xs, tok(tname, 0))
        p_cent = mm(xs, tok(tname, 1))
        p_next = mm(xs, tok(tname, 2))
        return mm(shift[0], p_prev) + p_cent + mm(shift[1], p_next) + extra

    # ================================ encoder =================================
    xe = r["xe"][...]                                                  # (NE, 25)
    x = token_embed(xe, "enc_tok_w", r["shift_enc"], r["extra_enc"][...])
    enc_bias = (r["enc_bias0"][...], r["enc_bias1"][...])
    for li in range(E_LAYERS):
        a, n = li * 4, li * 2
        new_x = mha_packed(x, x,
                           mat("enc_attn_w", a + 0), mat("enc_attn_w", a + 1),
                           mat("enc_attn_w", a + 2), mat("enc_attn_w", a + 3),
                           vec("enc_attn_b", a + 0), vec("enc_attn_b", a + 1),
                           vec("enc_attn_b", a + 2), vec("enc_attn_b", a + 3),
                           enc_bias[li])
        x = _layer_norm(x + new_x, vec("enc_ln_g", n), vec("enc_ln_b", n))
        y = _gelu(mm(x, mat("enc_ffn_w1", li)) + vec("enc_ffn_b1", li))
        y = mm(y, mat("enc_ffn_w2", li)) + vec("enc_ffn_b2", li)
        x = _layer_norm(x + y, vec("enc_ln_g", n + 1), vec("enc_ln_b", n + 1))
        if li < E_LAYERS - 1:
            # distilling ConvLayer: circular conv3 (BatchNorm folded at init)
            # -> ELU -> MaxPool1d(k=3, s=2, p=1), all via constant matmuls.
            sp, sn = r["shift_enc"][0], r["shift_enc"][1]
            xp, xn = mm(sp, x), mm(sn, x)
            ct = li * 3
            y = (mm(xp, mat("conv_w", ct + 0)) + mm(x, mat("conv_w", ct + 1))
                 + mm(xn, mat("conv_w", ct + 2)) + vec("conv_b", li))
            y = jnp.where(y > 0.0, y, jnp.exp(jnp.minimum(y, 0.0)) - 1.0)   # ELU(1)
            yp = mm(sp, y) + r["pool_edge"][0]          # left neighbour / -inf pad
            yn = mm(sn, y) + r["pool_edge"][1]          # right neighbour / -inf pad
            m = jnp.maximum(jnp.maximum(yp, y), yn)
            x = mm(r["pool_sel"][...], m)               # stride-2 window centres
    enc = _layer_norm(x, vec("enc_norm_g"), vec("enc_norm_b"))         # (NC, D_MODEL)

    # ================================ decoder =================================
    x = token_embed(r["xd"][...], "dec_tok_w", r["shift_dec"], r["extra_dec"][...])
    # -- self-attention (mask_flag=True), Informer mix=True output interleave.
    # TODO(synk): ProbAttention's stochastic top-u query sampling is replaced by
    # dense causal attention with the same masking.
    q = mm(x, mat("dec_sa_w", 0)) + vec("dec_sa_b", 0)
    k = mm(x, mat("dec_sa_w", 1)) + vec("dec_sa_b", 1)
    v = mm(x, mat("dec_sa_w", 2)) + vec("dec_sa_b", 2)
    dec_bias = r["dec_self_bias"][...]
    stacked = jnp.zeros((N_HEADS * ND, DH), jnp.float32)     # head-major row stack
    for h in range(N_HEADS):
        hmask = vec("head_mask", h)
        s = jax.lax.dot_general(q * hmask, k, (((1,), (1,)), ((), ())),
                                preferred_element_type=jnp.float32) * scale + dec_bias
        p = _softmax_rows(s)
        oh = mm(p, mm(v, r["head_extract"][h]))               # (ND, DH)
        stacked = stacked + mm(r["mix_place"][h], oh)
    # mix=True: (B,H,L,Dh) contiguous viewed as (B,L,H*Dh); each lane-chunk j of
    # the mixed layout is a constant row-gather (mix_sel) of `stacked`.
    sa = jnp.zeros((ND, D_MODEL), jnp.float32)
    for j in range(N_HEADS):
        sa = sa + mm(mm(r["mix_sel"][j], stacked), r["dec_sa_ow"][j])
    sa = sa + vec("dec_sa_ob")
    x = _layer_norm(x + sa, vec("dec_ln_g", 0), vec("dec_ln_b", 0))
    # -- cross attention over the encoder output --
    ca = mha_packed(x, enc,
                    mat("dec_ca_w", 0), mat("dec_ca_w", 1),
                    mat("dec_ca_w", 2), mat("dec_ca_w", 3),
                    vec("dec_ca_b", 0), vec("dec_ca_b", 1),
                    vec("dec_ca_b", 2), vec("dec_ca_b", 3),
                    r["cross_bias"][...])
    x = _layer_norm(x + ca, vec("dec_ln_g", 1), vec("dec_ln_b", 1))
    y = _gelu(mm(x, mat("dec_ffn_w1")) + vec("dec_ffn_b1"))
    y = mm(y, mat("dec_ffn_w2")) + vec("dec_ffn_b2")
    x = _layer_norm(x + y, vec("dec_ln_g", 2), vec("dec_ln_b", 2))
    x = _layer_norm(x, vec("dec_ln_g", 3), vec("dec_ln_b", 3))    # Decoder final norm
    # projection d_model -> c_out on the last (prediction) step of each batch
    last = mm(r["dec_last_sel"][...], x)                          # (B, D_MODEL)
    y_inf = jnp.sum(last * vec("dec_proj_w"), axis=-1, keepdims=True) + r["dec_proj_b"][...]

    # ================================ DNN heads ===============================
    # TODO(synk): Dnn_Net source not provided; assumed MLP in->1024->ReLU->1.
    w1_copy.wait()
    x0 = mm(r["enc_first_sel"][...], xe)                          # (B, 25) = x_enc[:, 0, :]
    ys = []
    for i in range(3):                                            # img, poi, eui
        xi = mm(x0, r["dnn_in_sel"][i])                           # (B, 16) column gather
        h1 = jnp.maximum(mm(xi, w1_vmem[i]) + r["dnn_b1"][i], 0.0)
        ys.append(jnp.sum(h1 * r["dnn_w2"][i], axis=-1, keepdims=True) + r["dnn_b2"][i])
    y_img, y_poi, y_eui = ys

    # final nn.Linear(4, c_out) on [y_informer, y_poi, y_img, y_eui]
    pw = r["proj_w"]
    informer_out = (y_inf * pw[0] + y_poi * pw[1] + y_img * pw[2] + y_eui * pw[3]
                    + r["proj_b"][...])
    # pack the five (B, 1) results into one (B, 5) output tile
    op = r["out_place"]
    out_ref[...] = (informer_out * op[0] + y_eui * op[1] + y_inf * op[2]
                    + y_poi * op[3] + y_img * op[4])


# ================================ JAX glue ====================================
def sinusoid_table(n, d):
    pos = np.arange(n)[:, None].astype(np.float64)
    div = np.exp(np.arange(0, d, 2).astype(np.float64) * -(np.log(10000.0) / d))
    tab = np.zeros((n, d), np.float64)
    tab[:, 0::2] = np.sin(pos * div)
    tab[:, 1::2] = np.cos(pos * div)
    return jnp.asarray(tab, dtype=jnp.float32)


PE_TABLE = sinusoid_table(128, D_MODEL)       # PositionalEmbedding
MONTH_TABLE = sinusoid_table(13, D_MODEL)     # FixedEmbedding tables (non-trainable)
DAY_TABLE = sinusoid_table(32, D_MODEL)
WEEKDAY_TABLE = sinusoid_table(7, D_MODEL)
HOUR_TABLE = sinusoid_table(24, D_MODEL)


def embed_extra(x_mark, L):
    # positional + fixed temporal embedding (freq='h'); table gathers stay in JAX.
    xm = x_mark.astype(jnp.int32)
    temp = (HOUR_TABLE[xm[..., 3]] + WEEKDAY_TABLE[xm[..., 2]]
            + DAY_TABLE[xm[..., 1]] + MONTH_TABLE[xm[..., 0]])
    return temp + PE_TABLE[:L][None, :, :]


def _make_in_specs():
    specs = []
    for k in _ARG_KEYS:
        if k == "dnn_w1":
            specs.append(pl.BlockSpec(memory_space=pl.ANY))
        else:
            specs.append(pl.BlockSpec(memory_space=pltpu.MemorySpace.VMEM))
    return specs


def informer_dnn_forward(params, x_enc, x_mark_enc, x_dec, x_mark_dec):
    ops = dict(params)
    ops["xe"] = x_enc.reshape(NE, ENC_FEATS)
    ops["xd"] = x_dec.reshape(ND, ENC_FEATS)
    ops["extra_enc"] = embed_extra(x_mark_enc, SEQ_LEN).reshape(NE, D_MODEL)
    ops["extra_dec"] = embed_extra(x_mark_dec, DEC_LEN).reshape(ND, D_MODEL)

    res = pl.pallas_call(
        fused_kernel,
        out_shape=jax.ShapeDtypeStruct((B, 5), jnp.float32),
        in_specs=_make_in_specs(),
        out_specs=pl.BlockSpec(memory_space=pltpu.MemorySpace.VMEM),
        scratch_shapes=[
            pltpu.VMEM((3, DNN_KMAX, DNN_HIDDEN), jnp.float32),
            pltpu.SemaphoreType.DMA(()),
        ],
    )(*[ops[k] for k in _ARG_KEYS])

    informer_out = res[:, 0:1][:, None, :]                                 # (B,1,1)
    y_eui = res[:, 1:2][:, None, :]                                        # (B,1,1)
    y_informer = res[:, 2:3].reshape(B, PRED_LEN, C_OUT)[:, None]          # (B,1,1,1)
    y_poi = res[:, 3:4][:, None, :]                                        # (B,1,1)
    y_img = res[:, 4:5][:, None, :]                                        # (B,1,1)
    # nn.Sigmoid() `activate` and Conv1d_ext are unused in the reference forward.
    return informer_out, y_eui, y_informer, y_poi, y_img


# --------------------- constant 0/1 & bias matrices (init-time) ---------------
def _const_params():
    def circ_shift(L):
        n = B * L
        sp = np.zeros((n, n), np.float32)
        sn = np.zeros((n, n), np.float32)
        for b in range(B):
            for l in range(L):
                sp[b * L + l, b * L + (l - 1) % L] = 1.0
                sn[b * L + l, b * L + (l + 1) % L] = 1.0
        return np.stack([sp, sn])

    def self_bias(L, causal):
        n = B * L
        m = np.zeros((n, n), np.float32)
        for i in range(n):
            for j in range(n):
                if (i // L != j // L) or (causal and (j % L) > (i % L)):
                    m[i, j] = NEG
        return m

    def cross_bias(Lq, Lk):
        m = np.zeros((B * Lq, B * Lk), np.float32)
        for i in range(B * Lq):
            for j in range(B * Lk):
                if i // Lq != j // Lk:
                    m[i, j] = NEG
        return m

    L0, Lout = ENC_LENS[0], ENC_LENS[1]
    pool_sel = np.zeros((B * Lout, B * L0), np.float32)
    for b in range(B):
        for l in range(Lout):
            pool_sel[b * Lout + l, b * L0 + 2 * l] = 1.0
    pool_edge = np.zeros((2, B * L0, 1), np.float32)
    for b in range(B):
        pool_edge[0, b * L0, 0] = NEG
        pool_edge[1, b * L0 + L0 - 1, 0] = NEG

    head_extract = np.zeros((N_HEADS, D_MODEL, DH), np.float32)
    for h in range(N_HEADS):
        for d in range(DH):
            head_extract[h, h * DH + d, d] = 1.0

    mix_place = np.zeros((N_HEADS, N_HEADS * ND, ND), np.float32)
    for h in range(N_HEADS):
        for s in range(ND):
            mix_place[h, h * ND + s, s] = 1.0

    # mix=True gather: mixed[b*L+l', 8j:8j+8] = head (4l'+j)//5 at time (4l'+j)%5
    mix_sel = np.zeros((N_HEADS, ND, N_HEADS * ND), np.float32)
    for j in range(N_HEADS):
        for b in range(B):
            for lp in range(DEC_LEN):
                idx = N_HEADS * lp + j
                h, t = idx // DEC_LEN, idx % DEC_LEN
                mix_sel[j, b * DEC_LEN + lp, h * ND + b * DEC_LEN + t] = 1.0

    enc_first_sel = np.zeros((B, NE), np.float32)
    dec_last_sel = np.zeros((B, ND), np.float32)
    for b in range(B):
        enc_first_sel[b, b * SEQ_LEN] = 1.0
        dec_last_sel[b, b * DEC_LEN + DEC_LEN - 1] = 1.0

    out_place = np.zeros((5, 1, 5), np.float32)
    for i in range(5):
        out_place[i, 0, i] = 1.0

    consts = {
        "shift_enc": circ_shift(SEQ_LEN),
        "shift_dec": circ_shift(DEC_LEN),
        "enc_bias0": self_bias(ENC_LENS[0], False),
        "enc_bias1": self_bias(ENC_LENS[1], False),
        "dec_self_bias": self_bias(DEC_LEN, True),
        "cross_bias": cross_bias(DEC_LEN, L_ENC_OUT),
        "pool_sel": pool_sel,
        "pool_edge": pool_edge,
        "head_extract": head_extract,
        "mix_place": mix_place,
        "mix_sel": mix_sel,
        "enc_first_sel": enc_first_sel,
        "dec_last_sel": dec_last_sel,
        "out_place": out_place,
    }
    return {k: jnp.asarray(v) for k, v in consts.items()}


# ============================ deterministic init ==============================
def init_params(key):
    keys = iter(jax.random.split(key, 32))

    def nrm(shape, scl=0.05):
        return np.asarray(jax.random.normal(next(keys), shape, dtype=jnp.float32)) * scl

    parts = {}
    # --- encoder ---
    parts["enc_attn_w"] = nrm((E_LAYERS * 4, D_MODEL, D_MODEL))   # per layer: q,k,v,o
    parts["enc_attn_b"] = np.zeros((E_LAYERS * 4, 1, D_MODEL), np.float32)
    parts["enc_ffn_w1"] = nrm((E_LAYERS, D_MODEL, D_FF))
    parts["enc_ffn_b1"] = np.zeros((E_LAYERS, 1, D_FF), np.float32)
    parts["enc_ffn_w2"] = nrm((E_LAYERS, D_FF, D_MODEL))
    parts["enc_ffn_b2"] = np.zeros((E_LAYERS, 1, D_MODEL), np.float32)
    parts["enc_ln_g"] = np.ones((E_LAYERS * 2, 1, D_MODEL), np.float32)
    parts["enc_ln_b"] = np.zeros((E_LAYERS * 2, 1, D_MODEL), np.float32)
    # distil ConvLayer: BatchNorm folded into the conv at init.
    # TODO(synk): BatchNorm1d modeled with inference running stats (mean 0, var 1).
    n_conv = E_LAYERS - 1
    conv_w_raw = nrm((n_conv * 3, D_MODEL, D_MODEL))              # [conv][tap] flattened
    bn_scale = np.ones((n_conv, D_MODEL), np.float32) / np.sqrt(1.0 + 1e-5)
    parts["conv_w"] = conv_w_raw * np.repeat(bn_scale, 3, axis=0)[:, None, :]
    parts["conv_b"] = np.zeros((n_conv, 1, D_MODEL), np.float32)
    parts["enc_norm_g"] = np.ones((1, 1, D_MODEL), np.float32)
    parts["enc_norm_b"] = np.zeros((1, 1, D_MODEL), np.float32)
    # --- decoder (single layer) ---
    parts["dec_sa_w"] = nrm((3, D_MODEL, D_MODEL))                # self-attn q,k,v
    parts["dec_sa_b"] = np.zeros((3, 1, D_MODEL), np.float32)
    dec_sa_ow = nrm((D_MODEL, D_MODEL))                           # self-attn out proj
    parts["dec_sa_ob"] = np.zeros((1, 1, D_MODEL), np.float32)
    parts["dec_ca_w"] = nrm((4, D_MODEL, D_MODEL))                # cross-attn q,k,v,o
    parts["dec_ca_b"] = np.zeros((4, 1, D_MODEL), np.float32)
    parts["dec_ffn_w1"] = nrm((1, D_MODEL, D_FF))
    parts["dec_ffn_b1"] = np.zeros((1, 1, D_FF), np.float32)
    parts["dec_ffn_w2"] = nrm((1, D_FF, D_MODEL))
    parts["dec_ffn_b2"] = np.zeros((1, 1, D_MODEL), np.float32)
    parts["dec_ln_g"] = np.ones((4, 1, D_MODEL), np.float32)      # ln1,ln2,ln3,final norm
    parts["dec_ln_b"] = np.zeros((4, 1, D_MODEL), np.float32)
    parts["dec_proj_w"] = nrm((1, 1, D_MODEL))                    # nn.Linear(d_model, 1)
    # head lane masks for packed multi-head attention
    hmask = np.zeros((N_HEADS, 1, D_MODEL), np.float32)
    for h in range(N_HEADS):
        hmask[h, 0, h * DH:(h + 1) * DH] = 1.0
    parts["head_mask"] = hmask
    # token-embedding conv taps [prev, center, next] with 25->5 selection folded in
    tparts = {}
    for name in ("enc_tok_w", "dec_tok_w"):
        raw = nrm((3, INF_IN, D_MODEL))
        folded = np.zeros((3, ENC_FEATS, D_MODEL), np.float32)
        folded[:, SEL_INFORMER, :] = raw
        tparts[name] = folded

    p = {
        "vec32": _pack_fields(_VEC32_FIELDS, parts, (1, D_MODEL)),
        "mat32": _pack_fields(_MAT32_FIELDS, parts, (D_MODEL, D_MODEL)),
        "tok_w": _pack_fields(_TOK_FIELDS, tparts, (ENC_FEATS, D_MODEL)),
        "dec_sa_ow": jnp.asarray(dec_sa_ow.reshape(N_HEADS, DH, D_MODEL)),
        "dec_proj_b": jnp.zeros((1, C_OUT), jnp.float32),
    }

    # --- Dnn_Net heads (order: img(4), poi(13), eui(1)); inputs gathered to 16 wide
    dnn_w1 = np.zeros((3, DNN_KMAX, DNN_HIDDEN), np.float32)
    dnn_in_sel = np.zeros((3, ENC_FEATS, DNN_KMAX), np.float32)
    for i, cols in enumerate(DNN_COLS):
        dnn_w1[i, :len(cols), :] = nrm((len(cols), DNN_HIDDEN))
        for kk, col in enumerate(cols):
            dnn_in_sel[i, int(col), kk] = 1.0
    p["dnn_w1"] = jnp.asarray(dnn_w1)
    p["dnn_in_sel"] = jnp.asarray(dnn_in_sel)
    p["dnn_b1"] = jnp.zeros((3, 1, DNN_HIDDEN), jnp.float32)
    p["dnn_w2"] = jnp.asarray(nrm((3, 1, DNN_HIDDEN)))            # 2nd linear as row vecs
    p["dnn_b2"] = jnp.zeros((3, 1, 1), jnp.float32)

    # --- final nn.Linear(4, c_out) (weights for [informer, poi, img, eui]) ---
    p["proj_w"] = jnp.asarray(nrm((4, 1, 1)))
    p["proj_b"] = jnp.zeros((1, 1), jnp.float32)

    p.update(_const_params())
    return p


def make_mark(key, b, l):
    k1, k2, k3, k4 = jax.random.split(key, 4)
    month = jax.random.randint(k1, (b, l), 1, 13)
    day = jax.random.randint(k2, (b, l), 1, 29)
    weekday = jax.random.randint(k3, (b, l), 0, 7)
    hour = jax.random.randint(k4, (b, l), 0, 24)
    return jnp.stack([month, day, weekday, hour], axis=-1).astype(jnp.float32)


if __name__ == "__main__":
    root = jax.random.PRNGKey(0)
    kp, kx1, kx2, km1, km2 = jax.random.split(root, 5)
    params = init_params(kp)
    x_enc = jax.random.normal(kx1, (B, SEQ_LEN, ENC_FEATS), jnp.float32)
    x_dec = jax.random.normal(kx2, (B, DEC_LEN, ENC_FEATS), jnp.float32)
    x_mark_enc = make_mark(km1, B, SEQ_LEN)
    x_mark_dec = make_mark(km2, B, DEC_LEN)

    fwd = jax.jit(informer_dnn_forward)
    outs = jax.block_until_ready(fwd(params, x_enc, x_mark_enc, x_dec, x_mark_dec))

    expected = [(B, 1, C_OUT), (B, 1, 1), (B, 1, PRED_LEN, C_OUT), (B, 1, 1), (B, 1, 1)]
    for o, s in zip(outs, expected):
        assert o.shape == s, (o.shape, s)
        assert bool(jnp.all(jnp.isfinite(o)))
    print("KERNEL_OK")
</pallas_src>

<mosaic_0001>
module attributes {stable_mosaic.version = 11 : i64} {
  func.func @fused_kernel(%arg0: memref<3x16x1024xf32, #tpu.memory_space<any>>, %arg1: memref<16x25xf32, #tpu.memory_space<vmem>>, %arg2: memref<10x25xf32, #tpu.memory_space<vmem>>, %arg3: memref<16x32xf32, #tpu.memory_space<vmem>>, %arg4: memref<10x32xf32, #tpu.memory_space<vmem>>, %arg5: memref<6x25x32xf32, #tpu.memory_space<vmem>>, %arg6: memref<24x32x32xf32, #tpu.memory_space<vmem>>, %arg7: memref<46x1x32xf32, #tpu.memory_space<vmem>>, %arg8: memref<2x16x16xf32, #tpu.memory_space<vmem>>, %arg9: memref<2x10x10xf32, #tpu.memory_space<vmem>>, %arg10: memref<16x16xf32, #tpu.memory_space<vmem>>, %arg11: memref<8x8xf32, #tpu.memory_space<vmem>>, %arg12: memref<10x10xf32, #tpu.memory_space<vmem>>, %arg13: memref<10x8xf32, #tpu.memory_space<vmem>>, %arg14: memref<8x16xf32, #tpu.memory_space<vmem>>, %arg15: memref<2x16x1xf32, #tpu.memory_space<vmem>>, %arg16: memref<4x40x10xf32, #tpu.memory_space<vmem>>, %arg17: memref<4x10x40xf32, #tpu.memory_space<vmem>>, %arg18: memref<4x32x8xf32, #tpu.memory_space<vmem>>, %arg19: memref<4x8x32xf32, #tpu.memory_space<vmem>>, %arg20: memref<2x16xf32, #tpu.memory_space<vmem>>, %arg21: memref<2x10xf32, #tpu.memory_space<vmem>>, %arg22: memref<3x25x16xf32, #tpu.memory_space<vmem>>, %arg23: memref<3x1x1024xf32, #tpu.memory_space<vmem>>, %arg24: memref<3x1x1024xf32, #tpu.memory_space<vmem>>, %arg25: memref<3x1x1xf32, #tpu.memory_space<vmem>>, %arg26: memref<4x1x1xf32, #tpu.memory_space<vmem>>, %arg27: memref<1x1xf32, #tpu.memory_space<vmem>>, %arg28: memref<1x1xf32, #tpu.memory_space<vmem>>, %arg29: memref<5x1x5xf32, #tpu.memory_space<vmem>>, %arg30: memref<2x5xf32, #tpu.memory_space<vmem>>, %arg31: memref<3x16x1024xf32, #tpu.memory_space<vmem>>, %arg32: memref<!tpu.dma_semaphore, #tpu.memory_space<semaphore_mem>>) attributes {dimension_semantics = [], scalar_prefetch = 0 : i64, scratch_operands = 2 : i64, tpu.core_type = #tpu.core_type<tc>} {
    tpu.enqueue_dma source(%arg0 : memref<3x16x1024xf32, #tpu.memory_space<any>>) target(%arg31 : memref<3x16x1024xf32, #tpu.memory_space<vmem>>) target_semaphore(%arg32 : memref<!tpu.dma_semaphore, #tpu.memory_space<semaphore_mem>>)
    %c0 = arith.constant 0 : index
    %c0_0 = arith.constant 0 : index
    %0 = vector.load %arg1[%c0, %c0_0] : memref<16x25xf32, #tpu.memory_space<vmem>>, vector<16x25xf32>
    %c0_1 = arith.constant 0 : index
    %c0_2 = arith.constant 0 : index
    %1 = vector.load %arg3[%c0_1, %c0_2] : memref<16x32xf32, #tpu.memory_space<vmem>>, vector<16x32xf32>
    %c0_3 = arith.constant 0 : index
    %c0_4 = arith.constant 0 : index
    %c0_5 = arith.constant 0 : index
    %2 = vector.load %arg5[%c0_3, %c0_4, %c0_5] : memref<6x25x32xf32, #tpu.memory_space<vmem>>, vector<1x25x32xf32>
    %3 = vector.shape_cast %2 : vector<1x25x32xf32> to vector<25x32xf32>
    %cst = arith.constant dense<0.000000e+00> : vector<16x32xf32>
    %4 = tpu.matmul %0, %3, %cst {dimension_numbers = #tpu.dot_dimension_numbers<[1], [0], [0], [1], [0, 0, 1, 1], [], []>} : vector<16x25xf32>, vector<25x32xf32>, vector<16x32xf32> -> vector<16x32xf32>
    %c1 = arith.constant 1 : index
    %c0_6 = arith.constant 0 : index
    %c0_7 = arith.constant 0 : index
    %5 = vector.load %arg5[%c1, %c0_6, %c0_7] : memref<6x25x32xf32, #tpu.memory_space<vmem>>, vector<1x25x32xf32>
    %6 = vector.shape_cast %5 : vector<1x25x32xf32> to vector<25x32xf32>
    %cst_8 = arith.constant dense<0.000000e+00> : vector<16x32xf32>
    %7 = tpu.matmul %0, %6, %cst_8 {dimension_numbers = #tpu.dot_dimension_numbers<[1], [0], [0], [1], [0, 0, 1, 1], [], []>} : vector<16x25xf32>, vector<25x32xf32>, vector<16x32xf32> -> vector<16x32xf32>
    %c2 = arith.constant 2 : index
    %c0_9 = arith.constant 0 : index
    %c0_10 = arith.constant 0 : index
    %8 = vector.load %arg5[%c2, %c0_9, %c0_10] : memref<6x25x32xf32, #tpu.memory_space<vmem>>, vector<1x25x32xf32>
    %9 = vector.shape_cast %8 : vector<1x25x32xf32> to vector<25x32xf32>
    %cst_11 = arith.constant dense<0.000000e+00> : vector<16x32xf32>
    %10 = tpu.matmul %0, %9, %cst_11 {dimension_numbers = #tpu.dot_dimension_numbers<[1], [0], [0], [1], [0, 0, 1, 1], [], []>} : vector<16x25xf32>, vector<25x32xf32>, vector<16x32xf32> -> vector<16x32xf32>
    %c0_12 = arith.constant 0 : index
    %c0_13 = arith.constant 0 : index
    %c0_14 = arith.constant 0 : index
    %11 = vector.load %arg8[%c0_12, %c0_13, %c0_14] : memref<2x16x16xf32, #tpu.memory_space<vmem>>, vector<1x16x16xf32>
    %12 = vector.shape_cast %11 : vector<1x16x16xf32> to vector<16x16xf32>
    %cst_15 = arith.constant dense<0.000000e+00> : vector<16x32xf32>
    %13 = tpu.matmul %12, %4, %cst_15 {dimension_numbers = #tpu.dot_dimension_numbers<[1], [0], [0], [1], [0, 0, 1, 1], [], []>} : vector<16x16xf32>, vector<16x32xf32>, vector<16x32xf32> -> vector<16x32xf32>
    %14 = arith.addf %13, %7 : vector<16x32xf32>
    %c1_16 = arith.constant 1 : index
    %c0_17 = arith.constant 0 : index
    %c0_18 = arith.constant 0 : index
    %15 = vector.load %arg8[%c1_16, %c0_17, %c0_18] : memref<2x16x16xf32, #tpu.memory_space<vmem>>, vector<1x16x16xf32>
    %16 = vector.shape_cast %15 : vector<1x16x16xf32> to vector<16x16xf32>
    %cst_19 = arith.constant dense<0.000000e+00> : vector<16x32xf32>
    %17 = tpu.matmul %16, %10, %cst_19 {dimension_numbers = #tpu.dot_dimension_numbers<[1], [0], [0], [1], [0, 0, 1, 1], [], []>} : vector<16x16xf32>, vector<16x32xf32>, vector<16x32xf32> -> vector<16x32xf32>
    %18 = arith.addf %14, %17 : vector<16x32xf32>
    %19 = arith.addf %18, %1 : vector<16x32xf32>
    %c0_20 = arith.constant 0 : index
    %c0_21 = arith.constant 0 : index
    %20 = vector.load %arg10[%c0_20, %c0_21] : memref<16x16xf32, #tpu.memory_space<vmem>>, vector<16x16xf32>
    %c0_22 = arith.constant 0 : index
    %c0_23 = arith.constant 0 : index
    %21 = vector.load %arg11[%c0_22, %c0_23] : memref<8x8xf32, #tpu.memory_space<vmem>>, vector<8x8xf32>
    %c0_24 = arith.constant 0 : index
    %c0_25 = arith.constant 0 : index
    %c0_26 = arith.constant 0 : index
    %22 = vector.load %arg6[%c0_24, %c0_25, %c0_26] : memref<24x32x32xf32, #tpu.memory_space<vmem>>, vector<1x32x32xf32>
    %23 = vector.shape_cast %22 : vector<1x32x32xf32> to vector<32x32xf32>
    %c1_27 = arith.constant 1 : index
    %c0_28 = arith.constant 0 : index
    %c0_29 = arith.constant 0 : index
    %24 = vector.load %arg6[%c1_27, %c0_28, %c0_29] : memref<24x32x32xf32, #tpu.memory_space<vmem>>, vector<1x32x32xf32>
    %25 = vector.shape_cast %24 : vector<1x32x32xf32> to vector<32x32xf32>
    %c2_30 = arith.constant 2 : index
    %c0_31 = arith.constant 0 : index
    %c0_32 = arith.constant 0 : index
    %26 = vector.load %arg6[%c2_30, %c0_31, %c0_32] : memref<24x32x32xf32, #tpu.memory_space<vmem>>, vector<1x32x32xf32>
    %27 = vector.shape_cast %26 : vector<1x32x32xf32> to vector<32x32xf32>
    %c3 = arith.constant 3 : index
    %c0_33 = arith.constant 0 : index
    %c0_34 = arith.constant 0 : index
    %28 = vector.load %arg6[%c3, %c0_33, %c0_34] : memref<24x32x32xf32, #tpu.memory_space<vmem>>, vector<1x32x32xf32>
    %29 = vector.shape_cast %28 : vector<1x32x32xf32> to vector<32x32xf32>
    %c0_35 = arith.constant 0 : index
    %c0_36 = arith.constant 0 : index
    %c0_37 = arith.constant 0 : index
    %30 = vector.load %arg7[%c0_35, %c0_36, %c0_37] : memref<46x1x32xf32, #tpu.memory_space<vmem>>, vector<1x1x32xf32>
    %31 = vector.shape_cast %30 : vector<1x1x32xf32> to vector<1x32xf32>
    %c1_38 = arith.constant 1 : index
    %c0_39 = arith.constant 0 : index
    %c0_40 = arith.constant 0 : index
    %32 = vector.load %arg7[%c1_38, %c0_39, %c0_40] : memref<46x1x32xf32, #tpu.memory_space<vmem>>, vector<1x1x32xf32>
    %33 = vector.shape_cast %32 : vector<1x1x32xf32> to vector<1x32xf32>
    %c2_41 = arith.constant 2 : index
    %c0_42 = arith.constant 0 : index
    %c0_43 = arith.constant 0 : index
    %34 = vector.load %arg7[%c2_41, %c0_42, %c0_43] : memref<46x1x32xf32, #tpu.memory_space<vmem>>, vector<1x1x32xf32>
    %35 = vector.shape_cast %34 : vector<1x1x32xf32> to vector<1x32xf32>
    %c3_44 = arith.constant 3 : index
    %c0_45 = arith.constant 0 : index
    %c0_46 = arith.constant 0 : index
    %36 = vector.load %arg7[%c3_44, %c0_45, %c0_46] : memref<46x1x32xf32, #tpu.memory_space<vmem>>, vector<1x1x32xf32>
    %37 = vector.shape_cast %36 : vector<1x1x32xf32> to vector<1x32xf32>
    %cst_47 = arith.constant dense<0.000000e+00> : vector<16x32xf32>
    %38 = tpu.matmul %19, %23, %cst_47 {dimension_numbers = #tpu.dot_dimension_numbers<[1], [0], [0], [1], [0, 0, 1, 1], [], []>} : vector<16x32xf32>, vector<32x32xf32>, vector<16x32xf32> -> vector<16x32xf32>
    %39 = vector.broadcast %31 : vector<1x32xf32> to vector<16x32xf32>
    %40 = arith.addf %38, %39 : vector<16x32xf32>
    %cst_48 = arith.constant dense<0.000000e+00> : vector<16x32xf32>
    %41 = tpu.matmul %19, %25, %cst_48 {dimension_numbers = #tpu.dot_dimension_numbers<[1], [0], [0], [1], [0, 0, 1, 1], [], []>} : vector<16x32xf32>, vector<32x32xf32>, vector<16x32xf32> -> vector<16x32xf32>
    %42 = vector.broadcast %33 : vector<1x32xf32> to vector<16x32xf32>
    %43 = arith.addf %41, %42 : vector<16x32xf32>
    %cst_49 = arith.constant dense<0.000000e+00> : vector<16x32xf32>
    %44 = tpu.matmul %19, %27, %cst_49 {dimension_numbers = #tpu.dot_dimension_numbers<[1], [0], [0], [1], [0, 0, 1, 1], [], []>} : vector<16x32xf32>, vector<32x32xf32>, vector<16x32xf32> -> vector<16x32xf32>
    %45 = vector.broadcast %35 : vector<1x32xf32> to vector<16x32xf32>
    %46 = arith.addf %44, %45 : vector<16x32xf32>
    %cst_50 = arith.constant 0.000000e+00 : f32
    %47 = vector.broadcast %cst_50 : f32 to vector<16x32xf32>
    %c42 = arith.constant 42 : index
    %c0_51 = arith.constant 0 : index
    %c0_52 = arith.constant 0 : index
    %48 = vector.load %arg7[%c42, %c0_51, %c0_52] : memref<46x1x32xf32, #tpu.memory_space<vmem>>, vector<1x1x32xf32>
    %49 = vector.shape_cast %48 : vector<1x1x32xf32> to vector<1x32xf32>
    %50 = vector.broadcast %49 : vector<1x32xf32> to vector<16x32xf32>
    %51 = arith.mulf %40, %50 : vector<16x32xf32>
    %cst_53 = arith.constant dense<0.000000e+00> : vector<16x16xf32>
    %52 = tpu.matmul %51, %43, %cst_53 {dimension_numbers = #tpu.dot_dimension_numbers<[1], [1], [0], [0], [0, 0, 1, 0], [], []>} : vector<16x32xf32>, vector<16x32xf32>, vector<16x16xf32> -> vector<16x16xf32>
    %cst_54 = arith.constant 0.353553385 : f32
    %53 = vector.broadcast %cst_54 : f32 to vector<16x16xf32>
    %54 = arith.mulf %52, %53 : vector<16x16xf32>
    %55 = arith.addf %54, %20 : vector<16x16xf32>
    %cst_55 = arith.constant dense<0xFF800000> : vector<16xf32>
    %56 = vector.multi_reduction <maximumf>, %55, %cst_55 [1] : vector<16x16xf32> to vector<16xf32>
    %57 = vector.shape_cast %56 : vector<16xf32> to vector<16x1xf32>
    %58 = vector.broadcast %57 : vector<16x1xf32> to vector<16x16xf32>
    %59 = arith.subf %55, %58 : vector<16x16xf32>
    %60 = math.exp %59 : vector<16x16xf32>
    %cst_56 = arith.constant dense<0.000000e+00> : vector<16xf32>
    %61 = vector.multi_reduction <add>, %60, %cst_56 [1] : vector<16x16xf32> to vector<16xf32>
    %62 = vector.shape_cast %61 : vector<16xf32> to vector<16x1xf32>
    %63 = tpu.reciprocal %62 {approx = true} : vector<16x1xf32> -> vector<16x1xf32>
    %64 = vector.broadcast %63 : vector<16x1xf32> to vector<16x16xf32>
    %65 = arith.mulf %60, %64 : vector<16x16xf32>
    %66 = vector.broadcast %49 : vector<1x32xf32> to vector<16x32xf32>
    %67 = arith.mulf %46, %66 : vector<16x32xf32>
    %cst_57 = arith.constant dense<0.000000e+00> : vector<16x32xf32>
    %68 = tpu.matmul %65, %67, %cst_57 {dimension_numbers = #tpu.dot_dimension_numbers<[1], [0], [0], [1], [0, 0, 1, 1], [], []>} : vector<16x16xf32>, vector<16x32xf32>, vector<16x32xf32> -> vector<16x32xf32>
    %69 = arith.addf %47, %68 : vector<16x32xf32>
    %c43 = arith.constant 43 : index
    %c0_58 = arith.constant 0 : index
    %c0_59 = arith.constant 0 : index
    %70 = vector.load %arg7[%c43, %c0_58, %c0_59] : memref<46x1x32xf32, #tpu.memory_space<vmem>>, vector<1x1x32xf32>
    %71 = vector.shape_cast %70 : vector<1x1x32xf32> to vector<1x32xf32>
    %72 = vector.broadcast %71 : vector<1x32xf32> to vector<16x32xf32>
    %73 = arith.mulf %40, %72 : vector<16x32xf32>
    %cst_60 = arith.constant dense<0.000000e+00> : vector<16x16xf32>
    %74 = tpu.matmul %73, %43, %cst_60 {dimension_numbers = #tpu.dot_dimension_numbers<[1], [1], [0], [0], [0, 0, 1, 0], [], []>} : vector<16x32xf32>, vector<16x32xf32>, vector<16x16xf32> -> vector<16x16xf32>
    %cst_61 = arith.constant 0.353553385 : f32
    %75 = vector.broadcast %cst_61 : f32 to vector<16x16xf32>
    %76 = arith.mulf %74, %75 : vector<16x16xf32>
    %77 = arith.addf %76, %20 : vector<16x16xf32>
    %cst_62 = arith.constant dense<0xFF800000> : vector<16xf32>
    %78 = vector.multi_reduction <maximumf>, %77, %cst_62 [1] : vector<16x16xf32> to vector<16xf32>
    %79 = vector.shape_cast %78 : vector<16xf32> to vector<16x1xf32>
    %80 = vector.broadcast %79 : vector<16x1xf32> to vector<16x16xf32>
    %81 = arith.subf %77, %80 : vector<16x16xf32>
    %82 = math.exp %81 : vector<16x16xf32>
    %cst_63 = arith.constant dense<0.000000e+00> : vector<16xf32>
    %83 = vector.multi_reduction <add>, %82, %cst_63 [1] : vector<16x16xf32> to vector<16xf32>
    %84 = vector.shape_cast %83 : vector<16xf32> to vector<16x1xf32>
    %85 = tpu.reciprocal %84 {approx = true} : vector<16x1xf32> -> vector<16x1xf32>
    %86 = vector.broadcast %85 : vector<16x1xf32> to vector<16x16xf32>
    %87 = arith.mulf %82, %86 : vector<16x16xf32>
    %88 = vector.broadcast %71 : vector<1x32xf32> to vector<16x32xf32>
    %89 = arith.mulf %46, %88 : vector<16x32xf32>
    %cst_64 = arith.constant dense<0.000000e+00> : vector<16x32xf32>
    %90 = tpu.matmul %87, %89, %cst_64 {dimension_numbers = #tpu.dot_dimension_numbers<[1], [0], [0], [1], [0, 0, 1, 1], [], []>} : vector<16x16xf32>, vector<16x32xf32>, vector<16x32xf32> -> vector<16x32xf32>
    %91 = arith.addf %69, %90 : vector<16x32xf32>
    %c44 = arith.constant 44 : index
    %c0_65 = arith.constant 0 : index
    %c0_66 = arith.constant 0 : index
    %92 = vector.load %arg7[%c44, %c0_65, %c0_66] : memref<46x1x32xf32, #tpu.memory_space<vmem>>, vector<1x1x32xf32>
    %93 = vector.shape_cast %92 : vector<1x1x32xf32> to vector<1x32xf32>
    %94 = vector.broadcast %93 : vector<1x32xf32> to vector<16x32xf32>
    %95 = arith.mulf %40, %94 : vector<16x32xf32>
    %cst_67 = arith.constant dense<0.000000e+00> : vector<16x16xf32>
    %96 = tpu.matmul %95, %43, %cst_67 {dimension_numbers = #tpu.dot_dimension_numbers<[1], [1], [0], [0], [0, 0, 1, 0], [], []>} : vector<16x32xf32>, vector<16x32xf32>, vector<16x16xf32> -> vector<16x16xf32>
    %cst_68 = arith.constant 0.353553385 : f32
    %97 = vector.broadcast %cst_68 : f32 to vector<16x16xf32>
    %98 = arith.mulf %96, %97 : vector<16x16xf32>
    %99 = arith.addf %98, %20 : vector<16x16xf32>
    %cst_69 = arith.constant dense<0xFF800000> : vector<16xf32>
    %100 = vector.multi_reduction <maximumf>, %99, %cst_69 [1] : vector<16x16xf32> to vector<16xf32>
    %101 = vector.shape_cast %100 : vector<16xf32> to vector<16x1xf32>
    %102 = vector.broadcast %101 : vector<16x1xf32> to vector<16x16xf32>
    %103 = arith.subf %99, %102 : vector<16x16xf32>
    %104 = math.exp %103 : vector<16x16xf32>
    %cst_70 = arith.constant dense<0.000000e+00> : vector<16xf32>
    %105 = vector.multi_reduction <add>, %104, %cst_70 [1] : vector<16x16xf32> to vector<16xf32>
    %106 = vector.shape_cast %105 : vector<16xf32> to vector<16x1xf32>
    %107 = tpu.reciprocal %106 {approx = true} : vector<16x1xf32> -> vector<16x1xf32>
    %108 = vector.broadcast %107 : vector<16x1xf32> to vector<16x16xf32>
    %109 = arith.mulf %104, %108 : vector<16x16xf32>
    %110 = vector.broadcast %93 : vector<1x32xf32> to vector<16x32xf32>
    %111 = arith.mulf %46, %110 : vector<16x32xf32>
    %cst_71 = arith.constant dense<0.000000e+00> : vector<16x32xf32>
    %112 = tpu.matmul %109, %111, %cst_71 {dimension_numbers = #tpu.dot_dimension_numbers<[1], [0], [0], [1], [0, 0, 1, 1], [], []>} : vector<16x16xf32>, vector<16x32xf32>, vector<16x32xf32> -> vector<16x32xf32>
    %113 = arith.addf %91, %112 : vector<16x32xf32>
    %c45 = arith.constant 45 : index
    %c0_72 = arith.constant 0 : index
    %c0_73 = arith.constant 0 : index
    %114 = vector.load %arg7[%c45, %c0_72, %c0_73] : memref<46x1x32xf32, #tpu.memory_space<vmem>>, vector<1x1x32xf32>
    %115 = vector.shape_cast %114 : vector<1x1x32xf32> to vector<1x32xf32>
    %116 = vector.broadcast %115 : vector<1x32xf32> to vector<16x32xf32>
    %117 = arith.mulf %40, %116 : vector<16x32xf32>
    %cst_74 = arith.constant dense<0.000000e+00> : vector<16x16xf32>
    %118 = tpu.matmul %117, %43, %cst_74 {dimension_numbers = #tpu.dot_dimension_numbers<[1], [1], [0], [0], [0, 0, 1, 0], [], []>} : vector<16x32xf32>, vector<16x32xf32>, vector<16x16xf32> -> vector<16x16xf32>
    %cst_75 = arith.constant 0.353553385 : f32
    %119 = vector.broadcast %cst_75 : f32 to vector<16x16xf32>
    %120 = arith.mulf %118, %119 : vector<16x16xf32>
    %121 = arith.addf %120, %20 : vector<16x16xf32>
    %cst_76 = arith.constant dense<0xFF800000> : vector<16xf32>
    %122 = vector.multi_reduction <maximumf>, %121, %cst_76 [1] : vector<16x16xf32> to vector<16xf32>
    %123 = vector.shape_cast %122 : vector<16xf32> to vector<16x1xf32>
    %124 = vector.broadcast %123 : vector<16x1xf32> to vector<16x16xf32>
    %125 = arith.subf %121, %124 : vector<16x16xf32>
    %126 = math.exp %125 : vector<16x16xf32>
    %cst_77 = arith.constant dense<0.000000e+00> : vector<16xf32>
    %127 = vector.multi_reduction <add>, %126, %cst_77 [1] : vector<16x16xf32> to vector<16xf32>
    %128 = vector.shape_cast %127 : vector<16xf32> to vector<16x1xf32>
    %129 = tpu.reciprocal %128 {approx = true} : vector<16x1xf32> -> vector<16x1xf32>
    %130 = vector.broadcast %129 : vector<16x1xf32> to vector<16x16xf32>
    %131 = arith.mulf %126, %130 : vector<16x16xf32>
    %132 = vector.broadcast %115 : vector<1x32xf32> to vector<16x32xf32>
    %133 = arith.mulf %46, %132 : vector<16x32xf32>
    %cst_78 = arith.constant dense<0.000000e+00> : vector<16x32xf32>
    %134 = tpu.matmul %131, %133, %cst_78 {dimension_numbers = #tpu.dot_dimension_numbers<[1], [0], [0], [1], [0, 0, 1, 1], [], []>} : vector<16x16xf32>, vector<16x32xf32>, vector<16x32xf32> -> vector<16x32xf32>
    %135 = arith.addf %113, %134 : vector<16x32xf32>
    %cst_79 = arith.constant dense<0.000000e+00> : vector<16x32xf32>
    %136 = tpu.matmul %135, %29, %cst_79 {dimension_numbers = #tpu.dot_dimension_numbers<[1], [0], [0], [1], [0, 0, 1, 1], [], []>} : vector<16x32xf32>, vector<32x32xf32>, vector<16x32xf32> -> vector<16x32xf32>
    %137 = vector.broadcast %37 : vector<1x32xf32> to vector<16x32xf32>
    %138 = arith.addf %136, %137 : vector<16x32xf32>
    %139 = arith.addf %19, %138 : vector<16x32xf32>
    %c12 = arith.constant 12 : index
    %c0_80 = arith.constant 0 : index
    %c0_81 = arith.constant 0 : index
    %140 = vector.load %arg7[%c12, %c0_80, %c0_81] : memref<46x1x32xf32, #tpu.memory_space<vmem>>, vector<1x1x32xf32>
    %141 = vector.shape_cast %140 : vector<1x1x32xf32> to vector<1x32xf32>
    %c16 = arith.constant 16 : index
    %c0_82 = arith.constant 0 : index
    %c0_83 = arith.constant 0 : index
    %142 = vector.load %arg7[%c16, %c0_82, %c0_83] : memref<46x1x32xf32, #tpu.memory_space<vmem>>, vector<1x1x32xf32>
    %143 = vector.shape_cast %142 : vector<1x1x32xf32> to vector<1x32xf32>
    %cst_84 = arith.constant dense<0.000000e+00> : vector<16xf32>
    %144 = vector.multi_reduction <add>, %139, %cst_84 [1] : vector<16x32xf32> to vector<16xf32>
    %145 = vector.shape_cast %144 : vector<16xf32> to vector<16x1xf32>
    %cst_85 = arith.constant 3.200000e+01 : f32
    %146 = vector.broadcast %cst_85 : f32 to vector<16x1xf32>
    %147 = arith.divf %145, %146 : vector<16x1xf32>
    %148 = vector.broadcast %147 : vector<16x1xf32> to vector<16x32xf32>
    %149 = arith.subf %139, %148 : vector<16x32xf32>
    %150 = arith.mulf %149, %149 : vector<16x32xf32>
    %cst_86 = arith.constant dense<0.000000e+00> : vector<16xf32>
    %151 = vector.multi_reduction <add>, %150, %cst_86 [1] : vector<16x32xf32> to vector<16xf32>
    %152 = vector.shape_cast %151 : vector<16xf32> to vector<16x1xf32>
    %cst_87 = arith.constant 3.200000e+01 : f32
    %153 = vector.broadcast %cst_87 : f32 to vector<16x1xf32>
    %154 = arith.divf %152, %153 : vector<16x1xf32>
    %cst_88 = arith.constant 9.99999974E-6 : f32
    %155 = vector.broadcast %cst_88 : f32 to vector<16x1xf32>
    %156 = arith.addf %154, %155 : vector<16x1xf32>
    %157 = math.rsqrt %156 : vector<16x1xf32>
    %158 = vector.broadcast %157 : vector<16x1xf32> to vector<16x32xf32>
    %159 = arith.mulf %149, %158 : vector<16x32xf32>
    %160 = vector.broadcast %141 : vector<1x32xf32> to vector<16x32xf32>
    %161 = arith.mulf %159, %160 : vector<16x32xf32>
    %162 = vector.broadcast %143 : vector<1x32xf32> to vector<16x32xf32>
    %163 = arith.addf %161, %162 : vector<16x32xf32>
    %c8 = arith.constant 8 : index
    %c0_89 = arith.constant 0 : index
    %c0_90 = arith.constant 0 : index
    %164 = vector.load %arg6[%c8, %c0_89, %c0_90] : memref<24x32x32xf32, #tpu.memory_space<vmem>>, vector<1x32x32xf32>
    %165 = vector.shape_cast %164 : vector<1x32x32xf32> to vector<32x32xf32>
    %cst_91 = arith.constant dense<0.000000e+00> : vector<16x32xf32>
    %166 = tpu.matmul %163, %165, %cst_91 {dimension_numbers = #tpu.dot_dimension_numbers<[1], [0], [0], [1], [0, 0, 1, 1], [], []>} : vector<16x32xf32>, vector<32x32xf32>, vector<16x32xf32> -> vector<16x32xf32>
    %c8_92 = arith.constant 8 : index
    %c0_93 = arith.constant 0 : index
    %c0_94 = arith.constant 0 : index
    %167 = vector.load %arg7[%c8_92, %c0_93, %c0_94] : memref<46x1x32xf32, #tpu.memory_space<vmem>>, vector<1x1x32xf32>
    %168 = vector.shape_cast %167 : vector<1x1x32xf32> to vector<1x32xf32>
    %169 = vector.broadcast %168 : vector<1x32xf32> to vector<16x32xf32>
    %170 = arith.addf %166, %169 : vector<16x32xf32>
    %cst_95 = arith.constant 5.000000e-01 : f32
    %171 = vector.broadcast %cst_95 : f32 to vector<16x32xf32>
    %172 = arith.mulf %171, %170 : vector<16x32xf32>
    %cst_96 = arith.constant 4.471500e-02 : f32
    %173 = vector.broadcast %cst_96 : f32 to vector<16x32xf32>
    %174 = arith.mulf %173, %170 : vector<16x32xf32>
    %175 = arith.mulf %174, %170 : vector<16x32xf32>
    %176 = arith.mulf %175, %170 : vector<16x32xf32>
    %177 = arith.addf %170, %176 : vector<16x32xf32>
    %cst_97 = arith.constant 0.797884583 : f32
    %178 = vector.broadcast %cst_97 : f32 to vector<16x32xf32>
    %179 = arith.mulf %178, %177 : vector<16x32xf32>
    %180 = math.tanh %179 : vector<16x32xf32>
    %cst_98 = arith.constant 1.000000e+00 : f32
    %181 = vector.broadcast %cst_98 : f32 to vector<16x32xf32>
    %182 = arith.addf %181, %180 : vector<16x32xf32>
    %183 = arith.mulf %172, %182 : vector<16x32xf32>
    %c10 = arith.constant 10 : index
    %c0_99 = arith.constant 0 : index
    %c0_100 = arith.constant 0 : index
    %184 = vector.load %arg6[%c10, %c0_99, %c0_100] : memref<24x32x32xf32, #tpu.memory_space<vmem>>, vector<1x32x32xf32>
    %185 = vector.shape_cast %184 : vector<1x32x32xf32> to vector<32x32xf32>
    %cst_101 = arith.constant dense<0.000000e+00> : vector<16x32xf32>
    %186 = tpu.matmul %183, %185, %cst_101 {dimension_numbers = #tpu.dot_dimension_numbers<[1], [0], [0], [1], [0, 0, 1, 1], [], []>} : vector<16x32xf32>, vector<32x32xf32>, vector<16x32xf32> -> vector<16x32xf32>
    %c10_102 = arith.constant 10 : index
    %c0_103 = arith.constant 0 : index
    %c0_104 = arith.constant 0 : index
    %187 = vector.load %arg7[%c10_102, %c0_103, %c0_104] : memref<46x1x32xf32, #tpu.memory_space<vmem>>, vector<1x1x32xf32>
    %188 = vector.shape_cast %187 : vector<1x1x32xf32> to vector<1x32xf32>
    %189 = vector.broadcast %188 : vector<1x32xf32> to vector<16x32xf32>
    %190 = arith.addf %186, %189 : vector<16x32xf32>
    %191 = arith.addf %163, %190 : vector<16x32xf32>
    %c13 = arith.constant 13 : index
    %c0_105 = arith.constant 0 : index
    %c0_106 = arith.constant 0 : index
    %192 = vector.load %arg7[%c13, %c0_105, %c0_106] : memref<46x1x32xf32, #tpu.memory_space<vmem>>, vector<1x1x32xf32>
    %193 = vector.shape_cast %192 : vector<1x1x32xf32> to vector<1x32xf32>
    %c17 = arith.constant 17 : index
    %c0_107 = arith.constant 0 : index
    %c0_108 = arith.constant 0 : index
    %194 = vector.load %arg7[%c17, %c0_107, %c0_108] : memref<46x1x32xf32, #tpu.memory_space<vmem>>, vector<1x1x32xf32>
    %195 = vector.shape_cast %194 : vector<1x1x32xf32> to vector<1x32xf32>
    %cst_109 = arith.constant dense<0.000000e+00> : vector<16xf32>
    %196 = vector.multi_reduction <add>, %191, %cst_109 [1] : vector<16x32xf32> to vector<16xf32>
    %197 = vector.shape_cast %196 : vector<16xf32> to vector<16x1xf32>
    %cst_110 = arith.constant 3.200000e+01 : f32
    %198 = vector.broadcast %cst_110 : f32 to vector<16x1xf32>
    %199 = arith.divf %197, %198 : vector<16x1xf32>
    %200 = vector.broadcast %199 : vector<16x1xf32> to vector<16x32xf32>
    %201 = arith.subf %191, %200 : vector<16x32xf32>
    %202 = arith.mulf %201, %201 : vector<16x32xf32>
    %cst_111 = arith.constant dense<0.000000e+00> : vector<16xf32>
    %203 = vector.multi_reduction <add>, %202, %cst_111 [1] : vector<16x32xf32> to vector<16xf32>
    %204 = vector.shape_cast %203 : vector<16xf32> to vector<16x1xf32>
    %cst_112 = arith.constant 3.200000e+01 : f32
    %205 = vector.broadcast %cst_112 : f32 to vector<16x1xf32>
    %206 = arith.divf %204, %205 : vector<16x1xf32>
    %cst_113 = arith.constant 9.99999974E-6 : f32
    %207 = vector.broadcast %cst_113 : f32 to vector<16x1xf32>
    %208 = arith.addf %206, %207 : vector<16x1xf32>
    %209 = math.rsqrt %208 : vector<16x1xf32>
    %210 = vector.broadcast %209 : vector<16x1xf32> to vector<16x32xf32>
    %211 = arith.mulf %201, %210 : vector<16x32xf32>
    %212 = vector.broadcast %193 : vector<1x32xf32> to vector<16x32xf32>
    %213 = arith.mulf %211, %212 : vector<16x32xf32>
    %214 = vector.broadcast %195 : vector<1x32xf32> to vector<16x32xf32>
    %215 = arith.addf %213, %214 : vector<16x32xf32>
    %c0_114 = arith.constant 0 : index
    %c0_115 = arith.constant 0 : index
    %c0_116 = arith.constant 0 : index
    %216 = vector.load %arg8[%c0_114, %c0_115, %c0_116] : memref<2x16x16xf32, #tpu.memory_space<vmem>>, vector<1x16x16xf32>
    %217 = vector.shape_cast %216 : vector<1x16x16xf32> to vector<16x16xf32>
    %c1_117 = arith.constant 1 : index
    %c0_118 = arith.constant 0 : index
    %c0_119 = arith.constant 0 : index
    %218 = vector.load %arg8[%c1_117, %c0_118, %c0_119] : memref<2x16x16xf32, #tpu.memory_space<vmem>>, vector<1x16x16xf32>
    %219 = vector.shape_cast %218 : vector<1x16x16xf32> to vector<16x16xf32>
    %cst_120 = arith.constant dense<0.000000e+00> : vector<16x32xf32>
    %220 = tpu.matmul %217, %215, %cst_120 {dimension_numbers = #tpu.dot_dimension_numbers<[1], [0], [0], [1], [0, 0, 1, 1], [], []>} : vector<16x16xf32>, vector<16x32xf32>, vector<16x32xf32> -> vector<16x32xf32>
    %cst_121 = arith.constant dense<0.000000e+00> : vector<16x32xf32>
    %221 = tpu.matmul %219, %215, %cst_121 {dimension_numbers = #tpu.dot_dimension_numbers<[1], [0], [0], [1], [0, 0, 1, 1], [], []>} : vector<16x16xf32>, vector<16x32xf32>, vector<16x32xf32> -> vector<16x32xf32>
    %c12_122 = arith.constant 12 : index
    %c0_123 = arith.constant 0 : index
    %c0_124 = arith.constant 0 : index
    %222 = vector.load %arg6[%c12_122, %c0_123, %c0_124] : memref<24x32x32xf32, #tpu.memory_space<vmem>>, vector<1x32x32xf32>
    %223 = vector.shape_cast %222 : vector<1x32x32xf32> to vector<32x32xf32>
    %cst_125 = arith.constant dense<0.000000e+00> : vector<16x32xf32>
    %224 = tpu.matmul %220, %223, %cst_125 {dimension_numbers = #tpu.dot_dimension_numbers<[1], [0], [0], [1], [0, 0, 1, 1], [], []>} : vector<16x32xf32>, vector<32x32xf32>, vector<16x32xf32> -> vector<16x32xf32>
    %c13_126 = arith.constant 13 : index
    %c0_127 = arith.constant 0 : index
    %c0_128 = arith.constant 0 : index
    %225 = vector.load %arg6[%c13_126, %c0_127, %c0_128] : memref<24x32x32xf32, #tpu.memory_space<vmem>>, vector<1x32x32xf32>
    %226 = vector.shape_cast %225 : vector<1x32x32xf32> to vector<32x32xf32>
    %cst_129 = arith.constant dense<0.000000e+00> : vector<16x32xf32>
    %227 = tpu.matmul %215, %226, %cst_129 {dimension_numbers = #tpu.dot_dimension_numbers<[1], [0], [0], [1], [0, 0, 1, 1], [], []>} : vector<16x32xf32>, vector<32x32xf32>, vector<16x32xf32> -> vector<16x32xf32>
    %228 = arith.addf %224, %227 : vector<16x32xf32>
    %c14 = arith.constant 14 : index
    %c0_130 = arith.constant 0 : index
    %c0_131 = arith.constant 0 : index
    %229 = vector.load %arg6[%c14, %c0_130, %c0_131] : memref<24x32x32xf32, #tpu.memory_space<vmem>>, vector<1x32x32xf32>
    %230 = vector.shape_cast %229 : vector<1x32x32xf32> to vector<32x32xf32>
    %cst_132 = arith.constant dense<0.000000e+00> : vector<16x32xf32>
    %231 = tpu.matmul %221, %230, %cst_132 {dimension_numbers = #tpu.dot_dimension_numbers<[1], [0], [0], [1], [0, 0, 1, 1], [], []>} : vector<16x32xf32>, vector<32x32xf32>, vector<16x32xf32> -> vector<16x32xf32>
    %232 = arith.addf %228, %231 : vector<16x32xf32>
    %c20 = arith.constant 20 : index
    %c0_133 = arith.constant 0 : index
    %c0_134 = arith.constant 0 : index
    %233 = vector.load %arg7[%c20, %c0_133, %c0_134] : memref<46x1x32xf32, #tpu.memory_space<vmem>>, vector<1x1x32xf32>
    %234 = vector.shape_cast %233 : vector<1x1x32xf32> to vector<1x32xf32>
    %235 = vector.broadcast %234 : vector<1x32xf32> to vector<16x32xf32>
    %236 = arith.addf %232, %235 : vector<16x32xf32>
    %cst_135 = arith.constant 0.000000e+00 : f32
    %237 = vector.broadcast %cst_135 : f32 to vector<16x32xf32>
    %238 = arith.cmpf ogt, %236, %237 : vector<16x32xf32>
    %cst_136 = arith.constant 0.000000e+00 : f32
    %239 = vector.broadcast %cst_136 : f32 to vector<16x32xf32>
    %240 = arith.minimumf %236, %239 : vector<16x32xf32>
    %241 = math.exp %240 : vector<16x32xf32>
    %cst_137 = arith.constant 1.000000e+00 : f32
    %242 = vector.broadcast %cst_137 : f32 to vector<16x32xf32>
    %243 = arith.subf %241, %242 : vector<16x32xf32>
    %244 = arith.select %238, %236, %243 : vector<16x32xi1>, vector<16x32xf32>
    %cst_138 = arith.constant dense<0.000000e+00> : vector<16x32xf32>
    %245 = tpu.matmul %217, %244, %cst_138 {dimension_numbers = #tpu.dot_dimension_numbers<[1], [0], [0], [1], [0, 0, 1, 1], [], []>} : vector<16x16xf32>, vector<16x32xf32>, vector<16x32xf32> -> vector<16x32xf32>
    %c0_139 = arith.constant 0 : index
    %c0_140 = arith.constant 0 : index
    %c0_141 = arith.constant 0 : index
    %246 = vector.load %arg15[%c0_139, %c0_140, %c0_141] : memref<2x16x1xf32, #tpu.memory_space<vmem>>, vector<1x16x1xf32>
    %247 = vector.shape_cast %246 : vector<1x16x1xf32> to vector<16x1xf32>
    %248 = vector.broadcast %247 : vector<16x1xf32> to vector<16x32xf32>
    %249 = arith.addf %245, %248 : vector<16x32xf32>
    %cst_142 = arith.constant dense<0.000000e+00> : vector<16x32xf32>
    %250 = tpu.matmul %219, %244, %cst_142 {dimension_numbers = #tpu.dot_dimension_numbers<[1], [0], [0], [1], [0, 0, 1, 1], [], []>} : vector<16x16xf32>, vector<16x32xf32>, vector<16x32xf32> -> vector<16x32xf32>
    %c1_143 = arith.constant 1 : index
    %c0_144 = arith.constant 0 : index
    %c0_145 = arith.constant 0 : index
    %251 = vector.load %arg15[%c1_143, %c0_144, %c0_145] : memref<2x16x1xf32, #tpu.memory_space<vmem>>, vector<1x16x1xf32>
    %252 = vector.shape_cast %251 : vector<1x16x1xf32> to vector<16x1xf32>
    %253 = vector.broadcast %252 : vector<16x1xf32> to vector<16x32xf32>
    %254 = arith.addf %250, %253 : vector<16x32xf32>
    %255 = arith.maximumf %249, %244 : vector<16x32xf32>
    %256 = arith.maximumf %255, %254 : vector<16x32xf32>
    %c0_146 = arith.constant 0 : index
    %c0_147 = arith.constant 0 : index
    %257 = vector.load %arg14[%c0_146, %c0_147] : memref<8x16xf32, #tpu.memory_space<vmem>>, vector<8x16xf32>
    %cst_148 = arith.constant dense<0.000000e+00> : vector<8x32xf32>
    %258 = tpu.matmul %257, %256, %cst_148 {dimension_numbers = #tpu.dot_dimension_numbers<[1], [0], [0], [1], [0, 0, 1, 1], [], []>} : vector<8x16xf32>, vector<16x32xf32>, vector<8x32xf32> -> vector<8x32xf32>
    %c4 = arith.constant 4 : index
    %c0_149 = arith.constant 0 : index
    %c0_150 = arith.constant 0 : index
    %259 = vector.load %arg6[%c4, %c0_149, %c0_150] : memref<24x32x32xf32, #tpu.memory_space<vmem>>, vector<1x32x32xf32>
    %260 = vector.shape_cast %259 : vector<1x32x32xf32> to vector<32x32xf32>
    %c5 = arith.constant 5 : index
    %c0_151 = arith.constant 0 : index
    %c0_152 = arith.constant 0 : index
    %261 = vector.load %arg6[%c5, %c0_151, %c0_152] : memref<24x32x32xf32, #tpu.memory_space<vmem>>, vector<1x32x32xf32>
    %262 = vector.shape_cast %261 : vector<1x32x32xf32> to vector<32x32xf32>
    %c6 = arith.constant 6 : index
    %c0_153 = arith.constant 0 : index
    %c0_154 = arith.constant 0 : index
    %263 = vector.load %arg6[%c6, %c0_153, %c0_154] : memref<24x32x32xf32, #tpu.memory_space<vmem>>, vector<1x32x32xf32>
    %264 = vector.shape_cast %263 : vector<1x32x32xf32> to vector<32x32xf32>
    %c7 = arith.constant 7 : index
    %c0_155 = arith.constant 0 : index
    %c0_156 = arith.constant 0 : index
    %265 = vector.load %arg6[%c7, %c0_155, %c0_156] : memref<24x32x32xf32, #tpu.memory_space<vmem>>, vector<1x32x32xf32>
    %266 = vector.shape_cast %265 : vector<1x32x32xf32> to vector<32x32xf32>
    %c4_157 = arith.constant 4 : index
    %c0_158 = arith.constant 0 : index
    %c0_159 = arith.constant 0 : index
    %267 = vector.load %arg7[%c4_157, %c0_158, %c0_159] : memref<46x1x32xf32, #tpu.memory_space<vmem>>, vector<1x1x32xf32>
    %268 = vector.shape_cast %267 : vector<1x1x32xf32> to vector<1x32xf32>
    %c5_160 = arith.constant 5 : index
    %c0_161 = arith.constant 0 : index
    %c0_162 = arith.constant 0 : index
    %269 = vector.load %arg7[%c5_160, %c0_161, %c0_162] : memref<46x1x32xf32, #tpu.memory_space<vmem>>, vector<1x1x32xf32>
    %270 = vector.shape_cast %269 : vector<1x1x32xf32> to vector<1x32xf32>
    %c6_163 = arith.constant 6 : index
    %c0_164 = arith.constant 0 : index
    %c0_165 = arith.constant 0 : index
    %271 = vector.load %arg7[%c6_163, %c0_164, %c0_165] : memref<46x1x32xf32, #tpu.memory_space<vmem>>, vector<1x1x32xf32>
    %272 = vector.shape_cast %271 : vector<1x1x32xf32> to vector<1x32xf32>
    %c7_166 = arith.constant 7 : index
    %c0_167 = arith.constant 0 : index
    %c0_168 = arith.constant 0 : index
    %273 = vector.load %arg7[%c7_166, %c0_167, %c0_168] : memref<46x1x32xf32, #tpu.memory_space<vmem>>, vector<1x1x32xf32>
    %274 = vector.shape_cast %273 : vector<1x1x32xf32> to vector<1x32xf32>
    %cst_169 = arith.constant dense<0.000000e+00> : vector<8x32xf32>
    %275 = tpu.matmul %258, %260, %cst_169 {dimension_numbers = #tpu.dot_dimension_numbers<[1], [0], [0], [1], [0, 0, 1, 1], [], []>} : vector<8x32xf32>, vector<32x32xf32>, vector<8x32xf32> -> vector<8x32xf32>
    %276 = vector.broadcast %268 : vector<1x32xf32> to vector<8x32xf32>
    %277 = arith.addf %275, %276 : vector<8x32xf32>
    %cst_170 = arith.constant dense<0.000000e+00> : vector<8x32xf32>
    %278 = tpu.matmul %258, %262, %cst_170 {dimension_numbers = #tpu.dot_dimension_numbers<[1], [0], [0], [1], [0, 0, 1, 1], [], []>} : vector<8x32xf32>, vector<32x32xf32>, vector<8x32xf32> -> vector<8x32xf32>
    %279 = vector.broadcast %270 : vector<1x32xf32> to vector<8x32xf32>
    %280 = arith.addf %278, %279 : vector<8x32xf32>
    %cst_171 = arith.constant dense<0.000000e+00> : vector<8x32xf32>
    %281 = tpu.matmul %258, %264, %cst_171 {dimension_numbers = #tpu.dot_dimension_numbers<[1], [0], [0], [1], [0, 0, 1, 1], [], []>} : vector<8x32xf32>, vector<32x32xf32>, vector<8x32xf32> -> vector<8x32xf32>
    %282 = vector.broadcast %272 : vector<1x32xf32> to vector<8x32xf32>
    %283 = arith.addf %281, %282 : vector<8x32xf32>
    %cst_172 = arith.constant 0.000000e+00 : f32
    %284 = vector.broadcast %cst_172 : f32 to vector<8x32xf32>
    %c42_173 = arith.constant 42 : index
    %c0_174 = arith.constant 0 : index
    %c0_175 = arith.constant 0 : index
    %285 = vector.load %arg7[%c42_173, %c0_174, %c0_175] : memref<46x1x32xf32, #tpu.memory_space<vmem>>, vector<1x1x32xf32>
    %286 = vector.shape_cast %285 : vector<1x1x32xf32> to vector<1x32xf32>
    %287 = vector.broadcast %286 : vector<1x32xf32> to vector<8x32xf32>
    %288 = arith.mulf %277, %287 : vector<8x32xf32>
    %cst_176 = arith.constant dense<0.000000e+00> : vector<8x8xf32>
    %289 = tpu.matmul %288, %280, %cst_176 {dimension_numbers = #tpu.dot_dimension_numbers<[1], [1], [0], [0], [0, 0, 1, 0], [], []>} : vector<8x32xf32>, vector<8x32xf32>, vector<8x8xf32> -> vector<8x8xf32>
    %cst_177 = arith.constant 0.353553385 : f32
    %290 = vector.broadcast %cst_177 : f32 to vector<8x8xf32>
    %291 = arith.mulf %289, %290 : vector<8x8xf32>
    %292 = arith.addf %291, %21 : vector<8x8xf32>
    %cst_178 = arith.constant dense<0xFF800000> : vector<8xf32>
    %293 = vector.multi_reduction <maximumf>, %292, %cst_178 [1] : vector<8x8xf32> to vector<8xf32>
    %294 = vector.shape_cast %293 : vector<8xf32> to vector<8x1xf32>
    %295 = vector.broadcast %294 : vector<8x1xf32> to vector<8x8xf32>
    %296 = arith.subf %292, %295 : vector<8x8xf32>
    %297 = math.exp %296 : vector<8x8xf32>
    %cst_179 = arith.constant dense<0.000000e+00> : vector<8xf32>
    %298 = vector.multi_reduction <add>, %297, %cst_179 [1] : vector<8x8xf32> to vector<8xf32>
    %299 = vector.shape_cast %298 : vector<8xf32> to vector<8x1xf32>
    %300 = tpu.reciprocal %299 {approx = true} : vector<8x1xf32> -> vector<8x1xf32>
    %301 = vector.broadcast %300 : vector<8x1xf32> to vector<8x8xf32>
    %302 = arith.mulf %297, %301 : vector<8x8xf32>
    %303 = vector.broadcast %286 : vector<1x32xf32> to vector<8x32xf32>
    %304 = arith.mulf %283, %303 : vector<8x32xf32>
    %cst_180 = arith.constant dense<0.000000e+00> : vector<8x32xf32>
    %305 = tpu.matmul %302, %304, %cst_180 {dimension_numbers = #tpu.dot_dimension_numbers<[1], [0], [0], [1], [0, 0, 1, 1], [], []>} : vector<8x8xf32>, vector<8x32xf32>, vector<8x32xf32> -> vector<8x32xf32>
    %306 = arith.addf %284, %305 : vector<8x32xf32>
    %c43_181 = arith.constant 43 : index
    %c0_182 = arith.constant 0 : index
    %c0_183 = arith.constant 0 : index
    %307 = vector.load %arg7[%c43_181, %c0_182, %c0_183] : memref<46x1x32xf32, #tpu.memory_space<vmem>>, vector<1x1x32xf32>
    %308 = vector.shape_cast %307 : vector<1x1x32xf32> to vector<1x32xf32>
    %309 = vector.broadcast %308 : vector<1x32xf32> to vector<8x32xf32>
    %310 = arith.mulf %277, %309 : vector<8x32xf32>
    %cst_184 = arith.constant dense<0.000000e+00> : vector<8x8xf32>
    %311 = tpu.matmul %310, %280, %cst_184 {dimension_numbers = #tpu.dot_dimension_numbers<[1], [1], [0], [0], [0, 0, 1, 0], [], []>} : vector<8x32xf32>, vector<8x32xf32>, vector<8x8xf32> -> vector<8x8xf32>
    %cst_185 = arith.constant 0.353553385 : f32
    %312 = vector.broadcast %cst_185 : f32 to vector<8x8xf32>
    %313 = arith.mulf %311, %312 : vector<8x8xf32>
    %314 = arith.addf %313, %21 : vector<8x8xf32>
    %cst_186 = arith.constant dense<0xFF800000> : vector<8xf32>
    %315 = vector.multi_reduction <maximumf>, %314, %cst_186 [1] : vector<8x8xf32> to vector<8xf32>
    %316 = vector.shape_cast %315 : vector<8xf32> to vector<8x1xf32>
    %317 = vector.broadcast %316 : vector<8x1xf32> to vector<8x8xf32>
    %318 = arith.subf %314, %317 : vector<8x8xf32>
    %319 = math.exp %318 : vector<8x8xf32>
    %cst_187 = arith.constant dense<0.000000e+00> : vector<8xf32>
    %320 = vector.multi_reduction <add>, %319, %cst_187 [1] : vector<8x8xf32> to vector<8xf32>
    %321 = vector.shape_cast %320 : vector<8xf32> to vector<8x1xf32>
    %322 = tpu.reciprocal %321 {approx = true} : vector<8x1xf32> -> vector<8x1xf32>
    %323 = vector.broadcast %322 : vector<8x1xf32> to vector<8x8xf32>
    %324 = arith.mulf %319, %323 : vector<8x8xf32>
    %325 = vector.broadcast %308 : vector<1x32xf32> to vector<8x32xf32>
    %326 = arith.mulf %283, %325 : vector<8x32xf32>
    %cst_188 = arith.constant dense<0.000000e+00> : vector<8x32xf32>
    %327 = tpu.matmul %324, %326, %cst_188 {dimension_numbers = #tpu.dot_dimension_numbers<[1], [0], [0], [1], [0, 0, 1, 1], [], []>} : vector<8x8xf32>, vector<8x32xf32>, vector<8x32xf32> -> vector<8x32xf32>
    %328 = arith.addf %306, %327 : vector<8x32xf32>
    %c44_189 = arith.constant 44 : index
    %c0_190 = arith.constant 0 : index
    %c0_191 = arith.constant 0 : index
    %329 = vector.load %arg7[%c44_189, %c0_190, %c0_191] : memref<46x1x32xf32, #tpu.memory_space<vmem>>, vector<1x1x32xf32>
    %330 = vector.shape_cast %329 : vector<1x1x32xf32> to vector<1x32xf32>
    %331 = vector.broadcast %330 : vector<1x32xf32> to vector<8x32xf32>
    %332 = arith.mulf %277, %331 : vector<8x32xf32>
    %cst_192 = arith.constant dense<0.000000e+00> : vector<8x8xf32>
    %333 = tpu.matmul %332, %280, %cst_192 {dimension_numbers = #tpu.dot_dimension_numbers<[1], [1], [0], [0], [0, 0, 1, 0], [], []>} : vector<8x32xf32>, vector<8x32xf32>, vector<8x8xf32> -> vector<8x8xf32>
    %cst_193 = arith.constant 0.353553385 : f32
    %334 = vector.broadcast %cst_193 : f32 to vector<8x8xf32>
    %335 = arith.mulf %333, %334 : vector<8x8xf32>
    %336 = arith.addf %335, %21 : vector<8x8xf32>
    %cst_194 = arith.constant dense<0xFF800000> : vector<8xf32>
    %337 = vector.multi_reduction <maximumf>, %336, %cst_194 [1] : vector<8x8xf32> to vector<8xf32>
    %338 = vector.shape_cast %337 : vector<8xf32> to vector<8x1xf32>
    %339 = vector.broadcast %338 : vector<8x1xf32> to vector<8x8xf32>
    %340 = arith.subf %336, %339 : vector<8x8xf32>
    %341 = math.exp %340 : vector<8x8xf32>
    %cst_195 = arith.constant dense<0.000000e+00> : vector<8xf32>
    %342 = vector.multi_reduction <add>, %341, %cst_195 [1] : vector<8x8xf32> to vector<8xf32>
    %343 = vector.shape_cast %342 : vector<8xf32> to vector<8x1xf32>
    %344 = tpu.reciprocal %343 {approx = true} : vector<8x1xf32> -> vector<8x1xf32>
    %345 = vector.broadcast %344 : vector<8x1xf32> to vector<8x8xf32>
    %346 = arith.mulf %341, %345 : vector<8x8xf32>
    %347 = vector.broadcast %330 : vector<1x32xf32> to vector<8x32xf32>
    %348 = arith.mulf %283, %347 : vector<8x32xf32>
    %cst_196 = arith.constant dense<0.000000e+00> : vector<8x32xf32>
    %349 = tpu.matmul %346, %348, %cst_196 {dimension_numbers = #tpu.dot_dimension_numbers<[1], [0], [0], [1], [0, 0, 1, 1], [], []>} : vector<8x8xf32>, vector<8x32xf32>, vector<8x32xf32> -> vector<8x32xf32>
    %350 = arith.addf %328, %349 : vector<8x32xf32>
    %c45_197 = arith.constant 45 : index
    %c0_198 = arith.constant 0 : index
    %c0_199 = arith.constant 0 : index
    %351 = vector.load %arg7[%c45_197, %c0_198, %c0_199] : memref<46x1x32xf32, #tpu.memory_space<vmem>>, vector<1x1x32xf32>
    %352 = vector.shape_cast %351 : vector<1x1x32xf32> to vector<1x32xf32>
    %353 = vector.broadcast %352 : vector<1x32xf32> to vector<8x32xf32>
    %354 = arith.mulf %277, %353 : vector<8x32xf32>
    %cst_200 = arith.constant dense<0.000000e+00> : vector<8x8xf32>
    %355 = tpu.matmul %354, %280, %cst_200 {dimension_numbers = #tpu.dot_dimension_numbers<[1], [1], [0], [0], [0, 0, 1, 0], [], []>} : vector<8x32xf32>, vector<8x32xf32>, vector<8x8xf32> -> vector<8x8xf32>
    %cst_201 = arith.constant 0.353553385 : f32
    %356 = vector.broadcast %cst_201 : f32 to vector<8x8xf32>
    %357 = arith.mulf %355, %356 : vector<8x8xf32>
    %358 = arith.addf %357, %21 : vector<8x8xf32>
    %cst_202 = arith.constant dense<0xFF800000> : vector<8xf32>
    %359 = vector.multi_reduction <maximumf>, %358, %cst_202 [1] : vector<8x8xf32> to vector<8xf32>
    %360 = vector.shape_cast %359 : vector<8xf32> to vector<8x1xf32>
    %361 = vector.broadcast %360 : vector<8x1xf32> to vector<8x8xf32>
    %362 = arith.subf %358, %361 : vector<8x8xf32>
    %363 = math.exp %362 : vector<8x8xf32>
    %cst_203 = arith.constant dense<0.000000e+00> : vector<8xf32>
    %364 = vector.multi_reduction <add>, %363, %cst_203 [1] : vector<8x8xf32> to vector<8xf32>
    %365 = vector.shape_cast %364 : vector<8xf32> to vector<8x1xf32>
    %366 = tpu.reciprocal %365 {approx = true} : vector<8x1xf32> -> vector<8x1xf32>
    %367 = vector.broadcast %366 : vector<8x1xf32> to vector<8x8xf32>
    %368 = arith.mulf %363, %367 : vector<8x8xf32>
    %369 = vector.broadcast %352 : vector<1x32xf32> to vector<8x32xf32>
    %370 = arith.mulf %283, %369 : vector<8x32xf32>
    %cst_204 = arith.constant dense<0.000000e+00> : vector<8x32xf32>
    %371 = tpu.matmul %368, %370, %cst_204 {dimension_numbers = #tpu.dot_dimension_numbers<[1], [0], [0], [1], [0, 0, 1, 1], [], []>} : vector<8x8xf32>, vector<8x32xf32>, vector<8x32xf32> -> vector<8x32xf32>
    %372 = arith.addf %350, %371 : vector<8x32xf32>
    %cst_205 = arith.constant dense<0.000000e+00> : vector<8x32xf32>
    %373 = tpu.matmul %372, %266, %cst_205 {dimension_numbers = #tpu.dot_dimension_numbers<[1], [0], [0], [1], [0, 0, 1, 1], [], []>} : vector<8x32xf32>, vector<32x32xf32>, vector<8x32xf32> -> vector<8x32xf32>
    %374 = vector.broadcast %274 : vector<1x32xf32> to vector<8x32xf32>
    %375 = arith.addf %373, %374 : vector<8x32xf32>
    %376 = arith.addf %258, %375 : vector<8x32xf32>
    %c14_206 = arith.constant 14 : index
    %c0_207 = arith.constant 0 : index
    %c0_208 = arith.constant 0 : index
    %377 = vector.load %arg7[%c14_206, %c0_207, %c0_208] : memref<46x1x32xf32, #tpu.memory_space<vmem>>, vector<1x1x32xf32>
    %378 = vector.shape_cast %377 : vector<1x1x32xf32> to vector<1x32xf32>
    %c18 = arith.constant 18 : index
    %c0_209 = arith.constant 0 : index
    %c0_210 = arith.constant 0 : index
    %379 = vector.load %arg7[%c18, %c0_209, %c0_210] : memref<46x1x32xf32, #tpu.memory_space<vmem>>, vector<1x1x32xf32>
    %380 = vector.shape_cast %379 : vector<1x1x32xf32> to vector<1x32xf32>
    %cst_211 = arith.constant dense<0.000000e+00> : vector<8xf32>
    %381 = vector.multi_reduction <add>, %376, %cst_211 [1] : vector<8x32xf32> to vector<8xf32>
    %382 = vector.shape_cast %381 : vector<8xf32> to vector<8x1xf32>
    %cst_212 = arith.constant 3.200000e+01 : f32
    %383 = vector.broadcast %cst_212 : f32 to vector<8x1xf32>
    %384 = arith.divf %382, %383 : vector<8x1xf32>
    %385 = vector.broadcast %384 : vector<8x1xf32> to vector<8x32xf32>
    %386 = arith.subf %376, %385 : vector<8x32xf32>
    %387 = arith.mulf %386, %386 : vector<8x32xf32>
    %cst_213 = arith.constant dense<0.000000e+00> : vector<8xf32>
    %388 = vector.multi_reduction <add>, %387, %cst_213 [1] : vector<8x32xf32> to vector<8xf32>
    %389 = vector.shape_cast %388 : vector<8xf32> to vector<8x1xf32>
    %cst_214 = arith.constant 3.200000e+01 : f32
    %390 = vector.broadcast %cst_214 : f32 to vector<8x1xf32>
    %391 = arith.divf %389, %390 : vector<8x1xf32>
    %cst_215 = arith.constant 9.99999974E-6 : f32
    %392 = vector.broadcast %cst_215 : f32 to vector<8x1xf32>
    %393 = arith.addf %391, %392 : vector<8x1xf32>
    %394 = math.rsqrt %393 : vector<8x1xf32>
    %395 = vector.broadcast %394 : vector<8x1xf32> to vector<8x32xf32>
    %396 = arith.mulf %386, %395 : vector<8x32xf32>
    %397 = vector.broadcast %378 : vector<1x32xf32> to vector<8x32xf32>
    %398 = arith.mulf %396, %397 : vector<8x32xf32>
    %399 = vector.broadcast %380 : vector<1x32xf32> to vector<8x32xf32>
    %400 = arith.addf %398, %399 : vector<8x32xf32>
    %c9 = arith.constant 9 : index
    %c0_216 = arith.constant 0 : index
    %c0_217 = arith.constant 0 : index
    %401 = vector.load %arg6[%c9, %c0_216, %c0_217] : memref<24x32x32xf32, #tpu.memory_space<vmem>>, vector<1x32x32xf32>
    %402 = vector.shape_cast %401 : vector<1x32x32xf32> to vector<32x32xf32>
    %cst_218 = arith.constant dense<0.000000e+00> : vector<8x32xf32>
    %403 = tpu.matmul %400, %402, %cst_218 {dimension_numbers = #tpu.dot_dimension_numbers<[1], [0], [0], [1], [0, 0, 1, 1], [], []>} : vector<8x32xf32>, vector<32x32xf32>, vector<8x32xf32> -> vector<8x32xf32>
    %c9_219 = arith.constant 9 : index
    %c0_220 = arith.constant 0 : index
    %c0_221 = arith.constant 0 : index
    %404 = vector.load %arg7[%c9_219, %c0_220, %c0_221] : memref<46x1x32xf32, #tpu.memory_space<vmem>>, vector<1x1x32xf32>
    %405 = vector.shape_cast %404 : vector<1x1x32xf32> to vector<1x32xf32>
    %406 = vector.broadcast %405 : vector<1x32xf32> to vector<8x32xf32>
    %407 = arith.addf %403, %406 : vector<8x32xf32>
    %cst_222 = arith.constant 5.000000e-01 : f32
    %408 = vector.broadcast %cst_222 : f32 to vector<8x32xf32>
    %409 = arith.mulf %408, %407 : vector<8x32xf32>
    %cst_223 = arith.constant 4.471500e-02 : f32
    %410 = vector.broadcast %cst_223 : f32 to vector<8x32xf32>
    %411 = arith.mulf %410, %407 : vector<8x32xf32>
    %412 = arith.mulf %411, %407 : vector<8x32xf32>
    %413 = arith.mulf %412, %407 : vector<8x32xf32>
    %414 = arith.addf %407, %413 : vector<8x32xf32>
    %cst_224 = arith.constant 0.797884583 : f32
    %415 = vector.broadcast %cst_224 : f32 to vector<8x32xf32>
    %416 = arith.mulf %415, %414 : vector<8x32xf32>
    %417 = math.tanh %416 : vector<8x32xf32>
    %cst_225 = arith.constant 1.000000e+00 : f32
    %418 = vector.broadcast %cst_225 : f32 to vector<8x32xf32>
    %419 = arith.addf %418, %417 : vector<8x32xf32>
    %420 = arith.mulf %409, %419 : vector<8x32xf32>
    %c11 = arith.constant 11 : index
    %c0_226 = arith.constant 0 : index
    %c0_227 = arith.constant 0 : index
    %421 = vector.load %arg6[%c11, %c0_226, %c0_227] : memref<24x32x32xf32, #tpu.memory_space<vmem>>, vector<1x32x32xf32>
    %422 = vector.shape_cast %421 : vector<1x32x32xf32> to vector<32x32xf32>
    %cst_228 = arith.constant dense<0.000000e+00> : vector<8x32xf32>
    %423 = tpu.matmul %420, %422, %cst_228 {dimension_numbers = #tpu.dot_dimension_numbers<[1], [0], [0], [1], [0, 0, 1, 1], [], []>} : vector<8x32xf32>, vector<32x32xf32>, vector<8x32xf32> -> vector<8x32xf32>
    %c11_229 = arith.constant 11 : index
    %c0_230 = arith.constant 0 : index
    %c0_231 = arith.constant 0 : index
    %424 = vector.load %arg7[%c11_229, %c0_230, %c0_231] : memref<46x1x32xf32, #tpu.memory_space<vmem>>, vector<1x1x32xf32>
    %425 = vector.shape_cast %424 : vector<1x1x32xf32> to vector<1x32xf32>
    %426 = vector.broadcast %425 : vector<1x32xf32> to vector<8x32xf32>
    %427 = arith.addf %423, %426 : vector<8x32xf32>
    %428 = arith.addf %400, %427 : vector<8x32xf32>
    %c15 = arith.constant 15 : index
    %c0_232 = arith.constant 0 : index
    %c0_233 = arith.constant 0 : index
    %429 = vector.load %arg7[%c15, %c0_232, %c0_233] : memref<46x1x32xf32, #tpu.memory_space<vmem>>, vector<1x1x32xf32>
    %430 = vector.shape_cast %429 : vector<1x1x32xf32> to vector<1x32xf32>
    %c19 = arith.constant 19 : index
    %c0_234 = arith.constant 0 : index
    %c0_235 = arith.constant 0 : index
    %431 = vector.load %arg7[%c19, %c0_234, %c0_235] : memref<46x1x32xf32, #tpu.memory_space<vmem>>, vector<1x1x32xf32>
    %432 = vector.shape_cast %431 : vector<1x1x32xf32> to vector<1x32xf32>
    %cst_236 = arith.constant dense<0.000000e+00> : vector<8xf32>
    %433 = vector.multi_reduction <add>, %428, %cst_236 [1] : vector<8x32xf32> to vector<8xf32>
    %434 = vector.shape_cast %433 : vector<8xf32> to vector<8x1xf32>
    %cst_237 = arith.constant 3.200000e+01 : f32
    %435 = vector.broadcast %cst_237 : f32 to vector<8x1xf32>
    %436 = arith.divf %434, %435 : vector<8x1xf32>
    %437 = vector.broadcast %436 : vector<8x1xf32> to vector<8x32xf32>
    %438 = arith.subf %428, %437 : vector<8x32xf32>
    %439 = arith.mulf %438, %438 : vector<8x32xf32>
    %cst_238 = arith.constant dense<0.000000e+00> : vector<8xf32>
    %440 = vector.multi_reduction <add>, %439, %cst_238 [1] : vector<8x32xf32> to vector<8xf32>
    %441 = vector.shape_cast %440 : vector<8xf32> to vector<8x1xf32>
    %cst_239 = arith.constant 3.200000e+01 : f32
    %442 = vector.broadcast %cst_239 : f32 to vector<8x1xf32>
    %443 = arith.divf %441, %442 : vector<8x1xf32>
    %cst_240 = arith.constant 9.99999974E-6 : f32
    %444 = vector.broadcast %cst_240 : f32 to vector<8x1xf32>
    %445 = arith.addf %443, %444 : vector<8x1xf32>
    %446 = math.rsqrt %445 : vector<8x1xf32>
    %447 = vector.broadcast %446 : vector<8x1xf32> to vector<8x32xf32>
    %448 = arith.mulf %438, %447 : vector<8x32xf32>
    %449 = vector.broadcast %430 : vector<1x32xf32> to vector<8x32xf32>
    %450 = arith.mulf %448, %449 : vector<8x32xf32>
    %451 = vector.broadcast %432 : vector<1x32xf32> to vector<8x32xf32>
    %452 = arith.addf %450, %451 : vector<8x32xf32>
    %c21 = arith.constant 21 : index
    %c0_241 = arith.constant 0 : index
    %c0_242 = arith.constant 0 : index
    %453 = vector.load %arg7[%c21, %c0_241, %c0_242] : memref<46x1x32xf32, #tpu.memory_space<vmem>>, vector<1x1x32xf32>
    %454 = vector.shape_cast %453 : vector<1x1x32xf32> to vector<1x32xf32>
    %c22 = arith.constant 22 : index
    %c0_243 = arith.constant 0 : index
    %c0_244 = arith.constant 0 : index
    %455 = vector.load %arg7[%c22, %c0_243, %c0_244] : memref<46x1x32xf32, #tpu.memory_space<vmem>>, vector<1x1x32xf32>
    %456 = vector.shape_cast %455 : vector<1x1x32xf32> to vector<1x32xf32>
    %cst_245 = arith.constant dense<0.000000e+00> : vector<8xf32>
    %457 = vector.multi_reduction <add>, %452, %cst_245 [1] : vector<8x32xf32> to vector<8xf32>
    %458 = vector.shape_cast %457 : vector<8xf32> to vector<8x1xf32>
    %cst_246 = arith.constant 3.200000e+01 : f32
    %459 = vector.broadcast %cst_246 : f32 to vector<8x1xf32>
    %460 = arith.divf %458, %459 : vector<8x1xf32>
    %461 = vector.broadcast %460 : vector<8x1xf32> to vector<8x32xf32>
    %462 = arith.subf %452, %461 : vector<8x32xf32>
    %463 = arith.mulf %462, %462 : vector<8x32xf32>
    %cst_247 = arith.constant dense<0.000000e+00> : vector<8xf32>
    %464 = vector.multi_reduction <add>, %463, %cst_247 [1] : vector<8x32xf32> to vector<8xf32>
    %465 = vector.shape_cast %464 : vector<8xf32> to vector<8x1xf32>
    %cst_248 = arith.constant 3.200000e+01 : f32
    %466 = vector.broadcast %cst_248 : f32 to vector<8x1xf32>
    %467 = arith.divf %465, %466 : vector<8x1xf32>
    %cst_249 = arith.constant 9.99999974E-6 : f32
    %468 = vector.broadcast %cst_249 : f32 to vector<8x1xf32>
    %469 = arith.addf %467, %468 : vector<8x1xf32>
    %470 = math.rsqrt %469 : vector<8x1xf32>
    %471 = vector.broadcast %470 : vector<8x1xf32> to vector<8x32xf32>
    %472 = arith.mulf %462, %471 : vector<8x32xf32>
    %473 = vector.broadcast %454 : vector<1x32xf32> to vector<8x32xf32>
    %474 = arith.mulf %472, %473 : vector<8x32xf32>
    %475 = vector.broadcast %456 : vector<1x32xf32> to vector<8x32xf32>
    %476 = arith.addf %474, %475 : vector<8x32xf32>
    %c0_250 = arith.constant 0 : index
    %c0_251 = arith.constant 0 : index
    %477 = vector.load %arg2[%c0_250, %c0_251] : memref<10x25xf32, #tpu.memory_space<vmem>>, vector<10x25xf32>
    %c0_252 = arith.constant 0 : index
    %c0_253 = arith.constant 0 : index
    %478 = vector.load %arg4[%c0_252, %c0_253] : memref<10x32xf32, #tpu.memory_space<vmem>>, vector<10x32xf32>
    %c3_254 = arith.constant 3 : index
    %c0_255 = arith.constant 0 : index
    %c0_256 = arith.constant 0 : index
    %479 = vector.load %arg5[%c3_254, %c0_255, %c0_256] : memref<6x25x32xf32, #tpu.memory_space<vmem>>, vector<1x25x32xf32>
    %480 = vector.shape_cast %479 : vector<1x25x32xf32> to vector<25x32xf32>
    %cst_257 = arith.constant dense<0.000000e+00> : vector<10x32xf32>
    %481 = tpu.matmul %477, %480, %cst_257 {dimension_numbers = #tpu.dot_dimension_numbers<[1], [0], [0], [1], [0, 0, 1, 1], [], []>} : vector<10x25xf32>, vector<25x32xf32>, vector<10x32xf32> -> vector<10x32xf32>
    %c4_258 = arith.constant 4 : index
    %c0_259 = arith.constant 0 : index
    %c0_260 = arith.constant 0 : index
    %482 = vector.load %arg5[%c4_258, %c0_259, %c0_260] : memref<6x25x32xf32, #tpu.memory_space<vmem>>, vector<1x25x32xf32>
    %483 = vector.shape_cast %482 : vector<1x25x32xf32> to vector<25x32xf32>
    %cst_261 = arith.constant dense<0.000000e+00> : vector<10x32xf32>
    %484 = tpu.matmul %477, %483, %cst_261 {dimension_numbers = #tpu.dot_dimension_numbers<[1], [0], [0], [1], [0, 0, 1, 1], [], []>} : vector<10x25xf32>, vector<25x32xf32>, vector<10x32xf32> -> vector<10x32xf32>
    %c5_262 = arith.constant 5 : index
    %c0_263 = arith.constant 0 : index
    %c0_264 = arith.constant 0 : index
    %485 = vector.load %arg5[%c5_262, %c0_263, %c0_264] : memref<6x25x32xf32, #tpu.memory_space<vmem>>, vector<1x25x32xf32>
    %486 = vector.shape_cast %485 : vector<1x25x32xf32> to vector<25x32xf32>
    %cst_265 = arith.constant dense<0.000000e+00> : vector<10x32xf32>
    %487 = tpu.matmul %477, %486, %cst_265 {dimension_numbers = #tpu.dot_dimension_numbers<[1], [0], [0], [1], [0, 0, 1, 1], [], []>} : vector<10x25xf32>, vector<25x32xf32>, vector<10x32xf32> -> vector<10x32xf32>
    %c0_266 = arith.constant 0 : index
    %c0_267 = arith.constant 0 : index
    %c0_268 = arith.constant 0 : index
    %488 = vector.load %arg9[%c0_266, %c0_267, %c0_268] : memref<2x10x10xf32, #tpu.memory_space<vmem>>, vector<1x10x10xf32>
    %489 = vector.shape_cast %488 : vector<1x10x10xf32> to vector<10x10xf32>
    %cst_269 = arith.constant dense<0.000000e+00> : vector<10x32xf32>
    %490 = tpu.matmul %489, %481, %cst_269 {dimension_numbers = #tpu.dot_dimension_numbers<[1], [0], [0], [1], [0, 0, 1, 1], [], []>} : vector<10x10xf32>, vector<10x32xf32>, vector<10x32xf32> -> vector<10x32xf32>
    %491 = arith.addf %490, %484 : vector<10x32xf32>
    %c1_270 = arith.constant 1 : index
    %c0_271 = arith.constant 0 : index
    %c0_272 = arith.constant 0 : index
    %492 = vector.load %arg9[%c1_270, %c0_271, %c0_272] : memref<2x10x10xf32, #tpu.memory_space<vmem>>, vector<1x10x10xf32>
    %493 = vector.shape_cast %492 : vector<1x10x10xf32> to vector<10x10xf32>
    %cst_273 = arith.constant dense<0.000000e+00> : vector<10x32xf32>
    %494 = tpu.matmul %493, %487, %cst_273 {dimension_numbers = #tpu.dot_dimension_numbers<[1], [0], [0], [1], [0, 0, 1, 1], [], []>} : vector<10x10xf32>, vector<10x32xf32>, vector<10x32xf32> -> vector<10x32xf32>
    %495 = arith.addf %491, %494 : vector<10x32xf32>
    %496 = arith.addf %495, %478 : vector<10x32xf32>
    %c15_274 = arith.constant 15 : index
    %c0_275 = arith.constant 0 : index
    %c0_276 = arith.constant 0 : index
    %497 = vector.load %arg6[%c15_274, %c0_275, %c0_276] : memref<24x32x32xf32, #tpu.memory_space<vmem>>, vector<1x32x32xf32>
    %498 = vector.shape_cast %497 : vector<1x32x32xf32> to vector<32x32xf32>
    %cst_277 = arith.constant dense<0.000000e+00> : vector<10x32xf32>
    %499 = tpu.matmul %496, %498, %cst_277 {dimension_numbers = #tpu.dot_dimension_numbers<[1], [0], [0], [1], [0, 0, 1, 1], [], []>} : vector<10x32xf32>, vector<32x32xf32>, vector<10x32xf32> -> vector<10x32xf32>
    %c23 = arith.constant 23 : index
    %c0_278 = arith.constant 0 : index
    %c0_279 = arith.constant 0 : index
    %500 = vector.load %arg7[%c23, %c0_278, %c0_279] : memref<46x1x32xf32, #tpu.memory_space<vmem>>, vector<1x1x32xf32>
    %501 = vector.shape_cast %500 : vector<1x1x32xf32> to vector<1x32xf32>
    %502 = vector.broadcast %501 : vector<1x32xf32> to vector<10x32xf32>
    %503 = arith.addf %499, %502 : vector<10x32xf32>
    %c16_280 = arith.constant 16 : index
    %c0_281 = arith.constant 0 : index
    %c0_282 = arith.constant 0 : index
    %504 = vector.load %arg6[%c16_280, %c0_281, %c0_282] : memref<24x32x32xf32, #tpu.memory_space<vmem>>, vector<1x32x32xf32>
    %505 = vector.shape_cast %504 : vector<1x32x32xf32> to vector<32x32xf32>
    %cst_283 = arith.constant dense<0.000000e+00> : vector<10x32xf32>
    %506 = tpu.matmul %496, %505, %cst_283 {dimension_numbers = #tpu.dot_dimension_numbers<[1], [0], [0], [1], [0, 0, 1, 1], [], []>} : vector<10x32xf32>, vector<32x32xf32>, vector<10x32xf32> -> vector<10x32xf32>
    %c24 = arith.constant 24 : index
    %c0_284 = arith.constant 0 : index
    %c0_285 = arith.constant 0 : index
    %507 = vector.load %arg7[%c24, %c0_284, %c0_285] : memref<46x1x32xf32, #tpu.memory_space<vmem>>, vector<1x1x32xf32>
    %508 = vector.shape_cast %507 : vector<1x1x32xf32> to vector<1x32xf32>
    %509 = vector.broadcast %508 : vector<1x32xf32> to vector<10x32xf32>
    %510 = arith.addf %506, %509 : vector<10x32xf32>
    %c17_286 = arith.constant 17 : index
    %c0_287 = arith.constant 0 : index
    %c0_288 = arith.constant 0 : index
    %511 = vector.load %arg6[%c17_286, %c0_287, %c0_288] : memref<24x32x32xf32, #tpu.memory_space<vmem>>, vector<1x32x32xf32>
    %512 = vector.shape_cast %511 : vector<1x32x32xf32> to vector<32x32xf32>
    %cst_289 = arith.constant dense<0.000000e+00> : vector<10x32xf32>
    %513 = tpu.matmul %496, %512, %cst_289 {dimension_numbers = #tpu.dot_dimension_numbers<[1], [0], [0], [1], [0, 0, 1, 1], [], []>} : vector<10x32xf32>, vector<32x32xf32>, vector<10x32xf32> -> vector<10x32xf32>
    %c25 = arith.constant 25 : index
    %c0_290 = arith.constant 0 : index
    %c0_291 = arith.constant 0 : index
    %514 = vector.load %arg7[%c25, %c0_290, %c0_291] : memref<46x1x32xf32, #tpu.memory_space<vmem>>, vector<1x1x32xf32>
    %515 = vector.shape_cast %514 : vector<1x1x32xf32> to vector<1x32xf32>
    %516 = vector.broadcast %515 : vector<1x32xf32> to vector<10x32xf32>
    %517 = arith.addf %513, %516 : vector<10x32xf32>
    %c0_292 = arith.constant 0 : index
    %c0_293 = arith.constant 0 : index
    %518 = vector.load %arg12[%c0_292, %c0_293] : memref<10x10xf32, #tpu.memory_space<vmem>>, vector<10x10xf32>
    %cst_294 = arith.constant 0.000000e+00 : f32
    %519 = vector.broadcast %cst_294 : f32 to vector<40x8xf32>
    %c42_295 = arith.constant 42 : index
    %c0_296 = arith.constant 0 : index
    %c0_297 = arith.constant 0 : index
    %520 = vector.load %arg7[%c42_295, %c0_296, %c0_297] : memref<46x1x32xf32, #tpu.memory_space<vmem>>, vector<1x1x32xf32>
    %521 = vector.shape_cast %520 : vector<1x1x32xf32> to vector<1x32xf32>
    %522 = vector.broadcast %521 : vector<1x32xf32> to vector<10x32xf32>
    %523 = arith.mulf %503, %522 : vector<10x32xf32>
    %cst_298 = arith.constant dense<0.000000e+00> : vector<10x10xf32>
    %524 = tpu.matmul %523, %510, %cst_298 {dimension_numbers = #tpu.dot_dimension_numbers<[1], [1], [0], [0], [0, 0, 1, 0], [], []>} : vector<10x32xf32>, vector<10x32xf32>, vector<10x10xf32> -> vector<10x10xf32>
    %cst_299 = arith.constant 0.353553385 : f32
    %525 = vector.broadcast %cst_299 : f32 to vector<10x10xf32>
    %526 = arith.mulf %524, %525 : vector<10x10xf32>
    %527 = arith.addf %526, %518 : vector<10x10xf32>
    %cst_300 = arith.constant dense<0xFF800000> : vector<10xf32>
    %528 = vector.multi_reduction <maximumf>, %527, %cst_300 [1] : vector<10x10xf32> to vector<10xf32>
    %529 = vector.shape_cast %528 : vector<10xf32> to vector<10x1xf32>
    %530 = vector.broadcast %529 : vector<10x1xf32> to vector<10x10xf32>
    %531 = arith.subf %527, %530 : vector<10x10xf32>
    %532 = math.exp %531 : vector<10x10xf32>
    %cst_301 = arith.constant dense<0.000000e+00> : vector<10xf32>
    %533 = vector.multi_reduction <add>, %532, %cst_301 [1] : vector<10x10xf32> to vector<10xf32>
    %534 = vector.shape_cast %533 : vector<10xf32> to vector<10x1xf32>
    %535 = tpu.reciprocal %534 {approx = true} : vector<10x1xf32> -> vector<10x1xf32>
    %536 = vector.broadcast %535 : vector<10x1xf32> to vector<10x10xf32>
    %537 = arith.mulf %532, %536 : vector<10x10xf32>
    %c0_302 = arith.constant 0 : index
    %c0_303 = arith.constant 0 : index
    %c0_304 = arith.constant 0 : index
    %538 = vector.load %arg18[%c0_302, %c0_303, %c0_304] : memref<4x32x8xf32, #tpu.memory_space<vmem>>, vector<1x32x8xf32>
    %539 = vector.shape_cast %538 : vector<1x32x8xf32> to vector<32x8xf32>
    %cst_305 = arith.constant dense<0.000000e+00> : vector<10x8xf32>
    %540 = tpu.matmul %517, %539, %cst_305 {dimension_numbers = #tpu.dot_dimension_numbers<[1], [0], [0], [1], [0, 0, 1, 1], [], []>} : vector<10x32xf32>, vector<32x8xf32>, vector<10x8xf32> -> vector<10x8xf32>
    %cst_306 = arith.constant dense<0.000000e+00> : vector<10x8xf32>
    %541 = tpu.matmul %537, %540, %cst_306 {dimension_numbers = #tpu.dot_dimension_numbers<[1], [0], [0], [1], [0, 0, 1, 1], [], []>} : vector<10x10xf32>, vector<10x8xf32>, vector<10x8xf32> -> vector<10x8xf32>
    %c0_307 = arith.constant 0 : index
    %c0_308 = arith.constant 0 : index
    %c0_309 = arith.constant 0 : index
    %542 = vector.load %arg16[%c0_307, %c0_308, %c0_309] : memref<4x40x10xf32, #tpu.memory_space<vmem>>, vector<1x40x10xf32>
    %543 = vector.shape_cast %542 : vector<1x40x10xf32> to vector<40x10xf32>
    %cst_310 = arith.constant dense<0.000000e+00> : vector<40x8xf32>
    %544 = tpu.matmul %543, %541, %cst_310 {dimension_numbers = #tpu.dot_dimension_numbers<[1], [0], [0], [1], [0, 0, 1, 1], [], []>} : vector<40x10xf32>, vector<10x8xf32>, vector<40x8xf32> -> vector<40x8xf32>
    %545 = arith.addf %519, %544 : vector<40x8xf32>
    %c43_311 = arith.constant 43 : index
    %c0_312 = arith.constant 0 : index
    %c0_313 = arith.constant 0 : index
    %546 = vector.load %arg7[%c43_311, %c0_312, %c0_313] : memref<46x1x32xf32, #tpu.memory_space<vmem>>, vector<1x1x32xf32>
    %547 = vector.shape_cast %546 : vector<1x1x32xf32> to vector<1x32xf32>
    %548 = vector.broadcast %547 : vector<1x32xf32> to vector<10x32xf32>
    %549 = arith.mulf %503, %548 : vector<10x32xf32>
    %cst_314 = arith.constant dense<0.000000e+00> : vector<10x10xf32>
    %550 = tpu.matmul %549, %510, %cst_314 {dimension_numbers = #tpu.dot_dimension_numbers<[1], [1], [0], [0], [0, 0, 1, 0], [], []>} : vector<10x32xf32>, vector<10x32xf32>, vector<10x10xf32> -> vector<10x10xf32>
    %cst_315 = arith.constant 0.353553385 : f32
    %551 = vector.broadcast %cst_315 : f32 to vector<10x10xf32>
    %552 = arith.mulf %550, %551 : vector<10x10xf32>
    %553 = arith.addf %552, %518 : vector<10x10xf32>
    %cst_316 = arith.constant dense<0xFF800000> : vector<10xf32>
    %554 = vector.multi_reduction <maximumf>, %553, %cst_316 [1] : vector<10x10xf32> to vector<10xf32>
    %555 = vector.shape_cast %554 : vector<10xf32> to vector<10x1xf32>
    %556 = vector.broadcast %555 : vector<10x1xf32> to vector<10x10xf32>
    %557 = arith.subf %553, %556 : vector<10x10xf32>
    %558 = math.exp %557 : vector<10x10xf32>
    %cst_317 = arith.constant dense<0.000000e+00> : vector<10xf32>
    %559 = vector.multi_reduction <add>, %558, %cst_317 [1] : vector<10x10xf32> to vector<10xf32>
    %560 = vector.shape_cast %559 : vector<10xf32> to vector<10x1xf32>
    %561 = tpu.reciprocal %560 {approx = true} : vector<10x1xf32> -> vector<10x1xf32>
    %562 = vector.broadcast %561 : vector<10x1xf32> to vector<10x10xf32>
    %563 = arith.mulf %558, %562 : vector<10x10xf32>
    %c1_318 = arith.constant 1 : index
    %c0_319 = arith.constant 0 : index
    %c0_320 = arith.constant 0 : index
    %564 = vector.load %arg18[%c1_318, %c0_319, %c0_320] : memref<4x32x8xf32, #tpu.memory_space<vmem>>, vector<1x32x8xf32>
    %565 = vector.shape_cast %564 : vector<1x32x8xf32> to vector<32x8xf32>
    %cst_321 = arith.constant dense<0.000000e+00> : vector<10x8xf32>
    %566 = tpu.matmul %517, %565, %cst_321 {dimension_numbers = #tpu.dot_dimension_numbers<[1], [0], [0], [1], [0, 0, 1, 1], [], []>} : vector<10x32xf32>, vector<32x8xf32>, vector<10x8xf32> -> vector<10x8xf32>
    %cst_322 = arith.constant dense<0.000000e+00> : vector<10x8xf32>
    %567 = tpu.matmul %563, %566, %cst_322 {dimension_numbers = #tpu.dot_dimension_numbers<[1], [0], [0], [1], [0, 0, 1, 1], [], []>} : vector<10x10xf32>, vector<10x8xf32>, vector<10x8xf32> -> vector<10x8xf32>
    %c1_323 = arith.constant 1 : index
    %c0_324 = arith.constant 0 : index
    %c0_325 = arith.constant 0 : index
    %568 = vector.load %arg16[%c1_323, %c0_324, %c0_325] : memref<4x40x10xf32, #tpu.memory_space<vmem>>, vector<1x40x10xf32>
    %569 = vector.shape_cast %568 : vector<1x40x10xf32> to vector<40x10xf32>
    %cst_326 = arith.constant dense<0.000000e+00> : vector<40x8xf32>
    %570 = tpu.matmul %569, %567, %cst_326 {dimension_numbers = #tpu.dot_dimension_numbers<[1], [0], [0], [1], [0, 0, 1, 1], [], []>} : vector<40x10xf32>, vector<10x8xf32>, vector<40x8xf32> -> vector<40x8xf32>
    %571 = arith.addf %545, %570 : vector<40x8xf32>
    %c44_327 = arith.constant 44 : index
    %c0_328 = arith.constant 0 : index
    %c0_329 = arith.constant 0 : index
    %572 = vector.load %arg7[%c44_327, %c0_328, %c0_329] : memref<46x1x32xf32, #tpu.memory_space<vmem>>, vector<1x1x32xf32>
    %573 = vector.shape_cast %572 : vector<1x1x32xf32> to vector<1x32xf32>
    %574 = vector.broadcast %573 : vector<1x32xf32> to vector<10x32xf32>
    %575 = arith.mulf %503, %574 : vector<10x32xf32>
    %cst_330 = arith.constant dense<0.000000e+00> : vector<10x10xf32>
    %576 = tpu.matmul %575, %510, %cst_330 {dimension_numbers = #tpu.dot_dimension_numbers<[1], [1], [0], [0], [0, 0, 1, 0], [], []>} : vector<10x32xf32>, vector<10x32xf32>, vector<10x10xf32> -> vector<10x10xf32>
    %cst_331 = arith.constant 0.353553385 : f32
    %577 = vector.broadcast %cst_331 : f32 to vector<10x10xf32>
    %578 = arith.mulf %576, %577 : vector<10x10xf32>
    %579 = arith.addf %578, %518 : vector<10x10xf32>
    %cst_332 = arith.constant dense<0xFF800000> : vector<10xf32>
    %580 = vector.multi_reduction <maximumf>, %579, %cst_332 [1] : vector<10x10xf32> to vector<10xf32>
    %581 = vector.shape_cast %580 : vector<10xf32> to vector<10x1xf32>
    %582 = vector.broadcast %581 : vector<10x1xf32> to vector<10x10xf32>
    %583 = arith.subf %579, %582 : vector<10x10xf32>
    %584 = math.exp %583 : vector<10x10xf32>
    %cst_333 = arith.constant dense<0.000000e+00> : vector<10xf32>
    %585 = vector.multi_reduction <add>, %584, %cst_333 [1] : vector<10x10xf32> to vector<10xf32>
    %586 = vector.shape_cast %585 : vector<10xf32> to vector<10x1xf32>
    %587 = tpu.reciprocal %586 {approx = true} : vector<10x1xf32> -> vector<10x1xf32>
    %588 = vector.broadcast %587 : vector<10x1xf32> to vector<10x10xf32>
    %589 = arith.mulf %584, %588 : vector<10x10xf32>
    %c2_334 = arith.constant 2 : index
    %c0_335 = arith.constant 0 : index
    %c0_336 = arith.constant 0 : index
    %590 = vector.load %arg18[%c2_334, %c0_335, %c0_336] : memref<4x32x8xf32, #tpu.memory_space<vmem>>, vector<1x32x8xf32>
    %591 = vector.shape_cast %590 : vector<1x32x8xf32> to vector<32x8xf32>
    %cst_337 = arith.constant dense<0.000000e+00> : vector<10x8xf32>
    %592 = tpu.matmul %517, %591, %cst_337 {dimension_numbers = #tpu.dot_dimension_numbers<[1], [0], [0], [1], [0, 0, 1, 1], [], []>} : vector<10x32xf32>, vector<32x8xf32>, vector<10x8xf32> -> vector<10x8xf32>
    %cst_338 = arith.constant dense<0.000000e+00> : vector<10x8xf32>
    %593 = tpu.matmul %589, %592, %cst_338 {dimension_numbers = #tpu.dot_dimension_numbers<[1], [0], [0], [1], [0, 0, 1, 1], [], []>} : vector<10x10xf32>, vector<10x8xf32>, vector<10x8xf32> -> vector<10x8xf32>
    %c2_339 = arith.constant 2 : index
    %c0_340 = arith.constant 0 : index
    %c0_341 = arith.constant 0 : index
    %594 = vector.load %arg16[%c2_339, %c0_340, %c0_341] : memref<4x40x10xf32, #tpu.memory_space<vmem>>, vector<1x40x10xf32>
    %595 = vector.shape_cast %594 : vector<1x40x10xf32> to vector<40x10xf32>
    %cst_342 = arith.constant dense<0.000000e+00> : vector<40x8xf32>
    %596 = tpu.matmul %595, %593, %cst_342 {dimension_numbers = #tpu.dot_dimension_numbers<[1], [0], [0], [1], [0, 0, 1, 1], [], []>} : vector<40x10xf32>, vector<10x8xf32>, vector<40x8xf32> -> vector<40x8xf32>
    %597 = arith.addf %571, %596 : vector<40x8xf32>
    %c45_343 = arith.constant 45 : index
    %c0_344 = arith.constant 0 : index
    %c0_345 = arith.constant 0 : index
    %598 = vector.load %arg7[%c45_343, %c0_344, %c0_345] : memref<46x1x32xf32, #tpu.memory_space<vmem>>, vector<1x1x32xf32>
    %599 = vector.shape_cast %598 : vector<1x1x32xf32> to vector<1x32xf32>
    %600 = vector.broadcast %599 : vector<1x32xf32> to vector<10x32xf32>
    %601 = arith.mulf %503, %600 : vector<10x32xf32>
    %cst_346 = arith.constant dense<0.000000e+00> : vector<10x10xf32>
    %602 = tpu.matmul %601, %510, %cst_346 {dimension_numbers = #tpu.dot_dimension_numbers<[1], [1], [0], [0], [0, 0, 1, 0], [], []>} : vector<10x32xf32>, vector<10x32xf32>, vector<10x10xf32> -> vector<10x10xf32>
    %cst_347 = arith.constant 0.353553385 : f32
    %603 = vector.broadcast %cst_347 : f32 to vector<10x10xf32>
    %604 = arith.mulf %602, %603 : vector<10x10xf32>
    %605 = arith.addf %604, %518 : vector<10x10xf32>
    %cst_348 = arith.constant dense<0xFF800000> : vector<10xf32>
    %606 = vector.multi_reduction <maximumf>, %605, %cst_348 [1] : vector<10x10xf32> to vector<10xf32>
    %607 = vector.shape_cast %606 : vector<10xf32> to vector<10x1xf32>
    %608 = vector.broadcast %607 : vector<10x1xf32> to vector<10x10xf32>
    %609 = arith.subf %605, %608 : vector<10x10xf32>
    %610 = math.exp %609 : vector<10x10xf32>
    %cst_349 = arith.constant dense<0.000000e+00> : vector<10xf32>
    %611 = vector.multi_reduction <add>, %610, %cst_349 [1] : vector<10x10xf32> to vector<10xf32>
    %612 = vector.shape_cast %611 : vector<10xf32> to vector<10x1xf32>
    %613 = tpu.reciprocal %612 {approx = true} : vector<10x1xf32> -> vector<10x1xf32>
    %614 = vector.broadcast %613 : vector<10x1xf32> to vector<10x10xf32>
    %615 = arith.mulf %610, %614 : vector<10x10xf32>
    %c3_350 = arith.constant 3 : index
    %c0_351 = arith.constant 0 : index
    %c0_352 = arith.constant 0 : index
    %616 = vector.load %arg18[%c3_350, %c0_351, %c0_352] : memref<4x32x8xf32, #tpu.memory_space<vmem>>, vector<1x32x8xf32>
    %617 = vector.shape_cast %616 : vector<1x32x8xf32> to vector<32x8xf32>
    %cst_353 = arith.constant dense<0.000000e+00> : vector<10x8xf32>
    %618 = tpu.matmul %517, %617, %cst_353 {dimension_numbers = #tpu.dot_dimension_numbers<[1], [0], [0], [1], [0, 0, 1, 1], [], []>} : vector<10x32xf32>, vector<32x8xf32>, vector<10x8xf32> -> vector<10x8xf32>
    %cst_354 = arith.constant dense<0.000000e+00> : vector<10x8xf32>
    %619 = tpu.matmul %615, %618, %cst_354 {dimension_numbers = #tpu.dot_dimension_numbers<[1], [0], [0], [1], [0, 0, 1, 1], [], []>} : vector<10x10xf32>, vector<10x8xf32>, vector<10x8xf32> -> vector<10x8xf32>
    %c3_355 = arith.constant 3 : index
    %c0_356 = arith.constant 0 : index
    %c0_357 = arith.constant 0 : index
    %620 = vector.load %arg16[%c3_355, %c0_356, %c0_357] : memref<4x40x10xf32, #tpu.memory_space<vmem>>, vector<1x40x10xf32>
    %621 = vector.shape_cast %620 : vector<1x40x10xf32> to vector<40x10xf32>
    %cst_358 = arith.constant dense<0.000000e+00> : vector<40x8xf32>
    %622 = tpu.matmul %621, %619, %cst_358 {dimension_numbers = #tpu.dot_dimension_numbers<[1], [0], [0], [1], [0, 0, 1, 1], [], []>} : vector<40x10xf32>, vector<10x8xf32>, vector<40x8xf32> -> vector<40x8xf32>
    %623 = arith.addf %597, %622 : vector<40x8xf32>
    %cst_359 = arith.constant 0.000000e+00 : f32
    %624 = vector.broadcast %cst_359 : f32 to vector<10x32xf32>
    %c0_360 = arith.constant 0 : index
    %c0_361 = arith.constant 0 : index
    %c0_362 = arith.constant 0 : index
    %625 = vector.load %arg17[%c0_360, %c0_361, %c0_362] : memref<4x10x40xf32, #tpu.memory_space<vmem>>, vector<1x10x40xf32>
    %626 = vector.shape_cast %625 : vector<1x10x40xf32> to vector<10x40xf32>
    %cst_363 = arith.constant dense<0.000000e+00> : vector<10x8xf32>
    %627 = tpu.matmul %626, %623, %cst_363 {dimension_numbers = #tpu.dot_dimension_numbers<[1], [0], [0], [1], [0, 0, 1, 1], [], []>} : vector<10x40xf32>, vector<40x8xf32>, vector<10x8xf32> -> vector<10x8xf32>
    %c0_364 = arith.constant 0 : index
    %c0_365 = arith.constant 0 : index
    %c0_366 = arith.constant 0 : index
    %628 = vector.load %arg19[%c0_364, %c0_365, %c0_366] : memref<4x8x32xf32, #tpu.memory_space<vmem>>, vector<1x8x32xf32>
    %629 = vector.shape_cast %628 : vector<1x8x32xf32> to vector<8x32xf32>
    %cst_367 = arith.constant dense<0.000000e+00> : vector<10x32xf32>
    %630 = tpu.matmul %627, %629, %cst_367 {dimension_numbers = #tpu.dot_dimension_numbers<[1], [0], [0], [1], [0, 0, 1, 1], [], []>} : vector<10x8xf32>, vector<8x32xf32>, vector<10x32xf32> -> vector<10x32xf32>
    %631 = arith.addf %624, %630 : vector<10x32xf32>
    %c1_368 = arith.constant 1 : index
    %c0_369 = arith.constant 0 : index
    %c0_370 = arith.constant 0 : index
    %632 = vector.load %arg17[%c1_368, %c0_369, %c0_370] : memref<4x10x40xf32, #tpu.memory_space<vmem>>, vector<1x10x40xf32>
    %633 = vector.shape_cast %632 : vector<1x10x40xf32> to vector<10x40xf32>
    %cst_371 = arith.constant dense<0.000000e+00> : vector<10x8xf32>
    %634 = tpu.matmul %633, %623, %cst_371 {dimension_numbers = #tpu.dot_dimension_numbers<[1], [0], [0], [1], [0, 0, 1, 1], [], []>} : vector<10x40xf32>, vector<40x8xf32>, vector<10x8xf32> -> vector<10x8xf32>
    %c1_372 = arith.constant 1 : index
    %c0_373 = arith.constant 0 : index
    %c0_374 = arith.constant 0 : index
    %635 = vector.load %arg19[%c1_372, %c0_373, %c0_374] : memref<4x8x32xf32, #tpu.memory_space<vmem>>, vector<1x8x32xf32>
    %636 = vector.shape_cast %635 : vector<1x8x32xf32> to vector<8x32xf32>
    %cst_375 = arith.constant dense<0.000000e+00> : vector<10x32xf32>
    %637 = tpu.matmul %634, %636, %cst_375 {dimension_numbers = #tpu.dot_dimension_numbers<[1], [0], [0], [1], [0, 0, 1, 1], [], []>} : vector<10x8xf32>, vector<8x32xf32>, vector<10x32xf32> -> vector<10x32xf32>
    %638 = arith.addf %631, %637 : vector<10x32xf32>
    %c2_376 = arith.constant 2 : index
    %c0_377 = arith.constant 0 : index
    %c0_378 = arith.constant 0 : index
    %639 = vector.load %arg17[%c2_376, %c0_377, %c0_378] : memref<4x10x40xf32, #tpu.memory_space<vmem>>, vector<1x10x40xf32>
    %640 = vector.shape_cast %639 : vector<1x10x40xf32> to vector<10x40xf32>
    %cst_379 = arith.constant dense<0.000000e+00> : vector<10x8xf32>
    %641 = tpu.matmul %640, %623, %cst_379 {dimension_numbers = #tpu.dot_dimension_numbers<[1], [0], [0], [1], [0, 0, 1, 1], [], []>} : vector<10x40xf32>, vector<40x8xf32>, vector<10x8xf32> -> vector<10x8xf32>
    %c2_380 = arith.constant 2 : index
    %c0_381 = arith.constant 0 : index
    %c0_382 = arith.constant 0 : index
    %642 = vector.load %arg19[%c2_380, %c0_381, %c0_382] : memref<4x8x32xf32, #tpu.memory_space<vmem>>, vector<1x8x32xf32>
    %643 = vector.shape_cast %642 : vector<1x8x32xf32> to vector<8x32xf32>
    %cst_383 = arith.constant dense<0.000000e+00> : vector<10x32xf32>
    %644 = tpu.matmul %641, %643, %cst_383 {dimension_numbers = #tpu.dot_dimension_numbers<[1], [0], [0], [1], [0, 0, 1, 1], [], []>} : vector<10x8xf32>, vector<8x32xf32>, vector<10x32xf32> -> vector<10x32xf32>
    %645 = arith.addf %638, %644 : vector<10x32xf32>
    %c3_384 = arith.constant 3 : index
    %c0_385 = arith.constant 0 : index
    %c0_386 = arith.constant 0 : index
    %646 = vector.load %arg17[%c3_384, %c0_385, %c0_386] : memref<4x10x40xf32, #tpu.memory_space<vmem>>, vector<1x10x40xf32>
    %647 = vector.shape_cast %646 : vector<1x10x40xf32> to vector<10x40xf32>
    %cst_387 = arith.constant dense<0.000000e+00> : vector<10x8xf32>
    %648 = tpu.matmul %647, %623, %cst_387 {dimension_numbers = #tpu.dot_dimension_numbers<[1], [0], [0], [1], [0, 0, 1, 1], [], []>} : vector<10x40xf32>, vector<40x8xf32>, vector<10x8xf32> -> vector<10x8xf32>
    %c3_388 = arith.constant 3 : index
    %c0_389 = arith.constant 0 : index
    %c0_390 = arith.constant 0 : index
    %649 = vector.load %arg19[%c3_388, %c0_389, %c0_390] : memref<4x8x32xf32, #tpu.memory_space<vmem>>, vector<1x8x32xf32>
    %650 = vector.shape_cast %649 : vector<1x8x32xf32> to vector<8x32xf32>
    %cst_391 = arith.constant dense<0.000000e+00> : vector<10x32xf32>
    %651 = tpu.matmul %648, %650, %cst_391 {dimension_numbers = #tpu.dot_dimension_numbers<[1], [0], [0], [1], [0, 0, 1, 1], [], []>} : vector<10x8xf32>, vector<8x32xf32>, vector<10x32xf32> -> vector<10x32xf32>
    %652 = arith.addf %645, %651 : vector<10x32xf32>
    %c26 = arith.constant 26 : index
    %c0_392 = arith.constant 0 : index
    %c0_393 = arith.constant 0 : index
    %653 = vector.load %arg7[%c26, %c0_392, %c0_393] : memref<46x1x32xf32, #tpu.memory_space<vmem>>, vector<1x1x32xf32>
    %654 = vector.shape_cast %653 : vector<1x1x32xf32> to vector<1x32xf32>
    %655 = vector.broadcast %654 : vector<1x32xf32> to vector<10x32xf32>
    %656 = arith.addf %652, %655 : vector<10x32xf32>
    %657 = arith.addf %496, %656 : vector<10x32xf32>
    %c33 = arith.constant 33 : index
    %c0_394 = arith.constant 0 : index
    %c0_395 = arith.constant 0 : index
    %658 = vector.load %arg7[%c33, %c0_394, %c0_395] : memref<46x1x32xf32, #tpu.memory_space<vmem>>, vector<1x1x32xf32>
    %659 = vector.shape_cast %658 : vector<1x1x32xf32> to vector<1x32xf32>
    %c37 = arith.constant 37 : index
    %c0_396 = arith.constant 0 : index
    %c0_397 = arith.constant 0 : index
    %660 = vector.load %arg7[%c37, %c0_396, %c0_397] : memref<46x1x32xf32, #tpu.memory_space<vmem>>, vector<1x1x32xf32>
    %661 = vector.shape_cast %660 : vector<1x1x32xf32> to vector<1x32xf32>
    %cst_398 = arith.constant dense<0.000000e+00> : vector<10xf32>
    %662 = vector.multi_reduction <add>, %657, %cst_398 [1] : vector<10x32xf32> to vector<10xf32>
    %663 = vector.shape_cast %662 : vector<10xf32> to vector<10x1xf32>
    %cst_399 = arith.constant 3.200000e+01 : f32
    %664 = vector.broadcast %cst_399 : f32 to vector<10x1xf32>
    %665 = arith.divf %663, %664 : vector<10x1xf32>
    %666 = vector.broadcast %665 : vector<10x1xf32> to vector<10x32xf32>
    %667 = arith.subf %657, %666 : vector<10x32xf32>
    %668 = arith.mulf %667, %667 : vector<10x32xf32>
    %cst_400 = arith.constant dense<0.000000e+00> : vector<10xf32>
    %669 = vector.multi_reduction <add>, %668, %cst_400 [1] : vector<10x32xf32> to vector<10xf32>
    %670 = vector.shape_cast %669 : vector<10xf32> to vector<10x1xf32>
    %cst_401 = arith.constant 3.200000e+01 : f32
    %671 = vector.broadcast %cst_401 : f32 to vector<10x1xf32>
    %672 = arith.divf %670, %671 : vector<10x1xf32>
    %cst_402 = arith.constant 9.99999974E-6 : f32
    %673 = vector.broadcast %cst_402 : f32 to vector<10x1xf32>
    %674 = arith.addf %672, %673 : vector<10x1xf32>
    %675 = math.rsqrt %674 : vector<10x1xf32>
    %676 = vector.broadcast %675 : vector<10x1xf32> to vector<10x32xf32>
    %677 = arith.mulf %667, %676 : vector<10x32xf32>
    %678 = vector.broadcast %659 : vector<1x32xf32> to vector<10x32xf32>
    %679 = arith.mulf %677, %678 : vector<10x32xf32>
    %680 = vector.broadcast %661 : vector<1x32xf32> to vector<10x32xf32>
    %681 = arith.addf %679, %680 : vector<10x32xf32>
    %c18_403 = arith.constant 18 : index
    %c0_404 = arith.constant 0 : index
    %c0_405 = arith.constant 0 : index
    %682 = vector.load %arg6[%c18_403, %c0_404, %c0_405] : memref<24x32x32xf32, #tpu.memory_space<vmem>>, vector<1x32x32xf32>
    %683 = vector.shape_cast %682 : vector<1x32x32xf32> to vector<32x32xf32>
    %c19_406 = arith.constant 19 : index
    %c0_407 = arith.constant 0 : index
    %c0_408 = arith.constant 0 : index
    %684 = vector.load %arg6[%c19_406, %c0_407, %c0_408] : memref<24x32x32xf32, #tpu.memory_space<vmem>>, vector<1x32x32xf32>
    %685 = vector.shape_cast %684 : vector<1x32x32xf32> to vector<32x32xf32>
    %c20_409 = arith.constant 20 : index
    %c0_410 = arith.constant 0 : index
    %c0_411 = arith.constant 0 : index
    %686 = vector.load %arg6[%c20_409, %c0_410, %c0_411] : memref<24x32x32xf32, #tpu.memory_space<vmem>>, vector<1x32x32xf32>
    %687 = vector.shape_cast %686 : vector<1x32x32xf32> to vector<32x32xf32>
    %c21_412 = arith.constant 21 : index
    %c0_413 = arith.constant 0 : index
    %c0_414 = arith.constant 0 : index
    %688 = vector.load %arg6[%c21_412, %c0_413, %c0_414] : memref<24x32x32xf32, #tpu.memory_space<vmem>>, vector<1x32x32xf32>
    %689 = vector.shape_cast %688 : vector<1x32x32xf32> to vector<32x32xf32>
    %c27 = arith.constant 27 : index
    %c0_415 = arith.constant 0 : index
    %c0_416 = arith.constant 0 : index
    %690 = vector.load %arg7[%c27, %c0_415, %c0_416] : memref<46x1x32xf32, #tpu.memory_space<vmem>>, vector<1x1x32xf32>
    %691 = vector.shape_cast %690 : vector<1x1x32xf32> to vector<1x32xf32>
    %c28 = arith.constant 28 : index
    %c0_417 = arith.constant 0 : index
    %c0_418 = arith.constant 0 : index
    %692 = vector.load %arg7[%c28, %c0_417, %c0_418] : memref<46x1x32xf32, #tpu.memory_space<vmem>>, vector<1x1x32xf32>
    %693 = vector.shape_cast %692 : vector<1x1x32xf32> to vector<1x32xf32>
    %c29 = arith.constant 29 : index
    %c0_419 = arith.constant 0 : index
    %c0_420 = arith.constant 0 : index
    %694 = vector.load %arg7[%c29, %c0_419, %c0_420] : memref<46x1x32xf32, #tpu.memory_space<vmem>>, vector<1x1x32xf32>
    %695 = vector.shape_cast %694 : vector<1x1x32xf32> to vector<1x32xf32>
    %c30 = arith.constant 30 : index
    %c0_421 = arith.constant 0 : index
    %c0_422 = arith.constant 0 : index
    %696 = vector.load %arg7[%c30, %c0_421, %c0_422] : memref<46x1x32xf32, #tpu.memory_space<vmem>>, vector<1x1x32xf32>
    %697 = vector.shape_cast %696 : vector<1x1x32xf32> to vector<1x32xf32>
    %c0_423 = arith.constant 0 : index
    %c0_424 = arith.constant 0 : index
    %698 = vector.load %arg13[%c0_423, %c0_424] : memref<10x8xf32, #tpu.memory_space<vmem>>, vector<10x8xf32>
    %cst_425 = arith.constant dense<0.000000e+00> : vector<10x32xf32>
    %699 = tpu.matmul %681, %683, %cst_425 {dimension_numbers = #tpu.dot_dimension_numbers<[1], [0], [0], [1], [0, 0, 1, 1], [], []>} : vector<10x32xf32>, vector<32x32xf32>, vector<10x32xf32> -> vector<10x32xf32>
    %700 = vector.broadcast %691 : vector<1x32xf32> to vector<10x32xf32>
    %701 = arith.addf %699, %700 : vector<10x32xf32>
    %cst_426 = arith.constant dense<0.000000e+00> : vector<8x32xf32>
    %702 = tpu.matmul %476, %685, %cst_426 {dimension_numbers = #tpu.dot_dimension_numbers<[1], [0], [0], [1], [0, 0, 1, 1], [], []>} : vector<8x32xf32>, vector<32x32xf32>, vector<8x32xf32> -> vector<8x32xf32>
    %703 = vector.broadcast %693 : vector<1x32xf32> to vector<8x32xf32>
    %704 = arith.addf %702, %703 : vector<8x32xf32>
    %cst_427 = arith.constant dense<0.000000e+00> : vector<8x32xf32>
    %705 = tpu.matmul %476, %687, %cst_427 {dimension_numbers = #tpu.dot_dimension_numbers<[1], [0], [0], [1], [0, 0, 1, 1], [], []>} : vector<8x32xf32>, vector<32x32xf32>, vector<8x32xf32> -> vector<8x32xf32>
    %706 = vector.broadcast %695 : vector<1x32xf32> to vector<8x32xf32>
    %707 = arith.addf %705, %706 : vector<8x32xf32>
    %cst_428 = arith.constant 0.000000e+00 : f32
    %708 = vector.broadcast %cst_428 : f32 to vector<10x32xf32>
    %c42_429 = arith.constant 42 : index
    %c0_430 = arith.constant 0 : index
    %c0_431 = arith.constant 0 : index
    %709 = vector.load %arg7[%c42_429, %c0_430, %c0_431] : memref<46x1x32xf32, #tpu.memory_space<vmem>>, vector<1x1x32xf32>
    %710 = vector.shape_cast %709 : vector<1x1x32xf32> to vector<1x32xf32>
    %711 = vector.broadcast %710 : vector<1x32xf32> to vector<10x32xf32>
    %712 = arith.mulf %701, %711 : vector<10x32xf32>
    %cst_432 = arith.constant dense<0.000000e+00> : vector<10x8xf32>
    %713 = tpu.matmul %712, %704, %cst_432 {dimension_numbers = #tpu.dot_dimension_numbers<[1], [1], [0], [0], [0, 0, 1, 0], [], []>} : vector<10x32xf32>, vector<8x32xf32>, vector<10x8xf32> -> vector<10x8xf32>
    %cst_433 = arith.constant 0.353553385 : f32
    %714 = vector.broadcast %cst_433 : f32 to vector<10x8xf32>
    %715 = arith.mulf %713, %714 : vector<10x8xf32>
    %716 = arith.addf %715, %698 : vector<10x8xf32>
    %cst_434 = arith.constant dense<0xFF800000> : vector<10xf32>
    %717 = vector.multi_reduction <maximumf>, %716, %cst_434 [1] : vector<10x8xf32> to vector<10xf32>
    %718 = vector.shape_cast %717 : vector<10xf32> to vector<10x1xf32>
    %719 = vector.broadcast %718 : vector<10x1xf32> to vector<10x8xf32>
    %720 = arith.subf %716, %719 : vector<10x8xf32>
    %721 = math.exp %720 : vector<10x8xf32>
    %cst_435 = arith.constant dense<0.000000e+00> : vector<10xf32>
    %722 = vector.multi_reduction <add>, %721, %cst_435 [1] : vector<10x8xf32> to vector<10xf32>
    %723 = vector.shape_cast %722 : vector<10xf32> to vector<10x1xf32>
    %724 = tpu.reciprocal %723 {approx = true} : vector<10x1xf32> -> vector<10x1xf32>
    %725 = vector.broadcast %724 : vector<10x1xf32> to vector<10x8xf32>
    %726 = arith.mulf %721, %725 : vector<10x8xf32>
    %727 = vector.broadcast %710 : vector<1x32xf32> to vector<8x32xf32>
    %728 = arith.mulf %707, %727 : vector<8x32xf32>
    %cst_436 = arith.constant dense<0.000000e+00> : vector<10x32xf32>
    %729 = tpu.matmul %726, %728, %cst_436 {dimension_numbers = #tpu.dot_dimension_numbers<[1], [0], [0], [1], [0, 0, 1, 1], [], []>} : vector<10x8xf32>, vector<8x32xf32>, vector<10x32xf32> -> vector<10x32xf32>
    %730 = arith.addf %708, %729 : vector<10x32xf32>
    %c43_437 = arith.constant 43 : index
    %c0_438 = arith.constant 0 : index
    %c0_439 = arith.constant 0 : index
    %731 = vector.load %arg7[%c43_437, %c0_438, %c0_439] : memref<46x1x32xf32, #tpu.memory_space<vmem>>, vector<1x1x32xf32>
    %732 = vector.shape_cast %731 : vector<1x1x32xf32> to vector<1x32xf32>
    %733 = vector.broadcast %732 : vector<1x32xf32> to vector<10x32xf32>
    %734 = arith.mulf %701, %733 : vector<10x32xf32>
    %cst_440 = arith.constant dense<0.000000e+00> : vector<10x8xf32>
    %735 = tpu.matmul %734, %704, %cst_440 {dimension_numbers = #tpu.dot_dimension_numbers<[1], [1], [0], [0], [0, 0, 1, 0], [], []>} : vector<10x32xf32>, vector<8x32xf32>, vector<10x8xf32> -> vector<10x8xf32>
    %cst_441 = arith.constant 0.353553385 : f32
    %736 = vector.broadcast %cst_441 : f32 to vector<10x8xf32>
    %737 = arith.mulf %735, %736 : vector<10x8xf32>
    %738 = arith.addf %737, %698 : vector<10x8xf32>
    %cst_442 = arith.constant dense<0xFF800000> : vector<10xf32>
    %739 = vector.multi_reduction <maximumf>, %738, %cst_442 [1] : vector<10x8xf32> to vector<10xf32>
    %740 = vector.shape_cast %739 : vector<10xf32> to vector<10x1xf32>
    %741 = vector.broadcast %740 : vector<10x1xf32> to vector<10x8xf32>
    %742 = arith.subf %738, %741 : vector<10x8xf32>
    %743 = math.exp %742 : vector<10x8xf32>
    %cst_443 = arith.constant dense<0.000000e+00> : vector<10xf32>
    %744 = vector.multi_reduction <add>, %743, %cst_443 [1] : vector<10x8xf32> to vector<10xf32>
    %745 = vector.shape_cast %744 : vector<10xf32> to vector<10x1xf32>
    %746 = tpu.reciprocal %745 {approx = true} : vector<10x1xf32> -> vector<10x1xf32>
    %747 = vector.broadcast %746 : vector<10x1xf32> to vector<10x8xf32>
    %748 = arith.mulf %743, %747 : vector<10x8xf32>
    %749 = vector.broadcast %732 : vector<1x32xf32> to vector<8x32xf32>
    %750 = arith.mulf %707, %749 : vector<8x32xf32>
    %cst_444 = arith.constant dense<0.000000e+00> : vector<10x32xf32>
    %751 = tpu.matmul %748, %750, %cst_444 {dimension_numbers = #tpu.dot_dimension_numbers<[1], [0], [0], [1], [0, 0, 1, 1], [], []>} : vector<10x8xf32>, vector<8x32xf32>, vector<10x32xf32> -> vector<10x32xf32>
    %752 = arith.addf %730, %751 : vector<10x32xf32>
    %c44_445 = arith.constant 44 : index
    %c0_446 = arith.constant 0 : index
    %c0_447 = arith.constant 0 : index
    %753 = vector.load %arg7[%c44_445, %c0_446, %c0_447] : memref<46x1x32xf32, #tpu.memory_space<vmem>>, vector<1x1x32xf32>
    %754 = vector.shape_cast %753 : vector<1x1x32xf32> to vector<1x32xf32>
    %755 = vector.broadcast %754 : vector<1x32xf32> to vector<10x32xf32>
    %756 = arith.mulf %701, %755 : vector<10x32xf32>
    %cst_448 = arith.constant dense<0.000000e+00> : vector<10x8xf32>
    %757 = tpu.matmul %756, %704, %cst_448 {dimension_numbers = #tpu.dot_dimension_numbers<[1], [1], [0], [0], [0, 0, 1, 0], [], []>} : vector<10x32xf32>, vector<8x32xf32>, vector<10x8xf32> -> vector<10x8xf32>
    %cst_449 = arith.constant 0.353553385 : f32
    %758 = vector.broadcast %cst_449 : f32 to vector<10x8xf32>
    %759 = arith.mulf %757, %758 : vector<10x8xf32>
    %760 = arith.addf %759, %698 : vector<10x8xf32>
    %cst_450 = arith.constant dense<0xFF800000> : vector<10xf32>
    %761 = vector.multi_reduction <maximumf>, %760, %cst_450 [1] : vector<10x8xf32> to vector<10xf32>
    %762 = vector.shape_cast %761 : vector<10xf32> to vector<10x1xf32>
    %763 = vector.broadcast %762 : vector<10x1xf32> to vector<10x8xf32>
    %764 = arith.subf %760, %763 : vector<10x8xf32>
    %765 = math.exp %764 : vector<10x8xf32>
    %cst_451 = arith.constant dense<0.000000e+00> : vector<10xf32>
    %766 = vector.multi_reduction <add>, %765, %cst_451 [1] : vector<10x8xf32> to vector<10xf32>
    %767 = vector.shape_cast %766 : vector<10xf32> to vector<10x1xf32>
    %768 = tpu.reciprocal %767 {approx = true} : vector<10x1xf32> -> vector<10x1xf32>
    %769 = vector.broadcast %768 : vector<10x1xf32> to vector<10x8xf32>
    %770 = arith.mulf %765, %769 : vector<10x8xf32>
    %771 = vector.broadcast %754 : vector<1x32xf32> to vector<8x32xf32>
    %772 = arith.mulf %707, %771 : vector<8x32xf32>
    %cst_452 = arith.constant dense<0.000000e+00> : vector<10x32xf32>
    %773 = tpu.matmul %770, %772, %cst_452 {dimension_numbers = #tpu.dot_dimension_numbers<[1], [0], [0], [1], [0, 0, 1, 1], [], []>} : vector<10x8xf32>, vector<8x32xf32>, vector<10x32xf32> -> vector<10x32xf32>
    %774 = arith.addf %752, %773 : vector<10x32xf32>
    %c45_453 = arith.constant 45 : index
    %c0_454 = arith.constant 0 : index
    %c0_455 = arith.constant 0 : index
    %775 = vector.load %arg7[%c45_453, %c0_454, %c0_455] : memref<46x1x32xf32, #tpu.memory_space<vmem>>, vector<1x1x32xf32>
    %776 = vector.shape_cast %775 : vector<1x1x32xf32> to vector<1x32xf32>
    %777 = vector.broadcast %776 : vector<1x32xf32> to vector<10x32xf32>
    %778 = arith.mulf %701, %777 : vector<10x32xf32>
    %cst_456 = arith.constant dense<0.000000e+00> : vector<10x8xf32>
    %779 = tpu.matmul %778, %704, %cst_456 {dimension_numbers = #tpu.dot_dimension_numbers<[1], [1], [0], [0], [0, 0, 1, 0], [], []>} : vector<10x32xf32>, vector<8x32xf32>, vector<10x8xf32> -> vector<10x8xf32>
    %cst_457 = arith.constant 0.353553385 : f32
    %780 = vector.broadcast %cst_457 : f32 to vector<10x8xf32>
    %781 = arith.mulf %779, %780 : vector<10x8xf32>
    %782 = arith.addf %781, %698 : vector<10x8xf32>
    %cst_458 = arith.constant dense<0xFF800000> : vector<10xf32>
    %783 = vector.multi_reduction <maximumf>, %782, %cst_458 [1] : vector<10x8xf32> to vector<10xf32>
    %784 = vector.shape_cast %783 : vector<10xf32> to vector<10x1xf32>
    %785 = vector.broadcast %784 : vector<10x1xf32> to vector<10x8xf32>
    %786 = arith.subf %782, %785 : vector<10x8xf32>
    %787 = math.exp %786 : vector<10x8xf32>
    %cst_459 = arith.constant dense<0.000000e+00> : vector<10xf32>
    %788 = vector.multi_reduction <add>, %787, %cst_459 [1] : vector<10x8xf32> to vector<10xf32>
    %789 = vector.shape_cast %788 : vector<10xf32> to vector<10x1xf32>
    %790 = tpu.reciprocal %789 {approx = true} : vector<10x1xf32> -> vector<10x1xf32>
    %791 = vector.broadcast %790 : vector<10x1xf32> to vector<10x8xf32>
    %792 = arith.mulf %787, %791 : vector<10x8xf32>
    %793 = vector.broadcast %776 : vector<1x32xf32> to vector<8x32xf32>
    %794 = arith.mulf %707, %793 : vector<8x32xf32>
    %cst_460 = arith.constant dense<0.000000e+00> : vector<10x32xf32>
    %795 = tpu.matmul %792, %794, %cst_460 {dimension_numbers = #tpu.dot_dimension_numbers<[1], [0], [0], [1], [0, 0, 1, 1], [], []>} : vector<10x8xf32>, vector<8x32xf32>, vector<10x32xf32> -> vector<10x32xf32>
    %796 = arith.addf %774, %795 : vector<10x32xf32>
    %cst_461 = arith.constant dense<0.000000e+00> : vector<10x32xf32>
    %797 = tpu.matmul %796, %689, %cst_461 {dimension_numbers = #tpu.dot_dimension_numbers<[1], [0], [0], [1], [0, 0, 1, 1], [], []>} : vector<10x32xf32>, vector<32x32xf32>, vector<10x32xf32> -> vector<10x32xf32>
    %798 = vector.broadcast %697 : vector<1x32xf32> to vector<10x32xf32>
    %799 = arith.addf %797, %798 : vector<10x32xf32>
    %800 = arith.addf %681, %799 : vector<10x32xf32>
    %c34 = arith.constant 34 : index
    %c0_462 = arith.constant 0 : index
    %c0_463 = arith.constant 0 : index
    %801 = vector.load %arg7[%c34, %c0_462, %c0_463] : memref<46x1x32xf32, #tpu.memory_space<vmem>>, vector<1x1x32xf32>
    %802 = vector.shape_cast %801 : vector<1x1x32xf32> to vector<1x32xf32>
    %c38 = arith.constant 38 : index
    %c0_464 = arith.constant 0 : index
    %c0_465 = arith.constant 0 : index
    %803 = vector.load %arg7[%c38, %c0_464, %c0_465] : memref<46x1x32xf32, #tpu.memory_space<vmem>>, vector<1x1x32xf32>
    %804 = vector.shape_cast %803 : vector<1x1x32xf32> to vector<1x32xf32>
    %cst_466 = arith.constant dense<0.000000e+00> : vector<10xf32>
    %805 = vector.multi_reduction <add>, %800, %cst_466 [1] : vector<10x32xf32> to vector<10xf32>
    %806 = vector.shape_cast %805 : vector<10xf32> to vector<10x1xf32>
    %cst_467 = arith.constant 3.200000e+01 : f32
    %807 = vector.broadcast %cst_467 : f32 to vector<10x1xf32>
    %808 = arith.divf %806, %807 : vector<10x1xf32>
    %809 = vector.broadcast %808 : vector<10x1xf32> to vector<10x32xf32>
    %810 = arith.subf %800, %809 : vector<10x32xf32>
    %811 = arith.mulf %810, %810 : vector<10x32xf32>
    %cst_468 = arith.constant dense<0.000000e+00> : vector<10xf32>
    %812 = vector.multi_reduction <add>, %811, %cst_468 [1] : vector<10x32xf32> to vector<10xf32>
    %813 = vector.shape_cast %812 : vector<10xf32> to vector<10x1xf32>
    %cst_469 = arith.constant 3.200000e+01 : f32
    %814 = vector.broadcast %cst_469 : f32 to vector<10x1xf32>
    %815 = arith.divf %813, %814 : vector<10x1xf32>
    %cst_470 = arith.constant 9.99999974E-6 : f32
    %816 = vector.broadcast %cst_470 : f32 to vector<10x1xf32>
    %817 = arith.addf %815, %816 : vector<10x1xf32>
    %818 = math.rsqrt %817 : vector<10x1xf32>
    %819 = vector.broadcast %818 : vector<10x1xf32> to vector<10x32xf32>
    %820 = arith.mulf %810, %819 : vector<10x32xf32>
    %821 = vector.broadcast %802 : vector<1x32xf32> to vector<10x32xf32>
    %822 = arith.mulf %820, %821 : vector<10x32xf32>
    %823 = vector.broadcast %804 : vector<1x32xf32> to vector<10x32xf32>
    %824 = arith.addf %822, %823 : vector<10x32xf32>
    %c22_471 = arith.constant 22 : index
    %c0_472 = arith.constant 0 : index
    %c0_473 = arith.constant 0 : index
    %825 = vector.load %arg6[%c22_471, %c0_472, %c0_473] : memref<24x32x32xf32, #tpu.memory_space<vmem>>, vector<1x32x32xf32>
    %826 = vector.shape_cast %825 : vector<1x32x32xf32> to vector<32x32xf32>
    %cst_474 = arith.constant dense<0.000000e+00> : vector<10x32xf32>
    %827 = tpu.matmul %824, %826, %cst_474 {dimension_numbers = #tpu.dot_dimension_numbers<[1], [0], [0], [1], [0, 0, 1, 1], [], []>} : vector<10x32xf32>, vector<32x32xf32>, vector<10x32xf32> -> vector<10x32xf32>
    %c31 = arith.constant 31 : index
    %c0_475 = arith.constant 0 : index
    %c0_476 = arith.constant 0 : index
    %828 = vector.load %arg7[%c31, %c0_475, %c0_476] : memref<46x1x32xf32, #tpu.memory_space<vmem>>, vector<1x1x32xf32>
    %829 = vector.shape_cast %828 : vector<1x1x32xf32> to vector<1x32xf32>
    %830 = vector.broadcast %829 : vector<1x32xf32> to vector<10x32xf32>
    %831 = arith.addf %827, %830 : vector<10x32xf32>
    %cst_477 = arith.constant 5.000000e-01 : f32
    %832 = vector.broadcast %cst_477 : f32 to vector<10x32xf32>
    %833 = arith.mulf %832, %831 : vector<10x32xf32>
    %cst_478 = arith.constant 4.471500e-02 : f32
    %834 = vector.broadcast %cst_478 : f32 to vector<10x32xf32>
    %835 = arith.mulf %834, %831 : vector<10x32xf32>
    %836 = arith.mulf %835, %831 : vector<10x32xf32>
    %837 = arith.mulf %836, %831 : vector<10x32xf32>
    %838 = arith.addf %831, %837 : vector<10x32xf32>
    %cst_479 = arith.constant 0.797884583 : f32
    %839 = vector.broadcast %cst_479 : f32 to vector<10x32xf32>
    %840 = arith.mulf %839, %838 : vector<10x32xf32>
    %841 = math.tanh %840 : vector<10x32xf32>
    %cst_480 = arith.constant 1.000000e+00 : f32
    %842 = vector.broadcast %cst_480 : f32 to vector<10x32xf32>
    %843 = arith.addf %842, %841 : vector<10x32xf32>
    %844 = arith.mulf %833, %843 : vector<10x32xf32>
    %c23_481 = arith.constant 23 : index
    %c0_482 = arith.constant 0 : index
    %c0_483 = arith.constant 0 : index
    %845 = vector.load %arg6[%c23_481, %c0_482, %c0_483] : memref<24x32x32xf32, #tpu.memory_space<vmem>>, vector<1x32x32xf32>
    %846 = vector.shape_cast %845 : vector<1x32x32xf32> to vector<32x32xf32>
    %cst_484 = arith.constant dense<0.000000e+00> : vector<10x32xf32>
    %847 = tpu.matmul %844, %846, %cst_484 {dimension_numbers = #tpu.dot_dimension_numbers<[1], [0], [0], [1], [0, 0, 1, 1], [], []>} : vector<10x32xf32>, vector<32x32xf32>, vector<10x32xf32> -> vector<10x32xf32>
    %c32 = arith.constant 32 : index
    %c0_485 = arith.constant 0 : index
    %c0_486 = arith.constant 0 : index
    %848 = vector.load %arg7[%c32, %c0_485, %c0_486] : memref<46x1x32xf32, #tpu.memory_space<vmem>>, vector<1x1x32xf32>
    %849 = vector.shape_cast %848 : vector<1x1x32xf32> to vector<1x32xf32>
    %850 = vector.broadcast %849 : vector<1x32xf32> to vector<10x32xf32>
    %851 = arith.addf %847, %850 : vector<10x32xf32>
    %852 = arith.addf %824, %851 : vector<10x32xf32>
    %c35 = arith.constant 35 : index
    %c0_487 = arith.constant 0 : index
    %c0_488 = arith.constant 0 : index
    %853 = vector.load %arg7[%c35, %c0_487, %c0_488] : memref<46x1x32xf32, #tpu.memory_space<vmem>>, vector<1x1x32xf32>
    %854 = vector.shape_cast %853 : vector<1x1x32xf32> to vector<1x32xf32>
    %c39 = arith.constant 39 : index
    %c0_489 = arith.constant 0 : index
    %c0_490 = arith.constant 0 : index
    %855 = vector.load %arg7[%c39, %c0_489, %c0_490] : memref<46x1x32xf32, #tpu.memory_space<vmem>>, vector<1x1x32xf32>
    %856 = vector.shape_cast %855 : vector<1x1x32xf32> to vector<1x32xf32>
    %cst_491 = arith.constant dense<0.000000e+00> : vector<10xf32>
    %857 = vector.multi_reduction <add>, %852, %cst_491 [1] : vector<10x32xf32> to vector<10xf32>
    %858 = vector.shape_cast %857 : vector<10xf32> to vector<10x1xf32>
    %cst_492 = arith.constant 3.200000e+01 : f32
    %859 = vector.broadcast %cst_492 : f32 to vector<10x1xf32>
    %860 = arith.divf %858, %859 : vector<10x1xf32>
    %861 = vector.broadcast %860 : vector<10x1xf32> to vector<10x32xf32>
    %862 = arith.subf %852, %861 : vector<10x32xf32>
    %863 = arith.mulf %862, %862 : vector<10x32xf32>
    %cst_493 = arith.constant dense<0.000000e+00> : vector<10xf32>
    %864 = vector.multi_reduction <add>, %863, %cst_493 [1] : vector<10x32xf32> to vector<10xf32>
    %865 = vector.shape_cast %864 : vector<10xf32> to vector<10x1xf32>
    %cst_494 = arith.constant 3.200000e+01 : f32
    %866 = vector.broadcast %cst_494 : f32 to vector<10x1xf32>
    %867 = arith.divf %865, %866 : vector<10x1xf32>
    %cst_495 = arith.constant 9.99999974E-6 : f32
    %868 = vector.broadcast %cst_495 : f32 to vector<10x1xf32>
    %869 = arith.addf %867, %868 : vector<10x1xf32>
    %870 = math.rsqrt %869 : vector<10x1xf32>
    %871 = vector.broadcast %870 : vector<10x1xf32> to vector<10x32xf32>
    %872 = arith.mulf %862, %871 : vector<10x32xf32>
    %873 = vector.broadcast %854 : vector<1x32xf32> to vector<10x32xf32>
    %874 = arith.mulf %872, %873 : vector<10x32xf32>
    %875 = vector.broadcast %856 : vector<1x32xf32> to vector<10x32xf32>
    %876 = arith.addf %874, %875 : vector<10x32xf32>
    %c36 = arith.constant 36 : index
    %c0_496 = arith.constant 0 : index
    %c0_497 = arith.constant 0 : index
    %877 = vector.load %arg7[%c36, %c0_496, %c0_497] : memref<46x1x32xf32, #tpu.memory_space<vmem>>, vector<1x1x32xf32>
    %878 = vector.shape_cast %877 : vector<1x1x32xf32> to vector<1x32xf32>
    %c40 = arith.constant 40 : index
    %c0_498 = arith.constant 0 : index
    %c0_499 = arith.constant 0 : index
    %879 = vector.load %arg7[%c40, %c0_498, %c0_499] : memref<46x1x32xf32, #tpu.memory_space<vmem>>, vector<1x1x32xf32>
    %880 = vector.shape_cast %879 : vector<1x1x32xf32> to vector<1x32xf32>
    %cst_500 = arith.constant dense<0.000000e+00> : vector<10xf32>
    %881 = vector.multi_reduction <add>, %876, %cst_500 [1] : vector<10x32xf32> to vector<10xf32>
    %882 = vector.shape_cast %881 : vector<10xf32> to vector<10x1xf32>
    %cst_501 = arith.constant 3.200000e+01 : f32
    %883 = vector.broadcast %cst_501 : f32 to vector<10x1xf32>
    %884 = arith.divf %882, %883 : vector<10x1xf32>
    %885 = vector.broadcast %884 : vector<10x1xf32> to vector<10x32xf32>
    %886 = arith.subf %876, %885 : vector<10x32xf32>
    %887 = arith.mulf %886, %886 : vector<10x32xf32>
    %cst_502 = arith.constant dense<0.000000e+00> : vector<10xf32>
    %888 = vector.multi_reduction <add>, %887, %cst_502 [1] : vector<10x32xf32> to vector<10xf32>
    %889 = vector.shape_cast %888 : vector<10xf32> to vector<10x1xf32>
    %cst_503 = arith.constant 3.200000e+01 : f32
    %890 = vector.broadcast %cst_503 : f32 to vector<10x1xf32>
    %891 = arith.divf %889, %890 : vector<10x1xf32>
    %cst_504 = arith.constant 9.99999974E-6 : f32
    %892 = vector.broadcast %cst_504 : f32 to vector<10x1xf32>
    %893 = arith.addf %891, %892 : vector<10x1xf32>
    %894 = math.rsqrt %893 : vector<10x1xf32>
    %895 = vector.broadcast %894 : vector<10x1xf32> to vector<10x32xf32>
    %896 = arith.mulf %886, %895 : vector<10x32xf32>
    %897 = vector.broadcast %878 : vector<1x32xf32> to vector<10x32xf32>
    %898 = arith.mulf %896, %897 : vector<10x32xf32>
    %899 = vector.broadcast %880 : vector<1x32xf32> to vector<10x32xf32>
    %900 = arith.addf %898, %899 : vector<10x32xf32>
    %c0_505 = arith.constant 0 : index
    %c0_506 = arith.constant 0 : index
    %901 = vector.load %arg21[%c0_505, %c0_506] : memref<2x10xf32, #tpu.memory_space<vmem>>, vector<2x10xf32>
    %cst_507 = arith.constant dense<0.000000e+00> : vector<2x32xf32>
    %902 = tpu.matmul %901, %900, %cst_507 {dimension_numbers = #tpu.dot_dimension_numbers<[1], [0], [0], [1], [0, 0, 1, 1], [], []>} : vector<2x10xf32>, vector<10x32xf32>, vector<2x32xf32> -> vector<2x32xf32>
    %c41 = arith.constant 41 : index
    %c0_508 = arith.constant 0 : index
    %c0_509 = arith.constant 0 : index
    %903 = vector.load %arg7[%c41, %c0_508, %c0_509] : memref<46x1x32xf32, #tpu.memory_space<vmem>>, vector<1x1x32xf32>
    %904 = vector.shape_cast %903 : vector<1x1x32xf32> to vector<1x32xf32>
    %905 = vector.broadcast %904 : vector<1x32xf32> to vector<2x32xf32>
    %906 = arith.mulf %902, %905 : vector<2x32xf32>
    %cst_510 = arith.constant dense<0.000000e+00> : vector<2xf32>
    %907 = vector.multi_reduction <add>, %906, %cst_510 [1] : vector<2x32xf32> to vector<2xf32>
    %908 = vector.shape_cast %907 : vector<2xf32> to vector<2x1xf32>
    %c0_511 = arith.constant 0 : index
    %c0_512 = arith.constant 0 : index
    %909 = vector.load %arg28[%c0_511, %c0_512] : memref<1x1xf32, #tpu.memory_space<vmem>>, vector<1x1xf32>
    %910 = vector.broadcast %909 : vector<1x1xf32> to vector<2x1xf32>
    %911 = arith.addf %908, %910 : vector<2x1xf32>
    tpu.wait_dma2 semaphore(%arg32 : memref<!tpu.dma_semaphore, #tpu.memory_space<semaphore_mem>>) src(%arg0 : memref<3x16x1024xf32, #tpu.memory_space<any>>) dst(%arg31 : memref<3x16x1024xf32, #tpu.memory_space<vmem>>)
    %c0_513 = arith.constant 0 : index
    %c0_514 = arith.constant 0 : index
    %912 = vector.load %arg20[%c0_513, %c0_514] : memref<2x16xf32, #tpu.memory_space<vmem>>, vector<2x16xf32>
    %cst_515 = arith.constant dense<0.000000e+00> : vector<2x25xf32>
    %913 = tpu.matmul %912, %0, %cst_515 {dimension_numbers = #tpu.dot_dimension_numbers<[1], [0], [0], [1], [0, 0, 1, 1], [], []>} : vector<2x16xf32>, vector<16x25xf32>, vector<2x25xf32> -> vector<2x25xf32>
    %c0_516 = arith.constant 0 : index
    %c0_517 = arith.constant 0 : index
    %c0_518 = arith.constant 0 : index
    %914 = vector.load %arg22[%c0_516, %c0_517, %c0_518] : memref<3x25x16xf32, #tpu.memory_space<vmem>>, vector<1x25x16xf32>
    %915 = vector.shape_cast %914 : vector<1x25x16xf32> to vector<25x16xf32>
    %cst_519 = arith.constant dense<0.000000e+00> : vector<2x16xf32>
    %916 = tpu.matmul %913, %915, %cst_519 {dimension_numbers = #tpu.dot_dimension_numbers<[1], [0], [0], [1], [0, 0, 1, 1], [], []>} : vector<2x25xf32>, vector<25x16xf32>, vector<2x16xf32> -> vector<2x16xf32>
    %c0_520 = arith.constant 0 : index
    %c0_521 = arith.constant 0 : index
    %c0_522 = arith.constant 0 : index
    %917 = vector.load %arg31[%c0_520, %c0_521, %c0_522] : memref<3x16x1024xf32, #tpu.memory_space<vmem>>, vector<1x16x1024xf32>
    %918 = vector.shape_cast %917 : vector<1x16x1024xf32> to vector<16x1024xf32>
    %cst_523 = arith.constant dense<0.000000e+00> : vector<2x1024xf32>
    %919 = tpu.matmul %916, %918, %cst_523 {dimension_numbers = #tpu.dot_dimension_numbers<[1], [0], [0], [1], [0, 0, 1, 1], [], []>} : vector<2x16xf32>, vector<16x1024xf32>, vector<2x1024xf32> -> vector<2x1024xf32>
    %c0_524 = arith.constant 0 : index
    %c0_525 = arith.constant 0 : index
    %c0_526 = arith.constant 0 : index
    %920 = vector.load %arg23[%c0_524, %c0_525, %c0_526] : memref<3x1x1024xf32, #tpu.memory_space<vmem>>, vector<1x1x1024xf32>
    %921 = vector.shape_cast %920 : vector<1x1x1024xf32> to vector<1x1024xf32>
    %922 = vector.broadcast %921 : vector<1x1024xf32> to vector<2x1024xf32>
    %923 = arith.addf %919, %922 : vector<2x1024xf32>
    %cst_527 = arith.constant 0.000000e+00 : f32
    %924 = vector.broadcast %cst_527 : f32 to vector<2x1024xf32>
    %925 = arith.maximumf %923, %924 : vector<2x1024xf32>
    %c0_528 = arith.constant 0 : index
    %c0_529 = arith.constant 0 : index
    %c0_530 = arith.constant 0 : index
    %926 = vector.load %arg24[%c0_528, %c0_529, %c0_530] : memref<3x1x1024xf32, #tpu.memory_space<vmem>>, vector<1x1x1024xf32>
    %927 = vector.shape_cast %926 : vector<1x1x1024xf32> to vector<1x1024xf32>
    %928 = vector.broadcast %927 : vector<1x1024xf32> to vector<2x1024xf32>
    %929 = arith.mulf %925, %928 : vector<2x1024xf32>
    %cst_531 = arith.constant dense<0.000000e+00> : vector<2xf32>
    %930 = vector.multi_reduction <add>, %929, %cst_531 [1] : vector<2x1024xf32> to vector<2xf32>
    %931 = vector.shape_cast %930 : vector<2xf32> to vector<2x1xf32>
    %c0_532 = arith.constant 0 : index
    %c0_533 = arith.constant 0 : index
    %c0_534 = arith.constant 0 : index
    %932 = vector.load %arg25[%c0_532, %c0_533, %c0_534] : memref<3x1x1xf32, #tpu.memory_space<vmem>>, vector<1x1x1xf32>
    %933 = vector.shape_cast %932 : vector<1x1x1xf32> to vector<1x1xf32>
    %934 = vector.broadcast %933 : vector<1x1xf32> to vector<2x1xf32>
    %935 = arith.addf %931, %934 : vector<2x1xf32>
    %c1_535 = arith.constant 1 : index
    %c0_536 = arith.constant 0 : index
    %c0_537 = arith.constant 0 : index
    %936 = vector.load %arg22[%c1_535, %c0_536, %c0_537] : memref<3x25x16xf32, #tpu.memory_space<vmem>>, vector<1x25x16xf32>
    %937 = vector.shape_cast %936 : vector<1x25x16xf32> to vector<25x16xf32>
    %cst_538 = arith.constant dense<0.000000e+00> : vector<2x16xf32>
    %938 = tpu.matmul %913, %937, %cst_538 {dimension_numbers = #tpu.dot_dimension_numbers<[1], [0], [0], [1], [0, 0, 1, 1], [], []>} : vector<2x25xf32>, vector<25x16xf32>, vector<2x16xf32> -> vector<2x16xf32>
    %c1_539 = arith.constant 1 : index
    %c0_540 = arith.constant 0 : index
    %c0_541 = arith.constant 0 : index
    %939 = vector.load %arg31[%c1_539, %c0_540, %c0_541] : memref<3x16x1024xf32, #tpu.memory_space<vmem>>, vector<1x16x1024xf32>
    %940 = vector.shape_cast %939 : vector<1x16x1024xf32> to vector<16x1024xf32>
    %cst_542 = arith.constant dense<0.000000e+00> : vector<2x1024xf32>
    %941 = tpu.matmul %938, %940, %cst_542 {dimension_numbers = #tpu.dot_dimension_numbers<[1], [0], [0], [1], [0, 0, 1, 1], [], []>} : vector<2x16xf32>, vector<16x1024xf32>, vector<2x1024xf32> -> vector<2x1024xf32>
    %c1_543 = arith.constant 1 : index
    %c0_544 = arith.constant 0 : index
    %c0_545 = arith.constant 0 : index
    %942 = vector.load %arg23[%c1_543, %c0_544, %c0_545] : memref<3x1x1024xf32, #tpu.memory_space<vmem>>, vector<1x1x1024xf32>
    %943 = vector.shape_cast %942 : vector<1x1x1024xf32> to vector<1x1024xf32>
    %944 = vector.broadcast %943 : vector<1x1024xf32> to vector<2x1024xf32>
    %945 = arith.addf %941, %944 : vector<2x1024xf32>
    %cst_546 = arith.constant 0.000000e+00 : f32
    %946 = vector.broadcast %cst_546 : f32 to vector<2x1024xf32>
    %947 = arith.maximumf %945, %946 : vector<2x1024xf32>
    %c1_547 = arith.constant 1 : index
    %c0_548 = arith.constant 0 : index
    %c0_549 = arith.constant 0 : index
    %948 = vector.load %arg24[%c1_547, %c0_548, %c0_549] : memref<3x1x1024xf32, #tpu.memory_space<vmem>>, vector<1x1x1024xf32>
    %949 = vector.shape_cast %948 : vector<1x1x1024xf32> to vector<1x1024xf32>
    %950 = vector.broadcast %949 : vector<1x1024xf32> to vector<2x1024xf32>
    %951 = arith.mulf %947, %950 : vector<2x1024xf32>
    %cst_550 = arith.constant dense<0.000000e+00> : vector<2xf32>
    %952 = vector.multi_reduction <add>, %951, %cst_550 [1] : vector<2x1024xf32> to vector<2xf32>
    %953 = vector.shape_cast %952 : vector<2xf32> to vector<2x1xf32>
    %c1_551 = arith.constant 1 : index
    %c0_552 = arith.constant 0 : index
    %c0_553 = arith.constant 0 : index
    %954 = vector.load %arg25[%c1_551, %c0_552, %c0_553] : memref<3x1x1xf32, #tpu.memory_space<vmem>>, vector<1x1x1xf32>
    %955 = vector.shape_cast %954 : vector<1x1x1xf32> to vector<1x1xf32>
    %956 = vector.broadcast %955 : vector<1x1xf32> to vector<2x1xf32>
    %957 = arith.addf %953, %956 : vector<2x1xf32>
    %c2_554 = arith.constant 2 : index
    %c0_555 = arith.constant 0 : index
    %c0_556 = arith.constant 0 : index
    %958 = vector.load %arg22[%c2_554, %c0_555, %c0_556] : memref<3x25x16xf32, #tpu.memory_space<vmem>>, vector<1x25x16xf32>
    %959 = vector.shape_cast %958 : vector<1x25x16xf32> to vector<25x16xf32>
    %cst_557 = arith.constant dense<0.000000e+00> : vector<2x16xf32>
    %960 = tpu.matmul %913, %959, %cst_557 {dimension_numbers = #tpu.dot_dimension_numbers<[1], [0], [0], [1], [0, 0, 1, 1], [], []>} : vector<2x25xf32>, vector<25x16xf32>, vector<2x16xf32> -> vector<2x16xf32>
    %c2_558 = arith.constant 2 : index
    %c0_559 = arith.constant 0 : index
    %c0_560 = arith.constant 0 : index
    %961 = vector.load %arg31[%c2_558, %c0_559, %c0_560] : memref<3x16x1024xf32, #tpu.memory_space<vmem>>, vector<1x16x1024xf32>
    %962 = vector.shape_cast %961 : vector<1x16x1024xf32> to vector<16x1024xf32>
    %cst_561 = arith.constant dense<0.000000e+00> : vector<2x1024xf32>
    %963 = tpu.matmul %960, %962, %cst_561 {dimension_numbers = #tpu.dot_dimension_numbers<[1], [0], [0], [1], [0, 0, 1, 1], [], []>} : vector<2x16xf32>, vector<16x1024xf32>, vector<2x1024xf32> -> vector<2x1024xf32>
    %c2_562 = arith.constant 2 : index
    %c0_563 = arith.constant 0 : index
    %c0_564 = arith.constant 0 : index
    %964 = vector.load %arg23[%c2_562, %c0_563, %c0_564] : memref<3x1x1024xf32, #tpu.memory_space<vmem>>, vector<1x1x1024xf32>
    %965 = vector.shape_cast %964 : vector<1x1x1024xf32> to vector<1x1024xf32>
    %966 = vector.broadcast %965 : vector<1x1024xf32> to vector<2x1024xf32>
    %967 = arith.addf %963, %966 : vector<2x1024xf32>
    %cst_565 = arith.constant 0.000000e+00 : f32
    %968 = vector.broadcast %cst_565 : f32 to vector<2x1024xf32>
    %969 = arith.maximumf %967, %968 : vector<2x1024xf32>
    %c2_566 = arith.constant 2 : index
    %c0_567 = arith.constant 0 : index
    %c0_568 = arith.constant 0 : index
    %970 = vector.load %arg24[%c2_566, %c0_567, %c0_568] : memref<3x1x1024xf32, #tpu.memory_space<vmem>>, vector<1x1x1024xf32>
    %971 = vector.shape_cast %970 : vector<1x1x1024xf32> to vector<1x1024xf32>
    %972 = vector.broadcast %971 : vector<1x1024xf32> to vector<2x1024xf32>
    %973 = arith.mulf %969, %972 : vector<2x1024xf32>
    %cst_569 = arith.constant dense<0.000000e+00> : vector<2xf32>
    %974 = vector.multi_reduction <add>, %973, %cst_569 [1] : vector<2x1024xf32> to vector<2xf32>
    %975 = vector.shape_cast %974 : vector<2xf32> to vector<2x1xf32>
    %c2_570 = arith.constant 2 : index
    %c0_571 = arith.constant 0 : index
    %c0_572 = arith.constant 0 : index
    %976 = vector.load %arg25[%c2_570, %c0_571, %c0_572] : memref<3x1x1xf32, #tpu.memory_space<vmem>>, vector<1x1x1xf32>
    %977 = vector.shape_cast %976 : vector<1x1x1xf32> to vector<1x1xf32>
    %978 = vector.broadcast %977 : vector<1x1xf32> to vector<2x1xf32>
    %979 = arith.addf %975, %978 : vector<2x1xf32>
    %c0_573 = arith.constant 0 : index
    %c0_574 = arith.constant 0 : index
    %c0_575 = arith.constant 0 : index
    %980 = vector.load %arg26[%c0_573, %c0_574, %c0_575] : memref<4x1x1xf32, #tpu.memory_space<vmem>>, vector<1x1x1xf32>
    %981 = vector.shape_cast %980 : vector<1x1x1xf32> to vector<1x1xf32>
    %982 = vector.broadcast %981 : vector<1x1xf32> to vector<2x1xf32>
    %983 = arith.mulf %911, %982 : vector<2x1xf32>
    %c1_576 = arith.constant 1 : index
    %c0_577 = arith.constant 0 : index
    %c0_578 = arith.constant 0 : index
    %984 = vector.load %arg26[%c1_576, %c0_577, %c0_578] : memref<4x1x1xf32, #tpu.memory_space<vmem>>, vector<1x1x1xf32>
    %985 = vector.shape_cast %984 : vector<1x1x1xf32> to vector<1x1xf32>
    %986 = vector.broadcast %985 : vector<1x1xf32> to vector<2x1xf32>
    %987 = arith.mulf %957, %986 : vector<2x1xf32>
    %988 = arith.addf %983, %987 : vector<2x1xf32>
    %c2_579 = arith.constant 2 : index
    %c0_580 = arith.constant 0 : index
    %c0_581 = arith.constant 0 : index
    %989 = vector.load %arg26[%c2_579, %c0_580, %c0_581] : memref<4x1x1xf32, #tpu.memory_space<vmem>>, vector<1x1x1xf32>
    %990 = vector.shape_cast %989 : vector<1x1x1xf32> to vector<1x1xf32>
    %991 = vector.broadcast %990 : vector<1x1xf32> to vector<2x1xf32>
    %992 = arith.mulf %935, %991 : vector<2x1xf32>
    %993 = arith.addf %988, %992 : vector<2x1xf32>
    %c3_582 = arith.constant 3 : index
    %c0_583 = arith.constant 0 : index
    %c0_584 = arith.constant 0 : index
    %994 = vector.load %arg26[%c3_582, %c0_583, %c0_584] : memref<4x1x1xf32, #tpu.memory_space<vmem>>, vector<1x1x1xf32>
    %995 = vector.shape_cast %994 : vector<1x1x1xf32> to vector<1x1xf32>
    %996 = vector.broadcast %995 : vector<1x1xf32> to vector<2x1xf32>
    %997 = arith.mulf %979, %996 : vector<2x1xf32>
    %998 = arith.addf %993, %997 : vector<2x1xf32>
    %c0_585 = arith.constant 0 : index
    %c0_586 = arith.constant 0 : index
    %999 = vector.load %arg27[%c0_585, %c0_586] : memref<1x1xf32, #tpu.memory_space<vmem>>, vector<1x1xf32>
    %1000 = vector.broadcast %999 : vector<1x1xf32> to vector<2x1xf32>
    %1001 = arith.addf %998, %1000 : vector<2x1xf32>
    %c0_587 = arith.constant 0 : index
    %c0_588 = arith.constant 0 : index
    %c0_589 = arith.constant 0 : index
    %1002 = vector.load %arg29[%c0_587, %c0_588, %c0_589] : memref<5x1x5xf32, #tpu.memory_space<vmem>>, vector<1x1x5xf32>
    %1003 = vector.shape_cast %1002 : vector<1x1x5xf32> to vector<1x5xf32>
    %1004 = vector.broadcast %1001 : vector<2x1xf32> to vector<2x5xf32>
    %1005 = vector.broadcast %1003 : vector<1x5xf32> to vector<2x5xf32>
    %1006 = arith.mulf %1004, %1005 : vector<2x5xf32>
    %c1_590 = arith.constant 1 : index
    %c0_591 = arith.constant 0 : index
    %c0_592 = arith.constant 0 : index
    %1007 = vector.load %arg29[%c1_590, %c0_591, %c0_592] : memref<5x1x5xf32, #tpu.memory_space<vmem>>, vector<1x1x5xf32>
    %1008 = vector.shape_cast %1007 : vector<1x1x5xf32> to vector<1x5xf32>
    %1009 = vector.broadcast %979 : vector<2x1xf32> to vector<2x5xf32>
    %1010 = vector.broadcast %1008 : vector<1x5xf32> to vector<2x5xf32>
    %1011 = arith.mulf %1009, %1010 : vector<2x5xf32>
    %1012 = arith.addf %1006, %1011 : vector<2x5xf32>
    %c2_593 = arith.constant 2 : index
    %c0_594 = arith.constant 0 : index
    %c0_595 = arith.constant 0 : index
    %1013 = vector.load %arg29[%c2_593, %c0_594, %c0_595] : memref<5x1x5xf32, #tpu.memory_space<vmem>>, vector<1x1x5xf32>
    %1014 = vector.shape_cast %1013 : vector<1x1x5xf32> to vector<1x5xf32>
    %1015 = vector.broadcast %911 : vector<2x1xf32> to vector<2x5xf32>
    %1016 = vector.broadcast %1014 : vector<1x5xf32> to vector<2x5xf32>
    %1017 = arith.mulf %1015, %1016 : vector<2x5xf32>
    %1018 = arith.addf %1012, %1017 : vector<2x5xf32>
    %c3_596 = arith.constant 3 : index
    %c0_597 = arith.constant 0 : index
    %c0_598 = arith.constant 0 : index
    %1019 = vector.load %arg29[%c3_596, %c0_597, %c0_598] : memref<5x1x5xf32, #tpu.memory_space<vmem>>, vector<1x1x5xf32>
    %1020 = vector.shape_cast %1019 : vector<1x1x5xf32> to vector<1x5xf32>
    %1021 = vector.broadcast %957 : vector<2x1xf32> to vector<2x5xf32>
    %1022 = vector.broadcast %1020 : vector<1x5xf32> to vector<2x5xf32>
    %1023 = arith.mulf %1021, %1022 : vector<2x5xf32>
    %1024 = arith.addf %1018, %1023 : vector<2x5xf32>
    %c4_599 = arith.constant 4 : index
    %c0_600 = arith.constant 0 : index
    %c0_601 = arith.constant 0 : index
    %1025 = vector.load %arg29[%c4_599, %c0_600, %c0_601] : memref<5x1x5xf32, #tpu.memory_space<vmem>>, vector<1x1x5xf32>
    %1026 = vector.shape_cast %1025 : vector<1x1x5xf32> to vector<1x5xf32>
    %1027 = vector.broadcast %935 : vector<2x1xf32> to vector<2x5xf32>
    %1028 = vector.broadcast %1026 : vector<1x5xf32> to vector<2x5xf32>
    %1029 = arith.mulf %1027, %1028 : vector<2x5xf32>
    %1030 = arith.addf %1024, %1029 : vector<2x5xf32>
    %c0_602 = arith.constant 0 : index
    %c0_603 = arith.constant 0 : index
    %1031 = vector.load %arg30[%c0_602, %c0_603] : memref<2x5xf32, #tpu.memory_space<vmem>>, vector<2x5xf32>
    tpu.vector_store %arg30[%c0_602, %c0_603], %1030 {strides = array<i32>} : memref<2x5xf32, #tpu.memory_space<vmem>>, vector<2x5xf32>,
    return
  }
}

</mosaic_0001>

<llo_original>
// kernel: informer_dnn_forward.1
$region0: #{informer_dnn_forward.1}
  #allocation0 [shape = 'u32[]', space=smem, size = 0x4, offset = 0x4, fixed_abs, tag = 'smem constant byte address 0x4 - core index']
  #allocation1 [shape = 'u32[72,128]{1,0:T(1,128)}', space=vmem, size = 0x9000, scoped, tag = 'internal scratch']
  #allocation2 [shape = 'f32[3,16,1024]{2,1,0:T(8,128)}', space=vmem, size = 0x30000, scoped, tag = 'scratch operand']
  #allocation3 [shape = 's32[1]{0}', space=sflag, size = 0x4, scoped, tag = 'scratch operand']
  #allocation4 [shape = 'f32[1,1]{1,0:T(1,128)S(1)}', space=vmem, size = 0x200, scoped, tag = 'scoped memory for informer_dnn_forward.1']
  #allocation5 [shape = 'f32[1,1]{1,0:T(1,128)S(1)}', space=vmem, size = 0x200, scoped, tag = 'scoped memory for informer_dnn_forward.1']
  #allocation6 [shape = 's32[]', space=sflag, size = 0x4, offset = 0, fixed_abs, tag = 'sflag constant byte address 0x0 - dummy sync flag']
  #allocation7 [shape = 's32[]', space=sflag, size = 0x4, offset = 0, fixed_abs, tag = 'sflag constant byte address 0x0 - dummy sync flag']
  #allocation8 [shape = 'u32[]', space=smem, size = 0x4, offset = 0x44, fixed_abs, tag = 'smem constant byte address 0x44 - assertion arg 0']
  #allocation9 [shape = 'u32[]', space=smem, size = 0x4, offset = 0x48, fixed_abs, tag = 'smem constant byte address 0x48 - assertion arg 1']
  %s0 = inlined_call_operand.smem [shape: u32[31], index: -1, kind: input, shape index: {}]
  %s1 = sld [smem:[%s0]]
  %s2 = scalar_lea.smem %s0, 1
  %s3 = sld [smem:[%s2]]
  %s4 = scalar_lea.smem %s0, 2
  %s5 = sld [smem:[%s4]]
  %s6 = scalar_lea.smem %s0, 3
  %s7 = sld [smem:[%s6]]
  %s8 = scalar_lea.smem %s0, 4
  %s9 = sld [smem:[%s8]]
  %s10 = scalar_lea.smem %s0, 5
  %s11 = sld [smem:[%s10]]
  %s12 = scalar_lea.smem %s0, 6
  %s13 = sld [smem:[%s12]]
  %s14 = scalar_lea.smem %s0, 7
  %s15 = sld [smem:[%s14]]
  %s16 = scalar_lea.smem %s0, 8
  %s17 = sld [smem:[%s16]]
  %s18 = scalar_lea.smem %s0, 9
  %s19 = sld [smem:[%s18]]
  %s20 = scalar_lea.smem %s0, 10
  %s21 = sld [smem:[%s20]]
  %s22 = scalar_lea.smem %s0, 11
  %s23 = sld [smem:[%s22]]
  %s24 = scalar_lea.smem %s0, 12
  %s25 = sld [smem:[%s24]]
  %s26 = scalar_lea.smem %s0, 13
  %s27 = sld [smem:[%s26]]
  %s28 = scalar_lea.smem %s0, 14
  %s29 = sld [smem:[%s28]]
  %s30 = scalar_lea.smem %s0, 15
  %s31 = sld [smem:[%s30]]
  %s32 = scalar_lea.smem %s0, 16
  %s33 = sld [smem:[%s32]]
  %s34 = scalar_lea.smem %s0, 17
  %s35 = sld [smem:[%s34]]
  %s36 = scalar_lea.smem %s0, 18
  %s37 = sld [smem:[%s36]]
  %s38 = scalar_lea.smem %s0, 19
  %s39 = sld [smem:[%s38]]
  %s40 = scalar_lea.smem %s0, 20
  %s41 = sld [smem:[%s40]]
  %s42 = scalar_lea.smem %s0, 21
  %s43 = sld [smem:[%s42]]
  %s44 = scalar_lea.smem %s0, 22
  %s45 = sld [smem:[%s44]]
  %s46 = scalar_lea.smem %s0, 23
  %s47 = sld [smem:[%s46]]
  %s48 = scalar_lea.smem %s0, 24
  %s49 = sld [smem:[%s48]]
  %s50 = scalar_lea.smem %s0, 25
  %s51 = sld [smem:[%s50]]
  %s52 = scalar_lea.smem %s0, 26
  %s53 = sld [smem:[%s52]]
  %s54 = scalar_lea.smem %s0, 27
  %s55 = sld [smem:[%s54]]
  %s56 = scalar_lea.smem %s0, 28
  %s57 = sld [smem:[%s56]]
  %s58 = scalar_lea.smem %s0, 29
  %s59 = sld [smem:[%s58]]
  %s60 = scalar_lea.smem %s0, 30
  %s61 = sld [smem:[%s60]]
  %s62 = sld [smem:[#allocation0]]
  $region130: #{informer_dnn_forward.1} parent=0
    _
  %s64 = ssub.s32 1, %s62
  %s65 = scalar_select 0, %s64, %s62
  %v66 = vstv %s55
  %67 = vst [vmem:[#allocation4] sm:$0x1] %v66
  %v68 = vstv %s57
  %69 = vst [vmem:[#allocation5] sm:$0x1] %v68
  // Predicated region
  $region2: #{informer_dnn_forward.1} parent=0 // pred_check
    _
  $region3: #{informer_dnn_forward.1} parent=0 // pred_check_branch
    %71 = sbr.rel (0) target = $region5
  $region4: #{informer_dnn_forward.1} parent=0 // pred_region
    _
  $region5: #{informer_dnn_forward.1} parent=0 // pred_fallthru
    _
  // Predicated region
  $region6: #{informer_dnn_forward.1} parent=0 // pred_check
    _
  $region7: #{informer_dnn_forward.1} parent=0 // pred_check_branch
    %73 = sbr.rel (0) target = $region9
  $region8: #{informer_dnn_forward.1} parent=0 // pred_region
    _
  $region9: #{informer_dnn_forward.1} parent=0 // pred_fallthru
    _
  // Predicated region
  $region10: #{informer_dnn_forward.1} parent=0 // pred_check
    _
  $region11: #{informer_dnn_forward.1} parent=0 // pred_check_branch
    %75 = sbr.rel (0) target = $region13
  $region12: #{informer_dnn_forward.1} parent=0 // pred_region
    _
  $region13: #{informer_dnn_forward.1} parent=0 // pred_fallthru
    _
  // Predicated region
  $region14: #{informer_dnn_forward.1} parent=0 // pred_check
    _
  $region15: #{informer_dnn_forward.1} parent=0 // pred_check_branch
    %77 = sbr.rel (0) target = $region17
  $region16: #{informer_dnn_forward.1} parent=0 // pred_region
    _
  $region17: #{informer_dnn_forward.1} parent=0 // pred_fallthru
    _
  // Predicated region
  $region18: #{informer_dnn_forward.1} parent=0 // pred_check
    _
  $region19: #{informer_dnn_forward.1} parent=0 // pred_check_branch
    %79 = sbr.rel (0) target = $region21
  $region20: #{informer_dnn_forward.1} parent=0 // pred_region
    _
  $region21: #{informer_dnn_forward.1} parent=0 // pred_fallthru
    _
  // Predicated region
  $region22: #{informer_dnn_forward.1} parent=0 // pred_check
    _
  $region23: #{informer_dnn_forward.1} parent=0 // pred_check_branch
    %81 = sbr.rel (0) target = $region25
  $region24: #{informer_dnn_forward.1} parent=0 // pred_region
    _
  $region25: #{informer_dnn_forward.1} parent=0 // pred_fallthru
    _
  // Predicated region
  $region26: #{informer_dnn_forward.1} parent=0 // pred_check
    _
  $region27: #{informer_dnn_forward.1} parent=0 // pred_check_branch
    %83 = sbr.rel (0) target = $region29
  $region28: #{informer_dnn_forward.1} parent=0 // pred_region
    _
  $region29: #{informer_dnn_forward.1} parent=0 // pred_fallthru
    _
  // Predicated region
  $region30: #{informer_dnn_forward.1} parent=0 // pred_check
    _
  $region31: #{informer_dnn_forward.1} parent=0 // pred_check_branch
    %85 = sbr.rel (0) target = $region33
  $region32: #{informer_dnn_forward.1} parent=0 // pred_region
    _
  $region33: #{informer_dnn_forward.1} parent=0 // pred_fallthru
    _
  // Predicated region
  $region34: #{informer_dnn_forward.1} parent=0 // pred_check
    _
  $region35: #{informer_dnn_forward.1} parent=0 // pred_check_branch
    %87 = sbr.rel (0) target = $region37
  $region36: #{informer_dnn_forward.1} parent=0 // pred_region
    _
  $region37: #{informer_dnn_forward.1} parent=0 // pred_fallthru
    _
  // Predicated region
  $region38: #{informer_dnn_forward.1} parent=0 // pred_check
    _
  $region39: #{informer_dnn_forward.1} parent=0 // pred_check_branch
    %89 = sbr.rel (0) target = $region41
  $region40: #{informer_dnn_forward.1} parent=0 // pred_region
    _
  $region41: #{informer_dnn_forward.1} parent=0 // pred_fallthru
    _
  // Predicated region
  $region42: #{informer_dnn_forward.1} parent=0 // pred_check
    _
  $region43: #{informer_dnn_forward.1} parent=0 // pred_check_branch
    %91 = sbr.rel (0) target = $region45
  $region44: #{informer_dnn_forward.1} parent=0 // pred_region
    _
  $region45: #{informer_dnn_forward.1} parent=0 // pred_fallthru
    _
  // Predicated region
  $region46: #{informer_dnn_forward.1} parent=0 // pred_check
    _
  $region47: #{informer_dnn_forward.1} parent=0 // pred_check_branch
    %93 = sbr.rel (0) target = $region49
  $region48: #{informer_dnn_forward.1} parent=0 // pred_region
    _
  $region49: #{informer_dnn_forward.1} parent=0 // pred_fallthru
    _
  // Predicated region
  $region50: #{informer_dnn_forward.1} parent=0 // pred_check
    _
  $region51: #{informer_dnn_forward.1} parent=0 // pred_check_branch
    %95 = sbr.rel (0) target = $region53
  $region52: #{informer_dnn_forward.1} parent=0 // pred_region
    _
  $region53: #{informer_dnn_forward.1} parent=0 // pred_fallthru
    _
  // Predicated region
  $region54: #{informer_dnn_forward.1} parent=0 // pred_check
    _
  $region55: #{informer_dnn_forward.1} parent=0 // pred_check_branch
    %97 = sbr.rel (0) target = $region57
  $region56: #{informer_dnn_forward.1} parent=0 // pred_region
    _
  $region57: #{informer_dnn_forward.1} parent=0 // pred_fallthru
    _
  // Predicated region
  $region58: #{informer_dnn_forward.1} parent=0 // pred_check
    _
  $region59: #{informer_dnn_forward.1} parent=0 // pred_check_branch
    %99 = sbr.rel (0) target = $region61
  $region60: #{informer_dnn_forward.1} parent=0 // pred_region
    _
  $region61: #{informer_dnn_forward.1} parent=0 // pred_fallthru
    _
  // Predicated region
  $region62: #{informer_dnn_forward.1} parent=0 // pred_check
    _
  $region63: #{informer_dnn_forward.1} parent=0 // pred_check_branch
    %101 = sbr.rel (0) target = $region65
  $region64: #{informer_dnn_forward.1} parent=0 // pred_region
    _
  $region65: #{informer_dnn_forward.1} parent=0 // pred_fallthru
    _
  // Predicated region
  $region66: #{informer_dnn_forward.1} parent=0 // pred_check
    _
  $region67: #{informer_dnn_forward.1} parent=0 // pred_check_branch
    %103 = sbr.rel (0) target = $region69
  $region68: #{informer_dnn_forward.1} parent=0 // pred_region
    _
  $region69: #{informer_dnn_forward.1} parent=0 // pred_fallthru
    _
  // Predicated region
  $region70: #{informer_dnn_forward.1} parent=0 // pred_check
    _
  $region71: #{informer_dnn_forward.1} parent=0 // pred_check_branch
    %105 = sbr.rel (0) target = $region73
  $region72: #{informer_dnn_forward.1} parent=0 // pred_region
    _
  $region73: #{informer_dnn_forward.1} parent=0 // pred_fallthru
    _
  // Predicated region
  $region74: #{informer_dnn_forward.1} parent=0 // pred_check
    _
  $region75: #{informer_dnn_forward.1} parent=0 // pred_check_branch
    %107 = sbr.rel (0) target = $region77
  $region76: #{informer_dnn_forward.1} parent=0 // pred_region
    _
  $region77: #{informer_dnn_forward.1} parent=0 // pred_fallthru
    _
  // Predicated region
  $region78: #{informer_dnn_forward.1} parent=0 // pred_check
    _
  $region79: #{informer_dnn_forward.1} parent=0 // pred_check_branch
    %109 = sbr.rel (0) target = $region81
  $region80: #{informer_dnn_forward.1} parent=0 // pred_region
    _
  $region81: #{informer_dnn_forward.1} parent=0 // pred_fallthru
    _
  // Predicated region
  $region82: #{informer_dnn_forward.1} parent=0 // pred_check
    _
  $region83: #{informer_dnn_forward.1} parent=0 // pred_check_branch
    %111 = sbr.rel (0) target = $region85
  $region84: #{informer_dnn_forward.1} parent=0 // pred_region
    _
  $region85: #{informer_dnn_forward.1} parent=0 // pred_fallthru
    _
  // Predicated region
  $region86: #{informer_dnn_forward.1} parent=0 // pred_check
    _
  $region87: #{informer_dnn_forward.1} parent=0 // pred_check_branch
    %113 = sbr.rel (0) target = $region89
  $region88: #{informer_dnn_forward.1} parent=0 // pred_region
    _
  $region89: #{informer_dnn_forward.1} parent=0 // pred_fallthru
    _
  // Predicated region
  $region90: #{informer_dnn_forward.1} parent=0 // pred_check
    _
  $region91: #{informer_dnn_forward.1} parent=0 // pred_check_branch
    %115 = sbr.rel (0) target = $region93
  $region92: #{informer_dnn_forward.1} parent=0 // pred_region
    _
  $region93: #{informer_dnn_forward.1} parent=0 // pred_fallthru
    _
  // Predicated region
  $region94: #{informer_dnn_forward.1} parent=0 // pred_check
    _
  $region95: #{informer_dnn_forward.1} parent=0 // pred_check_branch
    %117 = sbr.rel (0) target = $region97
  $region96: #{informer_dnn_forward.1} parent=0 // pred_region
    _
  $region97: #{informer_dnn_forward.1} parent=0 // pred_fallthru
    _
  // Predicated region
  $region98: #{informer_dnn_forward.1} parent=0 // pred_check
    _
  $region99: #{informer_dnn_forward.1} parent=0 // pred_check_branch
    %119 = sbr.rel (0) target = $region101
  $region100: #{informer_dnn_forward.1} parent=0 // pred_region
    _
  $region101: #{informer_dnn_forward.1} parent=0 // pred_fallthru
    _
  // Predicated region
  $region102: #{informer_dnn_forward.1} parent=0 // pred_check
    _
  $region103: #{informer_dnn_forward.1} parent=0 // pred_check_branch
    %121 = sbr.rel (0) target = $region105
  $region104: #{informer_dnn_forward.1} parent=0 // pred_region
    _
  $region105: #{informer_dnn_forward.1} parent=0 // pred_fallthru
    _
  // Predicated region
  $region106: #{informer_dnn_forward.1} parent=0 // pred_check
    _
  $region107: #{informer_dnn_forward.1} parent=0 // pred_check_branch
    %123 = sbr.rel (0) target = $region109
  $region108: #{informer_dnn_forward.1} parent=0 // pred_region
    _
  $region109: #{informer_dnn_forward.1} parent=0 // pred_fallthru
    _
  // Predicated region
  $region110: #{informer_dnn_forward.1} parent=0 // pred_check
    _
  $region111: #{informer_dnn_forward.1} parent=0 // pred_check_branch
    %125 = sbr.rel (0) target = $region113
  $region112: #{informer_dnn_forward.1} parent=0 // pred_region
    _
  $region113: #{informer_dnn_forward.1} parent=0 // pred_fallthru
    _
  // Predicated region
  $region114: #{informer_dnn_forward.1} parent=0 // pred_check
    _
  $region115: #{informer_dnn_forward.1} parent=0 // pred_check_branch
    %127 = sbr.rel (0) target = $region117
  $region116: #{informer_dnn_forward.1} parent=0 // pred_region
    _
  $region117: #{informer_dnn_forward.1} parent=0 // pred_fallthru
    _
  // Predicated region
  $region118: #{informer_dnn_forward.1} parent=0 // pred_check
    _
  $region119: #{informer_dnn_forward.1} parent=0 // pred_check_branch
    %129 = sbr.rel target = $region121
  $region120: #{informer_dnn_forward.1} parent=0 // pred_region
    %130 = sst [smem:[#allocation8]] [#allocation7]
    %131 = sst [smem:[#allocation9]] [#allocation6]
  $region121: #{informer_dnn_forward.1} parent=0 // pred_fallthru
    _
  %133 = shalt.err (0)
  %s135 = sshll.u32 %s1, 4
  %s136 = int_to_ptr.hbm [resolvable:$true] %s135
  %s137 = sshll.u32 [#allocation2], 4
  %s138 = int_to_ptr.vmem [resolvable:$true] %s137
  %140 = dma.hbm_to_vmem [thread:$0]  %s136, 6144, %s138, [#allocation3]
  %v141 = vld [vmem:[%s3] sm:$0xff]
  %v142 = vld [vmem:[%s3 + $0x8] sm:$0xff]
  %v143 = vld [vmem:[%s7] sm:$0xff]
  %v144 = vld [vmem:[%s7 + $0x8] sm:$0xff]
  %v145 = vld [vmem:[%s11] sm:$0xff]
  %v146 = vld [vmem:[%s11 + $0x8] sm:$0xff]
  %v147 = vld [vmem:[%s11 + $0x10] sm:$0xff]
  %v148 = vld [vmem:[%s11 + $0x18] sm:$0x1]
  %vm149 = vcmask 203776
  %v151 = vsel %vm149, %v141, 0
  %v154 = vsel %vm149, %v142, 0
  %vm156 = vcmask 1040384
  %v158 = vsel %vm156, %v148, 0
  %160 = vmatpush.msra.mxu0 0.0
  %161 = vmatpush.msra.mxu0 0.0
  %162 = vmatpush.msra.mxu0 0.0
  %163 = vmatpush.msra.mxu0 0.0
  %164 = vmatpush.msra.mxu0 0.0
  %165 = vmatpush.msra.mxu0 0.0
  %166 = vmatpush.msra.mxu0 0.0
  %167 = vmatpush.msra.mxu0 0.0
  %168 = vmatpush.msra.mxu0 0.0
  %169 = vmatpush.msra.mxu0 0.0
  %170 = vmatpush.msra.mxu0 0.0
  %171 = vmatpush.msra.mxu0 0.0
  %172 = vmatpush.msra.mxu0 %v158
  %173 = vmatpush.msra.mxu0 %v147
  %174 = vmatpush.msra.mxu0 %v146
  %175 = vmatpush.msra.mxu0 %v145
  %176 = vmatmul.f32.gmra.mxu0 %v151
  %v177 = vpop.f32.mrf.mxu0
  %v178 = vadd.f32 0.0, %v177
  %179 = vmatmul.f32.gmra.mxu0 %v154
  %v180 = vpop.f32.mrf.mxu0
  %v181 = vadd.f32 0.0, %v180
  %182 = vdwg.mxu0
  %s183 = scalar_lea.vmem %s11, 32
  %v184 = vld [vmem:[%s183] sm:$0xff]
  %v185 = vld [vmem:[%s183 + $0x8] sm:$0xff]
  %v186 = vld [vmem:[%s183 + $0x10] sm:$0xff]
  %v187 = vld [vmem:[%s183 + $0x18] sm:$0x1]
  %v189 = vsel %vm156, %v187, 0
  %191 = vmatpush.msra.mxu0 0.0
  %192 = vmatpush.msra.mxu0 0.0
  %193 = vmatpush.msra.mxu0 0.0
  %194 = vmatpush.msra.mxu0 0.0
  %195 = vmatpush.msra.mxu0 0.0
  %196 = vmatpush.msra.mxu0 0.0
  %197 = vmatpush.msra.mxu0 0.0
  %198 = vmatpush.msra.mxu0 0.0
  %199 = vmatpush.msra.mxu0 0.0
  %200 = vmatpush.msra.mxu0 0.0
  %201 = vmatpush.msra.mxu0 0.0
  %202 = vmatpush.msra.mxu0 0.0
  %203 = vmatpush.msra.mxu0 %v189
  %204 = vmatpush.msra.mxu0 %v186
  %205 = vmatpush.msra.mxu0 %v185
  %206 = vmatpush.msra.mxu0 %v184
  %207 = vmatmul.f32.gmra.mxu0 %v151
  %v208 = vpop.f32.mrf.mxu0
  %v209 = vadd.f32 0.0, %v208
  %210 = vmatmul.f32.gmra.mxu0 %v154
  %v211 = vpop.f32.mrf.mxu0
  %v212 = vadd.f32 0.0, %v211
  %213 = vdwg.mxu0
  %s214 = scalar_lea.vmem %s11, 64
  %v215 = vld [vmem:[%s214] sm:$0xff]
  %v216 = vld [vmem:[%s214 + $0x8] sm:$0xff]
  %v217 = vld [vmem:[%s214 + $0x10] sm:$0xff]
  %v218 = vld [vmem:[%s214 + $0x18] sm:$0x1]
  %v220 = vsel %vm156, %v218, 0
  %222 = vmatpush.msra.mxu0 0.0
  %223 = vmatpush.msra.mxu0 0.0
  %224 = vmatpush.msra.mxu0 0.0
  %225 = vmatpush.msra.mxu0 0.0
  %226 = vmatpush.msra.mxu0 0.0
  %227 = vmatpush.msra.mxu0 0.0
  %228 = vmatpush.msra.mxu0 0.0
  %229 = vmatpush.msra.mxu0 0.0
  %230 = vmatpush.msra.mxu0 0.0
  %231 = vmatpush.msra.mxu0 0.0
  %232 = vmatpush.msra.mxu0 0.0
  %233 = vmatpush.msra.mxu0 0.0
  %234 = vmatpush.msra.mxu0 %v220
  %235 = vmatpush.msra.mxu0 %v217
  %236 = vmatpush.msra.mxu0 %v216
  %237 = vmatpush.msra.mxu0 %v215
  %238 = vmatmul.f32.gmra.mxu0 %v151
  %v239 = vpop.f32.mrf.mxu0
  %v240 = vadd.f32 0.0, %v239
  %241 = vmatmul.f32.gmra.mxu0 %v154
  %v242 = vpop.f32.mrf.mxu0
  %v243 = vadd.f32 0.0, %v242
  %244 = vdwg.mxu0
  %v245 = vld [vmem:[%s17] sm:$0xff]
  %v246 = vld [vmem:[%s17 + $0x8] sm:$0xff]
  %vm247 = vcmask 130048
  %v249 = vsel %vm247, %v245, 0
  %v252 = vsel %vm247, %v246, 0
  %254 = vmatpush.msra.mxu0 0.0
  %255 = vmatpush.msra.mxu0 0.0
  %256 = vmatpush.msra.mxu0 0.0
  %257 = vmatpush.msra.mxu0 0.0
  %258 = vmatpush.msra.mxu0 0.0
  %259 = vmatpush.msra.mxu0 0.0
  %260 = vmatpush.msra.mxu0 0.0
  %261 = vmatpush.msra.mxu0 0.0
  %262 = vmatpush.msra.mxu0 0.0
  %263 = vmatpush.msra.mxu0 0.0
  %264 = vmatpush.msra.mxu0 0.0
  %265 = vmatpush.msra.mxu0 0.0
  %266 = vmatpush.msra.mxu0 0.0
  %267 = vmatpush.msra.mxu0 0.0
  %268 = vmatpush.msra.mxu0 %v181
  %269 = vmatpush.msra.mxu0 %v178
  %270 = vmatmul.f32.gmra.mxu0 %v249
  %v271 = vpop.f32.mrf.mxu0
  %v272 = vadd.f32 %v209, %v271
  %273 = vmatmul.f32.gmra.mxu0 %v252
  %v274 = vpop.f32.mrf.mxu0
  %v275 = vadd.f32 %v212, %v274
  %276 = vdwg.mxu0
  %s277 = scalar_lea.vmem %s17, 16
  %v278 = vld [vmem:[%s277] sm:$0xff]
  %v279 = vld [vmem:[%s277 + $0x8] sm:$0xff]
  %v281 = vsel %vm247, %v278, 0
  %v284 = vsel %vm247, %v279, 0
  %286 = vmatpush.msra.mxu0 0.0
  %287 = vmatpush.msra.mxu0 0.0
  %288 = vmatpush.msra.mxu0 0.0
  %289 = vmatpush.msra.mxu0 0.0
  %290 = vmatpush.msra.mxu0 0.0
  %291 = vmatpush.msra.mxu0 0.0
  %292 = vmatpush.msra.mxu0 0.0
  %293 = vmatpush.msra.mxu0 0.0
  %294 = vmatpush.msra.mxu0 0.0
  %295 = vmatpush.msra.mxu0 0.0
  %296 = vmatpush.msra.mxu0 0.0
  %297 = vmatpush.msra.mxu0 0.0
  %298 = vmatpush.msra.mxu0 0.0
  %299 = vmatpush.msra.mxu0 0.0
  %300 = vmatpush.msra.mxu0 %v243
  %301 = vmatpush.msra.mxu0 %v240
  %302 = vmatmul.f32.gmra.mxu0 %v281
  %v303 = vpop.f32.mrf.mxu0
  %v304 = vadd.f32 0.0, %v303
  %305 = vmatmul.f32.gmra.mxu0 %v284
  %v306 = vpop.f32.mrf.mxu0
  %v307 = vadd.f32 0.0, %v306
  %308 = vdwg.mxu0
  %v309 = vadd.f32 %v272, %v304
  %v310 = vadd.f32 %v275, %v307
  %v311 = vadd.f32 %v309, %v143
  %v312 = vadd.f32 %v310, %v144
  %v313 = vld [vmem:[%s21] sm:$0xff]
  %v314 = vld [vmem:[%s21 + $0x8] sm:$0xff]
  %v315 = vld [vmem:[%s23] sm:$0xff]
  %v316 = vld [vmem:[%s13] sm:$0xff]
  %v317 = vld [vmem:[%s13 + $0x8] sm:$0xff]
  %v318 = vld [vmem:[%s13 + $0x10] sm:$0xff]
  %v319 = vld [vmem:[%s13 + $0x18] sm:$0xff]
  %s320 = scalar_lea.vmem %s13, 32
  %v321 = vld [vmem:[%s320] sm:$0xff]
  %v322 = vld [vmem:[%s320 + $0x8] sm:$0xff]
  %v323 = vld [vmem:[%s320 + $0x10] sm:$0xff]
  %v324 = vld [vmem:[%s320 + $0x18] sm:$0xff]
  %s325 = scalar_lea.vmem %s13, 64
  %v326 = vld [vmem:[%s325] sm:$0xff]
  %v327 = vld [vmem:[%s325 + $0x8] sm:$0xff]
  %v328 = vld [vmem:[%s325 + $0x10] sm:$0xff]
  %v329 = vld [vmem:[%s325 + $0x18] sm:$0xff]
  %s330 = scalar_lea.vmem %s13, 96
  %v331 = vld [vmem:[%s330] sm:$0xff]
  %v332 = vld [vmem:[%s330 + $0x8] sm:$0xff]
  %v333 = vld [vmem:[%s330 + $0x10] sm:$0xff]
  %v334 = vld [vmem:[%s330 + $0x18] sm:$0xff]
  %v335 = vld [vmem:[%s15] sm:$0x1]
  %s336 = scalar_lea.vmem %s15, 1
  %v337 = vld [vmem:[%s336] sm:$0x1]
  %s338 = scalar_lea.vmem %s15, 2
  %v339 = vld [vmem:[%s338] sm:$0x1]
  %s340 = scalar_lea.vmem %s15, 3
  %v341 = vld [vmem:[%s340] sm:$0x1]
  %v343 = vperm.slane %v335, 0
  %vm345 = vcmask 261120
  %v347 = vsel %vm345, %v311, 0
  %v350 = vsel %vm345, %v312, 0
  %352 = vmatpush.msra.mxu0 0.0
  %353 = vmatpush.msra.mxu0 0.0
  %354 = vmatpush.msra.mxu0 0.0
  %355 = vmatpush.msra.mxu0 0.0
  %356 = vmatpush.msra.mxu0 0.0
  %357 = vmatpush.msra.mxu0 0.0
  %358 = vmatpush.msra.mxu0 0.0
  %359 = vmatpush.msra.mxu0 0.0
  %360 = vmatpush.msra.mxu0 0.0
  %361 = vmatpush.msra.mxu0 0.0
  %362 = vmatpush.msra.mxu0 0.0
  %363 = vmatpush.msra.mxu0 0.0
  %364 = vmatpush.msra.mxu0 %v319
  %365 = vmatpush.msra.mxu0 %v318
  %366 = vmatpush.msra.mxu0 %v317
  %367 = vmatpush.msra.mxu0 %v316
  %368 = vmatmul.f32.gmra.mxu0 %v347
  %v369 = vpop.f32.mrf.mxu0
  %v370 = vadd.f32 %v343, %v369
  %371 = vmatmul.f32.gmra.mxu0 %v350
  %v372 = vpop.f32.mrf.mxu0
  %v373 = vadd.f32 %v343, %v372
  %374 = vdwg.mxu0
  %v376 = vperm.slane %v337, 0
  %378 = vmatpush.msra.mxu0 0.0
  %379 = vmatpush.msra.mxu0 0.0
  %380 = vmatpush.msra.mxu0 0.0
  %381 = vmatpush.msra.mxu0 0.0
  %382 = vmatpush.msra.mxu0 0.0
  %383 = vmatpush.msra.mxu0 0.0
  %384 = vmatpush.msra.mxu0 0.0
  %385 = vmatpush.msra.mxu0 0.0
  %386 = vmatpush.msra.mxu0 0.0
  %387 = vmatpush.msra.mxu0 0.0
  %388 = vmatpush.msra.mxu0 0.0
  %389 = vmatpush.msra.mxu0 0.0
  %390 = vmatpush.msra.mxu0 %v324
  %391 = vmatpush.msra.mxu0 %v323
  %392 = vmatpush.msra.mxu0 %v322
  %393 = vmatpush.msra.mxu0 %v321
  %394 = vmatmul.f32.gmra.mxu0 %v347
  %v395 = vpop.f32.mrf.mxu0
  %v396 = vadd.f32 %v376, %v395
  %397 = vmatmul.f32.gmra.mxu0 %v350
  %v398 = vpop.f32.mrf.mxu0
  %v399 = vadd.f32 %v376, %v398
  %400 = vdwg.mxu0
  %v402 = vperm.slane %v339, 0
  %404 = vmatpush.msra.mxu0 0.0
  %405 = vmatpush.msra.mxu0 0.0
  %406 = vmatpush.msra.mxu0 0.0
  %407 = vmatpush.msra.mxu0 0.0
  %408 = vmatpush.msra.mxu0 0.0
  %409 = vmatpush.msra.mxu0 0.0
  %410 = vmatpush.msra.mxu0 0.0
  %411 = vmatpush.msra.mxu0 0.0
  %412 = vmatpush.msra.mxu0 0.0
  %413 = vmatpush.msra.mxu0 0.0
  %414 = vmatpush.msra.mxu0 0.0
  %415 = vmatpush.msra.mxu0 0.0
  %416 = vmatpush.msra.mxu0 %v329
  %417 = vmatpush.msra.mxu0 %v328
  %418 = vmatpush.msra.mxu0 %v327
  %419 = vmatpush.msra.mxu0 %v326
  %420 = vmatmul.f32.gmra.mxu0 %v347
  %v421 = vpop.f32.mrf.mxu0
  %v422 = vadd.f32 %v402, %v421
  %423 = vmatmul.f32.gmra.mxu0 %v350
  %v424 = vpop.f32.mrf.mxu0
  %v425 = vadd.f32 %v402, %v424
  %426 = vdwg.mxu0
  %s427 = scalar_lea.vmem %s15, 42
  %v428 = vld [vmem:[%s427] sm:$0x1]
  %v430 = vperm.slane %v428, 0
  %v432 = vmul.f32 %v370, %v430
  %v433 = vmul.f32 %v373, %v430
  %v435 = vsel %vm345, %v432, 0
  %v438 = vsel %vm345, %v433, 0
  %v441 = vsel %vm345, %v396, 0
  %v444 = vsel %vm345, %v399, 0
  %446 = vmatpush.xpose.msra.mxu0 0.0
  %447 = vmatpush.xpose.msra.mxu0 0.0
  %448 = vmatpush.xpose.msra.mxu0 0.0
  %449 = vmatpush.xpose.msra.mxu0 0.0
  %450 = vmatpush.xpose.msra.mxu0 0.0
  %451 = vmatpush.xpose.msra.mxu0 0.0
  %452 = vmatpush.xpose.msra.mxu0 0.0
  %453 = vmatpush.xpose.msra.mxu0 0.0
  %454 = vmatpush.xpose.msra.mxu0 0.0
  %455 = vmatpush.xpose.msra.mxu0 0.0
  %456 = vmatpush.xpose.msra.mxu0 0.0
  %457 = vmatpush.xpose.msra.mxu0 0.0
  %458 = vmatpush.xpose.msra.mxu0 0.0
  %459 = vmatpush.xpose.msra.mxu0 0.0
  %460 = vmatpush.xpose.msra.mxu0 %v444
  %461 = vmatpush.xpose.msra.mxu0 %v441
  %462 = vmatmul.f32.gmra.mxu0 %v435
  %v463 = vpop.f32.mrf.mxu0
  %v464 = vadd.f32 0.0, %v463
  %465 = vmatmul.f32.gmra.mxu0 %v438
  %v466 = vpop.f32.mrf.mxu0
  %v467 = vadd.f32 0.0, %v466
  %468 = vdwg.mxu0
  %v469 = vmul.f32 %v464, 0.35355338
  %v470 = vmul.f32 %v467, 0.35355338
  %v471 = vadd.f32 %v469, %v313
  %v472 = vadd.f32 %v470, %v314
  %v473 = vsel %vm247, %v471, -inf
  %474 = vmax.xlane.f32.xlu0 %v473
  %v475 = vpop.xlane.xlu0 %474
  %v476 = vsel %vm247, %v472, -inf
  %477 = vmax.xlane.f32.xlu0 %v476
  %v478 = vpop.xlane.xlu0 %477
  %v479 = vsub.f32 %v471, %v475
  %v480 = vsub.f32 %v472, %v478
  %v481 = vmul.f32 %v479, 1.442695
  %v482 = vpow.pop %v481
  %v483 = vmul.f32 %v480, 1.442695
  %v484 = vpow.pop %v483
  %v485 = vsel %vm247, %v482, 0.0
  %486 = vadd.xlane.f32.xlu0 %v485
  %v487 = vpop.xlane.xlu0 %486
  %v488 = vsel %vm247, %v484, 0.0
  %489 = vadd.xlane.f32.xlu0 %v488
  %v490 = vpop.xlane.xlu0 %489
  %v491 = vrcp.pop %v487
  %v492 = vrcp.pop %v490
  %v493 = vmul.f32 %v482, %v491
  %v494 = vmul.f32 %v484, %v492
  %v495 = vmul.f32 %v422, %v430
  %v496 = vmul.f32 %v425, %v430
  %s497 = scalar_lea.vmem %s15, 43
  %v498 = vld [vmem:[%s497] sm:$0x1]
  %v500 = vperm.slane %v498, 0
  %v502 = vmul.f32 %v370, %v500
  %v503 = vmul.f32 %v373, %v500
  %v505 = vsel %vm345, %v502, 0
  %v508 = vsel %vm345, %v503, 0
  %510 = vmatpush.xpose.msra.mxu0 0.0
  %511 = vmatpush.xpose.msra.mxu0 0.0
  %512 = vmatpush.xpose.msra.mxu0 0.0
  %513 = vmatpush.xpose.msra.mxu0 0.0
  %514 = vmatpush.xpose.msra.mxu0 0.0
  %515 = vmatpush.xpose.msra.mxu0 0.0
  %516 = vmatpush.xpose.msra.mxu0 0.0
  %517 = vmatpush.xpose.msra.mxu0 0.0
  %518 = vmatpush.xpose.msra.mxu0 0.0
  %519 = vmatpush.xpose.msra.mxu0 0.0
  %520 = vmatpush.xpose.msra.mxu0 0.0
  %521 = vmatpush.xpose.msra.mxu0 0.0
  %522 = vmatpush.xpose.msra.mxu0 0.0
  %523 = vmatpush.xpose.msra.mxu0 0.0
  %524 = vmatpush.xpose.msra.mxu0 %v444
  %525 = vmatpush.xpose.msra.mxu0 %v441
  %526 = vmatmul.f32.gmra.mxu0 %v505
  %v527 = vpop.f32.mrf.mxu0
  %v528 = vadd.f32 0.0, %v527
  %529 = vmatmul.f32.gmra.mxu0 %v508
  %v530 = vpop.f32.mrf.mxu0
  %v531 = vadd.f32 0.0, %v530
  %532 = vdwg.mxu0
  %v533 = vmul.f32 %v528, 0.35355338
  %v534 = vmul.f32 %v531, 0.35355338
  %v535 = vadd.f32 %v533, %v313
  %v536 = vadd.f32 %v534, %v314
  %v537 = vsel %vm247, %v535, -inf
  %538 = vmax.xlane.f32.xlu0 %v537
  %v539 = vpop.xlane.xlu0 %538
  %v540 = vsel %vm247, %v536, -inf
  %541 = vmax.xlane.f32.xlu0 %v540
  %v542 = vpop.xlane.xlu0 %541
  %v543 = vsub.f32 %v535, %v539
  %v544 = vsub.f32 %v536, %v542
  %v545 = vmul.f32 %v543, 1.442695
  %v546 = vpow.pop %v545
  %v547 = vmul.f32 %v544, 1.442695
  %v548 = vpow.pop %v547
  %v549 = vsel %vm247, %v546, 0.0
  %550 = vadd.xlane.f32.xlu0 %v549
  %v551 = vpop.xlane.xlu0 %550
  %v552 = vsel %vm247, %v548, 0.0
  %553 = vadd.xlane.f32.xlu0 %v552
  %v554 = vpop.xlane.xlu0 %553
  %v555 = vrcp.pop %v551
  %v556 = vrcp.pop %v554
  %v557 = vmul.f32 %v546, %v555
  %v558 = vmul.f32 %v548, %v556
  %v559 = vmul.f32 %v422, %v500
  %v560 = vmul.f32 %v425, %v500
  %v562 = vsel %vm247, %v557, 0
  %v565 = vsel %vm247, %v558, 0
  %567 = vmatpush.msra.mxu0 0.0
  %568 = vmatpush.msra.mxu0 0.0
  %569 = vmatpush.msra.mxu0 0.0
  %570 = vmatpush.msra.mxu0 0.0
  %571 = vmatpush.msra.mxu0 0.0
  %572 = vmatpush.msra.mxu0 0.0
  %573 = vmatpush.msra.mxu0 0.0
  %574 = vmatpush.msra.mxu0 0.0
  %575 = vmatpush.msra.mxu0 0.0
  %576 = vmatpush.msra.mxu0 0.0
  %577 = vmatpush.msra.mxu0 0.0
  %578 = vmatpush.msra.mxu0 0.0
  %579 = vmatpush.msra.mxu0 0.0
  %580 = vmatpush.msra.mxu0 0.0
  %581 = vmatpush.msra.mxu0 %v560
  %582 = vmatpush.msra.mxu0 %v559
  %583 = vmatmul.f32.gmra.mxu0 %v562
  %v584 = vpop.f32.mrf.mxu0
  %v585 = vadd.f32 0.0, %v584
  %586 = vmatmul.f32.gmra.mxu0 %v565
  %v587 = vpop.f32.mrf.mxu0
  %v588 = vadd.f32 0.0, %v587
  %589 = vdwg.mxu0
  %v591 = vsel %vm247, %v493, 0
  %v594 = vsel %vm247, %v494, 0
  %596 = vmatpush.msra.mxu0 0.0
  %597 = vmatpush.msra.mxu0 0.0
  %598 = vmatpush.msra.mxu0 0.0
  %599 = vmatpush.msra.mxu0 0.0
  %600 = vmatpush.msra.mxu0 0.0
  %601 = vmatpush.msra.mxu0 0.0
  %602 = vmatpush.msra.mxu0 0.0
  %603 = vmatpush.msra.mxu0 0.0
  %604 = vmatpush.msra.mxu0 0.0
  %605 = vmatpush.msra.mxu0 0.0
  %606 = vmatpush.msra.mxu0 0.0
  %607 = vmatpush.msra.mxu0 0.0
  %608 = vmatpush.msra.mxu0 0.0
  %609 = vmatpush.msra.mxu0 0.0
  %610 = vmatpush.msra.mxu0 %v496
  %611 = vmatpush.msra.mxu0 %v495
  %612 = vmatmul.f32.gmra.mxu0 %v591
  %v613 = vpop.f32.mrf.mxu0
  %v614 = vadd.f32 %v585, %v613
  %615 = vmatmul.f32.gmra.mxu0 %v594
  %v616 = vpop.f32.mrf.mxu0
  %v617 = vadd.f32 %v588, %v616
  %618 = vdwg.mxu0
  %s619 = scalar_lea.vmem %s15, 44
  %v620 = vld [vmem:[%s619] sm:$0x1]
  %v622 = vperm.slane %v620, 0
  %v624 = vmul.f32 %v370, %v622
  %v625 = vmul.f32 %v373, %v622
  %v627 = vsel %vm345, %v624, 0
  %v630 = vsel %vm345, %v625, 0
  %632 = vmatpush.xpose.msra.mxu0 0.0
  %633 = vmatpush.xpose.msra.mxu0 0.0
  %634 = vmatpush.xpose.msra.mxu0 0.0
  %635 = vmatpush.xpose.msra.mxu0 0.0
  %636 = vmatpush.xpose.msra.mxu0 0.0
  %637 = vmatpush.xpose.msra.mxu0 0.0
  %638 = vmatpush.xpose.msra.mxu0 0.0
  %639 = vmatpush.xpose.msra.mxu0 0.0
  %640 = vmatpush.xpose.msra.mxu0 0.0
  %641 = vmatpush.xpose.msra.mxu0 0.0
  %642 = vmatpush.xpose.msra.mxu0 0.0
  %643 = vmatpush.xpose.msra.mxu0 0.0
  %644 = vmatpush.xpose.msra.mxu0 0.0
  %645 = vmatpush.xpose.msra.mxu0 0.0
  %646 = vmatpush.xpose.msra.mxu0 %v444
  %647 = vmatpush.xpose.msra.mxu0 %v441
  %648 = vmatmul.f32.gmra.mxu0 %v627
  %v649 = vpop.f32.mrf.mxu0
  %v650 = vadd.f32 0.0, %v649
  %651 = vmatmul.f32.gmra.mxu0 %v630
  %v652 = vpop.f32.mrf.mxu0
  %v653 = vadd.f32 0.0, %v652
  %654 = vdwg.mxu0
  %v655 = vmul.f32 %v650, 0.35355338
  %v656 = vmul.f32 %v653, 0.35355338
  %v657 = vadd.f32 %v655, %v313
  %v658 = vadd.f32 %v656, %v314
  %v659 = vsel %vm247, %v657, -inf
  %660 = vmax.xlane.f32.xlu0 %v659
  %v661 = vpop.xlane.xlu0 %660
  %v662 = vsel %vm247, %v658, -inf
  %663 = vmax.xlane.f32.xlu0 %v662
  %v664 = vpop.xlane.xlu0 %663
  %v665 = vsub.f32 %v657, %v661
  %v666 = vsub.f32 %v658, %v664
  %v667 = vmul.f32 %v665, 1.442695
  %v668 = vpow.pop %v667
  %v669 = vmul.f32 %v666, 1.442695
  %v670 = vpow.pop %v669
  %v671 = vsel %vm247, %v668, 0.0
  %672 = vadd.xlane.f32.xlu0 %v671
  %v673 = vpop.xlane.xlu0 %672
  %v674 = vsel %vm247, %v670, 0.0
  %675 = vadd.xlane.f32.xlu0 %v674
  %v676 = vpop.xlane.xlu0 %675
  %v677 = vrcp.pop %v673
  %v678 = vrcp.pop %v676
  %v679 = vmul.f32 %v668, %v677
  %v680 = vmul.f32 %v670, %v678
  %v681 = vmul.f32 %v422, %v622
  %v682 = vmul.f32 %v425, %v622
  %v684 = vsel %vm247, %v679, 0
  %v687 = vsel %vm247, %v680, 0
  %689 = vmatpush.msra.mxu0 0.0
  %690 = vmatpush.msra.mxu0 0.0
  %691 = vmatpush.msra.mxu0 0.0
  %692 = vmatpush.msra.mxu0 0.0
  %693 = vmatpush.msra.mxu0 0.0
  %694 = vmatpush.msra.mxu0 0.0
  %695 = vmatpush.msra.mxu0 0.0
  %696 = vmatpush.msra.mxu0 0.0
  %697 = vmatpush.msra.mxu0 0.0
  %698 = vmatpush.msra.mxu0 0.0
  %699 = vmatpush.msra.mxu0 0.0
  %700 = vmatpush.msra.mxu0 0.0
  %701 = vmatpush.msra.mxu0 0.0
  %702 = vmatpush.msra.mxu0 0.0
  %703 = vmatpush.msra.mxu0 %v682
  %704 = vmatpush.msra.mxu0 %v681
  %705 = vmatmul.f32.gmra.mxu0 %v684
  %v706 = vpop.f32.mrf.mxu0
  %v707 = vadd.f32 0.0, %v706
  %708 = vmatmul.f32.gmra.mxu0 %v687
  %v709 = vpop.f32.mrf.mxu0
  %v710 = vadd.f32 0.0, %v709
  %711 = vdwg.mxu0
  %v712 = vadd.f32 %v614, %v707
  %v713 = vadd.f32 %v617, %v710
  %s714 = scalar_lea.vmem %s15, 45
  %v715 = vld [vmem:[%s714] sm:$0x1]
  %v717 = vperm.slane %v715, 0
  %v719 = vmul.f32 %v370, %v717
  %v720 = vmul.f32 %v373, %v717
  %v722 = vsel %vm345, %v719, 0
  %v725 = vsel %vm345, %v720, 0
  %727 = vmatpush.xpose.msra.mxu0 0.0
  %728 = vmatpush.xpose.msra.mxu0 0.0
  %729 = vmatpush.xpose.msra.mxu0 0.0
  %730 = vmatpush.xpose.msra.mxu0 0.0
  %731 = vmatpush.xpose.msra.mxu0 0.0
  %732 = vmatpush.xpose.msra.mxu0 0.0
  %733 = vmatpush.xpose.msra.mxu0 0.0
  %734 = vmatpush.xpose.msra.mxu0 0.0
  %735 = vmatpush.xpose.msra.mxu0 0.0
  %736 = vmatpush.xpose.msra.mxu0 0.0
  %737 = vmatpush.xpose.msra.mxu0 0.0
  %738 = vmatpush.xpose.msra.mxu0 0.0
  %739 = vmatpush.xpose.msra.mxu0 0.0
  %740 = vmatpush.xpose.msra.mxu0 0.0
  %741 = vmatpush.xpose.msra.mxu0 %v444
  %742 = vmatpush.xpose.msra.mxu0 %v441
  %743 = vmatmul.f32.gmra.mxu0 %v722
  %v744 = vpop.f32.mrf.mxu0
  %v745 = vadd.f32 0.0, %v744
  %746 = vmatmul.f32.gmra.mxu0 %v725
  %v747 = vpop.f32.mrf.mxu0
  %v748 = vadd.f32 0.0, %v747
  %749 = vdwg.mxu0
  %v750 = vmul.f32 %v745, 0.35355338
  %v751 = vmul.f32 %v748, 0.35355338
  %v752 = vadd.f32 %v750, %v313
  %v753 = vadd.f32 %v751, %v314
  %v754 = vsel %vm247, %v752, -inf
  %755 = vmax.xlane.f32.xlu0 %v754
  %v756 = vpop.xlane.xlu0 %755
  %v757 = vsel %vm247, %v753, -inf
  %758 = vmax.xlane.f32.xlu0 %v757
  %v759 = vpop.xlane.xlu0 %758
  %v760 = vsub.f32 %v752, %v756
  %v761 = vsub.f32 %v753, %v759
  %v762 = vmul.f32 %v760, 1.442695
  %v763 = vpow.pop %v762
  %v764 = vmul.f32 %v761, 1.442695
  %v765 = vpow.pop %v764
  %v766 = vsel %vm247, %v763, 0.0
  %767 = vadd.xlane.f32.xlu0 %v766
  %v768 = vpop.xlane.xlu0 %767
  %v769 = vsel %vm247, %v765, 0.0
  %770 = vadd.xlane.f32.xlu0 %v769
  %v771 = vpop.xlane.xlu0 %770
  %v772 = vrcp.pop %v768
  %v773 = vrcp.pop %v771
  %v774 = vmul.f32 %v763, %v772
  %v775 = vmul.f32 %v765, %v773
  %v776 = vmul.f32 %v422, %v717
  %v777 = vmul.f32 %v425, %v717
  %v779 = vsel %vm247, %v774, 0
  %v782 = vsel %vm247, %v775, 0
  %784 = vmatpush.msra.mxu0 0.0
  %785 = vmatpush.msra.mxu0 0.0
  %786 = vmatpush.msra.mxu0 0.0
  %787 = vmatpush.msra.mxu0 0.0
  %788 = vmatpush.msra.mxu0 0.0
  %789 = vmatpush.msra.mxu0 0.0
  %790 = vmatpush.msra.mxu0 0.0
  %791 = vmatpush.msra.mxu0 0.0
  %792 = vmatpush.msra.mxu0 0.0
  %793 = vmatpush.msra.mxu0 0.0
  %794 = vmatpush.msra.mxu0 0.0
  %795 = vmatpush.msra.mxu0 0.0
  %796 = vmatpush.msra.mxu0 0.0
  %797 = vmatpush.msra.mxu0 0.0
  %798 = vmatpush.msra.mxu0 %v777
  %799 = vmatpush.msra.mxu0 %v776
  %800 = vmatmul.f32.gmra.mxu0 %v779
  %v801 = vpop.f32.mrf.mxu0
  %v802 = vadd.f32 0.0, %v801
  %803 = vmatmul.f32.gmra.mxu0 %v782
  %v804 = vpop.f32.mrf.mxu0
  %v805 = vadd.f32 0.0, %v804
  %806 = vdwg.mxu0
  %v807 = vadd.f32 %v712, %v802
  %v808 = vadd.f32 %v713, %v805
  %v810 = vperm.slane %v341, 0
  %v813 = vsel %vm345, %v807, 0
  %v816 = vsel %vm345, %v808, 0
  %818 = vmatpush.msra.mxu0 0.0
  %819 = vmatpush.msra.mxu0 0.0
  %820 = vmatpush.msra.mxu0 0.0
  %821 = vmatpush.msra.mxu0 0.0
  %822 = vmatpush.msra.mxu0 0.0
  %823 = vmatpush.msra.mxu0 0.0
  %824 = vmatpush.msra.mxu0 0.0
  %825 = vmatpush.msra.mxu0 0.0
  %826 = vmatpush.msra.mxu0 0.0
  %827 = vmatpush.msra.mxu0 0.0
  %828 = vmatpush.msra.mxu0 0.0
  %829 = vmatpush.msra.mxu0 0.0
  %830 = vmatpush.msra.mxu0 %v334
  %831 = vmatpush.msra.mxu0 %v333
  %832 = vmatpush.msra.mxu0 %v332
  %833 = vmatpush.msra.mxu0 %v331
  %834 = vmatmul.f32.gmra.mxu0 %v813
  %v835 = vpop.f32.mrf.mxu0
  %v836 = vadd.f32 %v810, %v835
  %837 = vmatmul.f32.gmra.mxu0 %v816
  %v838 = vpop.f32.mrf.mxu0
  %v839 = vadd.f32 %v810, %v838
  %840 = vdwg.mxu0
  %v841 = vadd.f32 %v311, %v836
  %v842 = vadd.f32 %v312, %v839
  %s843 = scalar_lea.vmem %s15, 12
  %v844 = vld [vmem:[%s843] sm:$0x1]
  %s845 = scalar_lea.vmem %s15, 16
  %v846 = vld [vmem:[%s845] sm:$0x1]
  %v847 = vsel %vm345, %v841, 0.0
  %848 = vadd.xlane.f32.xlu0 %v847
  %v849 = vpop.xlane.xlu0 %848
  %v850 = vsel %vm345, %v842, 0.0
  %851 = vadd.xlane.f32.xlu0 %v850
  %v852 = vpop.xlane.xlu0 %851
  %v853 = vrcp.pop 32.0
  %v854 = vmul.f32 32.0, %v853
  %v855 = vsub.f32 1.0, %v854
  %v856 = vmul.f32 %v853, %v855
  %v857 = vadd.f32 %v853, %v856
  %vm858 = vweird.f32 %v853
  %v859 = vsel %vm858, %v853, %v857
  %v860 = vmul.f32 %v849, %v859
  %v861 = vmul.f32 %v852, %v859
  %v862 = vsub.f32 %v841, %v860
  %v863 = vsub.f32 %v842, %v861
  %v864 = vmul.f32 %v862, %v862
  %v865 = vmul.f32 %v863, %v863
  %v866 = vsel %vm345, %v864, 0.0
  %867 = vadd.xlane.f32.xlu0 %v866
  %v868 = vpop.xlane.xlu0 %867
  %v869 = vsel %vm345, %v865, 0.0
  %870 = vadd.xlane.f32.xlu0 %v869
  %v871 = vpop.xlane.xlu0 %870
  %v872 = vmul.f32 %v868, %v859
  %v873 = vmul.f32 %v871, %v859
  %v874 = vadd.f32 %v872, 1e-05
  %v875 = vadd.f32 %v873, 1e-05
  %v876 = vrsqrt.pop %v874
  %v877 = vmul.f32 %v876, %v874
  %v878 = vmul.f32 %v877, %v876
  %v879 = vmul.f32 0.5, %v878
  %v880 = vsub.f32 1.5, %v879
  %v881 = vmul.f32 %v876, %v880
  %vm882 = vweird.f32 %v874
  %vm883 = vweird.f32 %v876
  %vm884 = vmor %vm882, %vm883
  %v885 = vsel %vm884, %v876, %v881
  %v886 = vrsqrt.pop %v875
  %v887 = vmul.f32 %v886, %v875
  %v888 = vmul.f32 %v887, %v886
  %v889 = vmul.f32 0.5, %v888
  %v890 = vsub.f32 1.5, %v889
  %v891 = vmul.f32 %v886, %v890
  %vm892 = vweird.f32 %v875
  %vm893 = vweird.f32 %v886
  %vm894 = vmor %vm892, %vm893
  %v895 = vsel %vm894, %v886, %v891
  %v896 = vmul.f32 %v862, %v885
  %v897 = vmul.f32 %v863, %v895
  %v899 = vperm.slane %v844, 0
  %v901 = vmul.f32 %v896, %v899
  %v902 = vmul.f32 %v897, %v899
  %v904 = vperm.slane %v846, 0
  %v906 = vadd.f32 %v901, %v904
  %v907 = vadd.f32 %v902, %v904
  %s908 = scalar_lea.vmem %s13, 256
  %v909 = vld [vmem:[%s908] sm:$0xff]
  %v910 = vld [vmem:[%s908 + $0x8] sm:$0xff]
  %v911 = vld [vmem:[%s908 + $0x10] sm:$0xff]
  %v912 = vld [vmem:[%s908 + $0x18] sm:$0xff]
  %s913 = scalar_lea.vmem %s15, 8
  %v914 = vld [vmem:[%s913] sm:$0x1]
  %v916 = vperm.slane %v914, 0
  %v919 = vsel %vm345, %v906, 0
  %v922 = vsel %vm345, %v907, 0
  %924 = vmatpush.msra.mxu0 0.0
  %925 = vmatpush.msra.mxu0 0.0
  %926 = vmatpush.msra.mxu0 0.0
  %927 = vmatpush.msra.mxu0 0.0
  %928 = vmatpush.msra.mxu0 0.0
  %929 = vmatpush.msra.mxu0 0.0
  %930 = vmatpush.msra.mxu0 0.0
  %931 = vmatpush.msra.mxu0 0.0
  %932 = vmatpush.msra.mxu0 0.0
  %933 = vmatpush.msra.mxu0 0.0
  %934 = vmatpush.msra.mxu0 0.0
  %935 = vmatpush.msra.mxu0 0.0
  %936 = vmatpush.msra.mxu0 %v912
  %937 = vmatpush.msra.mxu0 %v911
  %938 = vmatpush.msra.mxu0 %v910
  %939 = vmatpush.msra.mxu0 %v909
  %940 = vmatmul.f32.gmra.mxu0 %v919
  %v941 = vpop.f32.mrf.mxu0
  %v942 = vadd.f32 %v916, %v941
  %943 = vmatmul.f32.gmra.mxu0 %v922
  %v944 = vpop.f32.mrf.mxu0
  %v945 = vadd.f32 %v916, %v944
  %946 = vdwg.mxu0
  %v947 = vmul.f32 %v942, 0.5
  %v948 = vmul.f32 %v945, 0.5
  %v949 = vmul.f32 %v942, 0.044715
  %v950 = vmul.f32 %v945, 0.044715
  %v951 = vmul.f32 %v949, %v942
  %v952 = vmul.f32 %v950, %v945
  %v953 = vmul.f32 %v951, %v942
  %v954 = vmul.f32 %v952, %v945
  %v955 = vadd.f32 %v942, %v953
  %v956 = vadd.f32 %v945, %v954
  %v957 = vmul.f32 %v955, 0.7978846
  %v958 = vmul.f32 %v956, 0.7978846
  %v959 = vtanh.pop %v957
  %v960 = vtanh.pop %v958
  %v961 = vadd.f32 %v959, 1.0
  %v962 = vadd.f32 %v960, 1.0
  %v963 = vmul.f32 %v947, %v961
  %v964 = vmul.f32 %v948, %v962
  %s965 = scalar_lea.vmem %s13, 320
  %v966 = vld [vmem:[%s965] sm:$0xff]
  %v967 = vld [vmem:[%s965 + $0x8] sm:$0xff]
  %v968 = vld [vmem:[%s965 + $0x10] sm:$0xff]
  %v969 = vld [vmem:[%s965 + $0x18] sm:$0xff]
  %s970 = scalar_lea.vmem %s15, 10
  %v971 = vld [vmem:[%s970] sm:$0x1]
  %v973 = vperm.slane %v971, 0
  %v976 = vsel %vm345, %v963, 0
  %v979 = vsel %vm345, %v964, 0
  %981 = vmatpush.msra.mxu0 0.0
  %982 = vmatpush.msra.mxu0 0.0
  %983 = vmatpush.msra.mxu0 0.0
  %984 = vmatpush.msra.mxu0 0.0
  %985 = vmatpush.msra.mxu0 0.0
  %986 = vmatpush.msra.mxu0 0.0
  %987 = vmatpush.msra.mxu0 0.0
  %988 = vmatpush.msra.mxu0 0.0
  %989 = vmatpush.msra.mxu0 0.0
  %990 = vmatpush.msra.mxu0 0.0
  %991 = vmatpush.msra.mxu0 0.0
  %992 = vmatpush.msra.mxu0 0.0
  %993 = vmatpush.msra.mxu0 %v969
  %994 = vmatpush.msra.mxu0 %v968
  %995 = vmatpush.msra.mxu0 %v967
  %996 = vmatpush.msra.mxu0 %v966
  %997 = vmatmul.f32.gmra.mxu0 %v976
  %v998 = vpop.f32.mrf.mxu0
  %v999 = vadd.f32 %v973, %v998
  %1000 = vmatmul.f32.gmra.mxu0 %v979
  %v1001 = vpop.f32.mrf.mxu0
  %v1002 = vadd.f32 %v973, %v1001
  %1003 = vdwg.mxu0
  %v1004 = vadd.f32 %v906, %v999
  %v1005 = vadd.f32 %v907, %v1002
  %s1006 = scalar_lea.vmem %s15, 13
  %v1007 = vld [vmem:[%s1006] sm:$0x1]
  %s1008 = scalar_lea.vmem %s15, 17
  %v1009 = vld [vmem:[%s1008] sm:$0x1]
  %v1010 = vsel %vm345, %v1004, 0.0
  %1011 = vadd.xlane.f32.xlu0 %v1010
  %v1012 = vpop.xlane.xlu0 %1011
  %v1013 = vsel %vm345, %v1005, 0.0
  %1014 = vadd.xlane.f32.xlu0 %v1013
  %v1015 = vpop.xlane.xlu0 %1014
  %v1016 = vmul.f32 %v1012, %v859
  %v1017 = vmul.f32 %v1015, %v859
  %v1018 = vsub.f32 %v1004, %v1016
  %v1019 = vsub.f32 %v1005, %v1017
  %v1020 = vmul.f32 %v1018, %v1018
  %v1021 = vmul.f32 %v1019, %v1019
  %v1022 = vsel %vm345, %v1020, 0.0
  %1023 = vadd.xlane.f32.xlu0 %v1022
  %v1024 = vpop.xlane.xlu0 %1023
  %v1025 = vsel %vm345, %v1021, 0.0
  %1026 = vadd.xlane.f32.xlu0 %v1025
  %v1027 = vpop.xlane.xlu0 %1026
  %v1028 = vmul.f32 %v1024, %v859
  %v1029 = vmul.f32 %v1027, %v859
  %v1030 = vadd.f32 %v1028, 1e-05
  %v1031 = vadd.f32 %v1029, 1e-05
  %v1032 = vrsqrt.pop %v1030
  %v1033 = vmul.f32 %v1032, %v1030
  %v1034 = vmul.f32 %v1033, %v1032
  %v1035 = vmul.f32 0.5, %v1034
  %v1036 = vsub.f32 1.5, %v1035
  %v1037 = vmul.f32 %v1032, %v1036
  %vm1038 = vweird.f32 %v1030
  %vm1039 = vweird.f32 %v1032
  %vm1040 = vmor %vm1038, %vm1039
  %v1041 = vsel %vm1040, %v1032, %v1037
  %v1042 = vrsqrt.pop %v1031
  %v1043 = vmul.f32 %v1042, %v1031
  %v1044 = vmul.f32 %v1043, %v1042
  %v1045 = vmul.f32 0.5, %v1044
  %v1046 = vsub.f32 1.5, %v1045
  %v1047 = vmul.f32 %v1042, %v1046
  %vm1048 = vweird.f32 %v1031
  %vm1049 = vweird.f32 %v1042
  %vm1050 = vmor %vm1048, %vm1049
  %v1051 = vsel %vm1050, %v1042, %v1047
  %v1052 = vmul.f32 %v1018, %v1041
  %v1053 = vmul.f32 %v1019, %v1051
  %v1055 = vperm.slane %v1007, 0
  %v1057 = vmul.f32 %v1052, %v1055
  %v1058 = vmul.f32 %v1053, %v1055
  %v1060 = vperm.slane %v1009, 0
  %v1062 = vadd.f32 %v1057, %v1060
  %v1063 = vadd.f32 %v1058, %v1060
  %1064 = vmatpush.msra.mxu0 0.0
  %1065 = vmatpush.msra.mxu0 0.0
  %1066 = vmatpush.msra.mxu0 0.0
  %1067 = vmatpush.msra.mxu0 0.0
  %1068 = vmatpush.msra.mxu0 0.0
  %1069 = vmatpush.msra.mxu0 0.0
  %1070 = vmatpush.msra.mxu0 0.0
  %1071 = vmatpush.msra.mxu0 0.0
  %1072 = vmatpush.msra.mxu0 0.0
  %1073 = vmatpush.msra.mxu0 0.0
  %1074 = vmatpush.msra.mxu0 0.0
  %1075 = vmatpush.msra.mxu0 0.0
  %1076 = vmatpush.msra.mxu0 0.0
  %1077 = vmatpush.msra.mxu0 0.0
  %1078 = vmatpush.msra.mxu0 %v1063
  %1079 = vmatpush.msra.mxu0 %v1062
  %1080 = vmatmul.f32.gmra.mxu0 %v249
  %v1081 = vpop.f32.mrf.mxu0
  %v1082 = vadd.f32 0.0, %v1081
  %1083 = vmatmul.f32.gmra.mxu0 %v252
  %v1084 = vpop.f32.mrf.mxu0
  %v1085 = vadd.f32 0.0, %v1084
  %1086 = vdwg.mxu0
  %1087 = vmatpush.msra.mxu0 0.0
  %1088 = vmatpush.msra.mxu0 0.0
  %1089 = vmatpush.msra.mxu0 0.0
  %1090 = vmatpush.msra.mxu0 0.0
  %1091 = vmatpush.msra.mxu0 0.0
  %1092 = vmatpush.msra.mxu0 0.0
  %1093 = vmatpush.msra.mxu0 0.0
  %1094 = vmatpush.msra.mxu0 0.0
  %1095 = vmatpush.msra.mxu0 0.0
  %1096 = vmatpush.msra.mxu0 0.0
  %1097 = vmatpush.msra.mxu0 0.0
  %1098 = vmatpush.msra.mxu0 0.0
  %1099 = vmatpush.msra.mxu0 0.0
  %1100 = vmatpush.msra.mxu0 0.0
  %1101 = vmatpush.msra.mxu0 %v1063
  %1102 = vmatpush.msra.mxu0 %v1062
  %1103 = vmatmul.f32.gmra.mxu0 %v281
  %v1104 = vpop.f32.mrf.mxu0
  %v1105 = vadd.f32 0.0, %v1104
  %1106 = vmatmul.f32.gmra.mxu0 %v284
  %v1107 = vpop.f32.mrf.mxu0
  %v1108 = vadd.f32 0.0, %v1107
  %1109 = vdwg.mxu0
  %s1110 = scalar_lea.vmem %s13, 384
  %v1111 = vld [vmem:[%s1110] sm:$0xff]
  %v1112 = vld [vmem:[%s1110 + $0x8] sm:$0xff]
  %v1113 = vld [vmem:[%s1110 + $0x10] sm:$0xff]
  %v1114 = vld [vmem:[%s1110 + $0x18] sm:$0xff]
  %s1115 = scalar_lea.vmem %s13, 416
  %v1116 = vld [vmem:[%s1115] sm:$0xff]
  %v1117 = vld [vmem:[%s1115 + $0x8] sm:$0xff]
  %v1118 = vld [vmem:[%s1115 + $0x10] sm:$0xff]
  %v1119 = vld [vmem:[%s1115 + $0x18] sm:$0xff]
  %v1121 = vsel %vm345, %v1062, 0
  %v1124 = vsel %vm345, %v1063, 0
  %1126 = vmatpush.msra.mxu0 0.0
  %1127 = vmatpush.msra.mxu0 0.0
  %1128 = vmatpush.msra.mxu0 0.0
  %1129 = vmatpush.msra.mxu0 0.0
  %1130 = vmatpush.msra.mxu0 0.0
  %1131 = vmatpush.msra.mxu0 0.0
  %1132 = vmatpush.msra.mxu0 0.0
  %1133 = vmatpush.msra.mxu0 0.0
  %1134 = vmatpush.msra.mxu0 0.0
  %1135 = vmatpush.msra.mxu0 0.0
  %1136 = vmatpush.msra.mxu0 0.0
  %1137 = vmatpush.msra.mxu0 0.0
  %1138 = vmatpush.msra.mxu0 %v1119
  %1139 = vmatpush.msra.mxu0 %v1118
  %1140 = vmatpush.msra.mxu0 %v1117
  %1141 = vmatpush.msra.mxu0 %v1116
  %1142 = vmatmul.f32.gmra.mxu0 %v1121
  %v1143 = vpop.f32.mrf.mxu0
  %v1144 = vadd.f32 0.0, %v1143
  %1145 = vmatmul.f32.gmra.mxu0 %v1124
  %v1146 = vpop.f32.mrf.mxu0
  %v1147 = vadd.f32 0.0, %v1146
  %1148 = vdwg.mxu0
  %v1150 = vsel %vm345, %v1082, 0
  %v1153 = vsel %vm345, %v1085, 0
  %1155 = vmatpush.msra.mxu0 0.0
  %1156 = vmatpush.msra.mxu0 0.0
  %1157 = vmatpush.msra.mxu0 0.0
  %1158 = vmatpush.msra.mxu0 0.0
  %1159 = vmatpush.msra.mxu0 0.0
  %1160 = vmatpush.msra.mxu0 0.0
  %1161 = vmatpush.msra.mxu0 0.0
  %1162 = vmatpush.msra.mxu0 0.0
  %1163 = vmatpush.msra.mxu0 0.0
  %1164 = vmatpush.msra.mxu0 0.0
  %1165 = vmatpush.msra.mxu0 0.0
  %1166 = vmatpush.msra.mxu0 0.0
  %1167 = vmatpush.msra.mxu0 %v1114
  %1168 = vmatpush.msra.mxu0 %v1113
  %1169 = vmatpush.msra.mxu0 %v1112
  %1170 = vmatpush.msra.mxu0 %v1111
  %1171 = vmatmul.f32.gmra.mxu0 %v1150
  %v1172 = vpop.f32.mrf.mxu0
  %v1173 = vadd.f32 %v1144, %v1172
  %1174 = vmatmul.f32.gmra.mxu0 %v1153
  %v1175 = vpop.f32.mrf.mxu0
  %v1176 = vadd.f32 %v1147, %v1175
  %1177 = vdwg.mxu0
  %s1178 = scalar_lea.vmem %s13, 448
  %v1179 = vld [vmem:[%s1178] sm:$0xff]
  %v1180 = vld [vmem:[%s1178 + $0x8] sm:$0xff]
  %v1181 = vld [vmem:[%s1178 + $0x10] sm:$0xff]
  %v1182 = vld [vmem:[%s1178 + $0x18] sm:$0xff]
  %v1184 = vsel %vm345, %v1105, 0
  %v1187 = vsel %vm345, %v1108, 0
  %1189 = vmatpush.msra.mxu0 0.0
  %1190 = vmatpush.msra.mxu0 0.0
  %1191 = vmatpush.msra.mxu0 0.0
  %1192 = vmatpush.msra.mxu0 0.0
  %1193 = vmatpush.msra.mxu0 0.0
  %1194 = vmatpush.msra.mxu0 0.0
  %1195 = vmatpush.msra.mxu0 0.0
  %1196 = vmatpush.msra.mxu0 0.0
  %1197 = vmatpush.msra.mxu0 0.0
  %1198 = vmatpush.msra.mxu0 0.0
  %1199 = vmatpush.msra.mxu0 0.0
  %1200 = vmatpush.msra.mxu0 0.0
  %1201 = vmatpush.msra.mxu0 %v1182
  %1202 = vmatpush.msra.mxu0 %v1181
  %1203 = vmatpush.msra.mxu0 %v1180
  %1204 = vmatpush.msra.mxu0 %v1179
  %1205 = vmatmul.f32.gmra.mxu0 %v1184
  %v1206 = vpop.f32.mrf.mxu0
  %v1207 = vadd.f32 0.0, %v1206
  %1208 = vmatmul.f32.gmra.mxu0 %v1187
  %v1209 = vpop.f32.mrf.mxu0
  %v1210 = vadd.f32 0.0, %v1209
  %1211 = vdwg.mxu0
  %v1212 = vadd.f32 %v1173, %v1207
  %v1213 = vadd.f32 %v1176, %v1210
  %s1214 = scalar_lea.vmem %s15, 20
  %v1215 = vld [vmem:[%s1214] sm:$0x1]
  %v1217 = vperm.slane %v1215, 0
  %v1219 = vadd.f32 %v1212, %v1217
  %v1220 = vadd.f32 %v1213, %v1217
  %vm1221 = vcmp.gt.f32.partialorder %v1219, 0.0
  %vm1222 = vcmp.gt.f32.partialorder %v1220, 0.0
  %v1223 = vmin.f32 %v1219, 0.0
  %v1224 = vmin.f32 %v1220, 0.0
  %v1225 = vmul.f32 %v1223, 1.442695
  %v1226 = vpow.pop %v1225
  %v1227 = vmul.f32 %v1224, 1.442695
  %v1228 = vpow.pop %v1227
  %v1229 = vsub.f32 %v1226, 1.0
  %v1230 = vsub.f32 %v1228, 1.0
  %v1231 = vsel %vm1221, %v1219, %v1229
  %v1232 = vsel %vm1222, %v1220, %v1230
  %v1233 = vld [vmem:[%s31] sm:$0xff]
  %v1234 = vld [vmem:[%s31 + $0x8] sm:$0xff]
  %1236 = vset.pattern.permute.xlu0 0
  %1237 = vperm.xlu0 %1236, %v1233
  %v1238 = vpop.permute.xlu0 %1237
  %1241 = vset.pattern.permute.xlu0 0
  %1242 = vperm.xlu0 %1241, %v1234
  %v1243 = vpop.permute.xlu0 %1242
  %1245 = vmatpush.msra.mxu0 0.0
  %1246 = vmatpush.msra.mxu0 0.0
  %1247 = vmatpush.msra.mxu0 0.0
  %1248 = vmatpush.msra.mxu0 0.0
  %1249 = vmatpush.msra.mxu0 0.0
  %1250 = vmatpush.msra.mxu0 0.0
  %1251 = vmatpush.msra.mxu0 0.0
  %1252 = vmatpush.msra.mxu0 0.0
  %1253 = vmatpush.msra.mxu0 0.0
  %1254 = vmatpush.msra.mxu0 0.0
  %1255 = vmatpush.msra.mxu0 0.0
  %1256 = vmatpush.msra.mxu0 0.0
  %1257 = vmatpush.msra.mxu0 0.0
  %1258 = vmatpush.msra.mxu0 0.0
  %1259 = vmatpush.msra.mxu0 %v1232
  %1260 = vmatpush.msra.mxu0 %v1231
  %1261 = vmatmul.f32.gmra.mxu0 %v249
  %v1262 = vpop.f32.mrf.mxu0
  %v1263 = vadd.f32 %v1238, %v1262
  %1264 = vmatmul.f32.gmra.mxu0 %v252
  %v1265 = vpop.f32.mrf.mxu0
  %v1266 = vadd.f32 %v1243, %v1265
  %1267 = vdwg.mxu0
  %s1268 = scalar_lea.vmem %s31, 16
  %v1269 = vld [vmem:[%s1268] sm:$0xff]
  %v1270 = vld [vmem:[%s1268 + $0x8] sm:$0xff]
  %1272 = vset.pattern.permute.xlu0 0
  %1273 = vperm.xlu0 %1272, %v1269
  %v1274 = vpop.permute.xlu0 %1273
  %1277 = vset.pattern.permute.xlu0 0
  %1278 = vperm.xlu0 %1277, %v1270
  %v1279 = vpop.permute.xlu0 %1278
  %1281 = vmatpush.msra.mxu0 0.0
  %1282 = vmatpush.msra.mxu0 0.0
  %1283 = vmatpush.msra.mxu0 0.0
  %1284 = vmatpush.msra.mxu0 0.0
  %1285 = vmatpush.msra.mxu0 0.0
  %1286 = vmatpush.msra.mxu0 0.0
  %1287 = vmatpush.msra.mxu0 0.0
  %1288 = vmatpush.msra.mxu0 0.0
  %1289 = vmatpush.msra.mxu0 0.0
  %1290 = vmatpush.msra.mxu0 0.0
  %1291 = vmatpush.msra.mxu0 0.0
  %1292 = vmatpush.msra.mxu0 0.0
  %1293 = vmatpush.msra.mxu0 0.0
  %1294 = vmatpush.msra.mxu0 0.0
  %1295 = vmatpush.msra.mxu0 %v1232
  %1296 = vmatpush.msra.mxu0 %v1231
  %1297 = vmatmul.f32.gmra.mxu0 %v281
  %v1298 = vpop.f32.mrf.mxu0
  %v1299 = vadd.f32 %v1274, %v1298
  %1300 = vmatmul.f32.gmra.mxu0 %v284
  %v1301 = vpop.f32.mrf.mxu0
  %v1302 = vadd.f32 %v1279, %v1301
  %1303 = vdwg.mxu0
  %v1304 = vmax.f32 %v1263, %v1231
  %v1305 = vmax.f32 %v1266, %v1232
  %v1306 = vmax.f32 %v1304, %v1299
  %v1307 = vmax.f32 %v1305, %v1302
  %v1308 = vld [vmem:[%s29] sm:$0xff]
  %v1310 = vsel %vm247, %v1308, 0
  %1312 = vmatpush.msra.mxu0 0.0
  %1313 = vmatpush.msra.mxu0 0.0
  %1314 = vmatpush.msra.mxu0 0.0
  %1315 = vmatpush.msra.mxu0 0.0
  %1316 = vmatpush.msra.mxu0 0.0
  %1317 = vmatpush.msra.mxu0 0.0
  %1318 = vmatpush.msra.mxu0 0.0
  %1319 = vmatpush.msra.mxu0 0.0
  %1320 = vmatpush.msra.mxu0 0.0
  %1321 = vmatpush.msra.mxu0 0.0
  %1322 = vmatpush.msra.mxu0 0.0
  %1323 = vmatpush.msra.mxu0 0.0
  %1324 = vmatpush.msra.mxu0 0.0
  %1325 = vmatpush.msra.mxu0 0.0
  %1326 = vmatpush.msra.mxu0 %v1307
  %1327 = vmatpush.msra.mxu0 %v1306
  %1328 = vmatmul.f32.gmra.mxu0 %v1310
  %v1329 = vpop.f32.mrf.mxu0
  %v1330 = vadd.f32 0.0, %v1329
  %1331 = vdwg.mxu0
  %s1332 = scalar_lea.vmem %s13, 128
  %v1333 = vld [vmem:[%s1332] sm:$0xff]
  %v1334 = vld [vmem:[%s1332 + $0x8] sm:$0xff]
  %v1335 = vld [vmem:[%s1332 + $0x10] sm:$0xff]
  %v1336 = vld [vmem:[%s1332 + $0x18] sm:$0xff]
  %s1337 = scalar_lea.vmem %s13, 160
  %v1338 = vld [vmem:[%s1337] sm:$0xff]
  %v1339 = vld [vmem:[%s1337 + $0x8] sm:$0xff]
  %v1340 = vld [vmem:[%s1337 + $0x10] sm:$0xff]
  %v1341 = vld [vmem:[%s1337 + $0x18] sm:$0xff]
  %s1342 = scalar_lea.vmem %s13, 192
  %v1343 = vld [vmem:[%s1342] sm:$0xff]
  %v1344 = vld [vmem:[%s1342 + $0x8] sm:$0xff]
  %v1345 = vld [vmem:[%s1342 + $0x10] sm:$0xff]
  %v1346 = vld [vmem:[%s1342 + $0x18] sm:$0xff]
  %s1347 = scalar_lea.vmem %s13, 224
  %v1348 = vld [vmem:[%s1347] sm:$0xff]
  %v1349 = vld [vmem:[%s1347 + $0x8] sm:$0xff]
  %v1350 = vld [vmem:[%s1347 + $0x10] sm:$0xff]
  %v1351 = vld [vmem:[%s1347 + $0x18] sm:$0xff]
  %s1352 = scalar_lea.vmem %s15, 4
  %v1353 = vld [vmem:[%s1352] sm:$0x1]
  %s1354 = scalar_lea.vmem %s15, 5
  %v1355 = vld [vmem:[%s1354] sm:$0x1]
  %s1356 = scalar_lea.vmem %s15, 6
  %v1357 = vld [vmem:[%s1356] sm:$0x1]
  %s1358 = scalar_lea.vmem %s15, 7
  %v1359 = vld [vmem:[%s1358] sm:$0x1]
  %v1361 = vperm.slane %v1353, 0
  %v1364 = vsel %vm345, %v1330, 0
  %1366 = vmatpush.msra.mxu0 0.0
  %1367 = vmatpush.msra.mxu0 0.0
  %1368 = vmatpush.msra.mxu0 0.0
  %1369 = vmatpush.msra.mxu0 0.0
  %1370 = vmatpush.msra.mxu0 0.0
  %1371 = vmatpush.msra.mxu0 0.0
  %1372 = vmatpush.msra.mxu0 0.0
  %1373 = vmatpush.msra.mxu0 0.0
  %1374 = vmatpush.msra.mxu0 0.0
  %1375 = vmatpush.msra.mxu0 0.0
  %1376 = vmatpush.msra.mxu0 0.0
  %1377 = vmatpush.msra.mxu0 0.0
  %1378 = vmatpush.msra.mxu0 %v1336
  %1379 = vmatpush.msra.mxu0 %v1335
  %1380 = vmatpush.msra.mxu0 %v1334
  %1381 = vmatpush.msra.mxu0 %v1333
  %1382 = vmatmul.f32.gmra.mxu0 %v1364
  %v1383 = vpop.f32.mrf.mxu0
  %v1384 = vadd.f32 %v1361, %v1383
  %1385 = vdwg.mxu0
  %v1387 = vperm.slane %v1355, 0
  %1389 = vmatpush.msra.mxu0 0.0
  %1390 = vmatpush.msra.mxu0 0.0
  %1391 = vmatpush.msra.mxu0 0.0
  %1392 = vmatpush.msra.mxu0 0.0
  %1393 = vmatpush.msra.mxu0 0.0
  %1394 = vmatpush.msra.mxu0 0.0
  %1395 = vmatpush.msra.mxu0 0.0
  %1396 = vmatpush.msra.mxu0 0.0
  %1397 = vmatpush.msra.mxu0 0.0
  %1398 = vmatpush.msra.mxu0 0.0
  %1399 = vmatpush.msra.mxu0 0.0
  %1400 = vmatpush.msra.mxu0 0.0
  %1401 = vmatpush.msra.mxu0 %v1341
  %1402 = vmatpush.msra.mxu0 %v1340
  %1403 = vmatpush.msra.mxu0 %v1339
  %1404 = vmatpush.msra.mxu0 %v1338
  %1405 = vmatmul.f32.gmra.mxu0 %v1364
  %v1406 = vpop.f32.mrf.mxu0
  %v1407 = vadd.f32 %v1387, %v1406
  %1408 = vdwg.mxu0
  %v1410 = vperm.slane %v1357, 0
  %1412 = vmatpush.msra.mxu0 0.0
  %1413 = vmatpush.msra.mxu0 0.0
  %1414 = vmatpush.msra.mxu0 0.0
  %1415 = vmatpush.msra.mxu0 0.0
  %1416 = vmatpush.msra.mxu0 0.0
  %1417 = vmatpush.msra.mxu0 0.0
  %1418 = vmatpush.msra.mxu0 0.0
  %1419 = vmatpush.msra.mxu0 0.0
  %1420 = vmatpush.msra.mxu0 0.0
  %1421 = vmatpush.msra.mxu0 0.0
  %1422 = vmatpush.msra.mxu0 0.0
  %1423 = vmatpush.msra.mxu0 0.0
  %1424 = vmatpush.msra.mxu0 %v1346
  %1425 = vmatpush.msra.mxu0 %v1345
  %1426 = vmatpush.msra.mxu0 %v1344
  %1427 = vmatpush.msra.mxu0 %v1343
  %1428 = vmatmul.f32.gmra.mxu0 %v1364
  %v1429 = vpop.f32.mrf.mxu0
  %v1430 = vadd.f32 %v1410, %v1429
  %1431 = vdwg.mxu0
  %v1432 = vmul.f32 %v1384, %v430
  %v1434 = vsel %vm345, %v1432, 0
  %v1437 = vsel %vm345, %v1407, 0
  %1439 = vmatpush.xpose.msra.mxu0 0.0
  %1440 = vmatpush.xpose.msra.mxu0 0.0
  %1441 = vmatpush.xpose.msra.mxu0 0.0
  %1442 = vmatpush.xpose.msra.mxu0 0.0
  %1443 = vmatpush.xpose.msra.mxu0 0.0
  %1444 = vmatpush.xpose.msra.mxu0 0.0
  %1445 = vmatpush.xpose.msra.mxu0 0.0
  %1446 = vmatpush.xpose.msra.mxu0 0.0
  %1447 = vmatpush.xpose.msra.mxu0 0.0
  %1448 = vmatpush.xpose.msra.mxu0 0.0
  %1449 = vmatpush.xpose.msra.mxu0 0.0
  %1450 = vmatpush.xpose.msra.mxu0 0.0
  %1451 = vmatpush.xpose.msra.mxu0 0.0
  %1452 = vmatpush.xpose.msra.mxu0 0.0
  %1453 = vmatpush.xpose.msra.mxu0 0.0
  %1454 = vmatpush.xpose.msra.mxu0 %v1437
  %1455 = vmatmul.f32.gmra.mxu0 %v1434
  %v1456 = vpop.f32.mrf.mxu0
  %v1457 = vadd.f32 0.0, %v1456
  %1458 = vdwg.mxu0
  %v1459 = vmul.f32 %v1457, 0.35355338
  %v1460 = vadd.f32 %v1459, %v315
  %vm1461 = vcmask 64512
  %v1462 = vsel %vm1461, %v1460, -inf
  %1463 = vmax.xlane.f32.xlu0 %v1462
  %v1464 = vpop.xlane.xlu0 %1463
  %v1465 = vsub.f32 %v1460, %v1464
  %v1466 = vmul.f32 %v1465, 1.442695
  %v1467 = vpow.pop %v1466
  %v1468 = vsel %vm1461, %v1467, 0.0
  %1469 = vadd.xlane.f32.xlu0 %v1468
  %v1470 = vpop.xlane.xlu0 %1469
  %v1471 = vrcp.pop %v1470
  %v1472 = vmul.f32 %v1467, %v1471
  %v1473 = vmul.f32 %v1430, %v430
  %v1474 = vmul.f32 %v1384, %v500
  %v1476 = vsel %vm345, %v1474, 0
  %1478 = vmatpush.xpose.msra.mxu0 0.0
  %1479 = vmatpush.xpose.msra.mxu0 0.0
  %1480 = vmatpush.xpose.msra.mxu0 0.0
  %1481 = vmatpush.xpose.msra.mxu0 0.0
  %1482 = vmatpush.xpose.msra.mxu0 0.0
  %1483 = vmatpush.xpose.msra.mxu0 0.0
  %1484 = vmatpush.xpose.msra.mxu0 0.0
  %1485 = vmatpush.xpose.msra.mxu0 0.0
  %1486 = vmatpush.xpose.msra.mxu0 0.0
  %1487 = vmatpush.xpose.msra.mxu0 0.0
  %1488 = vmatpush.xpose.msra.mxu0 0.0
  %1489 = vmatpush.xpose.msra.mxu0 0.0
  %1490 = vmatpush.xpose.msra.mxu0 0.0
  %1491 = vmatpush.xpose.msra.mxu0 0.0
  %1492 = vmatpush.xpose.msra.mxu0 0.0
  %1493 = vmatpush.xpose.msra.mxu0 %v1437
  %1494 = vmatmul.f32.gmra.mxu0 %v1476
  %v1495 = vpop.f32.mrf.mxu0
  %v1496 = vadd.f32 0.0, %v1495
  %1497 = vdwg.mxu0
  %v1498 = vmul.f32 %v1496, 0.35355338
  %v1499 = vadd.f32 %v1498, %v315
  %v1500 = vsel %vm1461, %v1499, -inf
  %1501 = vmax.xlane.f32.xlu0 %v1500
  %v1502 = vpop.xlane.xlu0 %1501
  %v1503 = vsub.f32 %v1499, %v1502
  %v1504 = vmul.f32 %v1503, 1.442695
  %v1505 = vpow.pop %v1504
  %v1506 = vsel %vm1461, %v1505, 0.0
  %1507 = vadd.xlane.f32.xlu0 %v1506
  %v1508 = vpop.xlane.xlu0 %1507
  %v1509 = vrcp.pop %v1508
  %v1510 = vmul.f32 %v1505, %v1509
  %v1511 = vmul.f32 %v1430, %v500
  %v1513 = vsel %vm1461, %v1510, 0
  %1515 = vmatpush.msra.mxu0 0.0
  %1516 = vmatpush.msra.mxu0 0.0
  %1517 = vmatpush.msra.mxu0 0.0
  %1518 = vmatpush.msra.mxu0 0.0
  %1519 = vmatpush.msra.mxu0 0.0
  %1520 = vmatpush.msra.mxu0 0.0
  %1521 = vmatpush.msra.mxu0 0.0
  %1522 = vmatpush.msra.mxu0 0.0
  %1523 = vmatpush.msra.mxu0 0.0
  %1524 = vmatpush.msra.mxu0 0.0
  %1525 = vmatpush.msra.mxu0 0.0
  %1526 = vmatpush.msra.mxu0 0.0
  %1527 = vmatpush.msra.mxu0 0.0
  %1528 = vmatpush.msra.mxu0 0.0
  %1529 = vmatpush.msra.mxu0 0.0
  %1530 = vmatpush.msra.mxu0 %v1511
  %1531 = vmatmul.f32.gmra.mxu0 %v1513
  %v1532 = vpop.f32.mrf.mxu0
  %v1533 = vadd.f32 0.0, %v1532
  %1534 = vdwg.mxu0
  %v1536 = vsel %vm1461, %v1472, 0
  %1538 = vmatpush.msra.mxu0 0.0
  %1539 = vmatpush.msra.mxu0 0.0
  %1540 = vmatpush.msra.mxu0 0.0
  %1541 = vmatpush.msra.mxu0 0.0
  %1542 = vmatpush.msra.mxu0 0.0
  %1543 = vmatpush.msra.mxu0 0.0
  %1544 = vmatpush.msra.mxu0 0.0
  %1545 = vmatpush.msra.mxu0 0.0
  %1546 = vmatpush.msra.mxu0 0.0
  %1547 = vmatpush.msra.mxu0 0.0
  %1548 = vmatpush.msra.mxu0 0.0
  %1549 = vmatpush.msra.mxu0 0.0
  %1550 = vmatpush.msra.mxu0 0.0
  %1551 = vmatpush.msra.mxu0 0.0
  %1552 = vmatpush.msra.mxu0 0.0
  %1553 = vmatpush.msra.mxu0 %v1473
  %1554 = vmatmul.f32.gmra.mxu0 %v1536
  %v1555 = vpop.f32.mrf.mxu0
  %v1556 = vadd.f32 %v1533, %v1555
  %1557 = vdwg.mxu0
  %v1558 = vmul.f32 %v1384, %v622
  %v1560 = vsel %vm345, %v1558, 0
  %1562 = vmatpush.xpose.msra.mxu0 0.0
  %1563 = vmatpush.xpose.msra.mxu0 0.0
  %1564 = vmatpush.xpose.msra.mxu0 0.0
  %1565 = vmatpush.xpose.msra.mxu0 0.0
  %1566 = vmatpush.xpose.msra.mxu0 0.0
  %1567 = vmatpush.xpose.msra.mxu0 0.0
  %1568 = vmatpush.xpose.msra.mxu0 0.0
  %1569 = vmatpush.xpose.msra.mxu0 0.0
  %1570 = vmatpush.xpose.msra.mxu0 0.0
  %1571 = vmatpush.xpose.msra.mxu0 0.0
  %1572 = vmatpush.xpose.msra.mxu0 0.0
  %1573 = vmatpush.xpose.msra.mxu0 0.0
  %1574 = vmatpush.xpose.msra.mxu0 0.0
  %1575 = vmatpush.xpose.msra.mxu0 0.0
  %1576 = vmatpush.xpose.msra.mxu0 0.0
  %1577 = vmatpush.xpose.msra.mxu0 %v1437
  %1578 = vmatmul.f32.gmra.mxu0 %v1560
  %v1579 = vpop.f32.mrf.mxu0
  %v1580 = vadd.f32 0.0, %v1579
  %1581 = vdwg.mxu0
  %v1582 = vmul.f32 %v1580, 0.35355338
  %v1583 = vadd.f32 %v1582, %v315
  %v1584 = vsel %vm1461, %v1583, -inf
  %1585 = vmax.xlane.f32.xlu0 %v1584
  %v1586 = vpop.xlane.xlu0 %1585
  %v1587 = vsub.f32 %v1583, %v1586
  %v1588 = vmul.f32 %v1587, 1.442695
  %v1589 = vpow.pop %v1588
  %v1590 = vsel %vm1461, %v1589, 0.0
  %1591 = vadd.xlane.f32.xlu0 %v1590
  %v1592 = vpop.xlane.xlu0 %1591
  %v1593 = vrcp.pop %v1592
  %v1594 = vmul.f32 %v1589, %v1593
  %v1595 = vmul.f32 %v1430, %v622
  %v1597 = vsel %vm1461, %v1594, 0
  %1599 = vmatpush.msra.mxu0 0.0
  %1600 = vmatpush.msra.mxu0 0.0
  %1601 = vmatpush.msra.mxu0 0.0
  %1602 = vmatpush.msra.mxu0 0.0
  %1603 = vmatpush.msra.mxu0 0.0
  %1604 = vmatpush.msra.mxu0 0.0
  %1605 = vmatpush.msra.mxu0 0.0
  %1606 = vmatpush.msra.mxu0 0.0
  %1607 = vmatpush.msra.mxu0 0.0
  %1608 = vmatpush.msra.mxu0 0.0
  %1609 = vmatpush.msra.mxu0 0.0
  %1610 = vmatpush.msra.mxu0 0.0
  %1611 = vmatpush.msra.mxu0 0.0
  %1612 = vmatpush.msra.mxu0 0.0
  %1613 = vmatpush.msra.mxu0 0.0
  %1614 = vmatpush.msra.mxu0 %v1595
  %1615 = vmatmul.f32.gmra.mxu0 %v1597
  %v1616 = vpop.f32.mrf.mxu0
  %v1617 = vadd.f32 0.0, %v1616
  %1618 = vdwg.mxu0
  %v1619 = vadd.f32 %v1556, %v1617
  %v1620 = vmul.f32 %v1384, %v717
  %v1622 = vsel %vm345, %v1620, 0
  %1624 = vmatpush.xpose.msra.mxu0 0.0
  %1625 = vmatpush.xpose.msra.mxu0 0.0
  %1626 = vmatpush.xpose.msra.mxu0 0.0
  %1627 = vmatpush.xpose.msra.mxu0 0.0
  %1628 = vmatpush.xpose.msra.mxu0 0.0
  %1629 = vmatpush.xpose.msra.mxu0 0.0
  %1630 = vmatpush.xpose.msra.mxu0 0.0
  %1631 = vmatpush.xpose.msra.mxu0 0.0
  %1632 = vmatpush.xpose.msra.mxu0 0.0
  %1633 = vmatpush.xpose.msra.mxu0 0.0
  %1634 = vmatpush.xpose.msra.mxu0 0.0
  %1635 = vmatpush.xpose.msra.mxu0 0.0
  %1636 = vmatpush.xpose.msra.mxu0 0.0
  %1637 = vmatpush.xpose.msra.mxu0 0.0
  %1638 = vmatpush.xpose.msra.mxu0 0.0
  %1639 = vmatpush.xpose.msra.mxu0 %v1437
  %1640 = vmatmul.f32.gmra.mxu0 %v1622
  %v1641 = vpop.f32.mrf.mxu0
  %v1642 = vadd.f32 0.0, %v1641
  %1643 = vdwg.mxu0
  %v1644 = vmul.f32 %v1642, 0.35355338
  %v1645 = vadd.f32 %v1644, %v315
  %v1646 = vsel %vm1461, %v1645, -inf
  %1647 = vmax.xlane.f32.xlu0 %v1646
  %v1648 = vpop.xlane.xlu0 %1647
  %v1649 = vsub.f32 %v1645, %v1648
  %v1650 = vmul.f32 %v1649, 1.442695
  %v1651 = vpow.pop %v1650
  %v1652 = vsel %vm1461, %v1651, 0.0
  %1653 = vadd.xlane.f32.xlu0 %v1652
  %v1654 = vpop.xlane.xlu0 %1653
  %v1655 = vrcp.pop %v1654
  %v1656 = vmul.f32 %v1651, %v1655
  %v1657 = vmul.f32 %v1430, %v717
  %v1659 = vsel %vm1461, %v1656, 0
  %1661 = vmatpush.msra.mxu0 0.0
  %1662 = vmatpush.msra.mxu0 0.0
  %1663 = vmatpush.msra.mxu0 0.0
  %1664 = vmatpush.msra.mxu0 0.0
  %1665 = vmatpush.msra.mxu0 0.0
  %1666 = vmatpush.msra.mxu0 0.0
  %1667 = vmatpush.msra.mxu0 0.0
  %1668 = vmatpush.msra.mxu0 0.0
  %1669 = vmatpush.msra.mxu0 0.0
  %1670 = vmatpush.msra.mxu0 0.0
  %1671 = vmatpush.msra.mxu0 0.0
  %1672 = vmatpush.msra.mxu0 0.0
  %1673 = vmatpush.msra.mxu0 0.0
  %1674 = vmatpush.msra.mxu0 0.0
  %1675 = vmatpush.msra.mxu0 0.0
  %1676 = vmatpush.msra.mxu0 %v1657
  %1677 = vmatmul.f32.gmra.mxu0 %v1659
  %v1678 = vpop.f32.mrf.mxu0
  %v1679 = vadd.f32 0.0, %v1678
  %1680 = vdwg.mxu0
  %v1681 = vadd.f32 %v1619, %v1679
  %v1683 = vperm.slane %v1359, 0
  %v1686 = vsel %vm345, %v1681, 0
  %1688 = vmatpush.msra.mxu0 0.0
  %1689 = vmatpush.msra.mxu0 0.0
  %1690 = vmatpush.msra.mxu0 0.0
  %1691 = vmatpush.msra.mxu0 0.0
  %1692 = vmatpush.msra.mxu0 0.0
  %1693 = vmatpush.msra.mxu0 0.0
  %1694 = vmatpush.msra.mxu0 0.0
  %1695 = vmatpush.msra.mxu0 0.0
  %1696 = vmatpush.msra.mxu0 0.0
  %1697 = vmatpush.msra.mxu0 0.0
  %1698 = vmatpush.msra.mxu0 0.0
  %1699 = vmatpush.msra.mxu0 0.0
  %1700 = vmatpush.msra.mxu0 %v1351
  %1701 = vmatpush.msra.mxu0 %v1350
  %1702 = vmatpush.msra.mxu0 %v1349
  %1703 = vmatpush.msra.mxu0 %v1348
  %1704 = vmatmul.f32.gmra.mxu0 %v1686
  %v1705 = vpop.f32.mrf.mxu0
  %v1706 = vadd.f32 %v1683, %v1705
  %1707 = vdwg.mxu0
  %v1708 = vadd.f32 %v1330, %v1706
  %s1709 = scalar_lea.vmem %s15, 14
  %v1710 = vld [vmem:[%s1709] sm:$0x1]
  %s1711 = scalar_lea.vmem %s15, 18
  %v1712 = vld [vmem:[%s1711] sm:$0x1]
  %v1713 = vsel %vm345, %v1708, 0.0
  %1714 = vadd.xlane.f32.xlu0 %v1713
  %v1715 = vpop.xlane.xlu0 %1714
  %v1716 = vmul.f32 %v1715, %v859
  %v1717 = vsub.f32 %v1708, %v1716
  %v1718 = vmul.f32 %v1717, %v1717
  %v1719 = vsel %vm345, %v1718, 0.0
  %1720 = vadd.xlane.f32.xlu0 %v1719
  %v1721 = vpop.xlane.xlu0 %1720
  %v1722 = vmul.f32 %v1721, %v859
  %v1723 = vadd.f32 %v1722, 1e-05
  %v1724 = vrsqrt.pop %v1723
  %v1725 = vmul.f32 %v1724, %v1723
  %v1726 = vmul.f32 %v1725, %v1724
  %v1727 = vmul.f32 0.5, %v1726
  %v1728 = vsub.f32 1.5, %v1727
  %v1729 = vmul.f32 %v1724, %v1728
  %vm1730 = vweird.f32 %v1723
  %vm1731 = vweird.f32 %v1724
  %vm1732 = vmor %vm1730, %vm1731
  %v1733 = vsel %vm1732, %v1724, %v1729
  %v1734 = vmul.f32 %v1717, %v1733
  %v1736 = vperm.slane %v1710, 0
  %v1738 = vmul.f32 %v1734, %v1736
  %v1740 = vperm.slane %v1712, 0
  %v1742 = vadd.f32 %v1738, %v1740
  %s1743 = scalar_lea.vmem %s13, 288
  %v1744 = vld [vmem:[%s1743] sm:$0xff]
  %v1745 = vld [vmem:[%s1743 + $0x8] sm:$0xff]
  %v1746 = vld [vmem:[%s1743 + $0x10] sm:$0xff]
  %v1747 = vld [vmem:[%s1743 + $0x18] sm:$0xff]
  %s1748 = scalar_lea.vmem %s15, 9
  %v1749 = vld [vmem:[%s1748] sm:$0x1]
  %v1751 = vperm.slane %v1749, 0
  %v1754 = vsel %vm345, %v1742, 0
  %1756 = vmatpush.msra.mxu0 0.0
  %1757 = vmatpush.msra.mxu0 0.0
  %1758 = vmatpush.msra.mxu0 0.0
  %1759 = vmatpush.msra.mxu0 0.0
  %1760 = vmatpush.msra.mxu0 0.0
  %1761 = vmatpush.msra.mxu0 0.0
  %1762 = vmatpush.msra.mxu0 0.0
  %1763 = vmatpush.msra.mxu0 0.0
  %1764 = vmatpush.msra.mxu0 0.0
  %1765 = vmatpush.msra.mxu0 0.0
  %1766 = vmatpush.msra.mxu0 0.0
  %1767 = vmatpush.msra.mxu0 0.0
  %1768 = vmatpush.msra.mxu0 %v1747
  %1769 = vmatpush.msra.mxu0 %v1746
  %1770 = vmatpush.msra.mxu0 %v1745
  %1771 = vmatpush.msra.mxu0 %v1744
  %1772 = vmatmul.f32.gmra.mxu0 %v1754
  %v1773 = vpop.f32.mrf.mxu0
  %v1774 = vadd.f32 %v1751, %v1773
  %1775 = vdwg.mxu0
  %v1776 = vmul.f32 %v1774, 0.5
  %v1777 = vmul.f32 %v1774, 0.044715
  %v1778 = vmul.f32 %v1777, %v1774
  %v1779 = vmul.f32 %v1778, %v1774
  %v1780 = vadd.f32 %v1774, %v1779
  %v1781 = vmul.f32 %v1780, 0.7978846
  %v1782 = vtanh.pop %v1781
  %v1783 = vadd.f32 %v1782, 1.0
  %v1784 = vmul.f32 %v1776, %v1783
  %s1785 = scalar_lea.vmem %s13, 352
  %v1786 = vld [vmem:[%s1785] sm:$0xff]
  %v1787 = vld [vmem:[%s1785 + $0x8] sm:$0xff]
  %v1788 = vld [vmem:[%s1785 + $0x10] sm:$0xff]
  %v1789 = vld [vmem:[%s1785 + $0x18] sm:$0xff]
  %s1790 = scalar_lea.vmem %s15, 11
  %v1791 = vld [vmem:[%s1790] sm:$0x1]
  %v1793 = vperm.slane %v1791, 0
  %v1796 = vsel %vm345, %v1784, 0
  %1798 = vmatpush.msra.mxu0 0.0
  %1799 = vmatpush.msra.mxu0 0.0
  %1800 = vmatpush.msra.mxu0 0.0
  %1801 = vmatpush.msra.mxu0 0.0
  %1802 = vmatpush.msra.mxu0 0.0
  %1803 = vmatpush.msra.mxu0 0.0
  %1804 = vmatpush.msra.mxu0 0.0
  %1805 = vmatpush.msra.mxu0 0.0
  %1806 = vmatpush.msra.mxu0 0.0
  %1807 = vmatpush.msra.mxu0 0.0
  %1808 = vmatpush.msra.mxu0 0.0
  %1809 = vmatpush.msra.mxu0 0.0
  %1810 = vmatpush.msra.mxu0 %v1789
  %1811 = vmatpush.msra.mxu0 %v1788
  %1812 = vmatpush.msra.mxu0 %v1787
  %1813 = vmatpush.msra.mxu0 %v1786
  %1814 = vmatmul.f32.gmra.mxu0 %v1796
  %v1815 = vpop.f32.mrf.mxu0
  %v1816 = vadd.f32 %v1793, %v1815
  %1817 = vdwg.mxu0
  %v1818 = vadd.f32 %v1742, %v1816
  %s1819 = scalar_lea.vmem %s15, 15
  %v1820 = vld [vmem:[%s1819] sm:$0x1]
  %s1821 = scalar_lea.vmem %s15, 19
  %v1822 = vld [vmem:[%s1821] sm:$0x1]
  %v1823 = vsel %vm345, %v1818, 0.0
  %1824 = vadd.xlane.f32.xlu0 %v1823
  %v1825 = vpop.xlane.xlu0 %1824
  %v1826 = vmul.f32 %v1825, %v859
  %v1827 = vsub.f32 %v1818, %v1826
  %v1828 = vmul.f32 %v1827, %v1827
  %v1829 = vsel %vm345, %v1828, 0.0
  %1830 = vadd.xlane.f32.xlu0 %v1829
  %v1831 = vpop.xlane.xlu0 %1830
  %v1832 = vmul.f32 %v1831, %v859
  %v1833 = vadd.f32 %v1832, 1e-05
  %v1834 = vrsqrt.pop %v1833
  %v1835 = vmul.f32 %v1834, %v1833
  %v1836 = vmul.f32 %v1835, %v1834
  %v1837 = vmul.f32 0.5, %v1836
  %v1838 = vsub.f32 1.5, %v1837
  %v1839 = vmul.f32 %v1834, %v1838
  %vm1840 = vweird.f32 %v1833
  %vm1841 = vweird.f32 %v1834
  %vm1842 = vmor %vm1840, %vm1841
  %v1843 = vsel %vm1842, %v1834, %v1839
  %v1844 = vmul.f32 %v1827, %v1843
  %v1846 = vperm.slane %v1820, 0
  %v1848 = vmul.f32 %v1844, %v1846
  %v1850 = vperm.slane %v1822, 0
  %v1852 = vadd.f32 %v1848, %v1850
  %s1853 = scalar_lea.vmem %s15, 21
  %v1854 = vld [vmem:[%s1853] sm:$0x1]
  %s1855 = scalar_lea.vmem %s15, 22
  %v1856 = vld [vmem:[%s1855] sm:$0x1]
  %v1857 = vsel %vm345, %v1852, 0.0
  %1858 = vadd.xlane.f32.xlu0 %v1857
  %v1859 = vpop.xlane.xlu0 %1858
  %v1860 = vmul.f32 %v1859, %v859
  %v1861 = vsub.f32 %v1852, %v1860
  %v1862 = vmul.f32 %v1861, %v1861
  %v1863 = vsel %vm345, %v1862, 0.0
  %1864 = vadd.xlane.f32.xlu0 %v1863
  %v1865 = vpop.xlane.xlu0 %1864
  %v1866 = vmul.f32 %v1865, %v859
  %v1867 = vadd.f32 %v1866, 1e-05
  %v1868 = vrsqrt.pop %v1867
  %v1869 = vmul.f32 %v1868, %v1867
  %v1870 = vmul.f32 %v1869, %v1868
  %v1871 = vmul.f32 0.5, %v1870
  %v1872 = vsub.f32 1.5, %v1871
  %v1873 = vmul.f32 %v1868, %v1872
  %vm1874 = vweird.f32 %v1867
  %vm1875 = vweird.f32 %v1868
  %vm1876 = vmor %vm1874, %vm1875
  %v1877 = vsel %vm1876, %v1868, %v1873
  %v1878 = vmul.f32 %v1861, %v1877
  %v1880 = vperm.slane %v1854, 0
  %v1882 = vmul.f32 %v1878, %v1880
  %v1884 = vperm.slane %v1856, 0
  %v1886 = vadd.f32 %v1882, %v1884
  %v1887 = vld [vmem:[%s5] sm:$0xff]
  %v1888 = vld [vmem:[%s5 + $0x8] sm:$0x3]
  %v1889 = vld [vmem:[%s9] sm:$0xff]
  %v1890 = vld [vmem:[%s9 + $0x8] sm:$0x3]
  %s1891 = scalar_lea.vmem %s11, 96
  %v1892 = vld [vmem:[%s1891] sm:$0xff]
  %v1893 = vld [vmem:[%s1891 + $0x8] sm:$0xff]
  %v1894 = vld [vmem:[%s1891 + $0x10] sm:$0xff]
  %v1895 = vld [vmem:[%s1891 + $0x18] sm:$0x1]
  %v1897 = vsel %vm149, %v1887, 0
  %v1900 = vsel %vm149, %v1888, 0
  %v1903 = vsel %vm156, %v1895, 0
  %1905 = vmatpush.msra.mxu0 0.0
  %1906 = vmatpush.msra.mxu0 0.0
  %1907 = vmatpush.msra.mxu0 0.0
  %1908 = vmatpush.msra.mxu0 0.0
  %1909 = vmatpush.msra.mxu0 0.0
  %1910 = vmatpush.msra.mxu0 0.0
  %1911 = vmatpush.msra.mxu0 0.0
  %1912 = vmatpush.msra.mxu0 0.0
  %1913 = vmatpush.msra.mxu0 0.0
  %1914 = vmatpush.msra.mxu0 0.0
  %1915 = vmatpush.msra.mxu0 0.0
  %1916 = vmatpush.msra.mxu0 0.0
  %1917 = vmatpush.msra.mxu0 %v1903
  %1918 = vmatpush.msra.mxu0 %v1894
  %1919 = vmatpush.msra.mxu0 %v1893
  %1920 = vmatpush.msra.mxu0 %v1892
  %1921 = vmatmul.f32.gmra.mxu0 %v1897
  %v1922 = vpop.f32.mrf.mxu0
  %v1923 = vadd.f32 0.0, %v1922
  %1924 = vmatmul.f32.gmra.mxu0 %v1900
  %v1925 = vpop.f32.mrf.mxu0
  %v1926 = vadd.f32 0.0, %v1925
  %1927 = vdwg.mxu0
  %s1928 = scalar_lea.vmem %s11, 128
  %v1929 = vld [vmem:[%s1928] sm:$0xff]
  %v1930 = vld [vmem:[%s1928 + $0x8] sm:$0xff]
  %v1931 = vld [vmem:[%s1928 + $0x10] sm:$0xff]
  %v1932 = vld [vmem:[%s1928 + $0x18] sm:$0x1]
  %v1934 = vsel %vm156, %v1932, 0
  %1936 = vmatpush.msra.mxu0 0.0
  %1937 = vmatpush.msra.mxu0 0.0
  %1938 = vmatpush.msra.mxu0 0.0
  %1939 = vmatpush.msra.mxu0 0.0
  %1940 = vmatpush.msra.mxu0 0.0
  %1941 = vmatpush.msra.mxu0 0.0
  %1942 = vmatpush.msra.mxu0 0.0
  %1943 = vmatpush.msra.mxu0 0.0
  %1944 = vmatpush.msra.mxu0 0.0
  %1945 = vmatpush.msra.mxu0 0.0
  %1946 = vmatpush.msra.mxu0 0.0
  %1947 = vmatpush.msra.mxu0 0.0
  %1948 = vmatpush.msra.mxu0 %v1934
  %1949 = vmatpush.msra.mxu0 %v1931
  %1950 = vmatpush.msra.mxu0 %v1930
  %1951 = vmatpush.msra.mxu0 %v1929
  %1952 = vmatmul.f32.gmra.mxu0 %v1897
  %v1953 = vpop.f32.mrf.mxu0
  %v1954 = vadd.f32 0.0, %v1953
  %1955 = vmatmul.f32.gmra.mxu0 %v1900
  %v1956 = vpop.f32.mrf.mxu0
  %v1957 = vadd.f32 0.0, %v1956
  %1958 = vdwg.mxu0
  %s1959 = scalar_lea.vmem %s11, 160
  %v1960 = vld [vmem:[%s1959] sm:$0xff]
  %v1961 = vld [vmem:[%s1959 + $0x8] sm:$0xff]
  %v1962 = vld [vmem:[%s1959 + $0x10] sm:$0xff]
  %v1963 = vld [vmem:[%s1959 + $0x18] sm:$0x1]
  %v1965 = vsel %vm156, %v1963, 0
  %1967 = vmatpush.msra.mxu0 0.0
  %1968 = vmatpush.msra.mxu0 0.0
  %1969 = vmatpush.msra.mxu0 0.0
  %1970 = vmatpush.msra.mxu0 0.0
  %1971 = vmatpush.msra.mxu0 0.0
  %1972 = vmatpush.msra.mxu0 0.0
  %1973 = vmatpush.msra.mxu0 0.0
  %1974 = vmatpush.msra.mxu0 0.0
  %1975 = vmatpush.msra.mxu0 0.0
  %1976 = vmatpush.msra.mxu0 0.0
  %1977 = vmatpush.msra.mxu0 0.0
  %1978 = vmatpush.msra.mxu0 0.0
  %1979 = vmatpush.msra.mxu0 %v1965
  %1980 = vmatpush.msra.mxu0 %v1962
  %1981 = vmatpush.msra.mxu0 %v1961
  %1982 = vmatpush.msra.mxu0 %v1960
  %1983 = vmatmul.f32.gmra.mxu0 %v1897
  %v1984 = vpop.f32.mrf.mxu0
  %v1985 = vadd.f32 0.0, %v1984
  %1986 = vmatmul.f32.gmra.mxu0 %v1900
  %v1987 = vpop.f32.mrf.mxu0
  %v1988 = vadd.f32 0.0, %v1987
  %1989 = vdwg.mxu0
  %v1990 = vld [vmem:[%s19] sm:$0xff]
  %v1991 = vld [vmem:[%s19 + $0x8] sm:$0x3]
  %vm1992 = vcmask 80896
  %v1994 = vsel %vm1992, %v1990, 0
  %v1997 = vsel %vm1992, %v1991, 0
  %vm1999 = vcmask 1041408
  %v2001 = vsel %vm1999, %v1926, 0
  %2003 = vmatpush.msra.mxu0 0.0
  %2004 = vmatpush.msra.mxu0 0.0
  %2005 = vmatpush.msra.mxu0 0.0
  %2006 = vmatpush.msra.mxu0 0.0
  %2007 = vmatpush.msra.mxu0 0.0
  %2008 = vmatpush.msra.mxu0 0.0
  %2009 = vmatpush.msra.mxu0 0.0
  %2010 = vmatpush.msra.mxu0 0.0
  %2011 = vmatpush.msra.mxu0 0.0
  %2012 = vmatpush.msra.mxu0 0.0
  %2013 = vmatpush.msra.mxu0 0.0
  %2014 = vmatpush.msra.mxu0 0.0
  %2015 = vmatpush.msra.mxu0 0.0
  %2016 = vmatpush.msra.mxu0 0.0
  %2017 = vmatpush.msra.mxu0 %v2001
  %2018 = vmatpush.msra.mxu0 %v1923
  %2019 = vmatmul.f32.gmra.mxu0 %v1994
  %v2020 = vpop.f32.mrf.mxu0
  %v2021 = vadd.f32 %v1954, %v2020
  %2022 = vmatmul.f32.gmra.mxu0 %v1997
  %v2023 = vpop.f32.mrf.mxu0
  %v2024 = vadd.f32 %v1957, %v2023
  %2025 = vdwg.mxu0
  %s2026 = scalar_lea.vmem %s19, 16
  %v2027 = vld [vmem:[%s2026] sm:$0xff]
  %v2028 = vld [vmem:[%s2026 + $0x8] sm:$0x3]
  %v2030 = vsel %vm1992, %v2027, 0
  %v2033 = vsel %vm1992, %v2028, 0
  %v2036 = vsel %vm1999, %v1988, 0
  %2038 = vmatpush.msra.mxu0 0.0
  %2039 = vmatpush.msra.mxu0 0.0
  %2040 = vmatpush.msra.mxu0 0.0
  %2041 = vmatpush.msra.mxu0 0.0
  %2042 = vmatpush.msra.mxu0 0.0
  %2043 = vmatpush.msra.mxu0 0.0
  %2044 = vmatpush.msra.mxu0 0.0
  %2045 = vmatpush.msra.mxu0 0.0
  %2046 = vmatpush.msra.mxu0 0.0
  %2047 = vmatpush.msra.mxu0 0.0
  %2048 = vmatpush.msra.mxu0 0.0
  %2049 = vmatpush.msra.mxu0 0.0
  %2050 = vmatpush.msra.mxu0 0.0
  %2051 = vmatpush.msra.mxu0 0.0
  %2052 = vmatpush.msra.mxu0 %v2036
  %2053 = vmatpush.msra.mxu0 %v1985
  %2054 = vmatmul.f32.gmra.mxu0 %v2030
  %v2055 = vpop.f32.mrf.mxu0
  %v2056 = vadd.f32 0.0, %v2055
  %2057 = vmatmul.f32.gmra.mxu0 %v2033
  %v2058 = vpop.f32.mrf.mxu0
  %v2059 = vadd.f32 0.0, %v2058
  %2060 = vdwg.mxu0
  %v2061 = vadd.f32 %v2021, %v2056
  %v2062 = vadd.f32 %v2024, %v2059
  %v2063 = vadd.f32 %v2061, %v1889
  %v2064 = vadd.f32 %v2062, %v1890
  %s2065 = scalar_lea.vmem %s13, 480
  %v2066 = vld [vmem:[%s2065] sm:$0xff]
  %v2067 = vld [vmem:[%s2065 + $0x8] sm:$0xff]
  %v2068 = vld [vmem:[%s2065 + $0x10] sm:$0xff]
  %v2069 = vld [vmem:[%s2065 + $0x18] sm:$0xff]
  %s2070 = scalar_lea.vmem %s15, 23
  %v2071 = vld [vmem:[%s2070] sm:$0x1]
  %v2073 = vperm.slane %v2071, 0
  %v2076 = vsel %vm345, %v2063, 0
  %v2079 = vsel %vm345, %v2064, 0
  %2081 = vmatpush.msra.mxu0 0.0
  %2082 = vmatpush.msra.mxu0 0.0
  %2083 = vmatpush.msra.mxu0 0.0
  %2084 = vmatpush.msra.mxu0 0.0
  %2085 = vmatpush.msra.mxu0 0.0
  %2086 = vmatpush.msra.mxu0 0.0
  %2087 = vmatpush.msra.mxu0 0.0
  %2088 = vmatpush.msra.mxu0 0.0
  %2089 = vmatpush.msra.mxu0 0.0
  %2090 = vmatpush.msra.mxu0 0.0
  %2091 = vmatpush.msra.mxu0 0.0
  %2092 = vmatpush.msra.mxu0 0.0
  %2093 = vmatpush.msra.mxu0 %v2069
  %2094 = vmatpush.msra.mxu0 %v2068
  %2095 = vmatpush.msra.mxu0 %v2067
  %2096 = vmatpush.msra.mxu0 %v2066
  %2097 = vmatmul.f32.gmra.mxu0 %v2076
  %v2098 = vpop.f32.mrf.mxu0
  %v2099 = vadd.f32 %v2073, %v2098
  %2100 = vmatmul.f32.gmra.mxu0 %v2079
  %v2101 = vpop.f32.mrf.mxu0
  %v2102 = vadd.f32 %v2073, %v2101
  %2103 = vdwg.mxu0
  %s2104 = scalar_lea.vmem %s13, 512
  %v2105 = vld [vmem:[%s2104] sm:$0xff]
  %v2106 = vld [vmem:[%s2104 + $0x8] sm:$0xff]
  %v2107 = vld [vmem:[%s2104 + $0x10] sm:$0xff]
  %v2108 = vld [vmem:[%s2104 + $0x18] sm:$0xff]
  %s2109 = scalar_lea.vmem %s15, 24
  %v2110 = vld [vmem:[%s2109] sm:$0x1]
  %v2112 = vperm.slane %v2110, 0
  %2114 = vmatpush.msra.mxu0 0.0
  %2115 = vmatpush.msra.mxu0 0.0
  %2116 = vmatpush.msra.mxu0 0.0
  %2117 = vmatpush.msra.mxu0 0.0
  %2118 = vmatpush.msra.mxu0 0.0
  %2119 = vmatpush.msra.mxu0 0.0
  %2120 = vmatpush.msra.mxu0 0.0
  %2121 = vmatpush.msra.mxu0 0.0
  %2122 = vmatpush.msra.mxu0 0.0
  %2123 = vmatpush.msra.mxu0 0.0
  %2124 = vmatpush.msra.mxu0 0.0
  %2125 = vmatpush.msra.mxu0 0.0
  %2126 = vmatpush.msra.mxu0 %v2108
  %2127 = vmatpush.msra.mxu0 %v2107
  %2128 = vmatpush.msra.mxu0 %v2106
  %2129 = vmatpush.msra.mxu0 %v2105
  %2130 = vmatmul.f32.gmra.mxu0 %v2076
  %v2131 = vpop.f32.mrf.mxu0
  %v2132 = vadd.f32 %v2112, %v2131
  %2133 = vmatmul.f32.gmra.mxu0 %v2079
  %v2134 = vpop.f32.mrf.mxu0
  %v2135 = vadd.f32 %v2112, %v2134
  %2136 = vdwg.mxu0
  %s2137 = scalar_lea.vmem %s13, 544
  %v2138 = vld [vmem:[%s2137] sm:$0xff]
  %v2139 = vld [vmem:[%s2137 + $0x8] sm:$0xff]
  %v2140 = vld [vmem:[%s2137 + $0x10] sm:$0xff]
  %v2141 = vld [vmem:[%s2137 + $0x18] sm:$0xff]
  %s2142 = scalar_lea.vmem %s15, 25
  %v2143 = vld [vmem:[%s2142] sm:$0x1]
  %v2145 = vperm.slane %v2143, 0
  %2147 = vmatpush.msra.mxu0 0.0
  %2148 = vmatpush.msra.mxu0 0.0
  %2149 = vmatpush.msra.mxu0 0.0
  %2150 = vmatpush.msra.mxu0 0.0
  %2151 = vmatpush.msra.mxu0 0.0
  %2152 = vmatpush.msra.mxu0 0.0
  %2153 = vmatpush.msra.mxu0 0.0
  %2154 = vmatpush.msra.mxu0 0.0
  %2155 = vmatpush.msra.mxu0 0.0
  %2156 = vmatpush.msra.mxu0 0.0
  %2157 = vmatpush.msra.mxu0 0.0
  %2158 = vmatpush.msra.mxu0 0.0
  %2159 = vmatpush.msra.mxu0 %v2141
  %2160 = vmatpush.msra.mxu0 %v2140
  %2161 = vmatpush.msra.mxu0 %v2139
  %2162 = vmatpush.msra.mxu0 %v2138
  %2163 = vmatmul.f32.gmra.mxu0 %v2076
  %v2164 = vpop.f32.mrf.mxu0
  %v2165 = vadd.f32 %v2145, %v2164
  %2166 = vmatmul.f32.gmra.mxu0 %v2079
  %v2167 = vpop.f32.mrf.mxu0
  %v2168 = vadd.f32 %v2145, %v2167
  %2169 = vdwg.mxu0
  %v2170 = vld [vmem:[%s25] sm:$0xff]
  %v2171 = vld [vmem:[%s25 + $0x8] sm:$0x3]
  %v2172 = vmul.f32 %v2099, %v430
  %v2173 = vmul.f32 %v2102, %v430
  %v2175 = vsel %vm345, %v2172, 0
  %v2178 = vsel %vm345, %v2173, 0
  %v2181 = vsel %vm345, %v2132, 0
  %v2184 = vsel %vm345, %v2135, 0
  %2186 = vmatpush.xpose.msra.mxu0 0.0
  %2187 = vmatpush.xpose.msra.mxu0 0.0
  %2188 = vmatpush.xpose.msra.mxu0 0.0
  %2189 = vmatpush.xpose.msra.mxu0 0.0
  %2190 = vmatpush.xpose.msra.mxu0 0.0
  %2191 = vmatpush.xpose.msra.mxu0 0.0
  %2192 = vmatpush.xpose.msra.mxu0 0.0
  %2193 = vmatpush.xpose.msra.mxu0 0.0
  %2194 = vmatpush.xpose.msra.mxu0 0.0
  %2195 = vmatpush.xpose.msra.mxu0 0.0
  %2196 = vmatpush.xpose.msra.mxu0 0.0
  %2197 = vmatpush.xpose.msra.mxu0 0.0
  %2198 = vmatpush.xpose.msra.mxu0 0.0
  %2199 = vmatpush.xpose.msra.mxu0 0.0
  %2200 = vmatpush.xpose.msra.mxu0 %v2184
  %2201 = vmatpush.xpose.msra.mxu0 %v2181
  %2202 = vmatmul.f32.gmra.mxu0 %v2175
  %v2203 = vpop.f32.mrf.mxu0
  %v2204 = vadd.f32 0.0, %v2203
  %2205 = vmatmul.f32.gmra.mxu0 %v2178
  %v2206 = vpop.f32.mrf.mxu0
  %v2207 = vadd.f32 0.0, %v2206
  %2208 = vdwg.mxu0
  %v2209 = vmul.f32 %v2204, 0.35355338
  %v2210 = vmul.f32 %v2207, 0.35355338
  %v2211 = vadd.f32 %v2209, %v2170
  %v2212 = vadd.f32 %v2210, %v2171
  %v2213 = vsel %vm1992, %v2211, -inf
  %2214 = vmax.xlane.f32.xlu0 %v2213
  %v2215 = vpop.xlane.xlu0 %2214
  %vm2216 = vcmask 74752
  %v2217 = vsel %vm2216, %v2212, -inf
  %2218 = vmax.xlane.f32.xlu0 %v2217
  %v2219 = vpop.xlane.xlu0 %2218
  %v2220 = vsub.f32 %v2211, %v2215
  %v2221 = vsub.f32 %v2212, %v2219
  %v2222 = vmul.f32 %v2220, 1.442695
  %v2223 = vpow.pop %v2222
  %v2224 = vmul.f32 %v2221, 1.442695
  %v2225 = vpow.pop %v2224
  %v2226 = vsel %vm1992, %v2223, 0.0
  %2227 = vadd.xlane.f32.xlu0 %v2226
  %v2228 = vpop.xlane.xlu0 %2227
  %v2229 = vsel %vm2216, %v2225, 0.0
  %2230 = vadd.xlane.f32.xlu0 %v2229
  %v2231 = vpop.xlane.xlu0 %2230
  %v2232 = vrcp.pop %v2228
  %v2233 = vrcp.pop %v2231
  %v2234 = vmul.f32 %v2223, %v2232
  %v2235 = vmul.f32 %v2225, %v2233
  %v2236 = vld [vmem:[%s37] sm:$0xff]
  %v2237 = vld [vmem:[%s37 + $0x8] sm:$0xff]
  %v2238 = vld [vmem:[%s37 + $0x10] sm:$0xff]
  %v2239 = vld [vmem:[%s37 + $0x18] sm:$0xff]
  %v2241 = vsel %vm345, %v2165, 0
  %v2244 = vsel %vm345, %v2168, 0
  %2246 = vmatpush.msra.mxu0 0.0
  %2247 = vmatpush.msra.mxu0 0.0
  %2248 = vmatpush.msra.mxu0 0.0
  %2249 = vmatpush.msra.mxu0 0.0
  %2250 = vmatpush.msra.mxu0 0.0
  %2251 = vmatpush.msra.mxu0 0.0
  %2252 = vmatpush.msra.mxu0 0.0
  %2253 = vmatpush.msra.mxu0 0.0
  %2254 = vmatpush.msra.mxu0 0.0
  %2255 = vmatpush.msra.mxu0 0.0
  %2256 = vmatpush.msra.mxu0 0.0
  %2257 = vmatpush.msra.mxu0 0.0
  %2258 = vmatpush.msra.mxu0 %v2239
  %2259 = vmatpush.msra.mxu0 %v2238
  %2260 = vmatpush.msra.mxu0 %v2237
  %2261 = vmatpush.msra.mxu0 %v2236
  %2262 = vmatmul.f32.gmra.mxu0 %v2241
  %v2263 = vpop.f32.mrf.mxu0
  %v2264 = vadd.f32 0.0, %v2263
  %2265 = vmatmul.f32.gmra.mxu0 %v2244
  %v2266 = vpop.f32.mrf.mxu0
  %v2267 = vadd.f32 0.0, %v2266
  %2268 = vdwg.mxu0
  %v2270 = vsel %vm1992, %v2234, 0
  %v2273 = vsel %vm1992, %v2235, 0
  %v2276 = vsel %vm1999, %v2267, 0
  %2278 = vmatpush.msra.mxu0 0.0
  %2279 = vmatpush.msra.mxu0 0.0
  %2280 = vmatpush.msra.mxu0 0.0
  %2281 = vmatpush.msra.mxu0 0.0
  %2282 = vmatpush.msra.mxu0 0.0
  %2283 = vmatpush.msra.mxu0 0.0
  %2284 = vmatpush.msra.mxu0 0.0
  %2285 = vmatpush.msra.mxu0 0.0
  %2286 = vmatpush.msra.mxu0 0.0
  %2287 = vmatpush.msra.mxu0 0.0
  %2288 = vmatpush.msra.mxu0 0.0
  %2289 = vmatpush.msra.mxu0 0.0
  %2290 = vmatpush.msra.mxu0 0.0
  %2291 = vmatpush.msra.mxu0 0.0
  %2292 = vmatpush.msra.mxu0 %v2276
  %2293 = vmatpush.msra.mxu0 %v2264
  %2294 = vmatmul.f32.gmra.mxu0 %v2270
  %v2295 = vpop.f32.mrf.mxu0
  %v2296 = vadd.f32 0.0, %v2295
  %2297 = vmatmul.f32.gmra.mxu0 %v2273
  %v2298 = vpop.f32.mrf.mxu0
  %v2299 = vadd.f32 0.0, %v2298
  %2300 = vdwg.mxu0
  %v2301 = vld [vmem:[%s33] sm:$0xff]
  %v2302 = vld [vmem:[%s33 + $0x8] sm:$0xff]
  %v2303 = vld [vmem:[%s33 + $0x10] sm:$0xff]
  %v2304 = vld [vmem:[%s33 + $0x18] sm:$0xff]
  %v2305 = vld [vmem:[%s33 + $0x20] sm:$0xff]
  %v2306 = vmul.f32 %v2099, %v500
  %v2307 = vmul.f32 %v2102, %v500
  %v2309 = vsel %vm345, %v2306, 0
  %v2312 = vsel %vm345, %v2307, 0
  %2314 = vmatpush.xpose.msra.mxu0 0.0
  %2315 = vmatpush.xpose.msra.mxu0 0.0
  %2316 = vmatpush.xpose.msra.mxu0 0.0
  %2317 = vmatpush.xpose.msra.mxu0 0.0
  %2318 = vmatpush.xpose.msra.mxu0 0.0
  %2319 = vmatpush.xpose.msra.mxu0 0.0
  %2320 = vmatpush.xpose.msra.mxu0 0.0
  %2321 = vmatpush.xpose.msra.mxu0 0.0
  %2322 = vmatpush.xpose.msra.mxu0 0.0
  %2323 = vmatpush.xpose.msra.mxu0 0.0
  %2324 = vmatpush.xpose.msra.mxu0 0.0
  %2325 = vmatpush.xpose.msra.mxu0 0.0
  %2326 = vmatpush.xpose.msra.mxu0 0.0
  %2327 = vmatpush.xpose.msra.mxu0 0.0
  %2328 = vmatpush.xpose.msra.mxu0 %v2184
  %2329 = vmatpush.xpose.msra.mxu0 %v2181
  %2330 = vmatmul.f32.gmra.mxu0 %v2309
  %v2331 = vpop.f32.mrf.mxu0
  %v2332 = vadd.f32 0.0, %v2331
  %2333 = vmatmul.f32.gmra.mxu0 %v2312
  %v2334 = vpop.f32.mrf.mxu0
  %v2335 = vadd.f32 0.0, %v2334
  %2336 = vdwg.mxu0
  %v2337 = vmul.f32 %v2332, 0.35355338
  %v2338 = vmul.f32 %v2335, 0.35355338
  %v2339 = vadd.f32 %v2337, %v2170
  %v2340 = vadd.f32 %v2338, %v2171
  %v2341 = vsel %vm1992, %v2339, -inf
  %2342 = vmax.xlane.f32.xlu0 %v2341
  %v2343 = vpop.xlane.xlu0 %2342
  %v2344 = vsel %vm2216, %v2340, -inf
  %2345 = vmax.xlane.f32.xlu0 %v2344
  %v2346 = vpop.xlane.xlu0 %2345
  %v2347 = vsub.f32 %v2339, %v2343
  %v2348 = vsub.f32 %v2340, %v2346
  %v2349 = vmul.f32 %v2347, 1.442695
  %v2350 = vpow.pop %v2349
  %v2351 = vmul.f32 %v2348, 1.442695
  %v2352 = vpow.pop %v2351
  %v2353 = vsel %vm1992, %v2350, 0.0
  %2354 = vadd.xlane.f32.xlu0 %v2353
  %v2355 = vpop.xlane.xlu0 %2354
  %v2356 = vsel %vm2216, %v2352, 0.0
  %2357 = vadd.xlane.f32.xlu0 %v2356
  %v2358 = vpop.xlane.xlu0 %2357
  %v2359 = vrcp.pop %v2355
  %v2360 = vrcp.pop %v2358
  %v2361 = vmul.f32 %v2350, %v2359
  %v2362 = vmul.f32 %v2352, %v2360
  %s2363 = scalar_lea.vmem %s37, 32
  %v2364 = vld [vmem:[%s2363] sm:$0xff]
  %v2365 = vld [vmem:[%s2363 + $0x8] sm:$0xff]
  %v2366 = vld [vmem:[%s2363 + $0x10] sm:$0xff]
  %v2367 = vld [vmem:[%s2363 + $0x18] sm:$0xff]
  %2368 = vmatpush.msra.mxu0 0.0
  %2369 = vmatpush.msra.mxu0 0.0
  %2370 = vmatpush.msra.mxu0 0.0
  %2371 = vmatpush.msra.mxu0 0.0
  %2372 = vmatpush.msra.mxu0 0.0
  %2373 = vmatpush.msra.mxu0 0.0
  %2374 = vmatpush.msra.mxu0 0.0
  %2375 = vmatpush.msra.mxu0 0.0
  %2376 = vmatpush.msra.mxu0 0.0
  %2377 = vmatpush.msra.mxu0 0.0
  %2378 = vmatpush.msra.mxu0 0.0
  %2379 = vmatpush.msra.mxu0 0.0
  %2380 = vmatpush.msra.mxu0 %v2367
  %2381 = vmatpush.msra.mxu0 %v2366
  %2382 = vmatpush.msra.mxu0 %v2365
  %2383 = vmatpush.msra.mxu0 %v2364
  %2384 = vmatmul.f32.gmra.mxu0 %v2241
  %v2385 = vpop.f32.mrf.mxu0
  %v2386 = vadd.f32 0.0, %v2385
  %2387 = vmatmul.f32.gmra.mxu0 %v2244
  %v2388 = vpop.f32.mrf.mxu0
  %v2389 = vadd.f32 0.0, %v2388
  %2390 = vdwg.mxu0
  %v2392 = vsel %vm1992, %v2361, 0
  %v2395 = vsel %vm1992, %v2362, 0
  %v2398 = vsel %vm1999, %v2389, 0
  %2400 = vmatpush.msra.mxu0 0.0
  %2401 = vmatpush.msra.mxu0 0.0
  %2402 = vmatpush.msra.mxu0 0.0
  %2403 = vmatpush.msra.mxu0 0.0
  %2404 = vmatpush.msra.mxu0 0.0
  %2405 = vmatpush.msra.mxu0 0.0
  %2406 = vmatpush.msra.mxu0 0.0
  %2407 = vmatpush.msra.mxu0 0.0
  %2408 = vmatpush.msra.mxu0 0.0
  %2409 = vmatpush.msra.mxu0 0.0
  %2410 = vmatpush.msra.mxu0 0.0
  %2411 = vmatpush.msra.mxu0 0.0
  %2412 = vmatpush.msra.mxu0 0.0
  %2413 = vmatpush.msra.mxu0 0.0
  %2414 = vmatpush.msra.mxu0 %v2398
  %2415 = vmatpush.msra.mxu0 %v2386
  %2416 = vmatmul.f32.gmra.mxu0 %v2392
  %v2417 = vpop.f32.mrf.mxu0
  %v2418 = vadd.f32 0.0, %v2417
  %2419 = vmatmul.f32.gmra.mxu0 %v2395
  %v2420 = vpop.f32.mrf.mxu0
  %v2421 = vadd.f32 0.0, %v2420
  %2422 = vdwg.mxu0
  %s2423 = scalar_lea.vmem %s33, 40
  %v2424 = vld [vmem:[%s2423] sm:$0xff]
  %v2425 = vld [vmem:[%s2423 + $0x8] sm:$0xff]
  %v2426 = vld [vmem:[%s2423 + $0x10] sm:$0xff]
  %v2427 = vld [vmem:[%s2423 + $0x18] sm:$0xff]
  %v2428 = vld [vmem:[%s2423 + $0x20] sm:$0xff]
  %v2430 = vsel %vm1992, %v2424, 0
  %v2433 = vsel %vm1992, %v2425, 0
  %v2436 = vsel %vm1992, %v2426, 0
  %v2439 = vsel %vm1992, %v2427, 0
  %v2442 = vsel %vm1992, %v2428, 0
  %v2445 = vsel %vm1999, %v2421, 0
  %2447 = vmatpush.msra.mxu0 0.0
  %2448 = vmatpush.msra.mxu0 0.0
  %2449 = vmatpush.msra.mxu0 0.0
  %2450 = vmatpush.msra.mxu0 0.0
  %2451 = vmatpush.msra.mxu0 0.0
  %2452 = vmatpush.msra.mxu0 0.0
  %2453 = vmatpush.msra.mxu0 0.0
  %2454 = vmatpush.msra.mxu0 0.0
  %2455 = vmatpush.msra.mxu0 0.0
  %2456 = vmatpush.msra.mxu0 0.0
  %2457 = vmatpush.msra.mxu0 0.0
  %2458 = vmatpush.msra.mxu0 0.0
  %2459 = vmatpush.msra.mxu0 0.0
  %2460 = vmatpush.msra.mxu0 0.0
  %2461 = vmatpush.msra.mxu0 %v2445
  %2462 = vmatpush.msra.mxu0 %v2418
  %2463 = vmatmul.f32.gmra.mxu0 %v2430
  %v2464 = vpop.f32.mrf.mxu0
  %v2465 = vadd.f32 0.0, %v2464
  %2466 = vmatmul.f32.gmra.mxu0 %v2433
  %v2467 = vpop.f32.mrf.mxu0
  %v2468 = vadd.f32 0.0, %v2467
  %2469 = vmatmul.f32.gmra.mxu0 %v2436
  %v2470 = vpop.f32.mrf.mxu0
  %v2471 = vadd.f32 0.0, %v2470
  %2472 = vmatmul.f32.gmra.mxu0 %v2439
  %v2473 = vpop.f32.mrf.mxu0
  %v2474 = vadd.f32 0.0, %v2473
  %2475 = vmatmul.f32.gmra.mxu0 %v2442
  %v2476 = vpop.f32.mrf.mxu0
  %v2477 = vadd.f32 0.0, %v2476
  %2478 = vdwg.mxu0
  %v2480 = vsel %vm1992, %v2301, 0
  %v2483 = vsel %vm1992, %v2302, 0
  %v2486 = vsel %vm1992, %v2303, 0
  %v2489 = vsel %vm1992, %v2304, 0
  %v2492 = vsel %vm1992, %v2305, 0
  %v2495 = vsel %vm1999, %v2299, 0
  %2497 = vmatpush.msra.mxu0 0.0
  %2498 = vmatpush.msra.mxu0 0.0
  %2499 = vmatpush.msra.mxu0 0.0
  %2500 = vmatpush.msra.mxu0 0.0
  %2501 = vmatpush.msra.mxu0 0.0
  %2502 = vmatpush.msra.mxu0 0.0
  %2503 = vmatpush.msra.mxu0 0.0
  %2504 = vmatpush.msra.mxu0 0.0
  %2505 = vmatpush.msra.mxu0 0.0
  %2506 = vmatpush.msra.mxu0 0.0
  %2507 = vmatpush.msra.mxu0 0.0
  %2508 = vmatpush.msra.mxu0 0.0
  %2509 = vmatpush.msra.mxu0 0.0
  %2510 = vmatpush.msra.mxu0 0.0
  %2511 = vmatpush.msra.mxu0 %v2495
  %2512 = vmatpush.msra.mxu0 %v2296
  %2513 = vmatmul.f32.gmra.mxu0 %v2480
  %v2514 = vpop.f32.mrf.mxu0
  %v2515 = vadd.f32 %v2465, %v2514
  %2516 = vmatmul.f32.gmra.mxu0 %v2483
  %v2517 = vpop.f32.mrf.mxu0
  %v2518 = vadd.f32 %v2468, %v2517
  %2519 = vmatmul.f32.gmra.mxu0 %v2486
  %v2520 = vpop.f32.mrf.mxu0
  %v2521 = vadd.f32 %v2471, %v2520
  %2522 = vmatmul.f32.gmra.mxu0 %v2489
  %v2523 = vpop.f32.mrf.mxu0
  %v2524 = vadd.f32 %v2474, %v2523
  %2525 = vmatmul.f32.gmra.mxu0 %v2492
  %v2526 = vpop.f32.mrf.mxu0
  %v2527 = vadd.f32 %v2477, %v2526
  %2528 = vdwg.mxu0
  %v2529 = vmul.f32 %v2099, %v622
  %v2530 = vmul.f32 %v2102, %v622
  %v2532 = vsel %vm345, %v2529, 0
  %v2535 = vsel %vm345, %v2530, 0
  %2537 = vmatpush.xpose.msra.mxu0 0.0
  %2538 = vmatpush.xpose.msra.mxu0 0.0
  %2539 = vmatpush.xpose.msra.mxu0 0.0
  %2540 = vmatpush.xpose.msra.mxu0 0.0
  %2541 = vmatpush.xpose.msra.mxu0 0.0
  %2542 = vmatpush.xpose.msra.mxu0 0.0
  %2543 = vmatpush.xpose.msra.mxu0 0.0
  %2544 = vmatpush.xpose.msra.mxu0 0.0
  %2545 = vmatpush.xpose.msra.mxu0 0.0
  %2546 = vmatpush.xpose.msra.mxu0 0.0
  %2547 = vmatpush.xpose.msra.mxu0 0.0
  %2548 = vmatpush.xpose.msra.mxu0 0.0
  %2549 = vmatpush.xpose.msra.mxu0 0.0
  %2550 = vmatpush.xpose.msra.mxu0 0.0
  %2551 = vmatpush.xpose.msra.mxu0 %v2184
  %2552 = vmatpush.xpose.msra.mxu0 %v2181
  %2553 = vmatmul.f32.gmra.mxu0 %v2532
  %v2554 = vpop.f32.mrf.mxu0
  %v2555 = vadd.f32 0.0, %v2554
  %2556 = vmatmul.f32.gmra.mxu0 %v2535
  %v2557 = vpop.f32.mrf.mxu0
  %v2558 = vadd.f32 0.0, %v2557
  %2559 = vdwg.mxu0
  %v2560 = vmul.f32 %v2555, 0.35355338
  %v2561 = vmul.f32 %v2558, 0.35355338
  %v2562 = vadd.f32 %v2560, %v2170
  %v2563 = vadd.f32 %v2561, %v2171
  %v2564 = vsel %vm1992, %v2562, -inf
  %2565 = vmax.xlane.f32.xlu0 %v2564
  %v2566 = vpop.xlane.xlu0 %2565
  %v2567 = vsel %vm2216, %v2563, -inf
  %2568 = vmax.xlane.f32.xlu0 %v2567
  %v2569 = vpop.xlane.xlu0 %2568
  %v2570 = vsub.f32 %v2562, %v2566
  %v2571 = vsub.f32 %v2563, %v2569
  %v2572 = vmul.f32 %v2570, 1.442695
  %v2573 = vpow.pop %v2572
  %v2574 = vmul.f32 %v2571, 1.442695
  %v2575 = vpow.pop %v2574
  %v2576 = vsel %vm1992, %v2573, 0.0
  %2577 = vadd.xlane.f32.xlu0 %v2576
  %v2578 = vpop.xlane.xlu0 %2577
  %v2579 = vsel %vm2216, %v2575, 0.0
  %2580 = vadd.xlane.f32.xlu0 %v2579
  %v2581 = vpop.xlane.xlu0 %2580
  %v2582 = vrcp.pop %v2578
  %v2583 = vrcp.pop %v2581
  %v2584 = vmul.f32 %v2573, %v2582
  %v2585 = vmul.f32 %v2575, %v2583
  %s2586 = scalar_lea.vmem %s37, 64
  %v2587 = vld [vmem:[%s2586] sm:$0xff]
  %v2588 = vld [vmem:[%s2586 + $0x8] sm:$0xff]
  %v2589 = vld [vmem:[%s2586 + $0x10] sm:$0xff]
  %v2590 = vld [vmem:[%s2586 + $0x18] sm:$0xff]
  %2591 = vmatpush.msra.mxu0 0.0
  %2592 = vmatpush.msra.mxu0 0.0
  %2593 = vmatpush.msra.mxu0 0.0
  %2594 = vmatpush.msra.mxu0 0.0
  %2595 = vmatpush.msra.mxu0 0.0
  %2596 = vmatpush.msra.mxu0 0.0
  %2597 = vmatpush.msra.mxu0 0.0
  %2598 = vmatpush.msra.mxu0 0.0
  %2599 = vmatpush.msra.mxu0 0.0
  %2600 = vmatpush.msra.mxu0 0.0
  %2601 = vmatpush.msra.mxu0 0.0
  %2602 = vmatpush.msra.mxu0 0.0
  %2603 = vmatpush.msra.mxu0 %v2590
  %2604 = vmatpush.msra.mxu0 %v2589
  %2605 = vmatpush.msra.mxu0 %v2588
  %2606 = vmatpush.msra.mxu0 %v2587
  %2607 = vmatmul.f32.gmra.mxu0 %v2241
  %v2608 = vpop.f32.mrf.mxu0
  %v2609 = vadd.f32 0.0, %v2608
  %2610 = vmatmul.f32.gmra.mxu0 %v2244
  %v2611 = vpop.f32.mrf.mxu0
  %v2612 = vadd.f32 0.0, %v2611
  %2613 = vdwg.mxu0
  %v2615 = vsel %vm1992, %v2584, 0
  %v2618 = vsel %vm1992, %v2585, 0
  %v2621 = vsel %vm1999, %v2612, 0
  %2623 = vmatpush.msra.mxu0 0.0
  %2624 = vmatpush.msra.mxu0 0.0
  %2625 = vmatpush.msra.mxu0 0.0
  %2626 = vmatpush.msra.mxu0 0.0
  %2627 = vmatpush.msra.mxu0 0.0
  %2628 = vmatpush.msra.mxu0 0.0
  %2629 = vmatpush.msra.mxu0 0.0
  %2630 = vmatpush.msra.mxu0 0.0
  %2631 = vmatpush.msra.mxu0 0.0
  %2632 = vmatpush.msra.mxu0 0.0
  %2633 = vmatpush.msra.mxu0 0.0
  %2634 = vmatpush.msra.mxu0 0.0
  %2635 = vmatpush.msra.mxu0 0.0
  %2636 = vmatpush.msra.mxu0 0.0
  %2637 = vmatpush.msra.mxu0 %v2621
  %2638 = vmatpush.msra.mxu0 %v2609
  %2639 = vmatmul.f32.gmra.mxu0 %v2615
  %v2640 = vpop.f32.mrf.mxu0
  %v2641 = vadd.f32 0.0, %v2640
  %2642 = vmatmul.f32.gmra.mxu0 %v2618
  %v2643 = vpop.f32.mrf.mxu0
  %v2644 = vadd.f32 0.0, %v2643
  %2645 = vdwg.mxu0
  %s2646 = scalar_lea.vmem %s33, 80
  %v2647 = vld [vmem:[%s2646] sm:$0xff]
  %v2648 = vld [vmem:[%s2646 + $0x8] sm:$0xff]
  %v2649 = vld [vmem:[%s2646 + $0x10] sm:$0xff]
  %v2650 = vld [vmem:[%s2646 + $0x18] sm:$0xff]
  %v2651 = vld [vmem:[%s2646 + $0x20] sm:$0xff]
  %v2653 = vsel %vm1992, %v2647, 0
  %v2656 = vsel %vm1992, %v2648, 0
  %v2659 = vsel %vm1992, %v2649, 0
  %v2662 = vsel %vm1992, %v2650, 0
  %v2665 = vsel %vm1992, %v2651, 0
  %v2668 = vsel %vm1999, %v2644, 0
  %2670 = vmatpush.msra.mxu0 0.0
  %2671 = vmatpush.msra.mxu0 0.0
  %2672 = vmatpush.msra.mxu0 0.0
  %2673 = vmatpush.msra.mxu0 0.0
  %2674 = vmatpush.msra.mxu0 0.0
  %2675 = vmatpush.msra.mxu0 0.0
  %2676 = vmatpush.msra.mxu0 0.0
  %2677 = vmatpush.msra.mxu0 0.0
  %2678 = vmatpush.msra.mxu0 0.0
  %2679 = vmatpush.msra.mxu0 0.0
  %2680 = vmatpush.msra.mxu0 0.0
  %2681 = vmatpush.msra.mxu0 0.0
  %2682 = vmatpush.msra.mxu0 0.0
  %2683 = vmatpush.msra.mxu0 0.0
  %2684 = vmatpush.msra.mxu0 %v2668
  %2685 = vmatpush.msra.mxu0 %v2641
  %2686 = vmatmul.f32.gmra.mxu0 %v2653
  %v2687 = vpop.f32.mrf.mxu0
  %v2688 = vadd.f32 0.0, %v2687
  %2689 = vmatmul.f32.gmra.mxu0 %v2656
  %v2690 = vpop.f32.mrf.mxu0
  %v2691 = vadd.f32 0.0, %v2690
  %2692 = vmatmul.f32.gmra.mxu0 %v2659
  %v2693 = vpop.f32.mrf.mxu0
  %v2694 = vadd.f32 0.0, %v2693
  %2695 = vmatmul.f32.gmra.mxu0 %v2662
  %v2696 = vpop.f32.mrf.mxu0
  %v2697 = vadd.f32 0.0, %v2696
  %2698 = vmatmul.f32.gmra.mxu0 %v2665
  %v2699 = vpop.f32.mrf.mxu0
  %v2700 = vadd.f32 0.0, %v2699
  %2701 = vdwg.mxu0
  %v2702 = vadd.f32 %v2515, %v2688
  %v2703 = vadd.f32 %v2518, %v2691
  %v2704 = vadd.f32 %v2521, %v2694
  %v2705 = vadd.f32 %v2524, %v2697
  %v2706 = vadd.f32 %v2527, %v2700
  %v2707 = vmul.f32 %v2099, %v717
  %v2708 = vmul.f32 %v2102, %v717
  %v2710 = vsel %vm345, %v2707, 0
  %v2713 = vsel %vm345, %v2708, 0
  %2715 = vmatpush.xpose.msra.mxu0 0.0
  %2716 = vmatpush.xpose.msra.mxu0 0.0
  %2717 = vmatpush.xpose.msra.mxu0 0.0
  %2718 = vmatpush.xpose.msra.mxu0 0.0
  %2719 = vmatpush.xpose.msra.mxu0 0.0
  %2720 = vmatpush.xpose.msra.mxu0 0.0
  %2721 = vmatpush.xpose.msra.mxu0 0.0
  %2722 = vmatpush.xpose.msra.mxu0 0.0
  %2723 = vmatpush.xpose.msra.mxu0 0.0
  %2724 = vmatpush.xpose.msra.mxu0 0.0
  %2725 = vmatpush.xpose.msra.mxu0 0.0
  %2726 = vmatpush.xpose.msra.mxu0 0.0
  %2727 = vmatpush.xpose.msra.mxu0 0.0
  %2728 = vmatpush.xpose.msra.mxu0 0.0
  %2729 = vmatpush.xpose.msra.mxu0 %v2184
  %2730 = vmatpush.xpose.msra.mxu0 %v2181
  %2731 = vmatmul.f32.gmra.mxu0 %v2710
  %v2732 = vpop.f32.mrf.mxu0
  %v2733 = vadd.f32 0.0, %v2732
  %2734 = vmatmul.f32.gmra.mxu0 %v2713
  %v2735 = vpop.f32.mrf.mxu0
  %v2736 = vadd.f32 0.0, %v2735
  %2737 = vdwg.mxu0
  %v2738 = vmul.f32 %v2733, 0.35355338
  %v2739 = vmul.f32 %v2736, 0.35355338
  %v2740 = vadd.f32 %v2738, %v2170
  %v2741 = vadd.f32 %v2739, %v2171
  %v2742 = vsel %vm1992, %v2740, -inf
  %2743 = vmax.xlane.f32.xlu0 %v2742
  %v2744 = vpop.xlane.xlu0 %2743
  %v2745 = vsel %vm2216, %v2741, -inf
  %2746 = vmax.xlane.f32.xlu0 %v2745
  %v2747 = vpop.xlane.xlu0 %2746
  %v2748 = vsub.f32 %v2740, %v2744
  %v2749 = vsub.f32 %v2741, %v2747
  %v2750 = vmul.f32 %v2748, 1.442695
  %v2751 = vpow.pop %v2750
  %v2752 = vmul.f32 %v2749, 1.442695
  %v2753 = vpow.pop %v2752
  %v2754 = vsel %vm1992, %v2751, 0.0
  %2755 = vadd.xlane.f32.xlu0 %v2754
  %v2756 = vpop.xlane.xlu0 %2755
  %v2757 = vsel %vm2216, %v2753, 0.0
  %2758 = vadd.xlane.f32.xlu0 %v2757
  %v2759 = vpop.xlane.xlu0 %2758
  %v2760 = vrcp.pop %v2756
  %v2761 = vrcp.pop %v2759
  %v2762 = vmul.f32 %v2751, %v2760
  %v2763 = vmul.f32 %v2753, %v2761
  %s2764 = scalar_lea.vmem %s37, 96
  %v2765 = vld [vmem:[%s2764] sm:$0xff]
  %v2766 = vld [vmem:[%s2764 + $0x8] sm:$0xff]
  %v2767 = vld [vmem:[%s2764 + $0x10] sm:$0xff]
  %v2768 = vld [vmem:[%s2764 + $0x18] sm:$0xff]
  %2769 = vmatpush.msra.mxu0 0.0
  %2770 = vmatpush.msra.mxu0 0.0
  %2771 = vmatpush.msra.mxu0 0.0
  %2772 = vmatpush.msra.mxu0 0.0
  %2773 = vmatpush.msra.mxu0 0.0
  %2774 = vmatpush.msra.mxu0 0.0
  %2775 = vmatpush.msra.mxu0 0.0
  %2776 = vmatpush.msra.mxu0 0.0
  %2777 = vmatpush.msra.mxu0 0.0
  %2778 = vmatpush.msra.mxu0 0.0
  %2779 = vmatpush.msra.mxu0 0.0
  %2780 = vmatpush.msra.mxu0 0.0
  %2781 = vmatpush.msra.mxu0 %v2768
  %2782 = vmatpush.msra.mxu0 %v2767
  %2783 = vmatpush.msra.mxu0 %v2766
  %2784 = vmatpush.msra.mxu0 %v2765
  %2785 = vmatmul.f32.gmra.mxu0 %v2241
  %v2786 = vpop.f32.mrf.mxu0
  %v2787 = vadd.f32 0.0, %v2786
  %2788 = vmatmul.f32.gmra.mxu0 %v2244
  %v2789 = vpop.f32.mrf.mxu0
  %v2790 = vadd.f32 0.0, %v2789
  %2791 = vdwg.mxu0
  %v2793 = vsel %vm1992, %v2762, 0
  %v2796 = vsel %vm1992, %v2763, 0
  %v2799 = vsel %vm1999, %v2790, 0
  %2801 = vmatpush.msra.mxu0 0.0
  %2802 = vmatpush.msra.mxu0 0.0
  %2803 = vmatpush.msra.mxu0 0.0
  %2804 = vmatpush.msra.mxu0 0.0
  %2805 = vmatpush.msra.mxu0 0.0
  %2806 = vmatpush.msra.mxu0 0.0
  %2807 = vmatpush.msra.mxu0 0.0
  %2808 = vmatpush.msra.mxu0 0.0
  %2809 = vmatpush.msra.mxu0 0.0
  %2810 = vmatpush.msra.mxu0 0.0
  %2811 = vmatpush.msra.mxu0 0.0
  %2812 = vmatpush.msra.mxu0 0.0
  %2813 = vmatpush.msra.mxu0 0.0
  %2814 = vmatpush.msra.mxu0 0.0
  %2815 = vmatpush.msra.mxu0 %v2799
  %2816 = vmatpush.msra.mxu0 %v2787
  %2817 = vmatmul.f32.gmra.mxu0 %v2793
  %v2818 = vpop.f32.mrf.mxu0
  %v2819 = vadd.f32 0.0, %v2818
  %2820 = vmatmul.f32.gmra.mxu0 %v2796
  %v2821 = vpop.f32.mrf.mxu0
  %v2822 = vadd.f32 0.0, %v2821
  %2823 = vdwg.mxu0
  %s2824 = scalar_lea.vmem %s33, 120
  %v2825 = vld [vmem:[%s2824] sm:$0xff]
  %v2826 = vld [vmem:[%s2824 + $0x8] sm:$0xff]
  %v2827 = vld [vmem:[%s2824 + $0x10] sm:$0xff]
  %v2828 = vld [vmem:[%s2824 + $0x18] sm:$0xff]
  %v2829 = vld [vmem:[%s2824 + $0x20] sm:$0xff]
  %v2831 = vsel %vm1992, %v2825, 0
  %v2834 = vsel %vm1992, %v2826, 0
  %v2837 = vsel %vm1992, %v2827, 0
  %v2840 = vsel %vm1992, %v2828, 0
  %v2843 = vsel %vm1992, %v2829, 0
  %v2846 = vsel %vm1999, %v2822, 0
  %2848 = vmatpush.msra.mxu0 0.0
  %2849 = vmatpush.msra.mxu0 0.0
  %2850 = vmatpush.msra.mxu0 0.0
  %2851 = vmatpush.msra.mxu0 0.0
  %2852 = vmatpush.msra.mxu0 0.0
  %2853 = vmatpush.msra.mxu0 0.0
  %2854 = vmatpush.msra.mxu0 0.0
  %2855 = vmatpush.msra.mxu0 0.0
  %2856 = vmatpush.msra.mxu0 0.0
  %2857 = vmatpush.msra.mxu0 0.0
  %2858 = vmatpush.msra.mxu0 0.0
  %2859 = vmatpush.msra.mxu0 0.0
  %2860 = vmatpush.msra.mxu0 0.0
  %2861 = vmatpush.msra.mxu0 0.0
  %2862 = vmatpush.msra.mxu0 %v2846
  %2863 = vmatpush.msra.mxu0 %v2819
  %2864 = vmatmul.f32.gmra.mxu0 %v2831
  %v2865 = vpop.f32.mrf.mxu0
  %v2866 = vadd.f32 0.0, %v2865
  %2867 = vmatmul.f32.gmra.mxu0 %v2834
  %v2868 = vpop.f32.mrf.mxu0
  %v2869 = vadd.f32 0.0, %v2868
  %2870 = vmatmul.f32.gmra.mxu0 %v2837
  %v2871 = vpop.f32.mrf.mxu0
  %v2872 = vadd.f32 0.0, %v2871
  %2873 = vmatmul.f32.gmra.mxu0 %v2840
  %v2874 = vpop.f32.mrf.mxu0
  %v2875 = vadd.f32 0.0, %v2874
  %2876 = vmatmul.f32.gmra.mxu0 %v2843
  %v2877 = vpop.f32.mrf.mxu0
  %v2878 = vadd.f32 0.0, %v2877
  %2879 = vdwg.mxu0
  %v2880 = vadd.f32 %v2702, %v2866
  %v2881 = vadd.f32 %v2703, %v2869
  %v2882 = vadd.f32 %v2704, %v2872
  %v2883 = vadd.f32 %v2705, %v2875
  %v2884 = vadd.f32 %v2706, %v2878
  %v2885 = vld [vmem:[%s35] sm:$0xff]
  %v2886 = vld [vmem:[%s35 + $0x8] sm:$0x3]
  %vm2887 = vcmask 326656
  %v2889 = vsel %vm2887, %v2885, 0
  %v2892 = vsel %vm2887, %v2886, 0
  %2894 = vmatpush.msra.mxu0 0.0
  %2895 = vmatpush.msra.mxu0 0.0
  %2896 = vmatpush.msra.mxu0 0.0
  %2897 = vmatpush.msra.mxu0 0.0
  %2898 = vmatpush.msra.mxu0 0.0
  %2899 = vmatpush.msra.mxu0 0.0
  %2900 = vmatpush.msra.mxu0 0.0
  %2901 = vmatpush.msra.mxu0 0.0
  %2902 = vmatpush.msra.mxu0 0.0
  %2903 = vmatpush.msra.mxu0 0.0
  %2904 = vmatpush.msra.mxu0 0.0
  %2905 = vmatpush.msra.mxu0 %v2884
  %2906 = vmatpush.msra.mxu0 %v2883
  %2907 = vmatpush.msra.mxu0 %v2882
  %2908 = vmatpush.msra.mxu0 %v2881
  %2909 = vmatpush.msra.mxu0 %v2880
  %2910 = vmatmul.f32.gmra.mxu0 %v2889
  %v2911 = vpop.f32.mrf.mxu0
  %v2912 = vadd.f32 0.0, %v2911
  %2913 = vmatmul.f32.gmra.mxu0 %v2892
  %v2914 = vpop.f32.mrf.mxu0
  %v2915 = vadd.f32 0.0, %v2914
  %2916 = vdwg.mxu0
  %v2917 = vld [vmem:[%s39] sm:$0xff]
  %s2918 = scalar_lea.vmem %s35, 16
  %v2919 = vld [vmem:[%s2918] sm:$0xff]
  %v2920 = vld [vmem:[%s2918 + $0x8] sm:$0x3]
  %v2922 = vsel %vm2887, %v2919, 0
  %v2925 = vsel %vm2887, %v2920, 0
  %2927 = vmatpush.msra.mxu0 0.0
  %2928 = vmatpush.msra.mxu0 0.0
  %2929 = vmatpush.msra.mxu0 0.0
  %2930 = vmatpush.msra.mxu0 0.0
  %2931 = vmatpush.msra.mxu0 0.0
  %2932 = vmatpush.msra.mxu0 0.0
  %2933 = vmatpush.msra.mxu0 0.0
  %2934 = vmatpush.msra.mxu0 0.0
  %2935 = vmatpush.msra.mxu0 0.0
  %2936 = vmatpush.msra.mxu0 0.0
  %2937 = vmatpush.msra.mxu0 0.0
  %2938 = vmatpush.msra.mxu0 %v2884
  %2939 = vmatpush.msra.mxu0 %v2883
  %2940 = vmatpush.msra.mxu0 %v2882
  %2941 = vmatpush.msra.mxu0 %v2881
  %2942 = vmatpush.msra.mxu0 %v2880
  %2943 = vmatmul.f32.gmra.mxu0 %v2922
  %v2944 = vpop.f32.mrf.mxu0
  %v2945 = vadd.f32 0.0, %v2944
  %2946 = vmatmul.f32.gmra.mxu0 %v2925
  %v2947 = vpop.f32.mrf.mxu0
  %v2948 = vadd.f32 0.0, %v2947
  %2949 = vdwg.mxu0
  %s2950 = scalar_lea.vmem %s39, 8
  %v2951 = vld [vmem:[%s2950] sm:$0xff]
  %v2953 = vsel %vm1461, %v2945, 0
  %v2956 = vsel %vm1461, %v2948, 0
  %2958 = vmatpush.msra.mxu0 0.0
  %2959 = vmatpush.msra.mxu0 0.0
  %2960 = vmatpush.msra.mxu0 0.0
  %2961 = vmatpush.msra.mxu0 0.0
  %2962 = vmatpush.msra.mxu0 0.0
  %2963 = vmatpush.msra.mxu0 0.0
  %2964 = vmatpush.msra.mxu0 0.0
  %2965 = vmatpush.msra.mxu0 0.0
  %2966 = vmatpush.msra.mxu0 0.0
  %2967 = vmatpush.msra.mxu0 0.0
  %2968 = vmatpush.msra.mxu0 0.0
  %2969 = vmatpush.msra.mxu0 0.0
  %2970 = vmatpush.msra.mxu0 0.0
  %2971 = vmatpush.msra.mxu0 0.0
  %2972 = vmatpush.msra.mxu0 0.0
  %2973 = vmatpush.msra.mxu0 %v2951
  %2974 = vmatmul.f32.gmra.mxu0 %v2953
  %v2975 = vpop.f32.mrf.mxu0
  %v2976 = vadd.f32 0.0, %v2975
  %2977 = vmatmul.f32.gmra.mxu0 %v2956
  %v2978 = vpop.f32.mrf.mxu0
  %v2979 = vadd.f32 0.0, %v2978
  %2980 = vdwg.mxu0
  %v2982 = vsel %vm1461, %v2912, 0
  %v2985 = vsel %vm1461, %v2915, 0
  %2987 = vmatpush.msra.mxu0 0.0
  %2988 = vmatpush.msra.mxu0 0.0
  %2989 = vmatpush.msra.mxu0 0.0
  %2990 = vmatpush.msra.mxu0 0.0
  %2991 = vmatpush.msra.mxu0 0.0
  %2992 = vmatpush.msra.mxu0 0.0
  %2993 = vmatpush.msra.mxu0 0.0
  %2994 = vmatpush.msra.mxu0 0.0
  %2995 = vmatpush.msra.mxu0 0.0
  %2996 = vmatpush.msra.mxu0 0.0
  %2997 = vmatpush.msra.mxu0 0.0
  %2998 = vmatpush.msra.mxu0 0.0
  %2999 = vmatpush.msra.mxu0 0.0
  %3000 = vmatpush.msra.mxu0 0.0
  %3001 = vmatpush.msra.mxu0 0.0
  %3002 = vmatpush.msra.mxu0 %v2917
  %3003 = vmatmul.f32.gmra.mxu0 %v2982
  %v3004 = vpop.f32.mrf.mxu0
  %v3005 = vadd.f32 %v2976, %v3004
  %3006 = vmatmul.f32.gmra.mxu0 %v2985
  %v3007 = vpop.f32.mrf.mxu0
  %v3008 = vadd.f32 %v2979, %v3007
  %3009 = vdwg.mxu0
  %s3010 = scalar_lea.vmem %s35, 32
  %v3011 = vld [vmem:[%s3010] sm:$0xff]
  %v3012 = vld [vmem:[%s3010 + $0x8] sm:$0x3]
  %v3014 = vsel %vm2887, %v3011, 0
  %v3017 = vsel %vm2887, %v3012, 0
  %3019 = vmatpush.msra.mxu0 0.0
  %3020 = vmatpush.msra.mxu0 0.0
  %3021 = vmatpush.msra.mxu0 0.0
  %3022 = vmatpush.msra.mxu0 0.0
  %3023 = vmatpush.msra.mxu0 0.0
  %3024 = vmatpush.msra.mxu0 0.0
  %3025 = vmatpush.msra.mxu0 0.0
  %3026 = vmatpush.msra.mxu0 0.0
  %3027 = vmatpush.msra.mxu0 0.0
  %3028 = vmatpush.msra.mxu0 0.0
  %3029 = vmatpush.msra.mxu0 0.0
  %3030 = vmatpush.msra.mxu0 %v2884
  %3031 = vmatpush.msra.mxu0 %v2883
  %3032 = vmatpush.msra.mxu0 %v2882
  %3033 = vmatpush.msra.mxu0 %v2881
  %3034 = vmatpush.msra.mxu0 %v2880
  %3035 = vmatmul.f32.gmra.mxu0 %v3014
  %v3036 = vpop.f32.mrf.mxu0
  %v3037 = vadd.f32 0.0, %v3036
  %3038 = vmatmul.f32.gmra.mxu0 %v3017
  %v3039 = vpop.f32.mrf.mxu0
  %v3040 = vadd.f32 0.0, %v3039
  %3041 = vdwg.mxu0
  %s3042 = scalar_lea.vmem %s39, 16
  %v3043 = vld [vmem:[%s3042] sm:$0xff]
  %v3045 = vsel %vm1461, %v3037, 0
  %v3048 = vsel %vm1461, %v3040, 0
  %3050 = vmatpush.msra.mxu0 0.0
  %3051 = vmatpush.msra.mxu0 0.0
  %3052 = vmatpush.msra.mxu0 0.0
  %3053 = vmatpush.msra.mxu0 0.0
  %3054 = vmatpush.msra.mxu0 0.0
  %3055 = vmatpush.msra.mxu0 0.0
  %3056 = vmatpush.msra.mxu0 0.0
  %3057 = vmatpush.msra.mxu0 0.0
  %3058 = vmatpush.msra.mxu0 0.0
  %3059 = vmatpush.msra.mxu0 0.0
  %3060 = vmatpush.msra.mxu0 0.0
  %3061 = vmatpush.msra.mxu0 0.0
  %3062 = vmatpush.msra.mxu0 0.0
  %3063 = vmatpush.msra.mxu0 0.0
  %3064 = vmatpush.msra.mxu0 0.0
  %3065 = vmatpush.msra.mxu0 %v3043
  %3066 = vmatmul.f32.gmra.mxu0 %v3045
  %v3067 = vpop.f32.mrf.mxu0
  %v3068 = vadd.f32 0.0, %v3067
  %3069 = vmatmul.f32.gmra.mxu0 %v3048
  %v3070 = vpop.f32.mrf.mxu0
  %v3071 = vadd.f32 0.0, %v3070
  %3072 = vdwg.mxu0
  %v3073 = vadd.f32 %v3005, %v3068
  %v3074 = vadd.f32 %v3008, %v3071
  %s3075 = scalar_lea.vmem %s35, 48
  %v3076 = vld [vmem:[%s3075] sm:$0xff]
  %v3077 = vld [vmem:[%s3075 + $0x8] sm:$0x3]
  %v3079 = vsel %vm2887, %v3076, 0
  %v3082 = vsel %vm2887, %v3077, 0
  %3084 = vmatpush.msra.mxu0 0.0
  %3085 = vmatpush.msra.mxu0 0.0
  %3086 = vmatpush.msra.mxu0 0.0
  %3087 = vmatpush.msra.mxu0 0.0
  %3088 = vmatpush.msra.mxu0 0.0
  %3089 = vmatpush.msra.mxu0 0.0
  %3090 = vmatpush.msra.mxu0 0.0
  %3091 = vmatpush.msra.mxu0 0.0
  %3092 = vmatpush.msra.mxu0 0.0
  %3093 = vmatpush.msra.mxu0 0.0
  %3094 = vmatpush.msra.mxu0 0.0
  %3095 = vmatpush.msra.mxu0 %v2884
  %3096 = vmatpush.msra.mxu0 %v2883
  %3097 = vmatpush.msra.mxu0 %v2882
  %3098 = vmatpush.msra.mxu0 %v2881
  %3099 = vmatpush.msra.mxu0 %v2880
  %3100 = vmatmul.f32.gmra.mxu0 %v3079
  %v3101 = vpop.f32.mrf.mxu0
  %v3102 = vadd.f32 0.0, %v3101
  %3103 = vmatmul.f32.gmra.mxu0 %v3082
  %v3104 = vpop.f32.mrf.mxu0
  %v3105 = vadd.f32 0.0, %v3104
  %3106 = vdwg.mxu0
  %s3107 = scalar_lea.vmem %s39, 24
  %v3108 = vld [vmem:[%s3107] sm:$0xff]
  %v3110 = vsel %vm1461, %v3102, 0
  %v3113 = vsel %vm1461, %v3105, 0
  %3115 = vmatpush.msra.mxu0 0.0
  %3116 = vmatpush.msra.mxu0 0.0
  %3117 = vmatpush.msra.mxu0 0.0
  %3118 = vmatpush.msra.mxu0 0.0
  %3119 = vmatpush.msra.mxu0 0.0
  %3120 = vmatpush.msra.mxu0 0.0
  %3121 = vmatpush.msra.mxu0 0.0
  %3122 = vmatpush.msra.mxu0 0.0
  %3123 = vmatpush.msra.mxu0 0.0
  %3124 = vmatpush.msra.mxu0 0.0
  %3125 = vmatpush.msra.mxu0 0.0
  %3126 = vmatpush.msra.mxu0 0.0
  %3127 = vmatpush.msra.mxu0 0.0
  %3128 = vmatpush.msra.mxu0 0.0
  %3129 = vmatpush.msra.mxu0 0.0
  %3130 = vmatpush.msra.mxu0 %v3108
  %3131 = vmatmul.f32.gmra.mxu0 %v3110
  %v3132 = vpop.f32.mrf.mxu0
  %v3133 = vadd.f32 0.0, %v3132
  %3134 = vmatmul.f32.gmra.mxu0 %v3113
  %v3135 = vpop.f32.mrf.mxu0
  %v3136 = vadd.f32 0.0, %v3135
  %3137 = vdwg.mxu0
  %v3138 = vadd.f32 %v3073, %v3133
  %v3139 = vadd.f32 %v3074, %v3136
  %s3140 = scalar_lea.vmem %s15, 26
  %v3141 = vld [vmem:[%s3140] sm:$0x1]
  %v3143 = vperm.slane %v3141, 0
  %v3145 = vadd.f32 %v3138, %v3143
  %v3146 = vadd.f32 %v3139, %v3143
  %v3147 = vadd.f32 %v2063, %v3145
  %v3148 = vadd.f32 %v2064, %v3146
  %s3149 = scalar_lea.vmem %s15, 33
  %v3150 = vld [vmem:[%s3149] sm:$0x1]
  %s3151 = scalar_lea.vmem %s15, 37
  %v3152 = vld [vmem:[%s3151] sm:$0x1]
  %v3153 = vsel %vm345, %v3147, 0.0
  %3154 = vadd.xlane.f32.xlu0 %v3153
  %v3155 = vpop.xlane.xlu0 %3154
  %vm3156 = vcmask 254976
  %v3157 = vsel %vm3156, %v3148, 0.0
  %3158 = vadd.xlane.f32.xlu0 %v3157
  %v3159 = vpop.xlane.xlu0 %3158
  %v3160 = vmul.f32 %v3155, %v859
  %v3161 = vmul.f32 %v3159, %v859
  %v3162 = vsub.f32 %v3147, %v3160
  %v3163 = vsub.f32 %v3148, %v3161
  %v3164 = vmul.f32 %v3162, %v3162
  %v3165 = vmul.f32 %v3163, %v3163
  %v3166 = vsel %vm345, %v3164, 0.0
  %3167 = vadd.xlane.f32.xlu0 %v3166
  %v3168 = vpop.xlane.xlu0 %3167
  %v3169 = vsel %vm3156, %v3165, 0.0
  %3170 = vadd.xlane.f32.xlu0 %v3169
  %v3171 = vpop.xlane.xlu0 %3170
  %v3172 = vmul.f32 %v3168, %v859
  %v3173 = vmul.f32 %v3171, %v859
  %v3174 = vadd.f32 %v3172, 1e-05
  %v3175 = vadd.f32 %v3173, 1e-05
  %v3176 = vrsqrt.pop %v3174
  %v3177 = vmul.f32 %v3176, %v3174
  %v3178 = vmul.f32 %v3177, %v3176
  %v3179 = vmul.f32 0.5, %v3178
  %v3180 = vsub.f32 1.5, %v3179
  %v3181 = vmul.f32 %v3176, %v3180
  %vm3182 = vweird.f32 %v3174
  %vm3183 = vweird.f32 %v3176
  %vm3184 = vmor %vm3182, %vm3183
  %v3185 = vsel %vm3184, %v3176, %v3181
  %v3186 = vrsqrt.pop %v3175
  %v3187 = vmul.f32 %v3186, %v3175
  %v3188 = vmul.f32 %v3187, %v3186
  %v3189 = vmul.f32 0.5, %v3188
  %v3190 = vsub.f32 1.5, %v3189
  %v3191 = vmul.f32 %v3186, %v3190
  %vm3192 = vweird.f32 %v3175
  %vm3193 = vweird.f32 %v3186
  %vm3194 = vmor %vm3192, %vm3193
  %v3195 = vsel %vm3194, %v3186, %v3191
  %v3196 = vmul.f32 %v3162, %v3185
  %v3197 = vmul.f32 %v3163, %v3195
  %v3199 = vperm.slane %v3150, 0
  %v3201 = vmul.f32 %v3196, %v3199
  %v3202 = vmul.f32 %v3197, %v3199
  %v3204 = vperm.slane %v3152, 0
  %v3206 = vadd.f32 %v3201, %v3204
  %v3207 = vadd.f32 %v3202, %v3204
  %s3208 = scalar_lea.vmem %s13, 576
  %v3209 = vld [vmem:[%s3208] sm:$0xff]
  %v3210 = vld [vmem:[%s3208 + $0x8] sm:$0xff]
  %v3211 = vld [vmem:[%s3208 + $0x10] sm:$0xff]
  %v3212 = vld [vmem:[%s3208 + $0x18] sm:$0xff]
  %s3213 = scalar_lea.vmem %s13, 608
  %v3214 = vld [vmem:[%s3213] sm:$0xff]
  %v3215 = vld [vmem:[%s3213 + $0x8] sm:$0xff]
  %v3216 = vld [vmem:[%s3213 + $0x10] sm:$0xff]
  %v3217 = vld [vmem:[%s3213 + $0x18] sm:$0xff]
  %s3218 = scalar_lea.vmem %s13, 640
  %v3219 = vld [vmem:[%s3218] sm:$0xff]
  %v3220 = vld [vmem:[%s3218 + $0x8] sm:$0xff]
  %v3221 = vld [vmem:[%s3218 + $0x10] sm:$0xff]
  %v3222 = vld [vmem:[%s3218 + $0x18] sm:$0xff]
  %s3223 = scalar_lea.vmem %s13, 672
  %v3224 = vld [vmem:[%s3223] sm:$0xff]
  %v3225 = vld [vmem:[%s3223 + $0x8] sm:$0xff]
  %v3226 = vld [vmem:[%s3223 + $0x10] sm:$0xff]
  %v3227 = vld [vmem:[%s3223 + $0x18] sm:$0xff]
  %s3228 = scalar_lea.vmem %s15, 27
  %v3229 = vld [vmem:[%s3228] sm:$0x1]
  %s3230 = scalar_lea.vmem %s15, 28
  %v3231 = vld [vmem:[%s3230] sm:$0x1]
  %s3232 = scalar_lea.vmem %s15, 29
  %v3233 = vld [vmem:[%s3232] sm:$0x1]
  %s3234 = scalar_lea.vmem %s15, 30
  %v3235 = vld [vmem:[%s3234] sm:$0x1]
  %v3236 = vld [vmem:[%s27] sm:$0xff]
  %v3237 = vld [vmem:[%s27 + $0x8] sm:$0x3]
  %v3239 = vperm.slane %v3229, 0
  %v3242 = vsel %vm345, %v3206, 0
  %v3245 = vsel %vm345, %v3207, 0
  %3247 = vmatpush.msra.mxu0 0.0
  %3248 = vmatpush.msra.mxu0 0.0
  %3249 = vmatpush.msra.mxu0 0.0
  %3250 = vmatpush.msra.mxu0 0.0
  %3251 = vmatpush.msra.mxu0 0.0
  %3252 = vmatpush.msra.mxu0 0.0
  %3253 = vmatpush.msra.mxu0 0.0
  %3254 = vmatpush.msra.mxu0 0.0
  %3255 = vmatpush.msra.mxu0 0.0
  %3256 = vmatpush.msra.mxu0 0.0
  %3257 = vmatpush.msra.mxu0 0.0
  %3258 = vmatpush.msra.mxu0 0.0
  %3259 = vmatpush.msra.mxu0 %v3212
  %3260 = vmatpush.msra.mxu0 %v3211
  %3261 = vmatpush.msra.mxu0 %v3210
  %3262 = vmatpush.msra.mxu0 %v3209
  %3263 = vmatmul.f32.gmra.mxu0 %v3242
  %v3264 = vpop.f32.mrf.mxu0
  %v3265 = vadd.f32 %v3239, %v3264
  %3266 = vmatmul.f32.gmra.mxu0 %v3245
  %v3267 = vpop.f32.mrf.mxu0
  %v3268 = vadd.f32 %v3239, %v3267
  %3269 = vdwg.mxu0
  %v3271 = vperm.slane %v3231, 0
  %v3274 = vsel %vm345, %v1886, 0
  %3276 = vmatpush.msra.mxu0 0.0
  %3277 = vmatpush.msra.mxu0 0.0
  %3278 = vmatpush.msra.mxu0 0.0
  %3279 = vmatpush.msra.mxu0 0.0
  %3280 = vmatpush.msra.mxu0 0.0
  %3281 = vmatpush.msra.mxu0 0.0
  %3282 = vmatpush.msra.mxu0 0.0
  %3283 = vmatpush.msra.mxu0 0.0
  %3284 = vmatpush.msra.mxu0 0.0
  %3285 = vmatpush.msra.mxu0 0.0
  %3286 = vmatpush.msra.mxu0 0.0
  %3287 = vmatpush.msra.mxu0 0.0
  %3288 = vmatpush.msra.mxu0 %v3217
  %3289 = vmatpush.msra.mxu0 %v3216
  %3290 = vmatpush.msra.mxu0 %v3215
  %3291 = vmatpush.msra.mxu0 %v3214
  %3292 = vmatmul.f32.gmra.mxu0 %v3274
  %v3293 = vpop.f32.mrf.mxu0
  %v3294 = vadd.f32 %v3271, %v3293
  %3295 = vdwg.mxu0
  %v3297 = vperm.slane %v3233, 0
  %3299 = vmatpush.msra.mxu0 0.0
  %3300 = vmatpush.msra.mxu0 0.0
  %3301 = vmatpush.msra.mxu0 0.0
  %3302 = vmatpush.msra.mxu0 0.0
  %3303 = vmatpush.msra.mxu0 0.0
  %3304 = vmatpush.msra.mxu0 0.0
  %3305 = vmatpush.msra.mxu0 0.0
  %3306 = vmatpush.msra.mxu0 0.0
  %3307 = vmatpush.msra.mxu0 0.0
  %3308 = vmatpush.msra.mxu0 0.0
  %3309 = vmatpush.msra.mxu0 0.0
  %3310 = vmatpush.msra.mxu0 0.0
  %3311 = vmatpush.msra.mxu0 %v3222
  %3312 = vmatpush.msra.mxu0 %v3221
  %3313 = vmatpush.msra.mxu0 %v3220
  %3314 = vmatpush.msra.mxu0 %v3219
  %3315 = vmatmul.f32.gmra.mxu0 %v3274
  %v3316 = vpop.f32.mrf.mxu0
  %v3317 = vadd.f32 %v3297, %v3316
  %3318 = vdwg.mxu0
  %v3319 = vmul.f32 %v3265, %v430
  %v3320 = vmul.f32 %v3268, %v430
  %v3322 = vsel %vm345, %v3319, 0
  %v3325 = vsel %vm345, %v3320, 0
  %v3328 = vsel %vm345, %v3294, 0
  %3330 = vmatpush.xpose.msra.mxu0 0.0
  %3331 = vmatpush.xpose.msra.mxu0 0.0
  %3332 = vmatpush.xpose.msra.mxu0 0.0
  %3333 = vmatpush.xpose.msra.mxu0 0.0
  %3334 = vmatpush.xpose.msra.mxu0 0.0
  %3335 = vmatpush.xpose.msra.mxu0 0.0
  %3336 = vmatpush.xpose.msra.mxu0 0.0
  %3337 = vmatpush.xpose.msra.mxu0 0.0
  %3338 = vmatpush.xpose.msra.mxu0 0.0
  %3339 = vmatpush.xpose.msra.mxu0 0.0
  %3340 = vmatpush.xpose.msra.mxu0 0.0
  %3341 = vmatpush.xpose.msra.mxu0 0.0
  %3342 = vmatpush.xpose.msra.mxu0 0.0
  %3343 = vmatpush.xpose.msra.mxu0 0.0
  %3344 = vmatpush.xpose.msra.mxu0 0.0
  %3345 = vmatpush.xpose.msra.mxu0 %v3328
  %3346 = vmatmul.f32.gmra.mxu0 %v3322
  %v3347 = vpop.f32.mrf.mxu0
  %v3348 = vadd.f32 0.0, %v3347
  %3349 = vmatmul.f32.gmra.mxu0 %v3325
  %v3350 = vpop.f32.mrf.mxu0
  %v3351 = vadd.f32 0.0, %v3350
  %3352 = vdwg.mxu0
  %v3353 = vmul.f32 %v3348, 0.35355338
  %v3354 = vmul.f32 %v3351, 0.35355338
  %v3355 = vadd.f32 %v3353, %v3236
  %v3356 = vadd.f32 %v3354, %v3237
  %v3357 = vsel %vm1461, %v3355, -inf
  %3358 = vmax.xlane.f32.xlu0 %v3357
  %v3359 = vpop.xlane.xlu0 %3358
  %vm3360 = vcmask 58368
  %v3361 = vsel %vm3360, %v3356, -inf
  %3362 = vmax.xlane.f32.xlu0 %v3361
  %v3363 = vpop.xlane.xlu0 %3362
  %v3364 = vsub.f32 %v3355, %v3359
  %v3365 = vsub.f32 %v3356, %v3363
  %v3366 = vmul.f32 %v3364, 1.442695
  %v3367 = vpow.pop %v3366
  %v3368 = vmul.f32 %v3365, 1.442695
  %v3369 = vpow.pop %v3368
  %v3370 = vsel %vm1461, %v3367, 0.0
  %3371 = vadd.xlane.f32.xlu0 %v3370
  %v3372 = vpop.xlane.xlu0 %3371
  %v3373 = vsel %vm3360, %v3369, 0.0
  %3374 = vadd.xlane.f32.xlu0 %v3373
  %v3375 = vpop.xlane.xlu0 %3374
  %v3376 = vrcp.pop %v3372
  %v3377 = vrcp.pop %v3375
  %v3378 = vmul.f32 %v3367, %v3376
  %v3379 = vmul.f32 %v3369, %v3377
  %v3380 = vmul.f32 %v3317, %v430
  %v3381 = vmul.f32 %v3265, %v500
  %v3382 = vmul.f32 %v3268, %v500
  %v3384 = vsel %vm345, %v3381, 0
  %v3387 = vsel %vm345, %v3382, 0
  %3389 = vmatpush.xpose.msra.mxu0 0.0
  %3390 = vmatpush.xpose.msra.mxu0 0.0
  %3391 = vmatpush.xpose.msra.mxu0 0.0
  %3392 = vmatpush.xpose.msra.mxu0 0.0
  %3393 = vmatpush.xpose.msra.mxu0 0.0
  %3394 = vmatpush.xpose.msra.mxu0 0.0
  %3395 = vmatpush.xpose.msra.mxu0 0.0
  %3396 = vmatpush.xpose.msra.mxu0 0.0
  %3397 = vmatpush.xpose.msra.mxu0 0.0
  %3398 = vmatpush.xpose.msra.mxu0 0.0
  %3399 = vmatpush.xpose.msra.mxu0 0.0
  %3400 = vmatpush.xpose.msra.mxu0 0.0
  %3401 = vmatpush.xpose.msra.mxu0 0.0
  %3402 = vmatpush.xpose.msra.mxu0 0.0
  %3403 = vmatpush.xpose.msra.mxu0 0.0
  %3404 = vmatpush.xpose.msra.mxu0 %v3328
  %3405 = vmatmul.f32.gmra.mxu0 %v3384
  %v3406 = vpop.f32.mrf.mxu0
  %v3407 = vadd.f32 0.0, %v3406
  %3408 = vmatmul.f32.gmra.mxu0 %v3387
  %v3409 = vpop.f32.mrf.mxu0
  %v3410 = vadd.f32 0.0, %v3409
  %3411 = vdwg.mxu0
  %v3412 = vmul.f32 %v3407, 0.35355338
  %v3413 = vmul.f32 %v3410, 0.35355338
  %v3414 = vadd.f32 %v3412, %v3236
  %v3415 = vadd.f32 %v3413, %v3237
  %v3416 = vsel %vm1461, %v3414, -inf
  %3417 = vmax.xlane.f32.xlu0 %v3416
  %v3418 = vpop.xlane.xlu0 %3417
  %v3419 = vsel %vm3360, %v3415, -inf
  %3420 = vmax.xlane.f32.xlu0 %v3419
  %v3421 = vpop.xlane.xlu0 %3420
  %v3422 = vsub.f32 %v3414, %v3418
  %v3423 = vsub.f32 %v3415, %v3421
  %v3424 = vmul.f32 %v3422, 1.442695
  %v3425 = vpow.pop %v3424
  %v3426 = vmul.f32 %v3423, 1.442695
  %v3427 = vpow.pop %v3426
  %v3428 = vsel %vm1461, %v3425, 0.0
  %3429 = vadd.xlane.f32.xlu0 %v3428
  %v3430 = vpop.xlane.xlu0 %3429
  %v3431 = vsel %vm3360, %v3427, 0.0
  %3432 = vadd.xlane.f32.xlu0 %v3431
  %v3433 = vpop.xlane.xlu0 %3432
  %v3434 = vrcp.pop %v3430
  %v3435 = vrcp.pop %v3433
  %v3436 = vmul.f32 %v3425, %v3434
  %v3437 = vmul.f32 %v3427, %v3435
  %v3438 = vmul.f32 %v3317, %v500
  %v3440 = vsel %vm1461, %v3436, 0
  %v3443 = vsel %vm1461, %v3437, 0
  %3445 = vmatpush.msra.mxu0 0.0
  %3446 = vmatpush.msra.mxu0 0.0
  %3447 = vmatpush.msra.mxu0 0.0
  %3448 = vmatpush.msra.mxu0 0.0
  %3449 = vmatpush.msra.mxu0 0.0
  %3450 = vmatpush.msra.mxu0 0.0
  %3451 = vmatpush.msra.mxu0 0.0
  %3452 = vmatpush.msra.mxu0 0.0
  %3453 = vmatpush.msra.mxu0 0.0
  %3454 = vmatpush.msra.mxu0 0.0
  %3455 = vmatpush.msra.mxu0 0.0
  %3456 = vmatpush.msra.mxu0 0.0
  %3457 = vmatpush.msra.mxu0 0.0
  %3458 = vmatpush.msra.mxu0 0.0
  %3459 = vmatpush.msra.mxu0 0.0
  %3460 = vmatpush.msra.mxu0 %v3438
  %3461 = vmatmul.f32.gmra.mxu0 %v3440
  %v3462 = vpop.f32.mrf.mxu0
  %v3463 = vadd.f32 0.0, %v3462
  %3464 = vmatmul.f32.gmra.mxu0 %v3443
  %v3465 = vpop.f32.mrf.mxu0
  %v3466 = vadd.f32 0.0, %v3465
  %3467 = vdwg.mxu0
  %v3469 = vsel %vm1461, %v3378, 0
  %v3472 = vsel %vm1461, %v3379, 0
  %3474 = vmatpush.msra.mxu0 0.0
  %3475 = vmatpush.msra.mxu0 0.0
  %3476 = vmatpush.msra.mxu0 0.0
  %3477 = vmatpush.msra.mxu0 0.0
  %3478 = vmatpush.msra.mxu0 0.0
  %3479 = vmatpush.msra.mxu0 0.0
  %3480 = vmatpush.msra.mxu0 0.0
  %3481 = vmatpush.msra.mxu0 0.0
  %3482 = vmatpush.msra.mxu0 0.0
  %3483 = vmatpush.msra.mxu0 0.0
  %3484 = vmatpush.msra.mxu0 0.0
  %3485 = vmatpush.msra.mxu0 0.0
  %3486 = vmatpush.msra.mxu0 0.0
  %3487 = vmatpush.msra.mxu0 0.0
  %3488 = vmatpush.msra.mxu0 0.0
  %3489 = vmatpush.msra.mxu0 %v3380
  %3490 = vmatmul.f32.gmra.mxu0 %v3469
  %v3491 = vpop.f32.mrf.mxu0
  %v3492 = vadd.f32 %v3463, %v3491
  %3493 = vmatmul.f32.gmra.mxu0 %v3472
  %v3494 = vpop.f32.mrf.mxu0
  %v3495 = vadd.f32 %v3466, %v3494
  %3496 = vdwg.mxu0
  %v3497 = vmul.f32 %v3265, %v622
  %v3498 = vmul.f32 %v3268, %v622
  %v3500 = vsel %vm345, %v3497, 0
  %v3503 = vsel %vm345, %v3498, 0
  %3505 = vmatpush.xpose.msra.mxu0 0.0
  %3506 = vmatpush.xpose.msra.mxu0 0.0
  %3507 = vmatpush.xpose.msra.mxu0 0.0
  %3508 = vmatpush.xpose.msra.mxu0 0.0
  %3509 = vmatpush.xpose.msra.mxu0 0.0
  %3510 = vmatpush.xpose.msra.mxu0 0.0
  %3511 = vmatpush.xpose.msra.mxu0 0.0
  %3512 = vmatpush.xpose.msra.mxu0 0.0
  %3513 = vmatpush.xpose.msra.mxu0 0.0
  %3514 = vmatpush.xpose.msra.mxu0 0.0
  %3515 = vmatpush.xpose.msra.mxu0 0.0
  %3516 = vmatpush.xpose.msra.mxu0 0.0
  %3517 = vmatpush.xpose.msra.mxu0 0.0
  %3518 = vmatpush.xpose.msra.mxu0 0.0
  %3519 = vmatpush.xpose.msra.mxu0 0.0
  %3520 = vmatpush.xpose.msra.mxu0 %v3328
  %3521 = vmatmul.f32.gmra.mxu0 %v3500
  %v3522 = vpop.f32.mrf.mxu0
  %v3523 = vadd.f32 0.0, %v3522
  %3524 = vmatmul.f32.gmra.mxu0 %v3503
  %v3525 = vpop.f32.mrf.mxu0
  %v3526 = vadd.f32 0.0, %v3525
  %3527 = vdwg.mxu0
  %v3528 = vmul.f32 %v3523, 0.35355338
  %v3529 = vmul.f32 %v3526, 0.35355338
  %v3530 = vadd.f32 %v3528, %v3236
  %v3531 = vadd.f32 %v3529, %v3237
  %v3532 = vsel %vm1461, %v3530, -inf
  %3533 = vmax.xlane.f32.xlu0 %v3532
  %v3534 = vpop.xlane.xlu0 %3533
  %v3535 = vsel %vm3360, %v3531, -inf
  %3536 = vmax.xlane.f32.xlu0 %v3535
  %v3537 = vpop.xlane.xlu0 %3536
  %v3538 = vsub.f32 %v3530, %v3534
  %v3539 = vsub.f32 %v3531, %v3537
  %v3540 = vmul.f32 %v3538, 1.442695
  %v3541 = vpow.pop %v3540
  %v3542 = vmul.f32 %v3539, 1.442695
  %v3543 = vpow.pop %v3542
  %v3544 = vsel %vm1461, %v3541, 0.0
  %3545 = vadd.xlane.f32.xlu0 %v3544
  %v3546 = vpop.xlane.xlu0 %3545
  %v3547 = vsel %vm3360, %v3543, 0.0
  %3548 = vadd.xlane.f32.xlu0 %v3547
  %v3549 = vpop.xlane.xlu0 %3548
  %v3550 = vrcp.pop %v3546
  %v3551 = vrcp.pop %v3549
  %v3552 = vmul.f32 %v3541, %v3550
  %v3553 = vmul.f32 %v3543, %v3551
  %v3554 = vmul.f32 %v3317, %v622
  %v3556 = vsel %vm1461, %v3552, 0
  %v3559 = vsel %vm1461, %v3553, 0
  %3561 = vmatpush.msra.mxu0 0.0
  %3562 = vmatpush.msra.mxu0 0.0
  %3563 = vmatpush.msra.mxu0 0.0
  %3564 = vmatpush.msra.mxu0 0.0
  %3565 = vmatpush.msra.mxu0 0.0
  %3566 = vmatpush.msra.mxu0 0.0
  %3567 = vmatpush.msra.mxu0 0.0
  %3568 = vmatpush.msra.mxu0 0.0
  %3569 = vmatpush.msra.mxu0 0.0
  %3570 = vmatpush.msra.mxu0 0.0
  %3571 = vmatpush.msra.mxu0 0.0
  %3572 = vmatpush.msra.mxu0 0.0
  %3573 = vmatpush.msra.mxu0 0.0
  %3574 = vmatpush.msra.mxu0 0.0
  %3575 = vmatpush.msra.mxu0 0.0
  %3576 = vmatpush.msra.mxu0 %v3554
  %3577 = vmatmul.f32.gmra.mxu0 %v3556
  %v3578 = vpop.f32.mrf.mxu0
  %v3579 = vadd.f32 0.0, %v3578
  %3580 = vmatmul.f32.gmra.mxu0 %v3559
  %v3581 = vpop.f32.mrf.mxu0
  %v3582 = vadd.f32 0.0, %v3581
  %3583 = vdwg.mxu0
  %v3584 = vadd.f32 %v3492, %v3579
  %v3585 = vadd.f32 %v3495, %v3582
  %v3586 = vmul.f32 %v3265, %v717
  %v3587 = vmul.f32 %v3268, %v717
  %v3589 = vsel %vm345, %v3586, 0
  %v3592 = vsel %vm345, %v3587, 0
  %3594 = vmatpush.xpose.msra.mxu0 0.0
  %3595 = vmatpush.xpose.msra.mxu0 0.0
  %3596 = vmatpush.xpose.msra.mxu0 0.0
  %3597 = vmatpush.xpose.msra.mxu0 0.0
  %3598 = vmatpush.xpose.msra.mxu0 0.0
  %3599 = vmatpush.xpose.msra.mxu0 0.0
  %3600 = vmatpush.xpose.msra.mxu0 0.0
  %3601 = vmatpush.xpose.msra.mxu0 0.0
  %3602 = vmatpush.xpose.msra.mxu0 0.0
  %3603 = vmatpush.xpose.msra.mxu0 0.0
  %3604 = vmatpush.xpose.msra.mxu0 0.0
  %3605 = vmatpush.xpose.msra.mxu0 0.0
  %3606 = vmatpush.xpose.msra.mxu0 0.0
  %3607 = vmatpush.xpose.msra.mxu0 0.0
  %3608 = vmatpush.xpose.msra.mxu0 0.0
  %3609 = vmatpush.xpose.msra.mxu0 %v3328
  %3610 = vmatmul.f32.gmra.mxu0 %v3589
  %v3611 = vpop.f32.mrf.mxu0
  %v3612 = vadd.f32 0.0, %v3611
  %3613 = vmatmul.f32.gmra.mxu0 %v3592
  %v3614 = vpop.f32.mrf.mxu0
  %v3615 = vadd.f32 0.0, %v3614
  %3616 = vdwg.mxu0
  %v3617 = vmul.f32 %v3612, 0.35355338
  %v3618 = vmul.f32 %v3615, 0.35355338
  %v3619 = vadd.f32 %v3617, %v3236
  %v3620 = vadd.f32 %v3618, %v3237
  %v3621 = vsel %vm1461, %v3619, -inf
  %3622 = vmax.xlane.f32.xlu0 %v3621
  %v3623 = vpop.xlane.xlu0 %3622
  %v3624 = vsel %vm3360, %v3620, -inf
  %3625 = vmax.xlane.f32.xlu0 %v3624
  %v3626 = vpop.xlane.xlu0 %3625
  %v3627 = vsub.f32 %v3619, %v3623
  %v3628 = vsub.f32 %v3620, %v3626
  %v3629 = vmul.f32 %v3627, 1.442695
  %v3630 = vpow.pop %v3629
  %v3631 = vmul.f32 %v3628, 1.442695
  %v3632 = vpow.pop %v3631
  %v3633 = vsel %vm1461, %v3630, 0.0
  %3634 = vadd.xlane.f32.xlu0 %v3633
  %v3635 = vpop.xlane.xlu0 %3634
  %v3636 = vsel %vm3360, %v3632, 0.0
  %3637 = vadd.xlane.f32.xlu0 %v3636
  %v3638 = vpop.xlane.xlu0 %3637
  %v3639 = vrcp.pop %v3635
  %v3640 = vrcp.pop %v3638
  %v3641 = vmul.f32 %v3630, %v3639
  %v3642 = vmul.f32 %v3632, %v3640
  %v3643 = vmul.f32 %v3317, %v717
  %v3645 = vsel %vm1461, %v3641, 0
  %v3648 = vsel %vm1461, %v3642, 0
  %3650 = vmatpush.msra.mxu0 0.0
  %3651 = vmatpush.msra.mxu0 0.0
  %3652 = vmatpush.msra.mxu0 0.0
  %3653 = vmatpush.msra.mxu0 0.0
  %3654 = vmatpush.msra.mxu0 0.0
  %3655 = vmatpush.msra.mxu0 0.0
  %3656 = vmatpush.msra.mxu0 0.0
  %3657 = vmatpush.msra.mxu0 0.0
  %3658 = vmatpush.msra.mxu0 0.0
  %3659 = vmatpush.msra.mxu0 0.0
  %3660 = vmatpush.msra.mxu0 0.0
  %3661 = vmatpush.msra.mxu0 0.0
  %3662 = vmatpush.msra.mxu0 0.0
  %3663 = vmatpush.msra.mxu0 0.0
  %3664 = vmatpush.msra.mxu0 0.0
  %3665 = vmatpush.msra.mxu0 %v3643
  %3666 = vmatmul.f32.gmra.mxu0 %v3645
  %v3667 = vpop.f32.mrf.mxu0
  %v3668 = vadd.f32 0.0, %v3667
  %3669 = vmatmul.f32.gmra.mxu0 %v3648
  %v3670 = vpop.f32.mrf.mxu0
  %v3671 = vadd.f32 0.0, %v3670
  %3672 = vdwg.mxu0
  %v3673 = vadd.f32 %v3584, %v3668
  %v3674 = vadd.f32 %v3585, %v3671
  %v3676 = vperm.slane %v3235, 0
  %v3679 = vsel %vm345, %v3673, 0
  %v3682 = vsel %vm345, %v3674, 0
  %3684 = vmatpush.msra.mxu0 0.0
  %3685 = vmatpush.msra.mxu0 0.0
  %3686 = vmatpush.msra.mxu0 0.0
  %3687 = vmatpush.msra.mxu0 0.0
  %3688 = vmatpush.msra.mxu0 0.0
  %3689 = vmatpush.msra.mxu0 0.0
  %3690 = vmatpush.msra.mxu0 0.0
  %3691 = vmatpush.msra.mxu0 0.0
  %3692 = vmatpush.msra.mxu0 0.0
  %3693 = vmatpush.msra.mxu0 0.0
  %3694 = vmatpush.msra.mxu0 0.0
  %3695 = vmatpush.msra.mxu0 0.0
  %3696 = vmatpush.msra.mxu0 %v3227
  %3697 = vmatpush.msra.mxu0 %v3226
  %3698 = vmatpush.msra.mxu0 %v3225
  %3699 = vmatpush.msra.mxu0 %v3224
  %3700 = vmatmul.f32.gmra.mxu0 %v3679
  %v3701 = vpop.f32.mrf.mxu0
  %v3702 = vadd.f32 %v3676, %v3701
  %3703 = vmatmul.f32.gmra.mxu0 %v3682
  %v3704 = vpop.f32.mrf.mxu0
  %v3705 = vadd.f32 %v3676, %v3704
  %3706 = vdwg.mxu0
  %v3707 = vadd.f32 %v3206, %v3702
  %v3708 = vadd.f32 %v3207, %v3705
  %s3709 = scalar_lea.vmem %s15, 34
  %v3710 = vld [vmem:[%s3709] sm:$0x1]
  %s3711 = scalar_lea.vmem %s15, 38
  %v3712 = vld [vmem:[%s3711] sm:$0x1]
  %v3713 = vsel %vm345, %v3707, 0.0
  %3714 = vadd.xlane.f32.xlu0 %v3713
  %v3715 = vpop.xlane.xlu0 %3714
  %v3716 = vsel %vm3156, %v3708, 0.0
  %3717 = vadd.xlane.f32.xlu0 %v3716
  %v3718 = vpop.xlane.xlu0 %3717
  %v3719 = vmul.f32 %v3715, %v859
  %v3720 = vmul.f32 %v3718, %v859
  %v3721 = vsub.f32 %v3707, %v3719
  %v3722 = vsub.f32 %v3708, %v3720
  %v3723 = vmul.f32 %v3721, %v3721
  %v3724 = vmul.f32 %v3722, %v3722
  %v3725 = vsel %vm345, %v3723, 0.0
  %3726 = vadd.xlane.f32.xlu0 %v3725
  %v3727 = vpop.xlane.xlu0 %3726
  %v3728 = vsel %vm3156, %v3724, 0.0
  %3729 = vadd.xlane.f32.xlu0 %v3728
  %v3730 = vpop.xlane.xlu0 %3729
  %v3731 = vmul.f32 %v3727, %v859
  %v3732 = vmul.f32 %v3730, %v859
  %v3733 = vadd.f32 %v3731, 1e-05
  %v3734 = vadd.f32 %v3732, 1e-05
  %v3735 = vrsqrt.pop %v3733
  %v3736 = vmul.f32 %v3735, %v3733
  %v3737 = vmul.f32 %v3736, %v3735
  %v3738 = vmul.f32 0.5, %v3737
  %v3739 = vsub.f32 1.5, %v3738
  %v3740 = vmul.f32 %v3735, %v3739
  %vm3741 = vweird.f32 %v3733
  %vm3742 = vweird.f32 %v3735
  %vm3743 = vmor %vm3741, %vm3742
  %v3744 = vsel %vm3743, %v3735, %v3740
  %v3745 = vrsqrt.pop %v3734
  %v3746 = vmul.f32 %v3745, %v3734
  %v3747 = vmul.f32 %v3746, %v3745
  %v3748 = vmul.f32 0.5, %v3747
  %v3749 = vsub.f32 1.5, %v3748
  %v3750 = vmul.f32 %v3745, %v3749
  %vm3751 = vweird.f32 %v3734
  %vm3752 = vweird.f32 %v3745
  %vm3753 = vmor %vm3751, %vm3752
  %v3754 = vsel %vm3753, %v3745, %v3750
  %v3755 = vmul.f32 %v3721, %v3744
  %v3756 = vmul.f32 %v3722, %v3754
  %v3758 = vperm.slane %v3710, 0
  %v3760 = vmul.f32 %v3755, %v3758
  %v3761 = vmul.f32 %v3756, %v3758
  %v3763 = vperm.slane %v3712, 0
  %v3765 = vadd.f32 %v3760, %v3763
  %v3766 = vadd.f32 %v3761, %v3763
  %s3767 = scalar_lea.vmem %s13, 704
  %v3768 = vld [vmem:[%s3767] sm:$0xff]
  %v3769 = vld [vmem:[%s3767 + $0x8] sm:$0xff]
  %v3770 = vld [vmem:[%s3767 + $0x10] sm:$0xff]
  %v3771 = vld [vmem:[%s3767 + $0x18] sm:$0xff]
  %s3772 = scalar_lea.vmem %s15, 31
  %v3773 = vld [vmem:[%s3772] sm:$0x1]
  %v3775 = vperm.slane %v3773, 0
  %v3778 = vsel %vm345, %v3765, 0
  %v3781 = vsel %vm345, %v3766, 0
  %3783 = vmatpush.msra.mxu0 0.0
  %3784 = vmatpush.msra.mxu0 0.0
  %3785 = vmatpush.msra.mxu0 0.0
  %3786 = vmatpush.msra.mxu0 0.0
  %3787 = vmatpush.msra.mxu0 0.0
  %3788 = vmatpush.msra.mxu0 0.0
  %3789 = vmatpush.msra.mxu0 0.0
  %3790 = vmatpush.msra.mxu0 0.0
  %3791 = vmatpush.msra.mxu0 0.0
  %3792 = vmatpush.msra.mxu0 0.0
  %3793 = vmatpush.msra.mxu0 0.0
  %3794 = vmatpush.msra.mxu0 0.0
  %3795 = vmatpush.msra.mxu0 %v3771
  %3796 = vmatpush.msra.mxu0 %v3770
  %3797 = vmatpush.msra.mxu0 %v3769
  %3798 = vmatpush.msra.mxu0 %v3768
  %3799 = vmatmul.f32.gmra.mxu0 %v3778
  %v3800 = vpop.f32.mrf.mxu0
  %v3801 = vadd.f32 %v3775, %v3800
  %3802 = vmatmul.f32.gmra.mxu0 %v3781
  %v3803 = vpop.f32.mrf.mxu0
  %v3804 = vadd.f32 %v3775, %v3803
  %3805 = vdwg.mxu0
  %v3806 = vmul.f32 %v3801, 0.5
  %v3807 = vmul.f32 %v3804, 0.5
  %v3808 = vmul.f32 %v3801, 0.044715
  %v3809 = vmul.f32 %v3804, 0.044715
  %v3810 = vmul.f32 %v3808, %v3801
  %v3811 = vmul.f32 %v3809, %v3804
  %v3812 = vmul.f32 %v3810, %v3801
  %v3813 = vmul.f32 %v3811, %v3804
  %v3814 = vadd.f32 %v3801, %v3812
  %v3815 = vadd.f32 %v3804, %v3813
  %v3816 = vmul.f32 %v3814, 0.7978846
  %v3817 = vmul.f32 %v3815, 0.7978846
  %v3818 = vtanh.pop %v3816
  %v3819 = vtanh.pop %v3817
  %v3820 = vadd.f32 %v3818, 1.0
  %v3821 = vadd.f32 %v3819, 1.0
  %v3822 = vmul.f32 %v3806, %v3820
  %v3823 = vmul.f32 %v3807, %v3821
  %s3824 = scalar_lea.vmem %s13, 736
  %v3825 = vld [vmem:[%s3824] sm:$0xff]
  %v3826 = vld [vmem:[%s3824 + $0x8] sm:$0xff]
  %v3827 = vld [vmem:[%s3824 + $0x10] sm:$0xff]
  %v3828 = vld [vmem:[%s3824 + $0x18] sm:$0xff]
  %s3829 = scalar_lea.vmem %s15, 32
  %v3830 = vld [vmem:[%s3829] sm:$0x1]
  %v3832 = vperm.slane %v3830, 0
  %v3835 = vsel %vm345, %v3822, 0
  %v3838 = vsel %vm345, %v3823, 0
  %3840 = vmatpush.msra.mxu0 0.0
  %3841 = vmatpush.msra.mxu0 0.0
  %3842 = vmatpush.msra.mxu0 0.0
  %3843 = vmatpush.msra.mxu0 0.0
  %3844 = vmatpush.msra.mxu0 0.0
  %3845 = vmatpush.msra.mxu0 0.0
  %3846 = vmatpush.msra.mxu0 0.0
  %3847 = vmatpush.msra.mxu0 0.0
  %3848 = vmatpush.msra.mxu0 0.0
  %3849 = vmatpush.msra.mxu0 0.0
  %3850 = vmatpush.msra.mxu0 0.0
  %3851 = vmatpush.msra.mxu0 0.0
  %3852 = vmatpush.msra.mxu0 %v3828
  %3853 = vmatpush.msra.mxu0 %v3827
  %3854 = vmatpush.msra.mxu0 %v3826
  %3855 = vmatpush.msra.mxu0 %v3825
  %3856 = vmatmul.f32.gmra.mxu0 %v3835
  %v3857 = vpop.f32.mrf.mxu0
  %v3858 = vadd.f32 %v3832, %v3857
  %3859 = vmatmul.f32.gmra.mxu0 %v3838
  %v3860 = vpop.f32.mrf.mxu0
  %v3861 = vadd.f32 %v3832, %v3860
  %3862 = vdwg.mxu0
  %v3863 = vadd.f32 %v3765, %v3858
  %v3864 = vadd.f32 %v3766, %v3861
  %s3865 = scalar_lea.vmem %s15, 35
  %v3866 = vld [vmem:[%s3865] sm:$0x1]
  %s3867 = scalar_lea.vmem %s15, 39
  %v3868 = vld [vmem:[%s3867] sm:$0x1]
  %v3869 = vsel %vm345, %v3863, 0.0
  %3870 = vadd.xlane.f32.xlu0 %v3869
  %v3871 = vpop.xlane.xlu0 %3870
  %v3872 = vsel %vm3156, %v3864, 0.0
  %3873 = vadd.xlane.f32.xlu0 %v3872
  %v3874 = vpop.xlane.xlu0 %3873
  %v3875 = vmul.f32 %v3871, %v859
  %v3876 = vmul.f32 %v3874, %v859
  %v3877 = vsub.f32 %v3863, %v3875
  %v3878 = vsub.f32 %v3864, %v3876
  %v3879 = vmul.f32 %v3877, %v3877
  %v3880 = vmul.f32 %v3878, %v3878
  %v3881 = vsel %vm345, %v3879, 0.0
  %3882 = vadd.xlane.f32.xlu0 %v3881
  %v3883 = vpop.xlane.xlu0 %3882
  %v3884 = vsel %vm3156, %v3880, 0.0
  %3885 = vadd.xlane.f32.xlu0 %v3884
  %v3886 = vpop.xlane.xlu0 %3885
  %v3887 = vmul.f32 %v3883, %v859
  %v3888 = vmul.f32 %v3886, %v859
  %v3889 = vadd.f32 %v3887, 1e-05
  %v3890 = vadd.f32 %v3888, 1e-05
  %v3891 = vrsqrt.pop %v3889
  %v3892 = vmul.f32 %v3891, %v3889
  %v3893 = vmul.f32 %v3892, %v3891
  %v3894 = vmul.f32 0.5, %v3893
  %v3895 = vsub.f32 1.5, %v3894
  %v3896 = vmul.f32 %v3891, %v3895
  %vm3897 = vweird.f32 %v3889
  %vm3898 = vweird.f32 %v3891
  %vm3899 = vmor %vm3897, %vm3898
  %v3900 = vsel %vm3899, %v3891, %v3896
  %v3901 = vrsqrt.pop %v3890
  %v3902 = vmul.f32 %v3901, %v3890
  %v3903 = vmul.f32 %v3902, %v3901
  %v3904 = vmul.f32 0.5, %v3903
  %v3905 = vsub.f32 1.5, %v3904
  %v3906 = vmul.f32 %v3901, %v3905
  %vm3907 = vweird.f32 %v3890
  %vm3908 = vweird.f32 %v3901
  %vm3909 = vmor %vm3907, %vm3908
  %v3910 = vsel %vm3909, %v3901, %v3906
  %v3911 = vmul.f32 %v3877, %v3900
  %v3912 = vmul.f32 %v3878, %v3910
  %v3914 = vperm.slane %v3866, 0
  %v3916 = vmul.f32 %v3911, %v3914
  %v3917 = vmul.f32 %v3912, %v3914
  %v3919 = vperm.slane %v3868, 0
  %v3921 = vadd.f32 %v3916, %v3919
  %v3922 = vadd.f32 %v3917, %v3919
  %s3923 = scalar_lea.vmem %s15, 36
  %v3924 = vld [vmem:[%s3923] sm:$0x1]
  %s3925 = scalar_lea.vmem %s15, 40
  %v3926 = vld [vmem:[%s3925] sm:$0x1]
  %v3927 = vsel %vm345, %v3921, 0.0
  %3928 = vadd.xlane.f32.xlu0 %v3927
  %v3929 = vpop.xlane.xlu0 %3928
  %v3930 = vsel %vm3156, %v3922, 0.0
  %3931 = vadd.xlane.f32.xlu0 %v3930
  %v3932 = vpop.xlane.xlu0 %3931
  %v3933 = vmul.f32 %v3929, %v859
  %v3934 = vmul.f32 %v3932, %v859
  %v3935 = vsub.f32 %v3921, %v3933
  %v3936 = vsub.f32 %v3922, %v3934
  %v3937 = vmul.f32 %v3935, %v3935
  %v3938 = vmul.f32 %v3936, %v3936
  %v3939 = vsel %vm345, %v3937, 0.0
  %3940 = vadd.xlane.f32.xlu0 %v3939
  %v3941 = vpop.xlane.xlu0 %3940
  %v3942 = vsel %vm3156, %v3938, 0.0
  %3943 = vadd.xlane.f32.xlu0 %v3942
  %v3944 = vpop.xlane.xlu0 %3943
  %v3945 = vmul.f32 %v3941, %v859
  %v3946 = vmul.f32 %v3944, %v859
  %v3947 = vadd.f32 %v3945, 1e-05
  %v3948 = vadd.f32 %v3946, 1e-05
  %v3949 = vrsqrt.pop %v3947
  %v3950 = vmul.f32 %v3949, %v3947
  %v3951 = vmul.f32 %v3950, %v3949
  %v3952 = vmul.f32 0.5, %v3951
  %v3953 = vsub.f32 1.5, %v3952
  %v3954 = vmul.f32 %v3949, %v3953
  %vm3955 = vweird.f32 %v3947
  %vm3956 = vweird.f32 %v3949
  %vm3957 = vmor %vm3955, %vm3956
  %v3958 = vsel %vm3957, %v3949, %v3954
  %v3959 = vrsqrt.pop %v3948
  %v3960 = vmul.f32 %v3959, %v3948
  %v3961 = vmul.f32 %v3960, %v3959
  %v3962 = vmul.f32 0.5, %v3961
  %v3963 = vsub.f32 1.5, %v3962
  %v3964 = vmul.f32 %v3959, %v3963
  %vm3965 = vweird.f32 %v3948
  %vm3966 = vweird.f32 %v3959
  %vm3967 = vmor %vm3965, %vm3966
  %v3968 = vsel %vm3967, %v3959, %v3964
  %v3969 = vmul.f32 %v3935, %v3958
  %v3970 = vmul.f32 %v3936, %v3968
  %v3972 = vperm.slane %v3924, 0
  %v3974 = vmul.f32 %v3969, %v3972
  %v3975 = vmul.f32 %v3970, %v3972
  %v3977 = vperm.slane %v3926, 0
  %v3979 = vadd.f32 %v3974, %v3977
  %v3980 = vadd.f32 %v3975, %v3977
  %v3981 = vld [vmem:[%s43] sm:$0x3]
  %v3983 = vsel %vm1992, %v3981, 0
  %v3986 = vsel %vm1999, %v3980, 0
  %3988 = vmatpush.msra.mxu0 0.0
  %3989 = vmatpush.msra.mxu0 0.0
  %3990 = vmatpush.msra.mxu0 0.0
  %3991 = vmatpush.msra.mxu0 0.0
  %3992 = vmatpush.msra.mxu0 0.0
  %3993 = vmatpush.msra.mxu0 0.0
  %3994 = vmatpush.msra.mxu0 0.0
  %3995 = vmatpush.msra.mxu0 0.0
  %3996 = vmatpush.msra.mxu0 0.0
  %3997 = vmatpush.msra.mxu0 0.0
  %3998 = vmatpush.msra.mxu0 0.0
  %3999 = vmatpush.msra.mxu0 0.0
  %4000 = vmatpush.msra.mxu0 0.0
  %4001 = vmatpush.msra.mxu0 0.0
  %4002 = vmatpush.msra.mxu0 %v3986
  %4003 = vmatpush.msra.mxu0 %v3979
  %4004 = vmatmul.f32.gmra.mxu0 %v3983
  %v4005 = vpop.f32.mrf.mxu0
  %v4006 = vadd.f32 0.0, %v4005
  %4007 = vdwg.mxu0
  %s4008 = scalar_lea.vmem %s15, 41
  %v4009 = vld [vmem:[%s4008] sm:$0x1]
  %v4011 = vperm.slane %v4009, 0
  %v4013 = vmul.f32 %v4006, %v4011
  %v4014 = vsel %vm3156, %v4013, 0.0
  %4015 = vadd.xlane.f32.xlu0 %v4014
  %v4016 = vpop.xlane.xlu0 %4015
  %v4017 = vld [vmem:[#allocation5] sm:$0x1]
  %v4019 = vperm.slane %v4017, 0
  %v4021 = vadd.f32 %v4016, %v4019
  %s4022 = smul.u32 8, 3
  %s4023 = smul.u32 %s4022, 2
  %s4024 = smul.u32 %s4023, 8
  %s4025 = sshll.u32 %s4024, 4
  %4026 = dma.done [#allocation3], %s4025
  %v4027 = vld [vmem:[%s41] sm:$0x3]
  %v4029 = vsel %vm247, %v4027, 0
  %4031 = vmatpush.msra.mxu0 0.0
  %4032 = vmatpush.msra.mxu0 0.0
  %4033 = vmatpush.msra.mxu0 0.0
  %4034 = vmatpush.msra.mxu0 0.0
  %4035 = vmatpush.msra.mxu0 0.0
  %4036 = vmatpush.msra.mxu0 0.0
  %4037 = vmatpush.msra.mxu0 0.0
  %4038 = vmatpush.msra.mxu0 0.0
  %4039 = vmatpush.msra.mxu0 0.0
  %4040 = vmatpush.msra.mxu0 0.0
  %4041 = vmatpush.msra.mxu0 0.0
  %4042 = vmatpush.msra.mxu0 0.0
  %4043 = vmatpush.msra.mxu0 0.0
  %4044 = vmatpush.msra.mxu0 0.0
  %4045 = vmatpush.msra.mxu0 %v142
  %4046 = vmatpush.msra.mxu0 %v141
  %4047 = vmatmul.f32.gmra.mxu0 %v4029
  %v4048 = vpop.f32.mrf.mxu0
  %v4049 = vadd.f32 0.0, %v4048
  %4050 = vdwg.mxu0
  %v4051 = vld [vmem:[%s45] sm:$0xff]
  %v4052 = vld [vmem:[%s45 + $0x8] sm:$0xff]
  %v4053 = vld [vmem:[%s45 + $0x10] sm:$0xff]
  %v4054 = vld [vmem:[%s45 + $0x18] sm:$0x1]
  %v4056 = vsel %vm149, %v4049, 0
  %v4059 = vsel %vm156, %v4054, 0
  %4061 = vmatpush.msra.mxu0 0.0
  %4062 = vmatpush.msra.mxu0 0.0
  %4063 = vmatpush.msra.mxu0 0.0
  %4064 = vmatpush.msra.mxu0 0.0
  %4065 = vmatpush.msra.mxu0 0.0
  %4066 = vmatpush.msra.mxu0 0.0
  %4067 = vmatpush.msra.mxu0 0.0
  %4068 = vmatpush.msra.mxu0 0.0
  %4069 = vmatpush.msra.mxu0 0.0
  %4070 = vmatpush.msra.mxu0 0.0
  %4071 = vmatpush.msra.mxu0 0.0
  %4072 = vmatpush.msra.mxu0 0.0
  %4073 = vmatpush.msra.mxu0 %v4059
  %4074 = vmatpush.msra.mxu0 %v4053
  %4075 = vmatpush.msra.mxu0 %v4052
  %4076 = vmatpush.msra.mxu0 %v4051
  %4077 = vmatmul.f32.gmra.mxu0 %v4056
  %v4078 = vpop.f32.mrf.mxu0
  %v4079 = vadd.f32 0.0, %v4078
  %4080 = vdwg.mxu0
  %v4081 = vld [vmem:[#allocation2] sm:$0xff]
  %v4082 = vld [vmem:[#allocation2 + $0x8] sm:$0xff]
  %v4083 = vld [vmem:[#allocation2 + $0x10] sm:$0xff]
  %v4084 = vld [vmem:[#allocation2 + $0x18] sm:$0xff]
  %v4085 = vld [vmem:[#allocation2 + $0x20] sm:$0xff]
  %v4086 = vld [vmem:[#allocation2 + $0x28] sm:$0xff]
  %v4087 = vld [vmem:[#allocation2 + $0x30] sm:$0xff]
  %v4088 = vld [vmem:[#allocation2 + $0x38] sm:$0xff]
  %v4089 = vld [vmem:[#allocation2 + $0x40] sm:$0xff]
  %v4090 = vld [vmem:[#allocation2 + $0x48] sm:$0xff]
  %v4091 = vld [vmem:[#allocation2 + $0x50] sm:$0xff]
  %v4092 = vld [vmem:[#allocation2 + $0x58] sm:$0xff]
  %v4093 = vld [vmem:[#allocation2 + $0x60] sm:$0xff]
  %v4094 = vld [vmem:[#allocation2 + $0x68] sm:$0xff]
  %v4095 = vld [vmem:[#allocation2 + $0x70] sm:$0xff]
  %v4096 = vld [vmem:[#allocation2 + $0x78] sm:$0xff]
  %v4097 = vld [vmem:[%s47] sm:$0xff]
  %v4099 = vperm.slane %v4097, 0
  %v4100 = vperm.slane %v4097, 1
  %v4101 = vperm.slane %v4097, 2
  %v4102 = vperm.slane %v4097, 3
  %v4103 = vperm.slane %v4097, 4
  %v4104 = vperm.slane %v4097, 5
  %v4105 = vperm.slane %v4097, 6
  %v4106 = vperm.slane %v4097, 7
  %v4116 = vsel %vm247, %v4079, 0
  %4118 = vmatpush.msra.mxu0 0.0
  %4119 = vmatpush.msra.mxu0 0.0
  %4120 = vmatpush.msra.mxu0 0.0
  %4121 = vmatpush.msra.mxu0 0.0
  %4122 = vmatpush.msra.mxu0 0.0
  %4123 = vmatpush.msra.mxu0 0.0
  %4124 = vmatpush.msra.mxu0 0.0
  %4125 = vmatpush.msra.mxu0 0.0
  %4126 = vmatpush.msra.mxu0 0.0
  %4127 = vmatpush.msra.mxu0 0.0
  %4128 = vmatpush.msra.mxu0 0.0
  %4129 = vmatpush.msra.mxu0 0.0
  %4130 = vmatpush.msra.mxu0 0.0
  %4131 = vmatpush.msra.mxu0 0.0
  %4132 = vmatpush.msra.mxu0 %v4089
  %4133 = vmatpush.msra.mxu0 %v4081
  %4134 = vmatmul.f32.gmra.mxu0 %v4116
  %v4135 = vpop.f32.mrf.mxu0
  %v4136 = vadd.f32 %v4099, %v4135
  %4137 = vdwg.mxu0
  %4138 = vmatpush.msra.mxu0 0.0
  %4139 = vmatpush.msra.mxu0 0.0
  %4140 = vmatpush.msra.mxu0 0.0
  %4141 = vmatpush.msra.mxu0 0.0
  %4142 = vmatpush.msra.mxu0 0.0
  %4143 = vmatpush.msra.mxu0 0.0
  %4144 = vmatpush.msra.mxu0 0.0
  %4145 = vmatpush.msra.mxu0 0.0
  %4146 = vmatpush.msra.mxu0 0.0
  %4147 = vmatpush.msra.mxu0 0.0
  %4148 = vmatpush.msra.mxu0 0.0
  %4149 = vmatpush.msra.mxu0 0.0
  %4150 = vmatpush.msra.mxu0 0.0
  %4151 = vmatpush.msra.mxu0 0.0
  %4152 = vmatpush.msra.mxu0 %v4090
  %4153 = vmatpush.msra.mxu0 %v4082
  %4154 = vmatmul.f32.gmra.mxu0 %v4116
  %v4155 = vpop.f32.mrf.mxu0
  %v4156 = vadd.f32 %v4100, %v4155
  %4157 = vdwg.mxu0
  %4158 = vmatpush.msra.mxu0 0.0
  %4159 = vmatpush.msra.mxu0 0.0
  %4160 = vmatpush.msra.mxu0 0.0
  %4161 = vmatpush.msra.mxu0 0.0
  %4162 = vmatpush.msra.mxu0 0.0
  %4163 = vmatpush.msra.mxu0 0.0
  %4164 = vmatpush.msra.mxu0 0.0
  %4165 = vmatpush.msra.mxu0 0.0
  %4166 = vmatpush.msra.mxu0 0.0
  %4167 = vmatpush.msra.mxu0 0.0
  %4168 = vmatpush.msra.mxu0 0.0
  %4169 = vmatpush.msra.mxu0 0.0
  %4170 = vmatpush.msra.mxu0 0.0
  %4171 = vmatpush.msra.mxu0 0.0
  %4172 = vmatpush.msra.mxu0 %v4091
  %4173 = vmatpush.msra.mxu0 %v4083
  %4174 = vmatmul.f32.gmra.mxu0 %v4116
  %v4175 = vpop.f32.mrf.mxu0
  %v4176 = vadd.f32 %v4101, %v4175
  %4177 = vdwg.mxu0
  %4178 = vmatpush.msra.mxu0 0.0
  %4179 = vmatpush.msra.mxu0 0.0
  %4180 = vmatpush.msra.mxu0 0.0
  %4181 = vmatpush.msra.mxu0 0.0
  %4182 = vmatpush.msra.mxu0 0.0
  %4183 = vmatpush.msra.mxu0 0.0
  %4184 = vmatpush.msra.mxu0 0.0
  %4185 = vmatpush.msra.mxu0 0.0
  %4186 = vmatpush.msra.mxu0 0.0
  %4187 = vmatpush.msra.mxu0 0.0
  %4188 = vmatpush.msra.mxu0 0.0
  %4189 = vmatpush.msra.mxu0 0.0
  %4190 = vmatpush.msra.mxu0 0.0
  %4191 = vmatpush.msra.mxu0 0.0
  %4192 = vmatpush.msra.mxu0 %v4092
  %4193 = vmatpush.msra.mxu0 %v4084
  %4194 = vmatmul.f32.gmra.mxu0 %v4116
  %v4195 = vpop.f32.mrf.mxu0
  %v4196 = vadd.f32 %v4102, %v4195
  %4197 = vdwg.mxu0
  %4198 = vmatpush.msra.mxu0 0.0
  %4199 = vmatpush.msra.mxu0 0.0
  %4200 = vmatpush.msra.mxu0 0.0
  %4201 = vmatpush.msra.mxu0 0.0
  %4202 = vmatpush.msra.mxu0 0.0
  %4203 = vmatpush.msra.mxu0 0.0
  %4204 = vmatpush.msra.mxu0 0.0
  %4205 = vmatpush.msra.mxu0 0.0
  %4206 = vmatpush.msra.mxu0 0.0
  %4207 = vmatpush.msra.mxu0 0.0
  %4208 = vmatpush.msra.mxu0 0.0
  %4209 = vmatpush.msra.mxu0 0.0
  %4210 = vmatpush.msra.mxu0 0.0
  %4211 = vmatpush.msra.mxu0 0.0
  %4212 = vmatpush.msra.mxu0 %v4093
  %4213 = vmatpush.msra.mxu0 %v4085
  %4214 = vmatmul.f32.gmra.mxu0 %v4116
  %v4215 = vpop.f32.mrf.mxu0
  %v4216 = vadd.f32 %v4103, %v4215
  %4217 = vdwg.mxu0
  %4218 = vmatpush.msra.mxu0 0.0
  %4219 = vmatpush.msra.mxu0 0.0
  %4220 = vmatpush.msra.mxu0 0.0
  %4221 = vmatpush.msra.mxu0 0.0
  %4222 = vmatpush.msra.mxu0 0.0
  %4223 = vmatpush.msra.mxu0 0.0
  %4224 = vmatpush.msra.mxu0 0.0
  %4225 = vmatpush.msra.mxu0 0.0
  %4226 = vmatpush.msra.mxu0 0.0
  %4227 = vmatpush.msra.mxu0 0.0
  %4228 = vmatpush.msra.mxu0 0.0
  %4229 = vmatpush.msra.mxu0 0.0
  %4230 = vmatpush.msra.mxu0 0.0
  %4231 = vmatpush.msra.mxu0 0.0
  %4232 = vmatpush.msra.mxu0 %v4094
  %4233 = vmatpush.msra.mxu0 %v4086
  %4234 = vmatmul.f32.gmra.mxu0 %v4116
  %v4235 = vpop.f32.mrf.mxu0
  %v4236 = vadd.f32 %v4104, %v4235
  %4237 = vdwg.mxu0
  %4238 = vmatpush.msra.mxu0 0.0
  %4239 = vmatpush.msra.mxu0 0.0
  %4240 = vmatpush.msra.mxu0 0.0
  %4241 = vmatpush.msra.mxu0 0.0
  %4242 = vmatpush.msra.mxu0 0.0
  %4243 = vmatpush.msra.mxu0 0.0
  %4244 = vmatpush.msra.mxu0 0.0
  %4245 = vmatpush.msra.mxu0 0.0
  %4246 = vmatpush.msra.mxu0 0.0
  %4247 = vmatpush.msra.mxu0 0.0
  %4248 = vmatpush.msra.mxu0 0.0
  %4249 = vmatpush.msra.mxu0 0.0
  %4250 = vmatpush.msra.mxu0 0.0
  %4251 = vmatpush.msra.mxu0 0.0
  %4252 = vmatpush.msra.mxu0 %v4095
  %4253 = vmatpush.msra.mxu0 %v4087
  %4254 = vmatmul.f32.gmra.mxu0 %v4116
  %v4255 = vpop.f32.mrf.mxu0
  %v4256 = vadd.f32 %v4105, %v4255
  %4257 = vdwg.mxu0
  %4258 = vmatpush.msra.mxu0 0.0
  %4259 = vmatpush.msra.mxu0 0.0
  %4260 = vmatpush.msra.mxu0 0.0
  %4261 = vmatpush.msra.mxu0 0.0
  %4262 = vmatpush.msra.mxu0 0.0
  %4263 = vmatpush.msra.mxu0 0.0
  %4264 = vmatpush.msra.mxu0 0.0
  %4265 = vmatpush.msra.mxu0 0.0
  %4266 = vmatpush.msra.mxu0 0.0
  %4267 = vmatpush.msra.mxu0 0.0
  %4268 = vmatpush.msra.mxu0 0.0
  %4269 = vmatpush.msra.mxu0 0.0
  %4270 = vmatpush.msra.mxu0 0.0
  %4271 = vmatpush.msra.mxu0 0.0
  %4272 = vmatpush.msra.mxu0 %v4096
  %4273 = vmatpush.msra.mxu0 %v4088
  %4274 = vmatmul.f32.gmra.mxu0 %v4116
  %v4275 = vpop.f32.mrf.mxu0
  %v4276 = vadd.f32 %v4106, %v4275
  %4277 = vdwg.mxu0
  %v4278 = vmax.f32 %v4136, 0.0
  %v4279 = vmax.f32 %v4156, 0.0
  %v4280 = vmax.f32 %v4176, 0.0
  %v4281 = vmax.f32 %v4196, 0.0
  %v4282 = vmax.f32 %v4216, 0.0
  %v4283 = vmax.f32 %v4236, 0.0
  %v4284 = vmax.f32 %v4256, 0.0
  %v4285 = vmax.f32 %v4276, 0.0
  %v4286 = vld [vmem:[%s49] sm:$0xff]
  %v4288 = vperm.slane %v4286, 0
  %v4289 = vperm.slane %v4286, 1
  %v4290 = vperm.slane %v4286, 2
  %v4291 = vperm.slane %v4286, 3
  %v4292 = vperm.slane %v4286, 4
  %v4293 = vperm.slane %v4286, 5
  %v4294 = vperm.slane %v4286, 6
  %v4295 = vperm.slane %v4286, 7
  %v4304 = vmul.f32 %v4278, %v4288
  %v4305 = vmul.f32 %v4279, %v4289
  %v4306 = vmul.f32 %v4280, %v4290
  %v4307 = vmul.f32 %v4281, %v4291
  %v4308 = vmul.f32 %v4282, %v4292
  %v4309 = vmul.f32 %v4283, %v4293
  %v4310 = vmul.f32 %v4284, %v4294
  %v4311 = vmul.f32 %v4285, %v4295
  %v4312 = vsel %vm1999, %v4304, 0.0
  %v4313 = vsel %vm1999, %v4305, 0.0
  %v4314 = vadd.f32 %v4312, %v4313
  %v4315 = vsel %vm1999, %v4306, 0.0
  %v4316 = vadd.f32 %v4314, %v4315
  %v4317 = vsel %vm1999, %v4307, 0.0
  %v4318 = vadd.f32 %v4316, %v4317
  %v4319 = vsel %vm1999, %v4308, 0.0
  %v4320 = vadd.f32 %v4318, %v4319
  %v4321 = vsel %vm1999, %v4309, 0.0
  %v4322 = vadd.f32 %v4320, %v4321
  %v4323 = vsel %vm1999, %v4310, 0.0
  %v4324 = vadd.f32 %v4322, %v4323
  %v4325 = vsel %vm1999, %v4311, 0.0
  %v4326 = vadd.f32 %v4324, %v4325
  %4327 = vadd.xlane.f32.xlu0 %v4326
  %v4328 = vpop.xlane.xlu0 %4327
  %v4329 = vld [vmem:[%s51] sm:$0x1]
  %v4331 = vperm.slane %v4329, 0
  %v4333 = vadd.f32 %v4328, %v4331
  %s4334 = scalar_lea.vmem %s45, 32
  %v4335 = vld [vmem:[%s4334] sm:$0xff]
  %v4336 = vld [vmem:[%s4334 + $0x8] sm:$0xff]
  %v4337 = vld [vmem:[%s4334 + $0x10] sm:$0xff]
  %v4338 = vld [vmem:[%s4334 + $0x18] sm:$0x1]
  %v4340 = vsel %vm156, %v4338, 0
  %4342 = vmatpush.msra.mxu0 0.0
  %4343 = vmatpush.msra.mxu0 0.0
  %4344 = vmatpush.msra.mxu0 0.0
  %4345 = vmatpush.msra.mxu0 0.0
  %4346 = vmatpush.msra.mxu0 0.0
  %4347 = vmatpush.msra.mxu0 0.0
  %4348 = vmatpush.msra.mxu0 0.0
  %4349 = vmatpush.msra.mxu0 0.0
  %4350 = vmatpush.msra.mxu0 0.0
  %4351 = vmatpush.msra.mxu0 0.0
  %4352 = vmatpush.msra.mxu0 0.0
  %4353 = vmatpush.msra.mxu0 0.0
  %4354 = vmatpush.msra.mxu0 %v4340
  %4355 = vmatpush.msra.mxu0 %v4337
  %4356 = vmatpush.msra.mxu0 %v4336
  %4357 = vmatpush.msra.mxu0 %v4335
  %4358 = vmatmul.f32.gmra.mxu0 %v4056
  %v4359 = vpop.f32.mrf.mxu0
  %v4360 = vadd.f32 0.0, %v4359
  %4361 = vdwg.mxu0
  %s4362 = scalar_lea.vmem [#allocation2], 128
  %v4363 = vld [vmem:[%s4362] sm:$0xff]
  %v4364 = vld [vmem:[%s4362 + $0x8] sm:$0xff]
  %v4365 = vld [vmem:[%s4362 + $0x10] sm:$0xff]
  %v4366 = vld [vmem:[%s4362 + $0x18] sm:$0xff]
  %v4367 = vld [vmem:[%s4362 + $0x20] sm:$0xff]
  %v4368 = vld [vmem:[%s4362 + $0x28] sm:$0xff]
  %v4369 = vld [vmem:[%s4362 + $0x30] sm:$0xff]
  %v4370 = vld [vmem:[%s4362 + $0x38] sm:$0xff]
  %v4371 = vld [vmem:[%s4362 + $0x40] sm:$0xff]
  %v4372 = vld [vmem:[%s4362 + $0x48] sm:$0xff]
  %v4373 = vld [vmem:[%s4362 + $0x50] sm:$0xff]
  %v4374 = vld [vmem:[%s4362 + $0x58] sm:$0xff]
  %v4375 = vld [vmem:[%s4362 + $0x60] sm:$0xff]
  %v4376 = vld [vmem:[%s4362 + $0x68] sm:$0xff]
  %v4377 = vld [vmem:[%s4362 + $0x70] sm:$0xff]
  %v4378 = vld [vmem:[%s4362 + $0x78] sm:$0xff]
  %s4379 = scalar_lea.vmem %s47, 8
  %v4380 = vld [vmem:[%s4379] sm:$0xff]
  %v4382 = vperm.slane %v4380, 0
  %v4383 = vperm.slane %v4380, 1
  %v4384 = vperm.slane %v4380, 2
  %v4385 = vperm.slane %v4380, 3
  %v4386 = vperm.slane %v4380, 4
  %v4387 = vperm.slane %v4380, 5
  %v4388 = vperm.slane %v4380, 6
  %v4389 = vperm.slane %v4380, 7
  %v4399 = vsel %vm247, %v4360, 0
  %4401 = vmatpush.msra.mxu0 0.0
  %4402 = vmatpush.msra.mxu0 0.0
  %4403 = vmatpush.msra.mxu0 0.0
  %4404 = vmatpush.msra.mxu0 0.0
  %4405 = vmatpush.msra.mxu0 0.0
  %4406 = vmatpush.msra.mxu0 0.0
  %4407 = vmatpush.msra.mxu0 0.0
  %4408 = vmatpush.msra.mxu0 0.0
  %4409 = vmatpush.msra.mxu0 0.0
  %4410 = vmatpush.msra.mxu0 0.0
  %4411 = vmatpush.msra.mxu0 0.0
  %4412 = vmatpush.msra.mxu0 0.0
  %4413 = vmatpush.msra.mxu0 0.0
  %4414 = vmatpush.msra.mxu0 0.0
  %4415 = vmatpush.msra.mxu0 %v4371
  %4416 = vmatpush.msra.mxu0 %v4363
  %4417 = vmatmul.f32.gmra.mxu0 %v4399
  %v4418 = vpop.f32.mrf.mxu0
  %v4419 = vadd.f32 %v4382, %v4418
  %4420 = vdwg.mxu0
  %4421 = vmatpush.msra.mxu0 0.0
  %4422 = vmatpush.msra.mxu0 0.0
  %4423 = vmatpush.msra.mxu0 0.0
  %4424 = vmatpush.msra.mxu0 0.0
  %4425 = vmatpush.msra.mxu0 0.0
  %4426 = vmatpush.msra.mxu0 0.0
  %4427 = vmatpush.msra.mxu0 0.0
  %4428 = vmatpush.msra.mxu0 0.0
  %4429 = vmatpush.msra.mxu0 0.0
  %4430 = vmatpush.msra.mxu0 0.0
  %4431 = vmatpush.msra.mxu0 0.0
  %4432 = vmatpush.msra.mxu0 0.0
  %4433 = vmatpush.msra.mxu0 0.0
  %4434 = vmatpush.msra.mxu0 0.0
  %4435 = vmatpush.msra.mxu0 %v4372
  %4436 = vmatpush.msra.mxu0 %v4364
  %4437 = vmatmul.f32.gmra.mxu0 %v4399
  %v4438 = vpop.f32.mrf.mxu0
  %v4439 = vadd.f32 %v4383, %v4438
  %4440 = vdwg.mxu0
  %4441 = vmatpush.msra.mxu0 0.0
  %4442 = vmatpush.msra.mxu0 0.0
  %4443 = vmatpush.msra.mxu0 0.0
  %4444 = vmatpush.msra.mxu0 0.0
  %4445 = vmatpush.msra.mxu0 0.0
  %4446 = vmatpush.msra.mxu0 0.0
  %4447 = vmatpush.msra.mxu0 0.0
  %4448 = vmatpush.msra.mxu0 0.0
  %4449 = vmatpush.msra.mxu0 0.0
  %4450 = vmatpush.msra.mxu0 0.0
  %4451 = vmatpush.msra.mxu0 0.0
  %4452 = vmatpush.msra.mxu0 0.0
  %4453 = vmatpush.msra.mxu0 0.0
  %4454 = vmatpush.msra.mxu0 0.0
  %4455 = vmatpush.msra.mxu0 %v4373
  %4456 = vmatpush.msra.mxu0 %v4365
  %4457 = vmatmul.f32.gmra.mxu0 %v4399
  %v4458 = vpop.f32.mrf.mxu0
  %v4459 = vadd.f32 %v4384, %v4458
  %4460 = vdwg.mxu0
  %4461 = vmatpush.msra.mxu0 0.0
  %4462 = vmatpush.msra.mxu0 0.0
  %4463 = vmatpush.msra.mxu0 0.0
  %4464 = vmatpush.msra.mxu0 0.0
  %4465 = vmatpush.msra.mxu0 0.0
  %4466 = vmatpush.msra.mxu0 0.0
  %4467 = vmatpush.msra.mxu0 0.0
  %4468 = vmatpush.msra.mxu0 0.0
  %4469 = vmatpush.msra.mxu0 0.0
  %4470 = vmatpush.msra.mxu0 0.0
  %4471 = vmatpush.msra.mxu0 0.0
  %4472 = vmatpush.msra.mxu0 0.0
  %4473 = vmatpush.msra.mxu0 0.0
  %4474 = vmatpush.msra.mxu0 0.0
  %4475 = vmatpush.msra.mxu0 %v4374
  %4476 = vmatpush.msra.mxu0 %v4366
  %4477 = vmatmul.f32.gmra.mxu0 %v4399
  %v4478 = vpop.f32.mrf.mxu0
  %v4479 = vadd.f32 %v4385, %v4478
  %4480 = vdwg.mxu0
  %4481 = vmatpush.msra.mxu0 0.0
  %4482 = vmatpush.msra.mxu0 0.0
  %4483 = vmatpush.msra.mxu0 0.0
  %4484 = vmatpush.msra.mxu0 0.0
  %4485 = vmatpush.msra.mxu0 0.0
  %4486 = vmatpush.msra.mxu0 0.0
  %4487 = vmatpush.msra.mxu0 0.0
  %4488 = vmatpush.msra.mxu0 0.0
  %4489 = vmatpush.msra.mxu0 0.0
  %4490 = vmatpush.msra.mxu0 0.0
  %4491 = vmatpush.msra.mxu0 0.0
  %4492 = vmatpush.msra.mxu0 0.0
  %4493 = vmatpush.msra.mxu0 0.0
  %4494 = vmatpush.msra.mxu0 0.0
  %4495 = vmatpush.msra.mxu0 %v4375
  %4496 = vmatpush.msra.mxu0 %v4367
  %4497 = vmatmul.f32.gmra.mxu0 %v4399
  %v4498 = vpop.f32.mrf.mxu0
  %v4499 = vadd.f32 %v4386, %v4498
  %4500 = vdwg.mxu0
  %4501 = vmatpush.msra.mxu0 0.0
  %4502 = vmatpush.msra.mxu0 0.0
  %4503 = vmatpush.msra.mxu0 0.0
  %4504 = vmatpush.msra.mxu0 0.0
  %4505 = vmatpush.msra.mxu0 0.0
  %4506 = vmatpush.msra.mxu0 0.0
  %4507 = vmatpush.msra.mxu0 0.0
  %4508 = vmatpush.msra.mxu0 0.0
  %4509 = vmatpush.msra.mxu0 0.0
  %4510 = vmatpush.msra.mxu0 0.0
  %4511 = vmatpush.msra.mxu0 0.0
  %4512 = vmatpush.msra.mxu0 0.0
  %4513 = vmatpush.msra.mxu0 0.0
  %4514 = vmatpush.msra.mxu0 0.0
  %4515 = vmatpush.msra.mxu0 %v4376
  %4516 = vmatpush.msra.mxu0 %v4368
  %4517 = vmatmul.f32.gmra.mxu0 %v4399
  %v4518 = vpop.f32.mrf.mxu0
  %v4519 = vadd.f32 %v4387, %v4518
  %4520 = vdwg.mxu0
  %4521 = vmatpush.msra.mxu0 0.0
  %4522 = vmatpush.msra.mxu0 0.0
  %4523 = vmatpush.msra.mxu0 0.0
  %4524 = vmatpush.msra.mxu0 0.0
  %4525 = vmatpush.msra.mxu0 0.0
  %4526 = vmatpush.msra.mxu0 0.0
  %4527 = vmatpush.msra.mxu0 0.0
  %4528 = vmatpush.msra.mxu0 0.0
  %4529 = vmatpush.msra.mxu0 0.0
  %4530 = vmatpush.msra.mxu0 0.0
  %4531 = vmatpush.msra.mxu0 0.0
  %4532 = vmatpush.msra.mxu0 0.0
  %4533 = vmatpush.msra.mxu0 0.0
  %4534 = vmatpush.msra.mxu0 0.0
  %4535 = vmatpush.msra.mxu0 %v4377
  %4536 = vmatpush.msra.mxu0 %v4369
  %4537 = vmatmul.f32.gmra.mxu0 %v4399
  %v4538 = vpop.f32.mrf.mxu0
  %v4539 = vadd.f32 %v4388, %v4538
  %4540 = vdwg.mxu0
  %4541 = vmatpush.msra.mxu0 0.0
  %4542 = vmatpush.msra.mxu0 0.0
  %4543 = vmatpush.msra.mxu0 0.0
  %4544 = vmatpush.msra.mxu0 0.0
  %4545 = vmatpush.msra.mxu0 0.0
  %4546 = vmatpush.msra.mxu0 0.0
  %4547 = vmatpush.msra.mxu0 0.0
  %4548 = vmatpush.msra.mxu0 0.0
  %4549 = vmatpush.msra.mxu0 0.0
  %4550 = vmatpush.msra.mxu0 0.0
  %4551 = vmatpush.msra.mxu0 0.0
  %4552 = vmatpush.msra.mxu0 0.0
  %4553 = vmatpush.msra.mxu0 0.0
  %4554 = vmatpush.msra.mxu0 0.0
  %4555 = vmatpush.msra.mxu0 %v4378
  %4556 = vmatpush.msra.mxu0 %v4370
  %4557 = vmatmul.f32.gmra.mxu0 %v4399
  %v4558 = vpop.f32.mrf.mxu0
  %v4559 = vadd.f32 %v4389, %v4558
  %4560 = vdwg.mxu0
  %v4561 = vmax.f32 %v4419, 0.0
  %v4562 = vmax.f32 %v4439, 0.0
  %v4563 = vmax.f32 %v4459, 0.0
  %v4564 = vmax.f32 %v4479, 0.0
  %v4565 = vmax.f32 %v4499, 0.0
  %v4566 = vmax.f32 %v4519, 0.0
  %v4567 = vmax.f32 %v4539, 0.0
  %v4568 = vmax.f32 %v4559, 0.0
  %s4569 = scalar_lea.vmem %s49, 8
  %v4570 = vld [vmem:[%s4569] sm:$0xff]
  %v4572 = vperm.slane %v4570, 0
  %v4573 = vperm.slane %v4570, 1
  %v4574 = vperm.slane %v4570, 2
  %v4575 = vperm.slane %v4570, 3
  %v4576 = vperm.slane %v4570, 4
  %v4577 = vperm.slane %v4570, 5
  %v4578 = vperm.slane %v4570, 6
  %v4579 = vperm.slane %v4570, 7
  %v4588 = vmul.f32 %v4561, %v4572
  %v4589 = vmul.f32 %v4562, %v4573
  %v4590 = vmul.f32 %v4563, %v4574
  %v4591 = vmul.f32 %v4564, %v4575
  %v4592 = vmul.f32 %v4565, %v4576
  %v4593 = vmul.f32 %v4566, %v4577
  %v4594 = vmul.f32 %v4567, %v4578
  %v4595 = vmul.f32 %v4568, %v4579
  %v4596 = vsel %vm1999, %v4588, 0.0
  %v4597 = vsel %vm1999, %v4589, 0.0
  %v4598 = vadd.f32 %v4596, %v4597
  %v4599 = vsel %vm1999, %v4590, 0.0
  %v4600 = vadd.f32 %v4598, %v4599
  %v4601 = vsel %vm1999, %v4591, 0.0
  %v4602 = vadd.f32 %v4600, %v4601
  %v4603 = vsel %vm1999, %v4592, 0.0
  %v4604 = vadd.f32 %v4602, %v4603
  %v4605 = vsel %vm1999, %v4593, 0.0
  %v4606 = vadd.f32 %v4604, %v4605
  %v4607 = vsel %vm1999, %v4594, 0.0
  %v4608 = vadd.f32 %v4606, %v4607
  %v4609 = vsel %vm1999, %v4595, 0.0
  %v4610 = vadd.f32 %v4608, %v4609
  %4611 = vadd.xlane.f32.xlu0 %v4610
  %v4612 = vpop.xlane.xlu0 %4611
  %s4613 = scalar_lea.vmem %s51, 1
  %v4614 = vld [vmem:[%s4613] sm:$0x1]
  %v4616 = vperm.slane %v4614, 0
  %v4618 = vadd.f32 %v4612, %v4616
  %s4619 = scalar_lea.vmem %s45, 64
  %v4620 = vld [vmem:[%s4619] sm:$0xff]
  %v4621 = vld [vmem:[%s4619 + $0x8] sm:$0xff]
  %v4622 = vld [vmem:[%s4619 + $0x10] sm:$0xff]
  %v4623 = vld [vmem:[%s4619 + $0x18] sm:$0x1]
  %v4625 = vsel %vm156, %v4623, 0
  %4627 = vmatpush.msra.mxu0 0.0
  %4628 = vmatpush.msra.mxu0 0.0
  %4629 = vmatpush.msra.mxu0 0.0
  %4630 = vmatpush.msra.mxu0 0.0
  %4631 = vmatpush.msra.mxu0 0.0
  %4632 = vmatpush.msra.mxu0 0.0
  %4633 = vmatpush.msra.mxu0 0.0
  %4634 = vmatpush.msra.mxu0 0.0
  %4635 = vmatpush.msra.mxu0 0.0
  %4636 = vmatpush.msra.mxu0 0.0
  %4637 = vmatpush.msra.mxu0 0.0
  %4638 = vmatpush.msra.mxu0 0.0
  %4639 = vmatpush.msra.mxu0 %v4625
  %4640 = vmatpush.msra.mxu0 %v4622
  %4641 = vmatpush.msra.mxu0 %v4621
  %4642 = vmatpush.msra.mxu0 %v4620
  %4643 = vmatmul.f32.gmra.mxu0 %v4056
  %v4644 = vpop.f32.mrf.mxu0
  %v4645 = vadd.f32 0.0, %v4644
  %4646 = vdwg.mxu0
  %s4647 = scalar_lea.vmem [#allocation2], 256
  %v4648 = vld [vmem:[%s4647] sm:$0xff]
  %v4649 = vld [vmem:[%s4647 + $0x8] sm:$0xff]
  %v4650 = vld [vmem:[%s4647 + $0x10] sm:$0xff]
  %v4651 = vld [vmem:[%s4647 + $0x18] sm:$0xff]
  %v4652 = vld [vmem:[%s4647 + $0x20] sm:$0xff]
  %v4653 = vld [vmem:[%s4647 + $0x28] sm:$0xff]
  %v4654 = vld [vmem:[%s4647 + $0x30] sm:$0xff]
  %v4655 = vld [vmem:[%s4647 + $0x38] sm:$0xff]
  %v4656 = vld [vmem:[%s4647 + $0x40] sm:$0xff]
  %v4657 = vld [vmem:[%s4647 + $0x48] sm:$0xff]
  %v4658 = vld [vmem:[%s4647 + $0x50] sm:$0xff]
  %v4659 = vld [vmem:[%s4647 + $0x58] sm:$0xff]
  %v4660 = vld [vmem:[%s4647 + $0x60] sm:$0xff]
  %v4661 = vld [vmem:[%s4647 + $0x68] sm:$0xff]
  %v4662 = vld [vmem:[%s4647 + $0x70] sm:$0xff]
  %v4663 = vld [vmem:[%s4647 + $0x78] sm:$0xff]
  %s4664 = scalar_lea.vmem %s47, 16
  %v4665 = vld [vmem:[%s4664] sm:$0xff]
  %v4667 = vperm.slane %v4665, 0
  %v4668 = vperm.slane %v4665, 1
  %v4669 = vperm.slane %v4665, 2
  %v4670 = vperm.slane %v4665, 3
  %v4671 = vperm.slane %v4665, 4
  %v4672 = vperm.slane %v4665, 5
  %v4673 = vperm.slane %v4665, 6
  %v4674 = vperm.slane %v4665, 7
  %v4684 = vsel %vm247, %v4645, 0
  %4686 = vmatpush.msra.mxu0 0.0
  %4687 = vmatpush.msra.mxu0 0.0
  %4688 = vmatpush.msra.mxu0 0.0
  %4689 = vmatpush.msra.mxu0 0.0
  %4690 = vmatpush.msra.mxu0 0.0
  %4691 = vmatpush.msra.mxu0 0.0
  %4692 = vmatpush.msra.mxu0 0.0
  %4693 = vmatpush.msra.mxu0 0.0
  %4694 = vmatpush.msra.mxu0 0.0
  %4695 = vmatpush.msra.mxu0 0.0
  %4696 = vmatpush.msra.mxu0 0.0
  %4697 = vmatpush.msra.mxu0 0.0
  %4698 = vmatpush.msra.mxu0 0.0
  %4699 = vmatpush.msra.mxu0 0.0
  %4700 = vmatpush.msra.mxu0 %v4656
  %4701 = vmatpush.msra.mxu0 %v4648
  %4702 = vmatmul.f32.gmra.mxu0 %v4684
  %v4703 = vpop.f32.mrf.mxu0
  %v4704 = vadd.f32 %v4667, %v4703
  %4705 = vdwg.mxu0
  %4706 = vmatpush.msra.mxu0 0.0
  %4707 = vmatpush.msra.mxu0 0.0
  %4708 = vmatpush.msra.mxu0 0.0
  %4709 = vmatpush.msra.mxu0 0.0
  %4710 = vmatpush.msra.mxu0 0.0
  %4711 = vmatpush.msra.mxu0 0.0
  %4712 = vmatpush.msra.mxu0 0.0
  %4713 = vmatpush.msra.mxu0 0.0
  %4714 = vmatpush.msra.mxu0 0.0
  %4715 = vmatpush.msra.mxu0 0.0
  %4716 = vmatpush.msra.mxu0 0.0
  %4717 = vmatpush.msra.mxu0 0.0
  %4718 = vmatpush.msra.mxu0 0.0
  %4719 = vmatpush.msra.mxu0 0.0
  %4720 = vmatpush.msra.mxu0 %v4657
  %4721 = vmatpush.msra.mxu0 %v4649
  %4722 = vmatmul.f32.gmra.mxu0 %v4684
  %v4723 = vpop.f32.mrf.mxu0
  %v4724 = vadd.f32 %v4668, %v4723
  %4725 = vdwg.mxu0
  %4726 = vmatpush.msra.mxu0 0.0
  %4727 = vmatpush.msra.mxu0 0.0
  %4728 = vmatpush.msra.mxu0 0.0
  %4729 = vmatpush.msra.mxu0 0.0
  %4730 = vmatpush.msra.mxu0 0.0
  %4731 = vmatpush.msra.mxu0 0.0
  %4732 = vmatpush.msra.mxu0 0.0
  %4733 = vmatpush.msra.mxu0 0.0
  %4734 = vmatpush.msra.mxu0 0.0
  %4735 = vmatpush.msra.mxu0 0.0
  %4736 = vmatpush.msra.mxu0 0.0
  %4737 = vmatpush.msra.mxu0 0.0
  %4738 = vmatpush.msra.mxu0 0.0
  %4739 = vmatpush.msra.mxu0 0.0
  %4740 = vmatpush.msra.mxu0 %v4658
  %4741 = vmatpush.msra.mxu0 %v4650
  %4742 = vmatmul.f32.gmra.mxu0 %v4684
  %v4743 = vpop.f32.mrf.mxu0
  %v4744 = vadd.f32 %v4669, %v4743
  %4745 = vdwg.mxu0
  %4746 = vmatpush.msra.mxu0 0.0
  %4747 = vmatpush.msra.mxu0 0.0
  %4748 = vmatpush.msra.mxu0 0.0
  %4749 = vmatpush.msra.mxu0 0.0
  %4750 = vmatpush.msra.mxu0 0.0
  %4751 = vmatpush.msra.mxu0 0.0
  %4752 = vmatpush.msra.mxu0 0.0
  %4753 = vmatpush.msra.mxu0 0.0
  %4754 = vmatpush.msra.mxu0 0.0
  %4755 = vmatpush.msra.mxu0 0.0
  %4756 = vmatpush.msra.mxu0 0.0
  %4757 = vmatpush.msra.mxu0 0.0
  %4758 = vmatpush.msra.mxu0 0.0
  %4759 = vmatpush.msra.mxu0 0.0
  %4760 = vmatpush.msra.mxu0 %v4659
  %4761 = vmatpush.msra.mxu0 %v4651
  %4762 = vmatmul.f32.gmra.mxu0 %v4684
  %v4763 = vpop.f32.mrf.mxu0
  %v4764 = vadd.f32 %v4670, %v4763
  %4765 = vdwg.mxu0
  %4766 = vmatpush.msra.mxu0 0.0
  %4767 = vmatpush.msra.mxu0 0.0
  %4768 = vmatpush.msra.mxu0 0.0
  %4769 = vmatpush.msra.mxu0 0.0
  %4770 = vmatpush.msra.mxu0 0.0
  %4771 = vmatpush.msra.mxu0 0.0
  %4772 = vmatpush.msra.mxu0 0.0
  %4773 = vmatpush.msra.mxu0 0.0
  %4774 = vmatpush.msra.mxu0 0.0
  %4775 = vmatpush.msra.mxu0 0.0
  %4776 = vmatpush.msra.mxu0 0.0
  %4777 = vmatpush.msra.mxu0 0.0
  %4778 = vmatpush.msra.mxu0 0.0
  %4779 = vmatpush.msra.mxu0 0.0
  %4780 = vmatpush.msra.mxu0 %v4660
  %4781 = vmatpush.msra.mxu0 %v4652
  %4782 = vmatmul.f32.gmra.mxu0 %v4684
  %v4783 = vpop.f32.mrf.mxu0
  %v4784 = vadd.f32 %v4671, %v4783
  %4785 = vdwg.mxu0
  %4786 = vmatpush.msra.mxu0 0.0
  %4787 = vmatpush.msra.mxu0 0.0
  %4788 = vmatpush.msra.mxu0 0.0
  %4789 = vmatpush.msra.mxu0 0.0
  %4790 = vmatpush.msra.mxu0 0.0
  %4791 = vmatpush.msra.mxu0 0.0
  %4792 = vmatpush.msra.mxu0 0.0
  %4793 = vmatpush.msra.mxu0 0.0
  %4794 = vmatpush.msra.mxu0 0.0
  %4795 = vmatpush.msra.mxu0 0.0
  %4796 = vmatpush.msra.mxu0 0.0
  %4797 = vmatpush.msra.mxu0 0.0
  %4798 = vmatpush.msra.mxu0 0.0
  %4799 = vmatpush.msra.mxu0 0.0
  %4800 = vmatpush.msra.mxu0 %v4661
  %4801 = vmatpush.msra.mxu0 %v4653
  %4802 = vmatmul.f32.gmra.mxu0 %v4684
  %v4803 = vpop.f32.mrf.mxu0
  %v4804 = vadd.f32 %v4672, %v4803
  %4805 = vdwg.mxu0
  %4806 = vmatpush.msra.mxu0 0.0
  %4807 = vmatpush.msra.mxu0 0.0
  %4808 = vmatpush.msra.mxu0 0.0
  %4809 = vmatpush.msra.mxu0 0.0
  %4810 = vmatpush.msra.mxu0 0.0
  %4811 = vmatpush.msra.mxu0 0.0
  %4812 = vmatpush.msra.mxu0 0.0
  %4813 = vmatpush.msra.mxu0 0.0
  %4814 = vmatpush.msra.mxu0 0.0
  %4815 = vmatpush.msra.mxu0 0.0
  %4816 = vmatpush.msra.mxu0 0.0
  %4817 = vmatpush.msra.mxu0 0.0
  %4818 = vmatpush.msra.mxu0 0.0
  %4819 = vmatpush.msra.mxu0 0.0
  %4820 = vmatpush.msra.mxu0 %v4662
  %4821 = vmatpush.msra.mxu0 %v4654
  %4822 = vmatmul.f32.gmra.mxu0 %v4684
  %v4823 = vpop.f32.mrf.mxu0
  %v4824 = vadd.f32 %v4673, %v4823
  %4825 = vdwg.mxu0
  %4826 = vmatpush.msra.mxu0 0.0
  %4827 = vmatpush.msra.mxu0 0.0
  %4828 = vmatpush.msra.mxu0 0.0
  %4829 = vmatpush.msra.mxu0 0.0
  %4830 = vmatpush.msra.mxu0 0.0
  %4831 = vmatpush.msra.mxu0 0.0
  %4832 = vmatpush.msra.mxu0 0.0
  %4833 = vmatpush.msra.mxu0 0.0
  %4834 = vmatpush.msra.mxu0 0.0
  %4835 = vmatpush.msra.mxu0 0.0
  %4836 = vmatpush.msra.mxu0 0.0
  %4837 = vmatpush.msra.mxu0 0.0
  %4838 = vmatpush.msra.mxu0 0.0
  %4839 = vmatpush.msra.mxu0 0.0
  %4840 = vmatpush.msra.mxu0 %v4663
  %4841 = vmatpush.msra.mxu0 %v4655
  %4842 = vmatmul.f32.gmra.mxu0 %v4684
  %v4843 = vpop.f32.mrf.mxu0
  %v4844 = vadd.f32 %v4674, %v4843
  %4845 = vdwg.mxu0
  %v4846 = vmax.f32 %v4704, 0.0
  %v4847 = vmax.f32 %v4724, 0.0
  %v4848 = vmax.f32 %v4744, 0.0
  %v4849 = vmax.f32 %v4764, 0.0
  %v4850 = vmax.f32 %v4784, 0.0
  %v4851 = vmax.f32 %v4804, 0.0
  %v4852 = vmax.f32 %v4824, 0.0
  %v4853 = vmax.f32 %v4844, 0.0
  %s4854 = scalar_lea.vmem %s49, 16
  %v4855 = vld [vmem:[%s4854] sm:$0xff]
  %v4857 = vperm.slane %v4855, 0
  %v4858 = vperm.slane %v4855, 1
  %v4859 = vperm.slane %v4855, 2
  %v4860 = vperm.slane %v4855, 3
  %v4861 = vperm.slane %v4855, 4
  %v4862 = vperm.slane %v4855, 5
  %v4863 = vperm.slane %v4855, 6
  %v4864 = vperm.slane %v4855, 7
  %v4873 = vmul.f32 %v4846, %v4857
  %v4874 = vmul.f32 %v4847, %v4858
  %v4875 = vmul.f32 %v4848, %v4859
  %v4876 = vmul.f32 %v4849, %v4860
  %v4877 = vmul.f32 %v4850, %v4861
  %v4878 = vmul.f32 %v4851, %v4862
  %v4879 = vmul.f32 %v4852, %v4863
  %v4880 = vmul.f32 %v4853, %v4864
  %v4881 = vsel %vm1999, %v4873, 0.0
  %v4882 = vsel %vm1999, %v4874, 0.0
  %v4883 = vadd.f32 %v4881, %v4882
  %v4884 = vsel %vm1999, %v4875, 0.0
  %v4885 = vadd.f32 %v4883, %v4884
  %v4886 = vsel %vm1999, %v4876, 0.0
  %v4887 = vadd.f32 %v4885, %v4886
  %v4888 = vsel %vm1999, %v4877, 0.0
  %v4889 = vadd.f32 %v4887, %v4888
  %v4890 = vsel %vm1999, %v4878, 0.0
  %v4891 = vadd.f32 %v4889, %v4890
  %v4892 = vsel %vm1999, %v4879, 0.0
  %v4893 = vadd.f32 %v4891, %v4892
  %v4894 = vsel %vm1999, %v4880, 0.0
  %v4895 = vadd.f32 %v4893, %v4894
  %4896 = vadd.xlane.f32.xlu0 %v4895
  %v4897 = vpop.xlane.xlu0 %4896
  %s4898 = scalar_lea.vmem %s51, 2
  %v4899 = vld [vmem:[%s4898] sm:$0x1]
  %v4901 = vperm.slane %v4899, 0
  %v4903 = vadd.f32 %v4897, %v4901
  %v4904 = vld [vmem:[%s53] sm:$0x1]
  %v4906 = vperm.slane %v4904, 0
  %v4908 = vmul.f32 %v4021, %v4906
  %s4909 = scalar_lea.vmem %s53, 1
  %v4910 = vld [vmem:[%s4909] sm:$0x1]
  %v4912 = vperm.slane %v4910, 0
  %v4914 = vmul.f32 %v4618, %v4912
  %v4915 = vadd.f32 %v4908, %v4914
  %s4916 = scalar_lea.vmem %s53, 2
  %v4917 = vld [vmem:[%s4916] sm:$0x1]
  %v4919 = vperm.slane %v4917, 0
  %v4921 = vmul.f32 %v4333, %v4919
  %v4922 = vadd.f32 %v4915, %v4921
  %s4923 = scalar_lea.vmem %s53, 3
  %v4924 = vld [vmem:[%s4923] sm:$0x1]
  %v4926 = vperm.slane %v4924, 0
  %v4928 = vmul.f32 %v4903, %v4926
  %v4929 = vadd.f32 %v4922, %v4928
  %v4930 = vld [vmem:[#allocation4] sm:$0x1]
  %v4932 = vperm.slane %v4930, 0
  %v4934 = vadd.f32 %v4929, %v4932
  %v4935 = vld [vmem:[%s59] sm:$0x1]
  %4937 = vset.pattern.permute.xlu0 0
  %4938 = vperm.xlu0 %4937, %v4934
  %v4939 = vpop.permute.xlu0 %4938
  %v4942 = vperm.slane %v4935, 0
  %v4944 = vmul.f32 %v4939, %v4942
  %s4945 = scalar_lea.vmem %s59, 1
  %v4946 = vld [vmem:[%s4945] sm:$0x1]
  %4948 = vset.pattern.permute.xlu0 0
  %4949 = vperm.xlu0 %4948, %v4903
  %v4950 = vpop.permute.xlu0 %4949
  %v4953 = vperm.slane %v4946, 0
  %v4955 = vmul.f32 %v4950, %v4953
  %v4956 = vadd.f32 %v4944, %v4955
  %s4957 = scalar_lea.vmem %s59, 2
  %v4958 = vld [vmem:[%s4957] sm:$0x1]
  %4960 = vset.pattern.permute.xlu0 0
  %4961 = vperm.xlu0 %4960, %v4021
  %v4962 = vpop.permute.xlu0 %4961
  %v4965 = vperm.slane %v4958, 0
  %v4967 = vmul.f32 %v4962, %v4965
  %v4968 = vadd.f32 %v4956, %v4967
  %s4969 = scalar_lea.vmem %s59, 3
  %v4970 = vld [vmem:[%s4969] sm:$0x1]
  %4972 = vset.pattern.permute.xlu0 0
  %4973 = vperm.xlu0 %4972, %v4618
  %v4974 = vpop.permute.xlu0 %4973
  %v4977 = vperm.slane %v4970, 0
  %v4979 = vmul.f32 %v4974, %v4977
  %v4980 = vadd.f32 %v4968, %v4979
  %s4981 = scalar_lea.vmem %s59, 4
  %v4982 = vld [vmem:[%s4981] sm:$0x1]
  %4984 = vset.pattern.permute.xlu0 0
  %4985 = vperm.xlu0 %4984, %v4333
  %v4986 = vpop.permute.xlu0 %4985
  %v4989 = vperm.slane %v4982, 0
  %v4991 = vmul.f32 %v4986, %v4989
  %v4992 = vadd.f32 %v4980, %v4991
  %vm4993 = vcmask 33792
  %4994 = vst.msk [vmem:[%s61] sm:$0x3] %vm4993, %v4992
  // Predicated region
  $region122: #{informer_dnn_forward.1} parent=0 // pred_check
    _
  $region123: #{informer_dnn_forward.1} parent=0 // pred_check_branch
    %4996 = sbr.rel (0) target = $region125
  $region124: #{informer_dnn_forward.1} parent=0 // pred_region
    _
  $region125: #{informer_dnn_forward.1} parent=0 // pred_fallthru
    _
  // Predicated region
  $region126: #{informer_dnn_forward.1} parent=0 // pred_check
    _
  $region127: #{informer_dnn_forward.1} parent=0 // pred_check_branch
    %4998 = sbr.rel (0) target = $region129
  $region128: #{informer_dnn_forward.1} parent=0 // pred_region
    _
  $region129: #{informer_dnn_forward.1} parent=0 // pred_fallthru
    _
  %4999 = vsyncmov [#allocation3]
  %s5000 = vpop.sfrf %4999
  %p5001 = scmp.eq.s32.totalorder %s5000, 0
  %p5002 = pneg %p5001
  %5004 = shalt.err (%p5002)

</llo_original>
